<compile_context>
chip_gen: v6e
topology: v6e:2x2x1
jax: 0.10.0
libtpu: 0.0.40
codegen_flags: <defaults>
</compile_context>

<pallas_src>
import jax
import jax.numpy as jnp
from jax.experimental import pallas as pl
from jax.experimental.pallas import tpu as pltpu


# ---------------------------------------------------------------------------
# Kernel
# ---------------------------------------------------------------------------
def mamba_block_kernel(x_ref, xhp_ref, xhn_ref, ln_w_ref, ln_b_ref,
                       w_in_ref, conv_w_ref, w_dt_ref, b_dt_ref,
                       w_out_ref, out_ref):
    l_idx = pl.program_id(1)
    n_l = pl.num_programs(1)
    d_inner = w_dt_ref.shape[0]

    x = x_ref[...].astype(jnp.float32)                 # (TL, D), kept for residual
    tl = x.shape[0]
    ln_w = ln_w_ref[...]                               # (1, D)
    ln_b = ln_b_ref[...]
    inv_d = 1.0 / x.shape[-1]

    # ---- LayerNorm (eps = 1e-5), two-pass variance ----
    def layernorm(v):
        mean = jnp.sum(v, axis=-1, keepdims=True) * inv_d
        c = v - mean
        var = jnp.sum(c * c, axis=-1, keepdims=True) * inv_d
        return c * jax.lax.rsqrt(var + 1e-5) * ln_w + ln_b

    xn = layernorm(x).astype(jnp.bfloat16)

    # ---- fused in_proj: one dot, lane-aligned split into x1 / x2 ----
    xp = jnp.dot(xn, w_in_ref[...], preferred_element_type=jnp.float32)  # (TL, 2*d_inner)
    x1 = xp[:, :d_inner]
    x2 = xp[:, d_inner:]

    # ---- conv halo rows: x[l*TL - 1] and x[(l+1)*TL], re-LN + project ----
    xh = jnp.concatenate([xhp_ref[7:8, :], xhn_ref[0:1, :]], axis=0)     # (2, D)
    xh = layernorm(xh.astype(jnp.float32)).astype(jnp.bfloat16)
    hh = jnp.dot(xh, w_in_ref[:, :d_inner], preferred_element_type=jnp.float32)
    prev_ok = jnp.where(l_idx > 0, 1.0, 0.0)           # zero pad at seq start
    next_ok = jnp.where(l_idx < n_l - 1, 1.0, 0.0)     # zero pad at seq end
    halo_prev = hh[0:1, :] * prev_ok
    halo_next = hh[1:2, :] * next_ok

    # ---- depthwise Conv1d k=3 pad=1 over L: XLU rolls + boundary selects ----
    row = jax.lax.broadcasted_iota(jnp.int32, (tl, 1), 0)                # (TL, 1)
    x1_tm1 = jnp.where(row == 0, halo_prev, pltpu.roll(x1, 1, axis=0))
    x1_tp1 = jnp.where(row == tl - 1, halo_next, pltpu.roll(x1, tl - 1, axis=0))
    x1_conv = (x1_tm1 * conv_w_ref[0:1, :]
               + x1 * conv_w_ref[1:2, :]
               + x1_tp1 * conv_w_ref[2:3, :])

    # ---- SiLU ----
    x1_ssm = x1_conv * jax.nn.sigmoid(x1_conv)

    # ---- dt_proj (+bias); fused sigmoid(softplus(dt)) = 1 - 1/(2 + exp(dt)) ----
    dt = jnp.dot(x1_ssm.astype(jnp.bfloat16), w_dt_ref[...],
                 preferred_element_type=jnp.float32) + b_dt_ref[...]
    e = jnp.exp(jnp.minimum(dt, 30.0))                 # clamp avoids inf in recip
    dt_gate = 1.0 - pl.reciprocal(2.0 + e, approx=True)

    # ---- gating ----
    x_gated = x1_ssm * dt_gate * jax.nn.sigmoid(x2)

    # ---- out_proj (layer_scale pre-folded into w_out) + residual ----
    out = jnp.dot(x_gated.astype(jnp.bfloat16), w_out_ref[...],
                  preferred_element_type=jnp.float32)
    out_ref[...] = (out + x).astype(out_ref.dtype)


# ---------------------------------------------------------------------------
# Parameters
# ---------------------------------------------------------------------------
def init_params(key, d_model, expand_factor=2.0):
    """Deterministic parameter init (shapes mirror the PyTorch module; linear /
    conv weights stored pre-transposed for `x @ W` use)."""
    d_inner = int(d_model * expand_factor)
    k = jax.random.split(key, 5)
    s = 0.15
    return {
        "ln_w": jnp.ones((d_model,), jnp.float32),
        "ln_b": jnp.zeros((d_model,), jnp.float32),
        # nn.Linear(d_model, 2*d_inner).weight is (2*d_inner, d_model); transposed:
        "w_in": s * jax.random.normal(k[0], (d_model, 2 * d_inner), jnp.float32),
        # Conv1d weight (d_inner, 1, 3) stored as (3, d_inner):
        "conv_w": s * jax.random.normal(k[1], (3, d_inner), jnp.float32),
        "w_dt": s * jax.random.normal(k[2], (d_inner, d_inner), jnp.float32),
        "b_dt": s * jax.random.normal(k[3], (d_inner,), jnp.float32),
        "w_out": s * jax.random.normal(k[4], (d_inner, d_model), jnp.float32),
        "layer_scale": 0.1 * jnp.ones((d_model,), jnp.float32),
    }


def prepare_kernel_params(params):
    """Kernel-ready params: bf16 matmul weights, layer_scale folded into w_out,
    (1, D)/(1, d_inner) layouts for the vectors."""
    return {
        "ln_w": params["ln_w"].reshape(1, -1).astype(jnp.float32),
        "ln_b": params["ln_b"].reshape(1, -1).astype(jnp.float32),
        "w_in": params["w_in"].astype(jnp.bfloat16),
        "conv_w": params["conv_w"].astype(jnp.float32),
        "w_dt": params["w_dt"].astype(jnp.bfloat16),
        "b_dt": params["b_dt"].reshape(1, -1).astype(jnp.float32),
        "w_out": (params["w_out"]
                  * params["layer_scale"].reshape(1, -1)).astype(jnp.bfloat16),
    }


# ---------------------------------------------------------------------------
# VMEM budget / tile selection / capability probe
# ---------------------------------------------------------------------------
def _vmem_budget_bytes():
    try:
        cap = int(getattr(pltpu.get_tpu_info(), "vmem_capacity_bytes",
                          64 * 1024 * 1024))
    except Exception:  # hardware query only; never masks kernel errors
        cap = 64 * 1024 * 1024
    if cap <= 64 * 1024 * 1024:          # v7x-class: 64 MiB physical per core
        return min(cap - 12 * 1024 * 1024, 48 * 1024 * 1024)
    return 96 * 1024 * 1024              # v5e/v6e: 128 MiB physical


def _pick_seq_tile(L, D, d_inner, budget_bytes, *, want_tiles=1):
    """Largest multiple-of-8 divisor of L whose working set fits the budget."""
    # Rough f32 per-row model: x/out double-buffered tiles + live intermediates.
    per_row = 4 * (4 * D + 12 * d_inner)
    fixed = 4 * 1024 * 1024                      # weights + compiler scratch
    cap_rows = max(8, (budget_bytes - fixed) // per_row)
    candidates = [t for t in range(8, L + 1, 8) if L % t == 0 and t <= cap_rows]
    if not candidates:
        return 8 if L % 8 == 0 else L
    ok = [t for t in candidates if (L // t) >= want_tiles]
    return max(ok) if ok else max(candidates)


_BUFFERED_WEIGHTS_SUPPORTED = None


def _buffered_weights_supported():
    """One-time probe: does this build accept pipeline_mode=pl.Buffered(1)?
    The real kernel call is NOT wrapped in try/except, so genuine errors
    always surface."""
    global _BUFFERED_WEIGHTS_SUPPORTED
    if _BUFFERED_WEIGHTS_SUPPORTED is None:
        def _probe(x_ref, o_ref):
            o_ref[...] = x_ref[...]
        try:
            x = jnp.zeros((8, 128), jnp.float32)
            jax.block_until_ready(pl.pallas_call(
                _probe,
                out_shape=jax.ShapeDtypeStruct((8, 128), jnp.float32),
                grid=(2,),
                in_specs=[pl.BlockSpec((8, 128), lambda i: (0, 0),
                                       pipeline_mode=pl.Buffered(1))],
                out_specs=pl.BlockSpec((8, 128), lambda i: (0, 0)),
            )(x))
            _BUFFERED_WEIGHTS_SUPPORTED = True
        except Exception:
            _BUFFERED_WEIGHTS_SUPPORTED = False
    return _BUFFERED_WEIGHTS_SUPPORTED


# ---------------------------------------------------------------------------
# pallas_call builder + wrapper
# ---------------------------------------------------------------------------
def _mamba_pallas_call(B, L, D, d_inner, tl, dtype, vmem_limit, cost,
                       single_buffer_weights):
    n_tiles = L // tl
    bpt = tl // 8                 # halo index_maps work in 8-row blocks
    last_blk = L // 8 - 1
    wkw = dict(pipeline_mode=pl.Buffered(1)) if single_buffer_weights else {}

    def wspec(shape):             # constant-index (resident) weights
        return pl.BlockSpec(shape, lambda b, l: (0,) * len(shape), **wkw)

    return pl.pallas_call(
        mamba_block_kernel,
        out_shape=jax.ShapeDtypeStruct((B, L, D), dtype),
        grid_spec=pltpu.PrefetchScalarGridSpec(
            num_scalar_prefetch=0,
            grid=(B, n_tiles),
            in_specs=[
                pl.BlockSpec((None, tl, D), lambda b, l: (b, l, 0)),      # x tile
                pl.BlockSpec((None, 8, D),                                # prev halo (row l*tl-1)
                             lambda b, l: (b, jnp.maximum(l * bpt - 1, 0), 0)),
                pl.BlockSpec((None, 8, D),                                # next halo (row (l+1)*tl)
                             lambda b, l: (b, jnp.minimum((l + 1) * bpt, last_blk), 0)),
                wspec((1, D)),                                            # ln_w
                wspec((1, D)),                                            # ln_b
                wspec((D, 2 * d_inner)),                                  # w_in (bf16)
                wspec((3, d_inner)),                                      # conv_w
                wspec((d_inner, d_inner)),                                # w_dt (bf16)
                wspec((1, d_inner)),                                      # b_dt
                wspec((d_inner, D)),                                      # w_out (bf16, scale folded)
            ],
            out_specs=pl.BlockSpec((None, tl, D), lambda b, l: (b, l, 0)),
        ),
        compiler_params=pltpu.CompilerParams(
            dimension_semantics=("parallel", "parallel"),
            vmem_limit_bytes=int(vmem_limit),
        ),
        cost_estimate=cost,
    )


def mamba_block_forward(x, params, *, reverse=False, seq_tile=None):
    B, L, D = x.shape
    assert L % 8 == 0, "L must be a multiple of 8"
    kp = prepare_kernel_params(params)
    d_inner = kp["w_dt"].shape[0]

    budget = _vmem_budget_bytes()
    if seq_tile is None:
        # For B == 1, ask for >= 2 L-tiles so both v7x TensorCores get work.
        want_tiles = 2 if B == 1 else 1
        seq_tile = _pick_seq_tile(L, D, d_inner, budget, want_tiles=want_tiles)
    tl = seq_tile
    assert L % tl == 0 and tl % 8 == 0, (
        "L must be a multiple of seq_tile and seq_tile a multiple of 8")

    if reverse:
        x = jnp.flip(x, axis=1)

    weight_bytes = sum(int(v.size) * v.dtype.itemsize for v in kp.values())
    cost = pl.CostEstimate(
        flops=2 * B * L * (2 * D * d_inner + d_inner * d_inner + d_inner * D),
        transcendentals=3 * B * L * d_inner,
        bytes_accessed=2 * B * L * D * 4 + weight_bytes,
    )

    call = _mamba_pallas_call(B, L, D, d_inner, tl, x.dtype, budget, cost,
                              _buffered_weights_supported())
    out = call(x, x, x, kp["ln_w"], kp["ln_b"], kp["w_in"], kp["conv_w"],
               kp["w_dt"], kp["b_dt"], kp["w_out"])

    if reverse:
        out = jnp.flip(out, axis=1)
    return out


# ---------------------------------------------------------------------------
# Pure-JAX reference (mirrors the PyTorch forward and the kernel's bf16-matmul
# precision contract) for validation.
# ---------------------------------------------------------------------------
def mamba_block_reference(x, params, *, reverse=False):
    kp = prepare_kernel_params(params)
    d_inner = kp["w_dt"].shape[0]
    residual = x
    mean = jnp.mean(x, axis=-1, keepdims=True)
    var = jnp.mean((x - mean) ** 2, axis=-1, keepdims=True)
    xn = (x - mean) / jnp.sqrt(var + 1e-5) * kp["ln_w"][0] + kp["ln_b"][0]
    if reverse:
        xn = jnp.flip(xn, axis=1)
    xp = jnp.dot(xn.astype(jnp.bfloat16), kp["w_in"],
                 preferred_element_type=jnp.float32)
    x1, x2 = xp[..., :d_inner], xp[..., d_inner:]
    x1_pad = jnp.pad(x1, ((0, 0), (1, 1), (0, 0)))
    x1_conv = (x1_pad[:, :-2, :] * kp["conv_w"][0]
               + x1_pad[:, 1:-1, :] * kp["conv_w"][1]
               + x1_pad[:, 2:, :] * kp["conv_w"][2])
    x1_ssm = x1_conv * jax.nn.sigmoid(x1_conv)
    dt = jnp.dot(x1_ssm.astype(jnp.bfloat16), kp["w_dt"],
                 preferred_element_type=jnp.float32) + kp["b_dt"][0]
    x_gated = x1_ssm * jax.nn.sigmoid(jax.nn.softplus(dt)) * jax.nn.sigmoid(x2)
    out = jnp.dot(x_gated.astype(jnp.bfloat16), kp["w_out"],
                  preferred_element_type=jnp.float32)
    if reverse:
        out = jnp.flip(out, axis=1)
    return out + residual


if __name__ == "__main__":
    # d_model=128 -> d_inner=256; L=384.  Auto tiling picks a single full-L
    # tile per batch element; seq_tile=128 forces three L-tiles to exercise
    # the conv halo path (first / interior / last tile).
    B, L, D = 2, 384, 128
    key = jax.random.PRNGKey(0)
    kx, kparam = jax.random.split(key)
    x = jax.random.normal(kx, (B, L, D), jnp.float32)
    params = init_params(kparam, D, expand_factor=2.0)

    for rev in (False, True):
        for tl in (None, 128):
            out = jax.block_until_ready(
                mamba_block_forward(x, params, reverse=rev, seq_tile=tl))
            ref = mamba_block_reference(x, params, reverse=rev)
            assert out.shape == (B, L, D)
            err = float(jnp.max(jnp.abs(out - ref)))
            assert err < 3e-3, f"reverse={rev} seq_tile={tl}: max err {err}"

    print("KERNEL_OK")
</pallas_src>

<mosaic_0001>
module attributes {stable_mosaic.version = 11 : i64} {
  func.func @_probe(%arg0: i32, %arg1: memref<8x128xf32, #tpu.memory_space<vmem>>, %arg2: memref<8x128xf32, #tpu.memory_space<vmem>>) attributes {dimension_semantics = [#tpu.dimension_semantics<arbitrary>], iteration_bounds = array<i64: 2>, scalar_prefetch = 0 : i64, scratch_operands = 0 : i64, tpu.core_type = #tpu.core_type<tc>, window_params = [{pipeline_mode = #tpu.pipeline_mode<synchronous>, transform_indices = @transform_0, window_bounds = array<i64: 8, 128>}, {pipeline_mode = #tpu.pipeline_mode<synchronous>, transform_indices = @transform_1, window_bounds = array<i64: 8, 128>}]} {
    %c0 = arith.constant 0 : index
    %c0_0 = arith.constant 0 : index
    %0 = vector.load %arg1[%c0, %c0_0] : memref<8x128xf32, #tpu.memory_space<vmem>>, vector<8x128xf32>
    %c0_1 = arith.constant 0 : index
    %c0_2 = arith.constant 0 : index
    %1 = vector.load %arg2[%c0_1, %c0_2] : memref<8x128xf32, #tpu.memory_space<vmem>>, vector<8x128xf32>
    tpu.vector_store %arg2[%c0_1, %c0_2], %0 {strides = array<i32>} : memref<8x128xf32, #tpu.memory_space<vmem>>, vector<8x128xf32>,
    return
  }
  func.func @transform_0(%arg0: i32) -> (i32, i32) {
    %c0_i32 = arith.constant 0 : i32
    %c0_i32_0 = arith.constant 0 : i32
    %c0_i32_1 = arith.constant 0 : i32
    return %c0_i32, %c0_i32_0 : i32, i32
  }
  func.func @transform_1(%arg0: i32) -> (i32, i32) {
    %c0_i32 = arith.constant 0 : i32
    %c0_i32_0 = arith.constant 0 : i32
    %c0_i32_1 = arith.constant 0 : i32
    return %c0_i32, %c0_i32_0 : i32, i32
  }
}

module attributes {stable_mosaic.version = 11 : i64} {
  func.func @mamba_block_kernel(%arg0: i32, %arg1: i32, %arg2: memref<1x384x128xf32, #tpu.memory_space<vmem>>, %arg3: memref<1x8x128xf32, #tpu.memory_space<vmem>>, %arg4: memref<1x8x128xf32, #tpu.memory_space<vmem>>, %arg5: memref<1x128xf32, #tpu.memory_space<vmem>>, %arg6: memref<1x128xf32, #tpu.memory_space<vmem>>, %arg7: memref<128x512xbf16, #tpu.memory_space<vmem>>, %arg8: memref<3x256xf32, #tpu.memory_space<vmem>>, %arg9: memref<256x256xbf16, #tpu.memory_space<vmem>>, %arg10: memref<1x256xf32, #tpu.memory_space<vmem>>, %arg11: memref<256x128xbf16, #tpu.memory_space<vmem>>, %arg12: memref<1x384x128xf32, #tpu.memory_space<vmem>>) attributes {dimension_semantics = [#tpu.dimension_semantics<parallel>, #tpu.dimension_semantics<parallel>], iteration_bounds = array<i64: 2, 1>, scalar_prefetch = 0 : i64, scratch_operands = 0 : i64, tpu.core_type = #tpu.core_type<tc>, window_params = [{transform_indices = @transform_0, window_bounds = array<i64: 1, 384, 128>}, {transform_indices = @transform_1, window_bounds = array<i64: 1, 8, 128>}, {transform_indices = @transform_2, window_bounds = array<i64: 1, 8, 128>}, {pipeline_mode = #tpu.pipeline_mode<synchronous>, transform_indices = @transform_3, window_bounds = array<i64: 1, 128>}, {pipeline_mode = #tpu.pipeline_mode<synchronous>, transform_indices = @transform_4, window_bounds = array<i64: 1, 128>}, {pipeline_mode = #tpu.pipeline_mode<synchronous>, transform_indices = @transform_5, window_bounds = array<i64: 128, 512>}, {pipeline_mode = #tpu.pipeline_mode<synchronous>, transform_indices = @transform_6, window_bounds = array<i64: 3, 256>}, {pipeline_mode = #tpu.pipeline_mode<synchronous>, transform_indices = @transform_7, window_bounds = array<i64: 256, 256>}, {pipeline_mode = #tpu.pipeline_mode<synchronous>, transform_indices = @transform_8, window_bounds = array<i64: 1, 256>}, {pipeline_mode = #tpu.pipeline_mode<synchronous>, transform_indices = @transform_9, window_bounds = array<i64: 256, 128>}, {transform_indices = @transform_10, window_bounds = array<i64: 1, 384, 128>}]} {
    %c0 = arith.constant 0 : index
    %c0_0 = arith.constant 0 : index
    %c0_1 = arith.constant 0 : index
    %0 = vector.load %arg2[%c0, %c0_0, %c0_1] : memref<1x384x128xf32, #tpu.memory_space<vmem>>, vector<1x384x128xf32>
    %1 = vector.shape_cast %0 : vector<1x384x128xf32> to vector<384x128xf32>
    %c0_2 = arith.constant 0 : index
    %c0_3 = arith.constant 0 : index
    %2 = vector.load %arg5[%c0_2, %c0_3] : memref<1x128xf32, #tpu.memory_space<vmem>>, vector<1x128xf32>
    %c0_4 = arith.constant 0 : index
    %c0_5 = arith.constant 0 : index
    %3 = vector.load %arg6[%c0_4, %c0_5] : memref<1x128xf32, #tpu.memory_space<vmem>>, vector<1x128xf32>
    %cst = arith.constant dense<0.000000e+00> : vector<384xf32>
    %4 = vector.multi_reduction <add>, %1, %cst [1] : vector<384x128xf32> to vector<384xf32>
    %5 = vector.shape_cast %4 : vector<384xf32> to vector<384x1xf32>
    %cst_6 = arith.constant 7.812500e-03 : f32
    %6 = vector.broadcast %cst_6 : f32 to vector<384x1xf32>
    %7 = arith.mulf %5, %6 : vector<384x1xf32>
    %8 = vector.broadcast %7 : vector<384x1xf32> to vector<384x128xf32>
    %9 = arith.subf %1, %8 : vector<384x128xf32>
    %10 = arith.mulf %9, %9 : vector<384x128xf32>
    %cst_7 = arith.constant dense<0.000000e+00> : vector<384xf32>
    %11 = vector.multi_reduction <add>, %10, %cst_7 [1] : vector<384x128xf32> to vector<384xf32>
    %12 = vector.shape_cast %11 : vector<384xf32> to vector<384x1xf32>
    %cst_8 = arith.constant 7.812500e-03 : f32
    %13 = vector.broadcast %cst_8 : f32 to vector<384x1xf32>
    %14 = arith.mulf %12, %13 : vector<384x1xf32>
    %cst_9 = arith.constant 9.99999974E-6 : f32
    %15 = vector.broadcast %cst_9 : f32 to vector<384x1xf32>
    %16 = arith.addf %14, %15 : vector<384x1xf32>
    %17 = math.rsqrt %16 : vector<384x1xf32>
    %18 = vector.broadcast %17 : vector<384x1xf32> to vector<384x128xf32>
    %19 = arith.mulf %9, %18 : vector<384x128xf32>
    %20 = vector.broadcast %2 : vector<1x128xf32> to vector<384x128xf32>
    %21 = arith.mulf %19, %20 : vector<384x128xf32>
    %22 = vector.broadcast %3 : vector<1x128xf32> to vector<384x128xf32>
    %23 = arith.addf %21, %22 : vector<384x128xf32>
    %24 = arith.truncf %23 : vector<384x128xf32> to vector<384x128xbf16>
    %c0_10 = arith.constant 0 : index
    %c0_11 = arith.constant 0 : index
    %25 = vector.load %arg7[%c0_10, %c0_11] : memref<128x512xbf16, #tpu.memory_space<vmem>>, vector<128x512xbf16>
    %cst_12 = arith.constant dense<0.000000e+00> : vector<384x512xf32>
    %26 = tpu.matmul %24, %25, %cst_12 {dimension_numbers = #tpu.dot_dimension_numbers<[1], [0], [0], [1], [0, 0, 1, 1], [], []>} : vector<384x128xbf16>, vector<128x512xbf16>, vector<384x512xf32> -> vector<384x512xf32>
    %27 = vector.extract_strided_slice %26 {offsets = [0, 0], sizes = [384, 256], strides = [1, 1]} : vector<384x512xf32> to vector<384x256xf32>
    %28 = vector.extract_strided_slice %26 {offsets = [0, 256], sizes = [384, 256], strides = [1, 1]} : vector<384x512xf32> to vector<384x256xf32>
    %c0_13 = arith.constant 0 : index
    %c7 = arith.constant 7 : index
    %c0_14 = arith.constant 0 : index
    %29 = vector.load %arg3[%c0_13, %c7, %c0_14] : memref<1x8x128xf32, #tpu.memory_space<vmem>>, vector<1x1x128xf32>
    %30 = vector.shape_cast %29 : vector<1x1x128xf32> to vector<1x128xf32>
    %c0_15 = arith.constant 0 : index
    %c0_16 = arith.constant 0 : index
    %c0_17 = arith.constant 0 : index
    %31 = vector.load %arg4[%c0_15, %c0_16, %c0_17] : memref<1x8x128xf32, #tpu.memory_space<vmem>>, vector<1x1x128xf32>
    %32 = vector.shape_cast %31 : vector<1x1x128xf32> to vector<1x128xf32>
    %33 = tpu.concatenate %30, %32 in 0 : vector<1x128xf32>, vector<1x128xf32> -> vector<2x128xf32>
    %cst_18 = arith.constant dense<0.000000e+00> : vector<2xf32>
    %34 = vector.multi_reduction <add>, %33, %cst_18 [1] : vector<2x128xf32> to vector<2xf32>
    %35 = vector.shape_cast %34 : vector<2xf32> to vector<2x1xf32>
    %cst_19 = arith.constant 7.812500e-03 : f32
    %36 = vector.broadcast %cst_19 : f32 to vector<2x1xf32>
    %37 = arith.mulf %35, %36 : vector<2x1xf32>
    %38 = vector.broadcast %37 : vector<2x1xf32> to vector<2x128xf32>
    %39 = arith.subf %33, %38 : vector<2x128xf32>
    %40 = arith.mulf %39, %39 : vector<2x128xf32>
    %cst_20 = arith.constant dense<0.000000e+00> : vector<2xf32>
    %41 = vector.multi_reduction <add>, %40, %cst_20 [1] : vector<2x128xf32> to vector<2xf32>
    %42 = vector.shape_cast %41 : vector<2xf32> to vector<2x1xf32>
    %cst_21 = arith.constant 7.812500e-03 : f32
    %43 = vector.broadcast %cst_21 : f32 to vector<2x1xf32>
    %44 = arith.mulf %42, %43 : vector<2x1xf32>
    %cst_22 = arith.constant 9.99999974E-6 : f32
    %45 = vector.broadcast %cst_22 : f32 to vector<2x1xf32>
    %46 = arith.addf %44, %45 : vector<2x1xf32>
    %47 = math.rsqrt %46 : vector<2x1xf32>
    %48 = vector.broadcast %47 : vector<2x1xf32> to vector<2x128xf32>
    %49 = arith.mulf %39, %48 : vector<2x128xf32>
    %50 = vector.broadcast %2 : vector<1x128xf32> to vector<2x128xf32>
    %51 = arith.mulf %49, %50 : vector<2x128xf32>
    %52 = vector.broadcast %3 : vector<1x128xf32> to vector<2x128xf32>
    %53 = arith.addf %51, %52 : vector<2x128xf32>
    %54 = arith.truncf %53 : vector<2x128xf32> to vector<2x128xbf16>
    %c0_23 = arith.constant 0 : index
    %c0_24 = arith.constant 0 : index
    %55 = vector.load %arg7[%c0_23, %c0_24] : memref<128x512xbf16, #tpu.memory_space<vmem>>, vector<128x256xbf16>
    %cst_25 = arith.constant dense<0.000000e+00> : vector<2x256xf32>
    %56 = tpu.matmul %54, %55, %cst_25 {dimension_numbers = #tpu.dot_dimension_numbers<[1], [0], [0], [1], [0, 0, 1, 1], [], []>} : vector<2x128xbf16>, vector<128x256xbf16>, vector<2x256xf32> -> vector<2x256xf32>
    %c0_i32 = arith.constant 0 : i32
    %57 = arith.cmpi sgt, %arg1, %c0_i32 : i32
    %cst_26 = arith.constant 1.000000e+00 : f32
    %cst_27 = arith.constant 0.000000e+00 : f32
    %58 = arith.select %57, %cst_26, %cst_27 : f32
    %c0_i32_28 = arith.constant 0 : i32
    %59 = arith.cmpi slt, %arg1, %c0_i32_28 : i32
    %cst_29 = arith.constant 1.000000e+00 : f32
    %cst_30 = arith.constant 0.000000e+00 : f32
    %60 = arith.select %59, %cst_29, %cst_30 : f32
    %61 = vector.extract_strided_slice %56 {offsets = [0, 0], sizes = [1, 256], strides = [1, 1]} : vector<2x256xf32> to vector<1x256xf32>
    %62 = vector.broadcast %58 : f32 to vector<1x256xf32>
    %63 = arith.mulf %61, %62 : vector<1x256xf32>
    %64 = vector.extract_strided_slice %56 {offsets = [1, 0], sizes = [1, 256], strides = [1, 1]} : vector<2x256xf32> to vector<1x256xf32>
    %65 = vector.broadcast %60 : f32 to vector<1x256xf32>
    %66 = arith.mulf %64, %65 : vector<1x256xf32>
    %67 = tpu.iota {dimensions = array<i32: 0>} : vector<384x1xi32>
    %c0_i32_31 = arith.constant 0 : i32
    %68 = vector.broadcast %c0_i32_31 : i32 to vector<384x1xi32>
    %69 = arith.cmpi eq, %67, %68 : vector<384x1xi32>
    %c1_i32 = arith.constant 1 : i32
    %70 = tpu.dynamic_rotate %27 by %c1_i32 dim 0 : vector<384x256xf32>, i32 -> vector<384x256xf32>
    %71 = vector.shape_cast %69 : vector<384x1xi1> to vector<384x1xi1>
    %72 = vector.broadcast %71 : vector<384x1xi1> to vector<384x256xi1>
    %73 = vector.shape_cast %63 : vector<1x256xf32> to vector<1x256xf32>
    %74 = vector.broadcast %73 : vector<1x256xf32> to vector<384x256xf32>
    %75 = arith.select %72, %74, %70 : vector<384x256xi1>, vector<384x256xf32>
    %c383_i32 = arith.constant 383 : i32
    %76 = vector.broadcast %c383_i32 : i32 to vector<384x1xi32>
    %77 = arith.cmpi eq, %67, %76 : vector<384x1xi32>
    %c383_i32_32 = arith.constant 383 : i32
    %78 = tpu.dynamic_rotate %27 by %c383_i32_32 dim 0 : vector<384x256xf32>, i32 -> vector<384x256xf32>
    %79 = vector.shape_cast %77 : vector<384x1xi1> to vector<384x1xi1>
    %80 = vector.broadcast %79 : vector<384x1xi1> to vector<384x256xi1>
    %81 = vector.shape_cast %66 : vector<1x256xf32> to vector<1x256xf32>
    %82 = vector.broadcast %81 : vector<1x256xf32> to vector<384x256xf32>
    %83 = arith.select %80, %82, %78 : vector<384x256xi1>, vector<384x256xf32>
    %c0_33 = arith.constant 0 : index
    %c0_34 = arith.constant 0 : index
    %84 = vector.load %arg8[%c0_33, %c0_34] : memref<3x256xf32, #tpu.memory_space<vmem>>, vector<1x256xf32>
    %85 = vector.broadcast %84 : vector<1x256xf32> to vector<384x256xf32>
    %86 = arith.mulf %75, %85 : vector<384x256xf32>
    %c1 = arith.constant 1 : index
    %c0_35 = arith.constant 0 : index
    %87 = vector.load %arg8[%c1, %c0_35] : memref<3x256xf32, #tpu.memory_space<vmem>>, vector<1x256xf32>
    %88 = vector.broadcast %87 : vector<1x256xf32> to vector<384x256xf32>
    %89 = arith.mulf %27, %88 : vector<384x256xf32>
    %90 = arith.addf %86, %89 : vector<384x256xf32>
    %c2 = arith.constant 2 : index
    %c0_36 = arith.constant 0 : index
    %91 = vector.load %arg8[%c2, %c0_36] : memref<3x256xf32, #tpu.memory_space<vmem>>, vector<1x256xf32>
    %92 = vector.broadcast %91 : vector<1x256xf32> to vector<384x256xf32>
    %93 = arith.mulf %83, %92 : vector<384x256xf32>
    %94 = arith.addf %90, %93 : vector<384x256xf32>
    %95 = arith.negf %94 : vector<384x256xf32>
    %96 = math.exp %95 : vector<384x256xf32>
    %cst_37 = arith.constant 1.000000e+00 : f32
    %97 = vector.broadcast %cst_37 : f32 to vector<384x256xf32>
    %98 = arith.addf %97, %96 : vector<384x256xf32>
    %99 = arith.divf %97, %98 : vector<384x256xf32>
    %100 = arith.mulf %94, %99 : vector<384x256xf32>
    %101 = arith.truncf %100 : vector<384x256xf32> to vector<384x256xbf16>
    %c0_38 = arith.constant 0 : index
    %c0_39 = arith.constant 0 : index
    %102 = vector.load %arg9[%c0_38, %c0_39] : memref<256x256xbf16, #tpu.memory_space<vmem>>, vector<256x256xbf16>
    %cst_40 = arith.constant dense<0.000000e+00> : vector<384x256xf32>
    %103 = tpu.matmul %101, %102, %cst_40 {dimension_numbers = #tpu.dot_dimension_numbers<[1], [0], [0], [1], [0, 0, 1, 1], [], []>} : vector<384x256xbf16>, vector<256x256xbf16>, vector<384x256xf32> -> vector<384x256xf32>
    %c0_41 = arith.constant 0 : index
    %c0_42 = arith.constant 0 : index
    %104 = vector.load %arg10[%c0_41, %c0_42] : memref<1x256xf32, #tpu.memory_space<vmem>>, vector<1x256xf32>
    %105 = vector.broadcast %104 : vector<1x256xf32> to vector<384x256xf32>
    %106 = arith.addf %103, %105 : vector<384x256xf32>
    %cst_43 = arith.constant 3.000000e+01 : f32
    %107 = vector.broadcast %cst_43 : f32 to vector<384x256xf32>
    %108 = arith.minimumf %106, %107 : vector<384x256xf32>
    %109 = math.exp %108 : vector<384x256xf32>
    %cst_44 = arith.constant 2.000000e+00 : f32
    %110 = vector.broadcast %cst_44 : f32 to vector<384x256xf32>
    %111 = arith.addf %110, %109 : vector<384x256xf32>
    %112 = tpu.reciprocal %111 {approx = true} : vector<384x256xf32> -> vector<384x256xf32>
    %cst_45 = arith.constant 1.000000e+00 : f32
    %113 = vector.broadcast %cst_45 : f32 to vector<384x256xf32>
    %114 = arith.subf %113, %112 : vector<384x256xf32>
    %115 = arith.mulf %100, %114 : vector<384x256xf32>
    %116 = arith.negf %28 : vector<384x256xf32>
    %117 = math.exp %116 : vector<384x256xf32>
    %cst_46 = arith.constant 1.000000e+00 : f32
    %118 = vector.broadcast %cst_46 : f32 to vector<384x256xf32>
    %119 = arith.addf %118, %117 : vector<384x256xf32>
    %120 = arith.divf %118, %119 : vector<384x256xf32>
    %121 = arith.mulf %115, %120 : vector<384x256xf32>
    %122 = arith.truncf %121 : vector<384x256xf32> to vector<384x256xbf16>
    %c0_47 = arith.constant 0 : index
    %c0_48 = arith.constant 0 : index
    %123 = vector.load %arg11[%c0_47, %c0_48] : memref<256x128xbf16, #tpu.memory_space<vmem>>, vector<256x128xbf16>
    %cst_49 = arith.constant dense<0.000000e+00> : vector<384x128xf32>
    %124 = tpu.matmul %122, %123, %cst_49 {dimension_numbers = #tpu.dot_dimension_numbers<[1], [0], [0], [1], [0, 0, 1, 1], [], []>} : vector<384x256xbf16>, vector<256x128xbf16>, vector<384x128xf32> -> vector<384x128xf32>
    %125 = arith.addf %124, %1 : vector<384x128xf32>
    %c0_50 = arith.constant 0 : index
    %c0_51 = arith.constant 0 : index
    %c0_52 = arith.constant 0 : index
    %126 = vector.load %arg12[%c0_50, %c0_51, %c0_52] : memref<1x384x128xf32, #tpu.memory_space<vmem>>, vector<1x384x128xf32>
    %127 = vector.shape_cast %126 : vector<1x384x128xf32> to vector<384x128xf32>
    %128 = vector.shape_cast %125 : vector<384x128xf32> to vector<1x384x128xf32>
    tpu.vector_store %arg12[%c0_50, %c0_51, %c0_52], %128 {strides = array<i32>} : memref<1x384x128xf32, #tpu.memory_space<vmem>>, vector<1x384x128xf32>,
    return
  }
  func.func @transform_0(%arg0: i32, %arg1: i32) -> (i32, i32, i32) {
    %c0_i32 = arith.constant 0 : i32
    %c0_i32_0 = arith.constant 0 : i32
    return %arg0, %arg1, %c0_i32 : i32, i32, i32
  }
  func.func @transform_1(%arg0: i32, %arg1: i32) -> (i32, i32, i32) {
    %c48_i32 = arith.constant 48 : i32
    %0 = arith.muli %arg1, %c48_i32 : i32
    %c1_i32 = arith.constant 1 : i32
    %1 = arith.subi %0, %c1_i32 : i32
    %c0_i32 = arith.constant 0 : i32
    %2 = arith.maxsi %1, %c0_i32 : i32
    %c0_i32_0 = arith.constant 0 : i32
    %c0_i32_1 = arith.constant 0 : i32
    return %arg0, %2, %c0_i32_0 : i32, i32, i32
  }
  func.func @transform_2(%arg0: i32, %arg1: i32) -> (i32, i32, i32) {
    %c1_i32 = arith.constant 1 : i32
    %0 = arith.addi %arg1, %c1_i32 : i32
    %c48_i32 = arith.constant 48 : i32
    %1 = arith.muli %0, %c48_i32 : i32
    %c47_i32 = arith.constant 47 : i32
    %2 = arith.minsi %1, %c47_i32 : i32
    %c0_i32 = arith.constant 0 : i32
    %c0_i32_0 = arith.constant 0 : i32
    return %arg0, %2, %c0_i32 : i32, i32, i32
  }
  func.func @transform_3(%arg0: i32, %arg1: i32) -> (i32, i32) {
    %c0_i32 = arith.constant 0 : i32
    %c0_i32_0 = arith.constant 0 : i32
    %c0_i32_1 = arith.constant 0 : i32
    return %c0_i32, %c0_i32_0 : i32, i32
  }
  func.func @transform_4(%arg0: i32, %arg1: i32) -> (i32, i32) {
    %c0_i32 = arith.constant 0 : i32
    %c0_i32_0 = arith.constant 0 : i32
    %c0_i32_1 = arith.constant 0 : i32
    return %c0_i32, %c0_i32_0 : i32, i32
  }
  func.func @transform_5(%arg0: i32, %arg1: i32) -> (i32, i32) {
    %c0_i32 = arith.constant 0 : i32
    %c0_i32_0 = arith.constant 0 : i32
    %c0_i32_1 = arith.constant 0 : i32
    return %c0_i32, %c0_i32_0 : i32, i32
  }
  func.func @transform_6(%arg0: i32, %arg1: i32) -> (i32, i32) {
    %c0_i32 = arith.constant 0 : i32
    %c0_i32_0 = arith.constant 0 : i32
    %c0_i32_1 = arith.constant 0 : i32
    return %c0_i32, %c0_i32_0 : i32, i32
  }
  func.func @transform_7(%arg0: i32, %arg1: i32) -> (i32, i32) {
    %c0_i32 = arith.constant 0 : i32
    %c0_i32_0 = arith.constant 0 : i32
    %c0_i32_1 = arith.constant 0 : i32
    return %c0_i32, %c0_i32_0 : i32, i32
  }
  func.func @transform_8(%arg0: i32, %arg1: i32) -> (i32, i32) {
    %c0_i32 = arith.constant 0 : i32
    %c0_i32_0 = arith.constant 0 : i32
    %c0_i32_1 = arith.constant 0 : i32
    return %c0_i32, %c0_i32_0 : i32, i32
  }
  func.func @transform_9(%arg0: i32, %arg1: i32) -> (i32, i32) {
    %c0_i32 = arith.constant 0 : i32
    %c0_i32_0 = arith.constant 0 : i32
    %c0_i32_1 = arith.constant 0 : i32
    return %c0_i32, %c0_i32_0 : i32, i32
  }
  func.func @transform_10(%arg0: i32, %arg1: i32) -> (i32, i32, i32) {
    %c0_i32 = arith.constant 0 : i32
    %c0_i32_0 = arith.constant 0 : i32
    return %arg0, %arg1, %c0_i32 : i32, i32, i32
  }
}

</mosaic_0001>

<llo_original>
// kernel: tpu_custom_call.1
$region0: #{tpu_custom_call.1}
  #allocation0 [shape = 'u32[]', space=smem, size = 0x4, offset = 0x4, fixed_abs, tag = 'smem constant byte address 0x4 - core index']
  #allocation1 [shape = 'u32[144,128]{1,0:T(1,128)}', space=vmem, size = 0x12000, scoped, tag = 'internal scratch']
  %s0 = inlined_call_operand.hbm [shape: f32[8,128], index: 0, kind: input, shape index: {}]
  %s1 = inlined_call_operand.hbm [shape: f32[8,128], index: 1, kind: output, shape index: {}]
  %s2 = sld [smem:[#allocation0]]
  $region41: #{tpu_custom_call.1} parent=0
    _
  %s4 = ssub.s32 1, %s2
  %s5 = scalar_select 0, %s4, %s2
  $region1: #{tpu_custom_call.1} parent=0
    #allocation2 [shape = 'u8[4096]{0}', space=vmem, size = 0x1000, scoped, tag = 'input window, operand 0, single buffered']
    #allocation3 [shape = 's32[2]{0}', space=sflag, size = 0x8, scoped, tag = 'scoped memory for tpu_custom_call.1']
    #allocation4 [shape = 's32[2]{0}', space=sflag, size = 0x8, scoped, tag = 'scoped memory for tpu_custom_call.1']
    #allocation5 [shape = 'u8[4096]{0}', space=vmem, size = 0x1000, scoped, tag = 'output window, operand 0, single buffered']
    %6 = vsyncpa [#allocation3], 0
    %7 = vsyncpa [#allocation4], 0
    loop: start=0, step=1, limit=4
    $region2: #{tpu_custom_call.1} parent=1 // loop_pre_header
      _
    $region3: #{tpu_custom_call.1} parent=1 // loop_header
      %s9 = sphi 0, %s13
      %p10 = scmp.ge.s32.totalorder %s9, 4
      %s17 = sphi 0, %s17
      %s19 = sphi 0, %s17
      %s20 = sphi 0, %s19
      %s34 = sphi 0, %s20
      %s38 = sphi 0, %s38
      %s40 = sphi 0, %s38
      %s41 = sphi 0, %s40
      %s55 = sphi 0, %s41
    $region4: #{tpu_custom_call.1} parent=1 // loop_header_branch
      %12 = sbr.rel (%p10) target = $region8
    $region5: #{tpu_custom_call.1} parent=1 // loop_body
      %s14 = ssub.s32 %s9, 1
      %s15 = ssub.s32 %s9, 2
      %s16 = sadd.s32 %s9, 1
      %s18 = sadd.s32 %s17, 1
      %p21 = scmp.eq.s32.totalorder %s9, 1
      %p22 = scmp.ne.s32.totalorder %s17, %s19
      %p23 = scmp.eq.s32.totalorder %s9, 0
      %p24 = por %p22, %p23
      %p25 = scmp.ne.s32.totalorder %s17, %s19
      %p26 = scmp.eq.s32.totalorder %s14, 1
      %p27 = por %p25, %p26
      %p28 = scmp.ne.s32.totalorder %s19, %s20
      %p29 = scmp.eq.s32.totalorder %s14, 0
      %p30 = por %p28, %p29
      %p31 = scmp.ne.s32.totalorder %s19, %s20
      %p32 = scmp.eq.s32.totalorder %s15, 1
      %p33 = por %p31, %p32
      %p35 = scmp.ne.s32.totalorder %s20, %s34
      %p36 = scmp.eq.s32.totalorder %s15, 0
      %p37 = por %p35, %p36
      %s39 = sadd.s32 %s38, 1
      %p42 = scmp.eq.s32.totalorder %s9, 1
      %p43 = scmp.ne.s32.totalorder %s38, %s40
      %p44 = scmp.eq.s32.totalorder %s9, 0
      %p45 = por %p43, %p44
      %p46 = scmp.ne.s32.totalorder %s38, %s40
      %p47 = scmp.eq.s32.totalorder %s14, 1
      %p48 = por %p46, %p47
      %p49 = scmp.ne.s32.totalorder %s40, %s41
      %p50 = scmp.eq.s32.totalorder %s14, 0
      %p51 = por %p49, %p50
      %p52 = scmp.ne.s32.totalorder %s40, %s41
      %p53 = scmp.eq.s32.totalorder %s15, 1
      %p54 = por %p52, %p53
      %p56 = scmp.ne.s32.totalorder %s41, %s55
      %p57 = scmp.eq.s32.totalorder %s15, 0
      %p58 = por %p56, %p57
      %p59 = scmp.le.s32.totalorder 1, %s9
      %p60 = scmp.lt.s32.totalorder %s9, 3
      %p61 = pnand %p59, %p60
      %p62 = pneg %p61
      // Predicated region
      $region9: #{tpu_custom_call.1} parent=5 // pred_check
        _
      $region10: #{tpu_custom_call.1} parent=5 // pred_check_branch
        %64 = sbr.rel (%p61) target = $region12
      $region11: #{tpu_custom_call.1} parent=5 // pred_region
        %s65 = ssub.s32 %s9, 1
        // Predicated region
        $region13: #{tpu_custom_call.1} parent=11 // pred_check
          %p66 = pneg %p30
        $region14: #{tpu_custom_call.1} parent=11 // pred_check_branch
          %68 = sbr.rel (%p66) target = $region16
        $region15: #{tpu_custom_call.1} parent=11 // pred_region
          %s70 = ssub.s32 128, 128
          %71 = vsyncadd [#allocation3], %s70
          %s73 = sshll.u32 [#allocation2], 4
          %s74 = int_to_ptr.vmem [resolvable:$true] %s73
          %76 = dma.hbm_to_vmem [thread:$0]  %s0, 128, %s74, [#allocation3]
        $region16: #{tpu_custom_call.1} parent=11 // pred_fallthru
          _
      $region12: #{tpu_custom_call.1} parent=5 // pred_fallthru
        _
      %p77 = scmp.lt.s32.totalorder %s9, 2
      // Predicated region
      $region17: #{tpu_custom_call.1} parent=5 // pred_check
        %p78 = pneg %p77
      $region18: #{tpu_custom_call.1} parent=5 // pred_check_branch
        %80 = sbr.rel (%p78) target = $region20
      $region19: #{tpu_custom_call.1} parent=5 // pred_region
        _
      $region20: #{tpu_custom_call.1} parent=5 // pred_fallthru
        _
      %p81 = scmp.le.s32.totalorder 1, %s9
      %p82 = scmp.lt.s32.totalorder %s9, 3
      %p83 = pnand %p81, %p82
      %p84 = pneg %p83
      // Predicated region
      $region21: #{tpu_custom_call.1} parent=5 // pred_check
        _
      $region22: #{tpu_custom_call.1} parent=5 // pred_check_branch
        %86 = sbr.rel (%p83) target = $region24
      $region23: #{tpu_custom_call.1} parent=5 // pred_region
        %s87 = ssub.s32 %s9, 1
        // Predicated region
        $region25: #{tpu_custom_call.1} parent=23 // pred_check
          %p88 = pneg %p30
        $region26: #{tpu_custom_call.1} parent=23 // pred_check_branch
          %90 = sbr.rel (%p88) target = $region28
        $region27: #{tpu_custom_call.1} parent=23 // pred_region
          %91 = dma.done [#allocation3], 128
        $region28: #{tpu_custom_call.1} parent=23 // pred_fallthru
          _
        %p92 = pneg %p30
        %p93 = pneg %p27
        %p94 = pneg %p51
        %p95 = pneg %p48
        %v96 = vld [vmem:[#allocation2] sm:$0xff]
        %97 = vst [vmem:[#allocation5] sm:$0xff] %v96
        // Predicated region
        $region29: #{tpu_custom_call.1} parent=23 // pred_check
          %p98 = pneg %p48
        $region30: #{tpu_custom_call.1} parent=23 // pred_check_branch
          %100 = sbr.rel (%p98) target = $region32
        $region31: #{tpu_custom_call.1} parent=23 // pred_region
          %s102 = ssub.s32 128, 128
          %103 = vsyncadd [#allocation4], %s102
          %s105 = sshll.u32 [#allocation5], 4
          %s106 = int_to_ptr.vmem [resolvable:$true] %s105
          %108 = dma.vmem_to_hbm [thread:$0]  %s106, 128, %s1, [#allocation4]
        $region32: #{tpu_custom_call.1} parent=23 // pred_fallthru
          _
        // Predicated region
        $region33: #{tpu_custom_call.1} parent=23 // pred_check
          %p109 = pneg %p48
        $region34: #{tpu_custom_call.1} parent=23 // pred_check_branch
          %111 = sbr.rel (%p109) target = $region36
        $region35: #{tpu_custom_call.1} parent=23 // pred_region
          %112 = dma.done [#allocation4], 128
        $region36: #{tpu_custom_call.1} parent=23 // pred_fallthru
          _
      $region24: #{tpu_custom_call.1} parent=5 // pred_fallthru
        _
      %p113 = scmp.le.s32.totalorder 2, %s9
      // Predicated region
      $region37: #{tpu_custom_call.1} parent=5 // pred_check
        %p114 = pneg %p113
      $region38: #{tpu_custom_call.1} parent=5 // pred_check_branch
        %116 = sbr.rel (%p114) target = $region40
      $region39: #{tpu_custom_call.1} parent=5 // pred_region
        %s117 = ssub.s32 %s9, 2
      $region40: #{tpu_custom_call.1} parent=5 // pred_fallthru
        _
    $region6: #{tpu_custom_call.1} parent=1 // loop_footer
      %s13 = sadd.s32 1, %s9
    $region7: #{tpu_custom_call.1} parent=1 // loop_footer_branch
      %8 = sbr.rel target = $region3
    $region8: #{tpu_custom_call.1} parent=1 // loop_exit
      _
    %118 = vsyncpa [#allocation3], 1
    %s119 = scalar_lea.sflag [#allocation3], 1
    %120 = vsyncpa %s119, 1
    %121 = vsyncpa [#allocation4], 1
    %s122 = scalar_lea.sflag [#allocation4], 1
    %123 = vsyncpa %s122, 1

// kernel: tpu_custom_call.1
$region0: #{tpu_custom_call.1}
  #allocation0 [shape = 'u32[]', space=smem, size = 0x4, offset = 0x4, fixed_abs, tag = 'smem constant byte address 0x4 - core index']
  #allocation1 [shape = 'u32[144,128]{1,0:T(1,128)}', space=vmem, size = 0x12000, scoped, tag = 'internal scratch']
  %s0 = inlined_call_operand.hbm [shape: f32[2,384,128], index: 0, kind: input, shape index: {}]
  %s1 = inlined_call_operand.hbm [shape: f32[2,384,128], index: 1, kind: input, shape index: {}]
  %s2 = inlined_call_operand.hbm [shape: f32[2,384,128], index: 2, kind: input, shape index: {}]
  %s3 = inlined_call_operand.hbm [shape: f32[1,128], index: 3, kind: input, shape index: {}]
  %s4 = inlined_call_operand.hbm [shape: f32[1,128], index: 4, kind: input, shape index: {}]
  %s5 = inlined_call_operand.hbm [shape: bf16[128,512], index: 5, kind: input, shape index: {}]
  %s6 = inlined_call_operand.vmem [shape: f32[3,256], index: 6, kind: input, shape index: {}]
  %s7 = inlined_call_operand.hbm [shape: bf16[256,256], index: 7, kind: input, shape index: {}]
  %s8 = inlined_call_operand.vmem [shape: f32[1,256], index: 8, kind: input, shape index: {}]
  %s9 = inlined_call_operand.hbm [shape: bf16[256,128], index: 9, kind: input, shape index: {}]
  %s10 = inlined_call_operand.hbm [shape: f32[2,384,128], index: 10, kind: output, shape index: {}]
  %s11 = sld [smem:[#allocation0]]
  $region105: #{tpu_custom_call.1} parent=0
    _
  %s13 = ssub.s32 1, %s11
  %s14 = scalar_select 0, %s13, %s11
  $region1: #{tpu_custom_call.1} parent=0
    #allocation2 [shape = 'u8[393216]{0}', space=vmem, size = 0x60000, scoped, tag = 'input window, operand 0']
    #allocation3 [shape = 's32[2]{0}', space=sflag, size = 0x8, scoped, tag = 'scoped memory for tpu_custom_call.1']
    #allocation4 [shape = 's32[2]{0}', space=sflag, size = 0x8, scoped, tag = 'scoped memory for tpu_custom_call.1']
    #allocation5 [shape = 'u8[8192]{0}', space=vmem, size = 0x2000, scoped, tag = 'input window, operand 1']
    #allocation6 [shape = 's32[2]{0}', space=sflag, size = 0x8, scoped, tag = 'scoped memory for tpu_custom_call.1']
    #allocation7 [shape = 'u8[8192]{0}', space=vmem, size = 0x2000, scoped, tag = 'input window, operand 2']
    #allocation8 [shape = 'u8[512]{0}', space=vmem, size = 0x400, scoped, tag = 'input window, operand 3, single buffered']
    #allocation9 [shape = 's32[1]{0}', space=sflag, size = 0x4, scoped, tag = 'scoped memory for tpu_custom_call.1']
    #allocation10 [shape = 'u8[512]{0}', space=vmem, size = 0x400, scoped, tag = 'input window, operand 4, single buffered']
    #allocation11 [shape = 'u8[131072]{0}', space=vmem, size = 0x20000, scoped, tag = 'input window, operand 5, single buffered']
    #allocation12 [shape = 's32[1]{0}', space=sflag, size = 0x4, scoped, tag = 'scoped memory for tpu_custom_call.1']
    #allocation13 [shape = 'u8[131072]{0}', space=vmem, size = 0x20000, scoped, tag = 'input window, operand 7, single buffered']
    #allocation14 [shape = 'u8[65536]{0}', space=vmem, size = 0x10000, scoped, tag = 'input window, operand 9, single buffered']
    #allocation15 [shape = 's32[1]{0}', space=sflag, size = 0x4, scoped, tag = 'scoped memory for tpu_custom_call.1']
    #allocation16 [shape = 'u8[393216]{0}', space=vmem, size = 0x60000, scoped, tag = 'output window, operand 0']
    %15 = vsyncpa [#allocation3], 0
    %s16 = scalar_lea.sflag [#allocation3], 1
    %17 = vsyncpa %s16, 0
    %18 = vsyncpa [#allocation6], 0
    %s19 = scalar_lea.sflag [#allocation6], 1
    %20 = vsyncpa %s19, 0
    %21 = vsyncpa [#allocation9], 0
    %22 = vsyncpa [#allocation12], 0
    %23 = vsyncpa [#allocation15], 0
    %24 = vsyncpa [#allocation4], 0
    %s25 = scalar_lea.sflag [#allocation4], 1
    %26 = vsyncpa %s25, 0
    loop: start=0, step=1, limit=4
    $region2: #{tpu_custom_call.1} parent=1 // loop_pre_header
      _
    $region3: #{tpu_custom_call.1} parent=1 // loop_header
      %s28 = sphi 0, %s32
      %p29 = scmp.ge.s32.totalorder %s28, 4
      %s35 = sphi 0, %s47
      %s36 = sphi 0, %s43
      %s37 = sphi 0, %s35
      %s38 = sphi 0, %s36
      %s39 = sphi 0, %s37
      %s40 = sphi 0, %s38
      %s52 = sphi 0, %s54
      %s55 = sphi 0, %s52
      %s56 = sphi 0, %s55
      %s72 = sphi 0, %s56
      %s88 = sphi 0, %s90
      %s91 = sphi 0, %s88
      %s92 = sphi 0, %s91
      %s108 = sphi 0, %s92
      %s124 = sphi 0, %s126
      %s127 = sphi 0, %s124
      %s128 = sphi 0, %s127
      %s144 = sphi 0, %s128
      %s148 = sphi 0, %s148
      %s150 = sphi 0, %s148
      %s151 = sphi 0, %s150
      %s165 = sphi 0, %s151
      %s169 = sphi 0, %s169
      %s171 = sphi 0, %s169
      %s172 = sphi 0, %s171
      %s186 = sphi 0, %s172
      %s190 = sphi 0, %s190
      %s192 = sphi 0, %s190
      %s193 = sphi 0, %s192
      %s207 = sphi 0, %s193
      %s211 = sphi 0, %s211
      %s213 = sphi 0, %s211
      %s214 = sphi 0, %s213
      %s228 = sphi 0, %s214
      %s232 = sphi 0, %s232
      %s234 = sphi 0, %s232
      %s235 = sphi 0, %s234
      %s249 = sphi 0, %s235
      %s253 = sphi 0, %s253
      %s255 = sphi 0, %s253
      %s256 = sphi 0, %s255
      %s270 = sphi 0, %s256
      %s274 = sphi 0, %s274
      %s276 = sphi 0, %s274
      %s277 = sphi 0, %s276
      %s291 = sphi 0, %s277
      %s299 = sphi 0, %s301
      %s302 = sphi 0, %s299
      %s303 = sphi 0, %s302
      %s319 = sphi 0, %s303
    $region4: #{tpu_custom_call.1} parent=1 // loop_header_branch
      %31 = sbr.rel (%p29) target = $region8
    $region5: #{tpu_custom_call.1} parent=1 // loop_body
      %s33 = ssub.s32 %s28, 1
      %s34 = ssub.s32 %s28, 2
      %s41 = sadd.s32 1, %s36
      %p42 = scmp.ge.s32.totalorder %s41, 1
      %s43 = scalar_select %p42, 0, %s41
      %s44 = sadd.s32 1, %s35
      %s45 = scalar_select %p42, %s44, %s35
      %p46 = scmp.ge.s32.totalorder %s45, 2
      %s47 = scalar_select %p46, 0, %s45
      %s48 = ssub.s32 %s35, %s47
      %s49 = ssub.s32 %s36, %s43
      %s50 = sor.u32 %s48, %s49
      %p51 = scmp.eq.s32.totalorder %s50, 0
      %s53 = sadd.s32 %s52, 1
      %s54 = scalar_select %p51, %s52, %s53
      %p57 = pneg %p51
      %p58 = scmp.eq.s32.totalorder %s28, 1
      %p59 = por %p57, %p58
      %p60 = scmp.ne.s32.totalorder %s52, %s55
      %p61 = scmp.eq.s32.totalorder %s28, 0
      %p62 = por %p60, %p61
      %p63 = scmp.ne.s32.totalorder %s52, %s55
      %p64 = scmp.eq.s32.totalorder %s33, 1
      %p65 = por %p63, %p64
      %p66 = scmp.ne.s32.totalorder %s55, %s56
      %p67 = scmp.eq.s32.totalorder %s33, 0
      %p68 = por %p66, %p67
      %p69 = scmp.ne.s32.totalorder %s55, %s56
      %p70 = scmp.eq.s32.totalorder %s34, 1
      %p71 = por %p69, %p70
      %p73 = scmp.ne.s32.totalorder %s56, %s72
      %p74 = scmp.eq.s32.totalorder %s34, 0
      %p75 = por %p73, %p74
      %s76 = smul.u32 %s36, 48
      %s77 = ssub.s32 %s76, 1
      %p78 = scmp.gt.s32.totalorder %s77, 0
      %s79 = scalar_select %p78, %s77, 0
      %s80 = smul.u32 %s43, 48
      %s81 = ssub.s32 %s80, 1
      %p82 = scmp.gt.s32.totalorder %s81, 0
      %s83 = scalar_select %p82, %s81, 0
      %s84 = ssub.s32 %s35, %s47
      %s85 = ssub.s32 %s79, %s83
      %s86 = sor.u32 %s84, %s85
      %p87 = scmp.eq.s32.totalorder %s86, 0
      %s89 = sadd.s32 %s88, 1
      %s90 = scalar_select %p87, %s88, %s89
      %p93 = pneg %p87
      %p94 = scmp.eq.s32.totalorder %s28, 1
      %p95 = por %p93, %p94
      %p96 = scmp.ne.s32.totalorder %s88, %s91
      %p97 = scmp.eq.s32.totalorder %s28, 0
      %p98 = por %p96, %p97
      %p99 = scmp.ne.s32.totalorder %s88, %s91
      %p100 = scmp.eq.s32.totalorder %s33, 1
      %p101 = por %p99, %p100
      %p102 = scmp.ne.s32.totalorder %s91, %s92
      %p103 = scmp.eq.s32.totalorder %s33, 0
      %p104 = por %p102, %p103
      %p105 = scmp.ne.s32.totalorder %s91, %s92
      %p106 = scmp.eq.s32.totalorder %s34, 1
      %p107 = por %p105, %p106
      %p109 = scmp.ne.s32.totalorder %s92, %s108
      %p110 = scmp.eq.s32.totalorder %s34, 0
      %p111 = por %p109, %p110
      %s112 = sadd.s32 %s36, 1
      %s113 = smul.u32 %s112, 48
      %p114 = scmp.lt.s32.totalorder %s113, 47
      %s115 = scalar_select %p114, %s113, 47
      %s116 = sadd.s32 %s43, 1
      %s117 = smul.u32 %s116, 48
      %p118 = scmp.lt.s32.totalorder %s117, 47
      %s119 = scalar_select %p118, %s117, 47
      %s120 = ssub.s32 %s35, %s47
      %s121 = ssub.s32 %s115, %s119
      %s122 = sor.u32 %s120, %s121
      %p123 = scmp.eq.s32.totalorder %s122, 0
      %s125 = sadd.s32 %s124, 1
      %s126 = scalar_select %p123, %s124, %s125
      %p129 = pneg %p123
      %p130 = scmp.eq.s32.totalorder %s28, 1
      %p131 = por %p129, %p130
      %p132 = scmp.ne.s32.totalorder %s124, %s127
      %p133 = scmp.eq.s32.totalorder %s28, 0
      %p134 = por %p132, %p133
      %p135 = scmp.ne.s32.totalorder %s124, %s127
      %p136 = scmp.eq.s32.totalorder %s33, 1
      %p137 = por %p135, %p136
      %p138 = scmp.ne.s32.totalorder %s127, %s128
      %p139 = scmp.eq.s32.totalorder %s33, 0
      %p140 = por %p138, %p139
      %p141 = scmp.ne.s32.totalorder %s127, %s128
      %p142 = scmp.eq.s32.totalorder %s34, 1
      %p143 = por %p141, %p142
      %p145 = scmp.ne.s32.totalorder %s128, %s144
      %p146 = scmp.eq.s32.totalorder %s34, 0
      %p147 = por %p145, %p146
      %s149 = sadd.s32 %s148, 1
      %p152 = scmp.eq.s32.totalorder %s28, 1
      %p153 = scmp.ne.s32.totalorder %s148, %s150
      %p154 = scmp.eq.s32.totalorder %s28, 0
      %p155 = por %p153, %p154
      %p156 = scmp.ne.s32.totalorder %s148, %s150
      %p157 = scmp.eq.s32.totalorder %s33, 1
      %p158 = por %p156, %p157
      %p159 = scmp.ne.s32.totalorder %s150, %s151
      %p160 = scmp.eq.s32.totalorder %s33, 0
      %p161 = por %p159, %p160
      %p162 = scmp.ne.s32.totalorder %s150, %s151
      %p163 = scmp.eq.s32.totalorder %s34, 1
      %p164 = por %p162, %p163
      %p166 = scmp.ne.s32.totalorder %s151, %s165
      %p167 = scmp.eq.s32.totalorder %s34, 0
      %p168 = por %p166, %p167
      %s170 = sadd.s32 %s169, 1
      %p173 = scmp.eq.s32.totalorder %s28, 1
      %p174 = scmp.ne.s32.totalorder %s169, %s171
      %p175 = scmp.eq.s32.totalorder %s28, 0
      %p176 = por %p174, %p175
      %p177 = scmp.ne.s32.totalorder %s169, %s171
      %p178 = scmp.eq.s32.totalorder %s33, 1
      %p179 = por %p177, %p178
      %p180 = scmp.ne.s32.totalorder %s171, %s172
      %p181 = scmp.eq.s32.totalorder %s33, 0
      %p182 = por %p180, %p181
      %p183 = scmp.ne.s32.totalorder %s171, %s172
      %p184 = scmp.eq.s32.totalorder %s34, 1
      %p185 = por %p183, %p184
      %p187 = scmp.ne.s32.totalorder %s172, %s186
      %p188 = scmp.eq.s32.totalorder %s34, 0
      %p189 = por %p187, %p188
      %s191 = sadd.s32 %s190, 1
      %p194 = scmp.eq.s32.totalorder %s28, 1
      %p195 = scmp.ne.s32.totalorder %s190, %s192
      %p196 = scmp.eq.s32.totalorder %s28, 0
      %p197 = por %p195, %p196
      %p198 = scmp.ne.s32.totalorder %s190, %s192
      %p199 = scmp.eq.s32.totalorder %s33, 1
      %p200 = por %p198, %p199
      %p201 = scmp.ne.s32.totalorder %s192, %s193
      %p202 = scmp.eq.s32.totalorder %s33, 0
      %p203 = por %p201, %p202
      %p204 = scmp.ne.s32.totalorder %s192, %s193
      %p205 = scmp.eq.s32.totalorder %s34, 1
      %p206 = por %p204, %p205
      %p208 = scmp.ne.s32.totalorder %s193, %s207
      %p209 = scmp.eq.s32.totalorder %s34, 0
      %p210 = por %p208, %p209
      %s212 = sadd.s32 %s211, 1
      %p215 = scmp.eq.s32.totalorder %s28, 1
      %p216 = scmp.ne.s32.totalorder %s211, %s213
      %p217 = scmp.eq.s32.totalorder %s28, 0
      %p218 = por %p216, %p217
      %p219 = scmp.ne.s32.totalorder %s211, %s213
      %p220 = scmp.eq.s32.totalorder %s33, 1
      %p221 = por %p219, %p220
      %p222 = scmp.ne.s32.totalorder %s213, %s214
      %p223 = scmp.eq.s32.totalorder %s33, 0
      %p224 = por %p222, %p223
      %p225 = scmp.ne.s32.totalorder %s213, %s214
      %p226 = scmp.eq.s32.totalorder %s34, 1
      %p227 = por %p225, %p226
      %p229 = scmp.ne.s32.totalorder %s214, %s228
      %p230 = scmp.eq.s32.totalorder %s34, 0
      %p231 = por %p229, %p230
      %s233 = sadd.s32 %s232, 1
      %p236 = scmp.eq.s32.totalorder %s28, 1
      %p237 = scmp.ne.s32.totalorder %s232, %s234
      %p238 = scmp.eq.s32.totalorder %s28, 0
      %p239 = por %p237, %p238
      %p240 = scmp.ne.s32.totalorder %s232, %s234
      %p241 = scmp.eq.s32.totalorder %s33, 1
      %p242 = por %p240, %p241
      %p243 = scmp.ne.s32.totalorder %s234, %s235
      %p244 = scmp.eq.s32.totalorder %s33, 0
      %p245 = por %p243, %p244
      %p246 = scmp.ne.s32.totalorder %s234, %s235
      %p247 = scmp.eq.s32.totalorder %s34, 1
      %p248 = por %p246, %p247
      %p250 = scmp.ne.s32.totalorder %s235, %s249
      %p251 = scmp.eq.s32.totalorder %s34, 0
      %p252 = por %p250, %p251
      %s254 = sadd.s32 %s253, 1
      %p257 = scmp.eq.s32.totalorder %s28, 1
      %p258 = scmp.ne.s32.totalorder %s253, %s255
      %p259 = scmp.eq.s32.totalorder %s28, 0
      %p260 = por %p258, %p259
      %p261 = scmp.ne.s32.totalorder %s253, %s255
      %p262 = scmp.eq.s32.totalorder %s33, 1
      %p263 = por %p261, %p262
      %p264 = scmp.ne.s32.totalorder %s255, %s256
      %p265 = scmp.eq.s32.totalorder %s33, 0
      %p266 = por %p264, %p265
      %p267 = scmp.ne.s32.totalorder %s255, %s256
      %p268 = scmp.eq.s32.totalorder %s34, 1
      %p269 = por %p267, %p268
      %p271 = scmp.ne.s32.totalorder %s256, %s270
      %p272 = scmp.eq.s32.totalorder %s34, 0
      %p273 = por %p271, %p272
      %s275 = sadd.s32 %s274, 1
      %p278 = scmp.eq.s32.totalorder %s28, 1
      %p279 = scmp.ne.s32.totalorder %s274, %s276
      %p280 = scmp.eq.s32.totalorder %s28, 0
      %p281 = por %p279, %p280
      %p282 = scmp.ne.s32.totalorder %s274, %s276
      %p283 = scmp.eq.s32.totalorder %s33, 1
      %p284 = por %p282, %p283
      %p285 = scmp.ne.s32.totalorder %s276, %s277
      %p286 = scmp.eq.s32.totalorder %s33, 0
      %p287 = por %p285, %p286
      %p288 = scmp.ne.s32.totalorder %s276, %s277
      %p289 = scmp.eq.s32.totalorder %s34, 1
      %p290 = por %p288, %p289
      %p292 = scmp.ne.s32.totalorder %s277, %s291
      %p293 = scmp.eq.s32.totalorder %s34, 0
      %p294 = por %p292, %p293
      %s295 = ssub.s32 %s35, %s47
      %s296 = ssub.s32 %s36, %s43
      %s297 = sor.u32 %s295, %s296
      %p298 = scmp.eq.s32.totalorder %s297, 0
      %s300 = sadd.s32 %s299, 1
      %s301 = scalar_select %p298, %s299, %s300
      %p304 = pneg %p298
      %p305 = scmp.eq.s32.totalorder %s28, 1
      %p306 = por %p304, %p305
      %p307 = scmp.ne.s32.totalorder %s299, %s302
      %p308 = scmp.eq.s32.totalorder %s28, 0
      %p309 = por %p307, %p308
      %p310 = scmp.ne.s32.totalorder %s299, %s302
      %p311 = scmp.eq.s32.totalorder %s33, 1
      %p312 = por %p310, %p311
      %p313 = scmp.ne.s32.totalorder %s302, %s303
      %p314 = scmp.eq.s32.totalorder %s33, 0
      %p315 = por %p313, %p314
      %p316 = scmp.ne.s32.totalorder %s302, %s303
      %p317 = scmp.eq.s32.totalorder %s34, 1
      %p318 = por %p316, %p317
      %p320 = scmp.ne.s32.totalorder %s303, %s319
      %p321 = scmp.eq.s32.totalorder %s34, 0
      %p322 = por %p320, %p321
      %p323 = scmp.le.s32.totalorder 1, %s28
      %p324 = scmp.lt.s32.totalorder %s28, 3
      %p325 = pnand %p323, %p324
      %p326 = pneg %p325
      // Predicated region
      $region9: #{tpu_custom_call.1} parent=5 // pred_check
        _
      $region10: #{tpu_custom_call.1} parent=5 // pred_check_branch
        %328 = sbr.rel (%p325) target = $region12
      $region11: #{tpu_custom_call.1} parent=5 // pred_region
        %s329 = ssub.s32 %s28, 1
        // Predicated region
        $region13: #{tpu_custom_call.1} parent=11 // pred_check
          %p330 = pneg %p161
        $region14: #{tpu_custom_call.1} parent=11 // pred_check_branch
          %332 = sbr.rel (%p330) target = $region16
        $region15: #{tpu_custom_call.1} parent=11 // pred_region
          %s334 = ssub.s32 16, 16
          %335 = vsyncadd [#allocation9], %s334
          %s337 = sshll.u32 [#allocation8], 4
          %s338 = int_to_ptr.vmem [resolvable:$true] %s337
          %340 = dma.hbm_to_vmem [thread:$0]  %s3, 16, %s338, [#allocation9]
        $region16: #{tpu_custom_call.1} parent=11 // pred_fallthru
          _
        // Predicated region
        $region17: #{tpu_custom_call.1} parent=11 // pred_check
          %p341 = pneg %p182
        $region18: #{tpu_custom_call.1} parent=11 // pred_check_branch
          %343 = sbr.rel (%p341) target = $region20
        $region19: #{tpu_custom_call.1} parent=11 // pred_region
          %s345 = ssub.s32 16, 16
          %346 = vsyncadd [#allocation9], %s345
          %s348 = sshll.u32 [#allocation10], 4
          %s349 = int_to_ptr.vmem [resolvable:$true] %s348
          %351 = dma.hbm_to_vmem [thread:$0]  %s4, 16, %s349, [#allocation9]
        $region20: #{tpu_custom_call.1} parent=11 // pred_fallthru
          _
        // Predicated region
        $region21: #{tpu_custom_call.1} parent=11 // pred_check
          %p352 = pneg %p203
        $region22: #{tpu_custom_call.1} parent=11 // pred_check_branch
          %354 = sbr.rel (%p352) target = $region24
        $region23: #{tpu_custom_call.1} parent=11 // pred_region
          %s356 = ssub.s32 4096, 4096
          %357 = vsyncadd [#allocation12], %s356
          %s358 = sshll.u32 [#allocation11], 4
          %s359 = int_to_ptr.vmem [resolvable:$true] %s358
          %364 = dma.hbm_to_vmem [thread:$0]  %s5, 4096, %s359, [#allocation12], 256, 256, 16
        $region24: #{tpu_custom_call.1} parent=11 // pred_fallthru
          _
        // Predicated region
        $region25: #{tpu_custom_call.1} parent=11 // pred_check
          %p365 = pneg %p224
        $region26: #{tpu_custom_call.1} parent=11 // pred_check_branch
          %367 = sbr.rel (%p365) target = $region28
        $region27: #{tpu_custom_call.1} parent=11 // pred_region
          _
        $region28: #{tpu_custom_call.1} parent=11 // pred_fallthru
          _
        // Predicated region
        $region29: #{tpu_custom_call.1} parent=11 // pred_check
          %p368 = pneg %p245
        $region30: #{tpu_custom_call.1} parent=11 // pred_check_branch
          %370 = sbr.rel (%p368) target = $region32
        $region31: #{tpu_custom_call.1} parent=11 // pred_region
          %s372 = ssub.s32 4096, 4096
          %373 = vsyncadd [#allocation12], %s372
          %s374 = sshll.u32 [#allocation13], 4
          %s375 = int_to_ptr.vmem [resolvable:$true] %s374
          %380 = dma.hbm_to_vmem [thread:$0]  %s7, 4096, %s375, [#allocation12], 128, 128, 8
        $region32: #{tpu_custom_call.1} parent=11 // pred_fallthru
          _
        // Predicated region
        $region33: #{tpu_custom_call.1} parent=11 // pred_check
          %p381 = pneg %p266
        $region34: #{tpu_custom_call.1} parent=11 // pred_check_branch
          %383 = sbr.rel (%p381) target = $region36
        $region35: #{tpu_custom_call.1} parent=11 // pred_region
          _
        $region36: #{tpu_custom_call.1} parent=11 // pred_fallthru
          _
        // Predicated region
        $region37: #{tpu_custom_call.1} parent=11 // pred_check
          %p384 = pneg %p287
        $region38: #{tpu_custom_call.1} parent=11 // pred_check_branch
          %386 = sbr.rel (%p384) target = $region40
        $region39: #{tpu_custom_call.1} parent=11 // pred_region
          %s388 = ssub.s32 2048, 2048
          %389 = vsyncadd [#allocation15], %s388
          %s390 = sshll.u32 [#allocation14], 4
          %s391 = int_to_ptr.vmem [resolvable:$true] %s390
          %396 = dma.hbm_to_vmem [thread:$0]  %s9, 2048, %s391, [#allocation15], 64, 64, 4
        $region40: #{tpu_custom_call.1} parent=11 // pred_fallthru
          _
      $region12: #{tpu_custom_call.1} parent=5 // pred_fallthru
        _
      %p397 = scmp.lt.s32.totalorder %s28, 2
      // Predicated region
      $region41: #{tpu_custom_call.1} parent=5 // pred_check
        %p398 = pneg %p397
      $region42: #{tpu_custom_call.1} parent=5 // pred_check_branch
        %400 = sbr.rel (%p398) target = $region44
      $region43: #{tpu_custom_call.1} parent=5 // pred_region
        // Predicated region
        $region45: #{tpu_custom_call.1} parent=43 // pred_check
          %p401 = pneg %p62
        $region46: #{tpu_custom_call.1} parent=43 // pred_check_branch
          %403 = sbr.rel (%p401) target = $region48
        $region47: #{tpu_custom_call.1} parent=43 // pred_region
          %s404 = sand.u32 %s52, 1
          %s405 = scalar_lea.sflag [#allocation3], %s404
          %s406 = sand.u32 %s52, 1
          %s407 = smul.addr %s406, 384
          %s408 = scalar_lea.vmem [#allocation2], %s407
          %s409 = smul.u32 48, %s36
          %s411 = ssub.s32 6144, 6144
          %412 = vsyncadd %s405, %s411
          %s413 = smul.addr %s35, 48
          %s414 = sadd.s32 %s409, %s413
          %s415 = smul.addr %s414, 128
          %s416 = scalar_lea.hbm %s0, %s415
          %s417 = sshll.u32 %s408, 4
          %s418 = int_to_ptr.vmem [resolvable:$true] %s417
          %423 = dma.hbm_to_vmem [thread:$0]  %s416, 6144, %s418, %s405, 128, 128, 8
        $region48: #{tpu_custom_call.1} parent=43 // pred_fallthru
          _
        // Predicated region
        $region49: #{tpu_custom_call.1} parent=43 // pred_check
          %p424 = pneg %p98
        $region50: #{tpu_custom_call.1} parent=43 // pred_check_branch
          %426 = sbr.rel (%p424) target = $region52
        $region51: #{tpu_custom_call.1} parent=43 // pred_region
          %s427 = sand.u32 %s28, 1
          %s428 = scalar_lea.sflag [#allocation6], %s427
          %s429 = sand.u32 %s88, 1
          %s430 = smul.addr %s429, 8
          %s431 = scalar_lea.vmem [#allocation5], %s430
          %s432 = smul.u32 %s36, 48
          %s433 = ssub.s32 %s432, 1
          %p434 = scmp.gt.s32.totalorder %s433, 0
          %s435 = scalar_select %p434, %s433, 0
          %s437 = ssub.s32 128, 128
          %438 = vsyncadd %s428, %s437
          %s439 = smul.addr %s35, 48
          %s440 = sadd.s32 %s435, %s439
          %s441 = smul.addr %s440, 128
          %s442 = scalar_lea.hbm %s1, %s441
          %s444 = sshll.u32 %s431, 4
          %s445 = int_to_ptr.vmem [resolvable:$true] %s444
          %447 = dma.hbm_to_vmem [thread:$0]  %s442, 128, %s445, %s428
        $region52: #{tpu_custom_call.1} parent=43 // pred_fallthru
          _
        // Predicated region
        $region53: #{tpu_custom_call.1} parent=43 // pred_check
          %p448 = pneg %p134
        $region54: #{tpu_custom_call.1} parent=43 // pred_check_branch
          %450 = sbr.rel (%p448) target = $region56
        $region55: #{tpu_custom_call.1} parent=43 // pred_region
          %s451 = sand.u32 %s28, 1
          %s452 = scalar_lea.sflag [#allocation6], %s451
          %s453 = sand.u32 %s124, 1
          %s454 = smul.addr %s453, 8
          %s455 = scalar_lea.vmem [#allocation7], %s454
          %s456 = sadd.s32 %s36, 1
          %s457 = smul.u32 %s456, 48
          %p458 = scmp.lt.s32.totalorder %s457, 47
          %s459 = scalar_select %p458, %s457, 47
          %s461 = ssub.s32 128, 128
          %462 = vsyncadd %s452, %s461
          %s463 = smul.addr %s35, 48
          %s464 = sadd.s32 %s459, %s463
          %s465 = smul.addr %s464, 128
          %s466 = scalar_lea.hbm %s2, %s465
          %s468 = sshll.u32 %s455, 4
          %s469 = int_to_ptr.vmem [resolvable:$true] %s468
          %471 = dma.hbm_to_vmem [thread:$0]  %s466, 128, %s469, %s452
        $region56: #{tpu_custom_call.1} parent=43 // pred_fallthru
          _
      $region44: #{tpu_custom_call.1} parent=5 // pred_fallthru
        _
      %p472 = scmp.le.s32.totalorder 1, %s28
      %p473 = scmp.lt.s32.totalorder %s28, 3
      %p474 = pnand %p472, %p473
      %p475 = pneg %p474
      // Predicated region
      $region57: #{tpu_custom_call.1} parent=5 // pred_check
        _
      $region58: #{tpu_custom_call.1} parent=5 // pred_check_branch
        %477 = sbr.rel (%p474) target = $region60
      $region59: #{tpu_custom_call.1} parent=5 // pred_region
        %s478 = ssub.s32 %s28, 1
        %s479 = sand.u32 %s55, 1
        %s480 = scalar_lea.sflag [#allocation3], %s479
        %s481 = sand.u32 %s55, 1
        %s482 = smul.addr %s481, 384
        %s483 = scalar_lea.vmem [#allocation2], %s482
        // Predicated region
        $region61: #{tpu_custom_call.1} parent=59 // pred_check
          %p484 = pneg %p68
        $region62: #{tpu_custom_call.1} parent=59 // pred_check_branch
          %486 = sbr.rel (%p484) target = $region64
        $region63: #{tpu_custom_call.1} parent=59 // pred_region
          %487 = dma.done %s480, 6144
        $region64: #{tpu_custom_call.1} parent=59 // pred_fallthru
          _
        %s488 = sand.u32 %s33, 1
        %s489 = scalar_lea.sflag [#allocation6], %s488
        %s490 = sand.u32 %s91, 1
        %s491 = smul.addr %s490, 8
        %s492 = scalar_lea.vmem [#allocation5], %s491
        // Predicated region
        $region65: #{tpu_custom_call.1} parent=59 // pred_check
          %p493 = pneg %p104
        $region66: #{tpu_custom_call.1} parent=59 // pred_check_branch
          %495 = sbr.rel (%p493) target = $region68
        $region67: #{tpu_custom_call.1} parent=59 // pred_region
          %496 = dma.done %s489, 128
        $region68: #{tpu_custom_call.1} parent=59 // pred_fallthru
          _
        %s497 = sand.u32 %s33, 1
        %s498 = scalar_lea.sflag [#allocation6], %s497
        %s499 = sand.u32 %s127, 1
        %s500 = smul.addr %s499, 8
        %s501 = scalar_lea.vmem [#allocation7], %s500
        // Predicated region
        $region69: #{tpu_custom_call.1} parent=59 // pred_check
          %p502 = pneg %p140
        $region70: #{tpu_custom_call.1} parent=59 // pred_check_branch
          %504 = sbr.rel (%p502) target = $region72
        $region71: #{tpu_custom_call.1} parent=59 // pred_region
          %505 = dma.done %s498, 128
        $region72: #{tpu_custom_call.1} parent=59 // pred_fallthru
          _
        // Predicated region
        $region73: #{tpu_custom_call.1} parent=59 // pred_check
          %p506 = pneg %p161
        $region74: #{tpu_custom_call.1} parent=59 // pred_check_branch
          %508 = sbr.rel (%p506) target = $region76
        $region75: #{tpu_custom_call.1} parent=59 // pred_region
          %509 = dma.done [#allocation9], 16
        $region76: #{tpu_custom_call.1} parent=59 // pred_fallthru
          _
        // Predicated region
        $region77: #{tpu_custom_call.1} parent=59 // pred_check
          %p510 = pneg %p182
        $region78: #{tpu_custom_call.1} parent=59 // pred_check_branch
          %512 = sbr.rel (%p510) target = $region80
        $region79: #{tpu_custom_call.1} parent=59 // pred_region
          %513 = dma.done [#allocation9], 16
        $region80: #{tpu_custom_call.1} parent=59 // pred_fallthru
          _
        // Predicated region
        $region81: #{tpu_custom_call.1} parent=59 // pred_check
          %p514 = pneg %p203
        $region82: #{tpu_custom_call.1} parent=59 // pred_check_branch
          %516 = sbr.rel (%p514) target = $region84
        $region83: #{tpu_custom_call.1} parent=59 // pred_region
          %517 = dma.done [#allocation12], 4096
        $region84: #{tpu_custom_call.1} parent=59 // pred_fallthru
          _
        // Predicated region
        $region85: #{tpu_custom_call.1} parent=59 // pred_check
          %p518 = pneg %p245
        $region86: #{tpu_custom_call.1} parent=59 // pred_check_branch
          %520 = sbr.rel (%p518) target = $region88
        $region87: #{tpu_custom_call.1} parent=59 // pred_region
          %521 = dma.done [#allocation12], 4096
        $region88: #{tpu_custom_call.1} parent=59 // pred_fallthru
          _
        // Predicated region
        $region89: #{tpu_custom_call.1} parent=59 // pred_check
          %p522 = pneg %p287
        $region90: #{tpu_custom_call.1} parent=59 // pred_check_branch
          %524 = sbr.rel (%p522) target = $region92
        $region91: #{tpu_custom_call.1} parent=59 // pred_region
          %525 = dma.done [#allocation15], 2048
        $region92: #{tpu_custom_call.1} parent=59 // pred_fallthru
          _
        %s526 = sand.u32 %s55, 1
        %s527 = scalar_lea.sflag [#allocation3], %s526
        %s528 = sand.u32 %s55, 1
        %s529 = smul.addr %s528, 384
        %s530 = scalar_lea.vmem [#allocation2], %s529
        %p531 = pneg %p68
        %p532 = pneg %p65
        %s533 = sand.u32 %s33, 1
        %s534 = scalar_lea.sflag [#allocation6], %s533
        %s535 = sand.u32 %s91, 1
        %s536 = smul.addr %s535, 8
        %s537 = scalar_lea.vmem [#allocation5], %s536
        %p538 = pneg %p104
        %p539 = pneg %p101
        %s540 = sand.u32 %s33, 1
        %s541 = scalar_lea.sflag [#allocation6], %s540
        %s542 = sand.u32 %s127, 1
        %s543 = smul.addr %s542, 8
        %s544 = scalar_lea.vmem [#allocation7], %s543
        %p545 = pneg %p140
        %p546 = pneg %p137
        %p547 = pneg %p161
        %p548 = pneg %p158
        %p549 = pneg %p182
        %p550 = pneg %p179
        %p551 = pneg %p203
        %p552 = pneg %p200
        %p553 = pneg %p224
        %p554 = pneg %p221
        %p555 = pneg %p245
        %p556 = pneg %p242
        %p557 = pneg %p266
        %p558 = pneg %p263
        %p559 = pneg %p287
        %p560 = pneg %p284
        %p561 = pneg %p315
        %p562 = pneg %p312
        %s563 = sand.u32 %s302, 1
        %s564 = scalar_lea.sflag [#allocation4], %s563
        %s565 = sand.u32 %s302, 1
        %s566 = smul.addr %s565, 384
        %s567 = scalar_lea.vmem [#allocation16], %s566
        %s568 = smul.u32 48, %s38
        %s569 = smul.u32 %s38, 48
        %s570 = ssub.s32 %s569, 1
        %p571 = scmp.gt.s32.totalorder %s570, 0
        %s572 = scalar_select %p571, %s570, 0
        %s573 = sadd.s32 %s38, 1
        %s574 = smul.u32 %s573, 48
        %p575 = scmp.lt.s32.totalorder %s574, 47
        %s576 = scalar_select %p575, %s574, 47
        %s577 = smul.u32 48, %s38
        %v579 = vld [vmem:[%s483] sm:$0xff]
        %v580 = vld [vmem:[%s483 + $0x8] sm:$0xff]
        %v581 = vld [vmem:[%s483 + $0x10] sm:$0xff]
        %v582 = vld [vmem:[%s483 + $0x18] sm:$0xff]
        %v583 = vld [vmem:[%s483 + $0x20] sm:$0xff]
        %v584 = vld [vmem:[%s483 + $0x28] sm:$0xff]
        %v585 = vld [vmem:[%s483 + $0x30] sm:$0xff]
        %v586 = vld [vmem:[%s483 + $0x38] sm:$0xff]
        %v587 = vld [vmem:[%s483 + $0x40] sm:$0xff]
        %v588 = vld [vmem:[%s483 + $0x48] sm:$0xff]
        %v589 = vld [vmem:[%s483 + $0x50] sm:$0xff]
        %v590 = vld [vmem:[%s483 + $0x58] sm:$0xff]
        %v591 = vld [vmem:[%s483 + $0x60] sm:$0xff]
        %v592 = vld [vmem:[%s483 + $0x68] sm:$0xff]
        %v593 = vld [vmem:[%s483 + $0x70] sm:$0xff]
        %v594 = vld [vmem:[%s483 + $0x78] sm:$0xff]
        %v595 = vld [vmem:[%s483 + $0x80] sm:$0xff]
        %v596 = vld [vmem:[%s483 + $0x88] sm:$0xff]
        %v597 = vld [vmem:[%s483 + $0x90] sm:$0xff]
        %v598 = vld [vmem:[%s483 + $0x98] sm:$0xff]
        %v599 = vld [vmem:[%s483 + $0xa0] sm:$0xff]
        %v600 = vld [vmem:[%s483 + $0xa8] sm:$0xff]
        %v601 = vld [vmem:[%s483 + $0xb0] sm:$0xff]
        %v602 = vld [vmem:[%s483 + $0xb8] sm:$0xff]
        %v603 = vld [vmem:[%s483 + $0xc0] sm:$0xff]
        %v604 = vld [vmem:[%s483 + $0xc8] sm:$0xff]
        %v605 = vld [vmem:[%s483 + $0xd0] sm:$0xff]
        %v606 = vld [vmem:[%s483 + $0xd8] sm:$0xff]
        %v607 = vld [vmem:[%s483 + $0xe0] sm:$0xff]
        %v608 = vld [vmem:[%s483 + $0xe8] sm:$0xff]
        %v609 = vld [vmem:[%s483 + $0xf0] sm:$0xff]
        %v610 = vld [vmem:[%s483 + $0xf8] sm:$0xff]
        %v611 = vld [vmem:[%s483 + $0x100] sm:$0xff]
        %v612 = vld [vmem:[%s483 + $0x108] sm:$0xff]
        %v613 = vld [vmem:[%s483 + $0x110] sm:$0xff]
        %v614 = vld [vmem:[%s483 + $0x118] sm:$0xff]
        %v615 = vld [vmem:[%s483 + $0x120] sm:$0xff]
        %v616 = vld [vmem:[%s483 + $0x128] sm:$0xff]
        %v617 = vld [vmem:[%s483 + $0x130] sm:$0xff]
        %v618 = vld [vmem:[%s483 + $0x138] sm:$0xff]
        %v619 = vld [vmem:[%s483 + $0x140] sm:$0xff]
        %v620 = vld [vmem:[%s483 + $0x148] sm:$0xff]
        %v621 = vld [vmem:[%s483 + $0x150] sm:$0xff]
        %v622 = vld [vmem:[%s483 + $0x158] sm:$0xff]
        %v623 = vld [vmem:[%s483 + $0x160] sm:$0xff]
        %v624 = vld [vmem:[%s483 + $0x168] sm:$0xff]
        %v625 = vld [vmem:[%s483 + $0x170] sm:$0xff]
        %v626 = vld [vmem:[%s483 + $0x178] sm:$0xff]
        %v627 = vld [vmem:[#allocation8] sm:$0x1]
        %v628 = vld [vmem:[#allocation10] sm:$0x1]
        %629 = vadd.xlane.f32.xlu0 %v579
        %v630 = vpop.xlane.xlu0 %629
        %631 = vadd.xlane.f32.xlu0 %v580
        %v632 = vpop.xlane.xlu0 %631
        %633 = vadd.xlane.f32.xlu0 %v581
        %v634 = vpop.xlane.xlu0 %633
        %635 = vadd.xlane.f32.xlu0 %v582
        %v636 = vpop.xlane.xlu0 %635
        %637 = vadd.xlane.f32.xlu0 %v583
        %v638 = vpop.xlane.xlu0 %637
        %639 = vadd.xlane.f32.xlu0 %v584
        %v640 = vpop.xlane.xlu0 %639
        %641 = vadd.xlane.f32.xlu0 %v585
        %v642 = vpop.xlane.xlu0 %641
        %643 = vadd.xlane.f32.xlu0 %v586
        %v644 = vpop.xlane.xlu0 %643
        %645 = vadd.xlane.f32.xlu0 %v587
        %v646 = vpop.xlane.xlu0 %645
        %647 = vadd.xlane.f32.xlu0 %v588
        %v648 = vpop.xlane.xlu0 %647
        %649 = vadd.xlane.f32.xlu0 %v589
        %v650 = vpop.xlane.xlu0 %649
        %651 = vadd.xlane.f32.xlu0 %v590
        %v652 = vpop.xlane.xlu0 %651
        %653 = vadd.xlane.f32.xlu0 %v591
        %v654 = vpop.xlane.xlu0 %653
        %655 = vadd.xlane.f32.xlu0 %v592
        %v656 = vpop.xlane.xlu0 %655
        %657 = vadd.xlane.f32.xlu0 %v593
        %v658 = vpop.xlane.xlu0 %657
        %659 = vadd.xlane.f32.xlu0 %v594
        %v660 = vpop.xlane.xlu0 %659
        %661 = vadd.xlane.f32.xlu0 %v595
        %v662 = vpop.xlane.xlu0 %661
        %663 = vadd.xlane.f32.xlu0 %v596
        %v664 = vpop.xlane.xlu0 %663
        %665 = vadd.xlane.f32.xlu0 %v597
        %v666 = vpop.xlane.xlu0 %665
        %667 = vadd.xlane.f32.xlu0 %v598
        %v668 = vpop.xlane.xlu0 %667
        %669 = vadd.xlane.f32.xlu0 %v599
        %v670 = vpop.xlane.xlu0 %669
        %671 = vadd.xlane.f32.xlu0 %v600
        %v672 = vpop.xlane.xlu0 %671
        %673 = vadd.xlane.f32.xlu0 %v601
        %v674 = vpop.xlane.xlu0 %673
        %675 = vadd.xlane.f32.xlu0 %v602
        %v676 = vpop.xlane.xlu0 %675
        %677 = vadd.xlane.f32.xlu0 %v603
        %v678 = vpop.xlane.xlu0 %677
        %679 = vadd.xlane.f32.xlu0 %v604
        %v680 = vpop.xlane.xlu0 %679
        %681 = vadd.xlane.f32.xlu0 %v605
        %v682 = vpop.xlane.xlu0 %681
        %683 = vadd.xlane.f32.xlu0 %v606
        %v684 = vpop.xlane.xlu0 %683
        %685 = vadd.xlane.f32.xlu0 %v607
        %v686 = vpop.xlane.xlu0 %685
        %687 = vadd.xlane.f32.xlu0 %v608
        %v688 = vpop.xlane.xlu0 %687
        %689 = vadd.xlane.f32.xlu0 %v609
        %v690 = vpop.xlane.xlu0 %689
        %691 = vadd.xlane.f32.xlu0 %v610
        %v692 = vpop.xlane.xlu0 %691
        %693 = vadd.xlane.f32.xlu0 %v611
        %v694 = vpop.xlane.xlu0 %693
        %695 = vadd.xlane.f32.xlu0 %v612
        %v696 = vpop.xlane.xlu0 %695
        %697 = vadd.xlane.f32.xlu0 %v613
        %v698 = vpop.xlane.xlu0 %697
        %699 = vadd.xlane.f32.xlu0 %v614
        %v700 = vpop.xlane.xlu0 %699
        %701 = vadd.xlane.f32.xlu0 %v615
        %v702 = vpop.xlane.xlu0 %701
        %703 = vadd.xlane.f32.xlu0 %v616
        %v704 = vpop.xlane.xlu0 %703
        %705 = vadd.xlane.f32.xlu0 %v617
        %v706 = vpop.xlane.xlu0 %705
        %707 = vadd.xlane.f32.xlu0 %v618
        %v708 = vpop.xlane.xlu0 %707
        %709 = vadd.xlane.f32.xlu0 %v619
        %v710 = vpop.xlane.xlu0 %709
        %711 = vadd.xlane.f32.xlu0 %v620
        %v712 = vpop.xlane.xlu0 %711
        %713 = vadd.xlane.f32.xlu0 %v621
        %v714 = vpop.xlane.xlu0 %713
        %715 = vadd.xlane.f32.xlu0 %v622
        %v716 = vpop.xlane.xlu0 %715
        %717 = vadd.xlane.f32.xlu0 %v623
        %v718 = vpop.xlane.xlu0 %717
        %719 = vadd.xlane.f32.xlu0 %v624
        %v720 = vpop.xlane.xlu0 %719
        %721 = vadd.xlane.f32.xlu0 %v625
        %v722 = vpop.xlane.xlu0 %721
        %723 = vadd.xlane.f32.xlu0 %v626
        %v724 = vpop.xlane.xlu0 %723
        %v725 = vmul.f32 %v630, 0.0078125
        %v726 = vmul.f32 %v632, 0.0078125
        %v727 = vmul.f32 %v634, 0.0078125
        %v728 = vmul.f32 %v636, 0.0078125
        %v729 = vmul.f32 %v638, 0.0078125
        %v730 = vmul.f32 %v640, 0.0078125
        %v731 = vmul.f32 %v642, 0.0078125
        %v732 = vmul.f32 %v644, 0.0078125
        %v733 = vmul.f32 %v646, 0.0078125
        %v734 = vmul.f32 %v648, 0.0078125
        %v735 = vmul.f32 %v650, 0.0078125
        %v736 = vmul.f32 %v652, 0.0078125
        %v737 = vmul.f32 %v654, 0.0078125
        %v738 = vmul.f32 %v656, 0.0078125
        %v739 = vmul.f32 %v658, 0.0078125
        %v740 = vmul.f32 %v660, 0.0078125
        %v741 = vmul.f32 %v662, 0.0078125
        %v742 = vmul.f32 %v664, 0.0078125
        %v743 = vmul.f32 %v666, 0.0078125
        %v744 = vmul.f32 %v668, 0.0078125
        %v745 = vmul.f32 %v670, 0.0078125
        %v746 = vmul.f32 %v672, 0.0078125
        %v747 = vmul.f32 %v674, 0.0078125
        %v748 = vmul.f32 %v676, 0.0078125
        %v749 = vmul.f32 %v678, 0.0078125
        %v750 = vmul.f32 %v680, 0.0078125
        %v751 = vmul.f32 %v682, 0.0078125
        %v752 = vmul.f32 %v684, 0.0078125
        %v753 = vmul.f32 %v686, 0.0078125
        %v754 = vmul.f32 %v688, 0.0078125
        %v755 = vmul.f32 %v690, 0.0078125
        %v756 = vmul.f32 %v692, 0.0078125
        %v757 = vmul.f32 %v694, 0.0078125
        %v758 = vmul.f32 %v696, 0.0078125
        %v759 = vmul.f32 %v698, 0.0078125
        %v760 = vmul.f32 %v700, 0.0078125
        %v761 = vmul.f32 %v702, 0.0078125
        %v762 = vmul.f32 %v704, 0.0078125
        %v763 = vmul.f32 %v706, 0.0078125
        %v764 = vmul.f32 %v708, 0.0078125
        %v765 = vmul.f32 %v710, 0.0078125
        %v766 = vmul.f32 %v712, 0.0078125
        %v767 = vmul.f32 %v714, 0.0078125
        %v768 = vmul.f32 %v716, 0.0078125
        %v769 = vmul.f32 %v718, 0.0078125
        %v770 = vmul.f32 %v720, 0.0078125
        %v771 = vmul.f32 %v722, 0.0078125
        %v772 = vmul.f32 %v724, 0.0078125
        %v773 = vsub.f32 %v579, %v725
        %v774 = vsub.f32 %v580, %v726
        %v775 = vsub.f32 %v581, %v727
        %v776 = vsub.f32 %v582, %v728
        %v777 = vsub.f32 %v583, %v729
        %v778 = vsub.f32 %v584, %v730
        %v779 = vsub.f32 %v585, %v731
        %v780 = vsub.f32 %v586, %v732
        %v781 = vsub.f32 %v587, %v733
        %v782 = vsub.f32 %v588, %v734
        %v783 = vsub.f32 %v589, %v735
        %v784 = vsub.f32 %v590, %v736
        %v785 = vsub.f32 %v591, %v737
        %v786 = vsub.f32 %v592, %v738
        %v787 = vsub.f32 %v593, %v739
        %v788 = vsub.f32 %v594, %v740
        %v789 = vsub.f32 %v595, %v741
        %v790 = vsub.f32 %v596, %v742
        %v791 = vsub.f32 %v597, %v743
        %v792 = vsub.f32 %v598, %v744
        %v793 = vsub.f32 %v599, %v745
        %v794 = vsub.f32 %v600, %v746
        %v795 = vsub.f32 %v601, %v747
        %v796 = vsub.f32 %v602, %v748
        %v797 = vsub.f32 %v603, %v749
        %v798 = vsub.f32 %v604, %v750
        %v799 = vsub.f32 %v605, %v751
        %v800 = vsub.f32 %v606, %v752
        %v801 = vsub.f32 %v607, %v753
        %v802 = vsub.f32 %v608, %v754
        %v803 = vsub.f32 %v609, %v755
        %v804 = vsub.f32 %v610, %v756
        %v805 = vsub.f32 %v611, %v757
        %v806 = vsub.f32 %v612, %v758
        %v807 = vsub.f32 %v613, %v759
        %v808 = vsub.f32 %v614, %v760
        %v809 = vsub.f32 %v615, %v761
        %v810 = vsub.f32 %v616, %v762
        %v811 = vsub.f32 %v617, %v763
        %v812 = vsub.f32 %v618, %v764
        %v813 = vsub.f32 %v619, %v765
        %v814 = vsub.f32 %v620, %v766
        %v815 = vsub.f32 %v621, %v767
        %v816 = vsub.f32 %v622, %v768
        %v817 = vsub.f32 %v623, %v769
        %v818 = vsub.f32 %v624, %v770
        %v819 = vsub.f32 %v625, %v771
        %v820 = vsub.f32 %v626, %v772
        %v821 = vmul.f32 %v773, %v773
        %v822 = vmul.f32 %v774, %v774
        %v823 = vmul.f32 %v775, %v775
        %v824 = vmul.f32 %v776, %v776
        %v825 = vmul.f32 %v777, %v777
        %v826 = vmul.f32 %v778, %v778
        %v827 = vmul.f32 %v779, %v779
        %v828 = vmul.f32 %v780, %v780
        %v829 = vmul.f32 %v781, %v781
        %v830 = vmul.f32 %v782, %v782
        %v831 = vmul.f32 %v783, %v783
        %v832 = vmul.f32 %v784, %v784
        %v833 = vmul.f32 %v785, %v785
        %v834 = vmul.f32 %v786, %v786
        %v835 = vmul.f32 %v787, %v787
        %v836 = vmul.f32 %v788, %v788
        %v837 = vmul.f32 %v789, %v789
        %v838 = vmul.f32 %v790, %v790
        %v839 = vmul.f32 %v791, %v791
        %v840 = vmul.f32 %v792, %v792
        %v841 = vmul.f32 %v793, %v793
        %v842 = vmul.f32 %v794, %v794
        %v843 = vmul.f32 %v795, %v795
        %v844 = vmul.f32 %v796, %v796
        %v845 = vmul.f32 %v797, %v797
        %v846 = vmul.f32 %v798, %v798
        %v847 = vmul.f32 %v799, %v799
        %v848 = vmul.f32 %v800, %v800
        %v849 = vmul.f32 %v801, %v801
        %v850 = vmul.f32 %v802, %v802
        %v851 = vmul.f32 %v803, %v803
        %v852 = vmul.f32 %v804, %v804
        %v853 = vmul.f32 %v805, %v805
        %v854 = vmul.f32 %v806, %v806
        %v855 = vmul.f32 %v807, %v807
        %v856 = vmul.f32 %v808, %v808
        %v857 = vmul.f32 %v809, %v809
        %v858 = vmul.f32 %v810, %v810
        %v859 = vmul.f32 %v811, %v811
        %v860 = vmul.f32 %v812, %v812
        %v861 = vmul.f32 %v813, %v813
        %v862 = vmul.f32 %v814, %v814
        %v863 = vmul.f32 %v815, %v815
        %v864 = vmul.f32 %v816, %v816
        %v865 = vmul.f32 %v817, %v817
        %v866 = vmul.f32 %v818, %v818
        %v867 = vmul.f32 %v819, %v819
        %v868 = vmul.f32 %v820, %v820
        %869 = vadd.xlane.f32.xlu0 %v821
        %v870 = vpop.xlane.xlu0 %869
        %871 = vadd.xlane.f32.xlu0 %v822
        %v872 = vpop.xlane.xlu0 %871
        %873 = vadd.xlane.f32.xlu0 %v823
        %v874 = vpop.xlane.xlu0 %873
        %875 = vadd.xlane.f32.xlu0 %v824
        %v876 = vpop.xlane.xlu0 %875
        %877 = vadd.xlane.f32.xlu0 %v825
        %v878 = vpop.xlane.xlu0 %877
        %879 = vadd.xlane.f32.xlu0 %v826
        %v880 = vpop.xlane.xlu0 %879
        %881 = vadd.xlane.f32.xlu0 %v827
        %v882 = vpop.xlane.xlu0 %881
        %883 = vadd.xlane.f32.xlu0 %v828
        %v884 = vpop.xlane.xlu0 %883
        %885 = vadd.xlane.f32.xlu0 %v829
        %v886 = vpop.xlane.xlu0 %885
        %887 = vadd.xlane.f32.xlu0 %v830
        %v888 = vpop.xlane.xlu0 %887
        %889 = vadd.xlane.f32.xlu0 %v831
        %v890 = vpop.xlane.xlu0 %889
        %891 = vadd.xlane.f32.xlu0 %v832
        %v892 = vpop.xlane.xlu0 %891
        %893 = vadd.xlane.f32.xlu0 %v833
        %v894 = vpop.xlane.xlu0 %893
        %895 = vadd.xlane.f32.xlu0 %v834
        %v896 = vpop.xlane.xlu0 %895
        %897 = vadd.xlane.f32.xlu0 %v835
        %v898 = vpop.xlane.xlu0 %897
        %899 = vadd.xlane.f32.xlu0 %v836
        %v900 = vpop.xlane.xlu0 %899
        %901 = vadd.xlane.f32.xlu0 %v837
        %v902 = vpop.xlane.xlu0 %901
        %903 = vadd.xlane.f32.xlu0 %v838
        %v904 = vpop.xlane.xlu0 %903
        %905 = vadd.xlane.f32.xlu0 %v839
        %v906 = vpop.xlane.xlu0 %905
        %907 = vadd.xlane.f32.xlu0 %v840
        %v908 = vpop.xlane.xlu0 %907
        %909 = vadd.xlane.f32.xlu0 %v841
        %v910 = vpop.xlane.xlu0 %909
        %911 = vadd.xlane.f32.xlu0 %v842
        %v912 = vpop.xlane.xlu0 %911
        %913 = vadd.xlane.f32.xlu0 %v843
        %v914 = vpop.xlane.xlu0 %913
        %915 = vadd.xlane.f32.xlu0 %v844
        %v916 = vpop.xlane.xlu0 %915
        %917 = vadd.xlane.f32.xlu0 %v845
        %v918 = vpop.xlane.xlu0 %917
        %919 = vadd.xlane.f32.xlu0 %v846
        %v920 = vpop.xlane.xlu0 %919
        %921 = vadd.xlane.f32.xlu0 %v847
        %v922 = vpop.xlane.xlu0 %921
        %923 = vadd.xlane.f32.xlu0 %v848
        %v924 = vpop.xlane.xlu0 %923
        %925 = vadd.xlane.f32.xlu0 %v849
        %v926 = vpop.xlane.xlu0 %925
        %927 = vadd.xlane.f32.xlu0 %v850
        %v928 = vpop.xlane.xlu0 %927
        %929 = vadd.xlane.f32.xlu0 %v851
        %v930 = vpop.xlane.xlu0 %929
        %931 = vadd.xlane.f32.xlu0 %v852
        %v932 = vpop.xlane.xlu0 %931
        %933 = vadd.xlane.f32.xlu0 %v853
        %v934 = vpop.xlane.xlu0 %933
        %935 = vadd.xlane.f32.xlu0 %v854
        %v936 = vpop.xlane.xlu0 %935
        %937 = vadd.xlane.f32.xlu0 %v855
        %v938 = vpop.xlane.xlu0 %937
        %939 = vadd.xlane.f32.xlu0 %v856
        %v940 = vpop.xlane.xlu0 %939
        %941 = vadd.xlane.f32.xlu0 %v857
        %v942 = vpop.xlane.xlu0 %941
        %943 = vadd.xlane.f32.xlu0 %v858
        %v944 = vpop.xlane.xlu0 %943
        %945 = vadd.xlane.f32.xlu0 %v859
        %v946 = vpop.xlane.xlu0 %945
        %947 = vadd.xlane.f32.xlu0 %v860
        %v948 = vpop.xlane.xlu0 %947
        %949 = vadd.xlane.f32.xlu0 %v861
        %v950 = vpop.xlane.xlu0 %949
        %951 = vadd.xlane.f32.xlu0 %v862
        %v952 = vpop.xlane.xlu0 %951
        %953 = vadd.xlane.f32.xlu0 %v863
        %v954 = vpop.xlane.xlu0 %953
        %955 = vadd.xlane.f32.xlu0 %v864
        %v956 = vpop.xlane.xlu0 %955
        %957 = vadd.xlane.f32.xlu0 %v865
        %v958 = vpop.xlane.xlu0 %957
        %959 = vadd.xlane.f32.xlu0 %v866
        %v960 = vpop.xlane.xlu0 %959
        %961 = vadd.xlane.f32.xlu0 %v867
        %v962 = vpop.xlane.xlu0 %961
        %963 = vadd.xlane.f32.xlu0 %v868
        %v964 = vpop.xlane.xlu0 %963
        %v965 = vmul.f32 %v870, 0.0078125
        %v966 = vmul.f32 %v872, 0.0078125
        %v967 = vmul.f32 %v874, 0.0078125
        %v968 = vmul.f32 %v876, 0.0078125
        %v969 = vmul.f32 %v878, 0.0078125
        %v970 = vmul.f32 %v880, 0.0078125
        %v971 = vmul.f32 %v882, 0.0078125
        %v972 = vmul.f32 %v884, 0.0078125
        %v973 = vmul.f32 %v886, 0.0078125
        %v974 = vmul.f32 %v888, 0.0078125
        %v975 = vmul.f32 %v890, 0.0078125
        %v976 = vmul.f32 %v892, 0.0078125
        %v977 = vmul.f32 %v894, 0.0078125
        %v978 = vmul.f32 %v896, 0.0078125
        %v979 = vmul.f32 %v898, 0.0078125
        %v980 = vmul.f32 %v900, 0.0078125
        %v981 = vmul.f32 %v902, 0.0078125
        %v982 = vmul.f32 %v904, 0.0078125
        %v983 = vmul.f32 %v906, 0.0078125
        %v984 = vmul.f32 %v908, 0.0078125
        %v985 = vmul.f32 %v910, 0.0078125
        %v986 = vmul.f32 %v912, 0.0078125
        %v987 = vmul.f32 %v914, 0.0078125
        %v988 = vmul.f32 %v916, 0.0078125
        %v989 = vmul.f32 %v918, 0.0078125
        %v990 = vmul.f32 %v920, 0.0078125
        %v991 = vmul.f32 %v922, 0.0078125
        %v992 = vmul.f32 %v924, 0.0078125
        %v993 = vmul.f32 %v926, 0.0078125
        %v994 = vmul.f32 %v928, 0.0078125
        %v995 = vmul.f32 %v930, 0.0078125
        %v996 = vmul.f32 %v932, 0.0078125
        %v997 = vmul.f32 %v934, 0.0078125
        %v998 = vmul.f32 %v936, 0.0078125
        %v999 = vmul.f32 %v938, 0.0078125
        %v1000 = vmul.f32 %v940, 0.0078125
        %v1001 = vmul.f32 %v942, 0.0078125
        %v1002 = vmul.f32 %v944, 0.0078125
        %v1003 = vmul.f32 %v946, 0.0078125
        %v1004 = vmul.f32 %v948, 0.0078125
        %v1005 = vmul.f32 %v950, 0.0078125
        %v1006 = vmul.f32 %v952, 0.0078125
        %v1007 = vmul.f32 %v954, 0.0078125
        %v1008 = vmul.f32 %v956, 0.0078125
        %v1009 = vmul.f32 %v958, 0.0078125
        %v1010 = vmul.f32 %v960, 0.0078125
        %v1011 = vmul.f32 %v962, 0.0078125
        %v1012 = vmul.f32 %v964, 0.0078125
        %v1013 = vadd.f32 %v965, 1e-05
        %v1014 = vadd.f32 %v966, 1e-05
        %v1015 = vadd.f32 %v967, 1e-05
        %v1016 = vadd.f32 %v968, 1e-05
        %v1017 = vadd.f32 %v969, 1e-05
        %v1018 = vadd.f32 %v970, 1e-05
        %v1019 = vadd.f32 %v971, 1e-05
        %v1020 = vadd.f32 %v972, 1e-05
        %v1021 = vadd.f32 %v973, 1e-05
        %v1022 = vadd.f32 %v974, 1e-05
        %v1023 = vadd.f32 %v975, 1e-05
        %v1024 = vadd.f32 %v976, 1e-05
        %v1025 = vadd.f32 %v977, 1e-05
        %v1026 = vadd.f32 %v978, 1e-05
        %v1027 = vadd.f32 %v979, 1e-05
        %v1028 = vadd.f32 %v980, 1e-05
        %v1029 = vadd.f32 %v981, 1e-05
        %v1030 = vadd.f32 %v982, 1e-05
        %v1031 = vadd.f32 %v983, 1e-05
        %v1032 = vadd.f32 %v984, 1e-05
        %v1033 = vadd.f32 %v985, 1e-05
        %v1034 = vadd.f32 %v986, 1e-05
        %v1035 = vadd.f32 %v987, 1e-05
        %v1036 = vadd.f32 %v988, 1e-05
        %v1037 = vadd.f32 %v989, 1e-05
        %v1038 = vadd.f32 %v990, 1e-05
        %v1039 = vadd.f32 %v991, 1e-05
        %v1040 = vadd.f32 %v992, 1e-05
        %v1041 = vadd.f32 %v993, 1e-05
        %v1042 = vadd.f32 %v994, 1e-05
        %v1043 = vadd.f32 %v995, 1e-05
        %v1044 = vadd.f32 %v996, 1e-05
        %v1045 = vadd.f32 %v997, 1e-05
        %v1046 = vadd.f32 %v998, 1e-05
        %v1047 = vadd.f32 %v999, 1e-05
        %v1048 = vadd.f32 %v1000, 1e-05
        %v1049 = vadd.f32 %v1001, 1e-05
        %v1050 = vadd.f32 %v1002, 1e-05
        %v1051 = vadd.f32 %v1003, 1e-05
        %v1052 = vadd.f32 %v1004, 1e-05
        %v1053 = vadd.f32 %v1005, 1e-05
        %v1054 = vadd.f32 %v1006, 1e-05
        %v1055 = vadd.f32 %v1007, 1e-05
        %v1056 = vadd.f32 %v1008, 1e-05
        %v1057 = vadd.f32 %v1009, 1e-05
        %v1058 = vadd.f32 %v1010, 1e-05
        %v1059 = vadd.f32 %v1011, 1e-05
        %v1060 = vadd.f32 %v1012, 1e-05
        %v1061 = vrsqrt.pop %v1013
        %v1062 = vrsqrt.pop %v1014
        %v1063 = vrsqrt.pop %v1015
        %v1064 = vrsqrt.pop %v1016
        %v1065 = vrsqrt.pop %v1017
        %v1066 = vrsqrt.pop %v1018
        %v1067 = vrsqrt.pop %v1019
        %v1068 = vrsqrt.pop %v1020
        %v1069 = vrsqrt.pop %v1021
        %v1070 = vrsqrt.pop %v1022
        %v1071 = vrsqrt.pop %v1023
        %v1072 = vrsqrt.pop %v1024
        %v1073 = vrsqrt.pop %v1025
        %v1074 = vrsqrt.pop %v1026
        %v1075 = vrsqrt.pop %v1027
        %v1076 = vrsqrt.pop %v1028
        %v1077 = vrsqrt.pop %v1029
        %v1078 = vrsqrt.pop %v1030
        %v1079 = vrsqrt.pop %v1031
        %v1080 = vrsqrt.pop %v1032
        %v1081 = vrsqrt.pop %v1033
        %v1082 = vrsqrt.pop %v1034
        %v1083 = vrsqrt.pop %v1035
        %v1084 = vrsqrt.pop %v1036
        %v1085 = vrsqrt.pop %v1037
        %v1086 = vrsqrt.pop %v1038
        %v1087 = vrsqrt.pop %v1039
        %v1088 = vrsqrt.pop %v1040
        %v1089 = vrsqrt.pop %v1041
        %v1090 = vrsqrt.pop %v1042
        %v1091 = vrsqrt.pop %v1043
        %v1092 = vrsqrt.pop %v1044
        %v1093 = vrsqrt.pop %v1045
        %v1094 = vrsqrt.pop %v1046
        %v1095 = vrsqrt.pop %v1047
        %v1096 = vrsqrt.pop %v1048
        %v1097 = vrsqrt.pop %v1049
        %v1098 = vrsqrt.pop %v1050
        %v1099 = vrsqrt.pop %v1051
        %v1100 = vrsqrt.pop %v1052
        %v1101 = vrsqrt.pop %v1053
        %v1102 = vrsqrt.pop %v1054
        %v1103 = vrsqrt.pop %v1055
        %v1104 = vrsqrt.pop %v1056
        %v1105 = vrsqrt.pop %v1057
        %v1106 = vrsqrt.pop %v1058
        %v1107 = vrsqrt.pop %v1059
        %v1108 = vrsqrt.pop %v1060
        %v1109 = vmul.f32 %v773, %v1061
        %v1110 = vmul.f32 %v774, %v1062
        %v1111 = vmul.f32 %v775, %v1063
        %v1112 = vmul.f32 %v776, %v1064
        %v1113 = vmul.f32 %v777, %v1065
        %v1114 = vmul.f32 %v778, %v1066
        %v1115 = vmul.f32 %v779, %v1067
        %v1116 = vmul.f32 %v780, %v1068
        %v1117 = vmul.f32 %v781, %v1069
        %v1118 = vmul.f32 %v782, %v1070
        %v1119 = vmul.f32 %v783, %v1071
        %v1120 = vmul.f32 %v784, %v1072
        %v1121 = vmul.f32 %v785, %v1073
        %v1122 = vmul.f32 %v786, %v1074
        %v1123 = vmul.f32 %v787, %v1075
        %v1124 = vmul.f32 %v788, %v1076
        %v1125 = vmul.f32 %v789, %v1077
        %v1126 = vmul.f32 %v790, %v1078
        %v1127 = vmul.f32 %v791, %v1079
        %v1128 = vmul.f32 %v792, %v1080
        %v1129 = vmul.f32 %v793, %v1081
        %v1130 = vmul.f32 %v794, %v1082
        %v1131 = vmul.f32 %v795, %v1083
        %v1132 = vmul.f32 %v796, %v1084
        %v1133 = vmul.f32 %v797, %v1085
        %v1134 = vmul.f32 %v798, %v1086
        %v1135 = vmul.f32 %v799, %v1087
        %v1136 = vmul.f32 %v800, %v1088
        %v1137 = vmul.f32 %v801, %v1089
        %v1138 = vmul.f32 %v802, %v1090
        %v1139 = vmul.f32 %v803, %v1091
        %v1140 = vmul.f32 %v804, %v1092
        %v1141 = vmul.f32 %v805, %v1093
        %v1142 = vmul.f32 %v806, %v1094
        %v1143 = vmul.f32 %v807, %v1095
        %v1144 = vmul.f32 %v808, %v1096
        %v1145 = vmul.f32 %v809, %v1097
        %v1146 = vmul.f32 %v810, %v1098
        %v1147 = vmul.f32 %v811, %v1099
        %v1148 = vmul.f32 %v812, %v1100
        %v1149 = vmul.f32 %v813, %v1101
        %v1150 = vmul.f32 %v814, %v1102
        %v1151 = vmul.f32 %v815, %v1103
        %v1152 = vmul.f32 %v816, %v1104
        %v1153 = vmul.f32 %v817, %v1105
        %v1154 = vmul.f32 %v818, %v1106
        %v1155 = vmul.f32 %v819, %v1107
        %v1156 = vmul.f32 %v820, %v1108
        %v1158 = vlaneseq
        %v1159 = vshrl.u32 %v1158, 7
        %v1160 = vsub.s32 0, %v1159
        %v1161 = vrot.slane %v627, %v1160
        %v1163 = vmul.f32 %v1109, %v1161
        %v1164 = vmul.f32 %v1110, %v1161
        %v1165 = vmul.f32 %v1111, %v1161
        %v1166 = vmul.f32 %v1112, %v1161
        %v1167 = vmul.f32 %v1113, %v1161
        %v1168 = vmul.f32 %v1114, %v1161
        %v1169 = vmul.f32 %v1115, %v1161
        %v1170 = vmul.f32 %v1116, %v1161
        %v1171 = vmul.f32 %v1117, %v1161
        %v1172 = vmul.f32 %v1118, %v1161
        %v1173 = vmul.f32 %v1119, %v1161
        %v1174 = vmul.f32 %v1120, %v1161
        %v1175 = vmul.f32 %v1121, %v1161
        %v1176 = vmul.f32 %v1122, %v1161
        %v1177 = vmul.f32 %v1123, %v1161
        %v1178 = vmul.f32 %v1124, %v1161
        %v1179 = vmul.f32 %v1125, %v1161
        %v1180 = vmul.f32 %v1126, %v1161
        %v1181 = vmul.f32 %v1127, %v1161
        %v1182 = vmul.f32 %v1128, %v1161
        %v1183 = vmul.f32 %v1129, %v1161
        %v1184 = vmul.f32 %v1130, %v1161
        %v1185 = vmul.f32 %v1131, %v1161
        %v1186 = vmul.f32 %v1132, %v1161
        %v1187 = vmul.f32 %v1133, %v1161
        %v1188 = vmul.f32 %v1134, %v1161
        %v1189 = vmul.f32 %v1135, %v1161
        %v1190 = vmul.f32 %v1136, %v1161
        %v1191 = vmul.f32 %v1137, %v1161
        %v1192 = vmul.f32 %v1138, %v1161
        %v1193 = vmul.f32 %v1139, %v1161
        %v1194 = vmul.f32 %v1140, %v1161
        %v1195 = vmul.f32 %v1141, %v1161
        %v1196 = vmul.f32 %v1142, %v1161
        %v1197 = vmul.f32 %v1143, %v1161
        %v1198 = vmul.f32 %v1144, %v1161
        %v1199 = vmul.f32 %v1145, %v1161
        %v1200 = vmul.f32 %v1146, %v1161
        %v1201 = vmul.f32 %v1147, %v1161
        %v1202 = vmul.f32 %v1148, %v1161
        %v1203 = vmul.f32 %v1149, %v1161
        %v1204 = vmul.f32 %v1150, %v1161
        %v1205 = vmul.f32 %v1151, %v1161
        %v1206 = vmul.f32 %v1152, %v1161
        %v1207 = vmul.f32 %v1153, %v1161
        %v1208 = vmul.f32 %v1154, %v1161
        %v1209 = vmul.f32 %v1155, %v1161
        %v1210 = vmul.f32 %v1156, %v1161
        %v1212 = vlaneseq
        %v1213 = vshrl.u32 %v1212, 7
        %v1214 = vsub.s32 0, %v1213
        %v1215 = vrot.slane %v628, %v1214
        %v1217 = vadd.f32 %v1163, %v1215
        %v1218 = vadd.f32 %v1164, %v1215
        %v1219 = vadd.f32 %v1165, %v1215
        %v1220 = vadd.f32 %v1166, %v1215
        %v1221 = vadd.f32 %v1167, %v1215
        %v1222 = vadd.f32 %v1168, %v1215
        %v1223 = vadd.f32 %v1169, %v1215
        %v1224 = vadd.f32 %v1170, %v1215
        %v1225 = vadd.f32 %v1171, %v1215
        %v1226 = vadd.f32 %v1172, %v1215
        %v1227 = vadd.f32 %v1173, %v1215
        %v1228 = vadd.f32 %v1174, %v1215
        %v1229 = vadd.f32 %v1175, %v1215
        %v1230 = vadd.f32 %v1176, %v1215
        %v1231 = vadd.f32 %v1177, %v1215
        %v1232 = vadd.f32 %v1178, %v1215
        %v1233 = vadd.f32 %v1179, %v1215
        %v1234 = vadd.f32 %v1180, %v1215
        %v1235 = vadd.f32 %v1181, %v1215
        %v1236 = vadd.f32 %v1182, %v1215
        %v1237 = vadd.f32 %v1183, %v1215
        %v1238 = vadd.f32 %v1184, %v1215
        %v1239 = vadd.f32 %v1185, %v1215
        %v1240 = vadd.f32 %v1186, %v1215
        %v1241 = vadd.f32 %v1187, %v1215
        %v1242 = vadd.f32 %v1188, %v1215
        %v1243 = vadd.f32 %v1189, %v1215
        %v1244 = vadd.f32 %v1190, %v1215
        %v1245 = vadd.f32 %v1191, %v1215
        %v1246 = vadd.f32 %v1192, %v1215
        %v1247 = vadd.f32 %v1193, %v1215
        %v1248 = vadd.f32 %v1194, %v1215
        %v1249 = vadd.f32 %v1195, %v1215
        %v1250 = vadd.f32 %v1196, %v1215
        %v1251 = vadd.f32 %v1197, %v1215
        %v1252 = vadd.f32 %v1198, %v1215
        %v1253 = vadd.f32 %v1199, %v1215
        %v1254 = vadd.f32 %v1200, %v1215
        %v1255 = vadd.f32 %v1201, %v1215
        %v1256 = vadd.f32 %v1202, %v1215
        %v1257 = vadd.f32 %v1203, %v1215
        %v1258 = vadd.f32 %v1204, %v1215
        %v1259 = vadd.f32 %v1205, %v1215
        %v1260 = vadd.f32 %v1206, %v1215
        %v1261 = vadd.f32 %v1207, %v1215
        %v1262 = vadd.f32 %v1208, %v1215
        %v1263 = vadd.f32 %v1209, %v1215
        %v1264 = vadd.f32 %v1210, %v1215
        %v1265 = vpack.c.bf16 %v1218, %v1217
        %v1266 = vpack.c.bf16 %v1220, %v1219
        %v1267 = vpack.c.bf16 %v1222, %v1221
        %v1268 = vpack.c.bf16 %v1224, %v1223
        %v1269 = vpack.c.bf16 %v1226, %v1225
        %v1270 = vpack.c.bf16 %v1228, %v1227
        %v1271 = vpack.c.bf16 %v1230, %v1229
        %v1272 = vpack.c.bf16 %v1232, %v1231
        %v1273 = vpack.c.bf16 %v1234, %v1233
        %v1274 = vpack.c.bf16 %v1236, %v1235
        %v1275 = vpack.c.bf16 %v1238, %v1237
        %v1276 = vpack.c.bf16 %v1240, %v1239
        %v1277 = vpack.c.bf16 %v1242, %v1241
        %v1278 = vpack.c.bf16 %v1244, %v1243
        %v1279 = vpack.c.bf16 %v1246, %v1245
        %v1280 = vpack.c.bf16 %v1248, %v1247
        %v1281 = vpack.c.bf16 %v1250, %v1249
        %v1282 = vpack.c.bf16 %v1252, %v1251
        %v1283 = vpack.c.bf16 %v1254, %v1253
        %v1284 = vpack.c.bf16 %v1256, %v1255
        %v1285 = vpack.c.bf16 %v1258, %v1257
        %v1286 = vpack.c.bf16 %v1260, %v1259
        %v1287 = vpack.c.bf16 %v1262, %v1261
        %v1288 = vpack.c.bf16 %v1264, %v1263
        %v1289 = vld [vmem:[#allocation11] sm:$0xff]
        %v1290 = vld [vmem:[#allocation11 + $0x8] sm:$0xff]
        %v1291 = vld [vmem:[#allocation11 + $0x10] sm:$0xff]
        %v1292 = vld [vmem:[#allocation11 + $0x18] sm:$0xff]
        %v1293 = vld [vmem:[#allocation11 + $0x20] sm:$0xff]
        %v1294 = vld [vmem:[#allocation11 + $0x28] sm:$0xff]
        %v1295 = vld [vmem:[#allocation11 + $0x30] sm:$0xff]
        %v1296 = vld [vmem:[#allocation11 + $0x38] sm:$0xff]
        %v1297 = vld [vmem:[#allocation11 + $0x40] sm:$0xff]
        %v1298 = vld [vmem:[#allocation11 + $0x48] sm:$0xff]
        %v1299 = vld [vmem:[#allocation11 + $0x50] sm:$0xff]
        %v1300 = vld [vmem:[#allocation11 + $0x58] sm:$0xff]
        %v1301 = vld [vmem:[#allocation11 + $0x60] sm:$0xff]
        %v1302 = vld [vmem:[#allocation11 + $0x68] sm:$0xff]
        %v1303 = vld [vmem:[#allocation11 + $0x70] sm:$0xff]
        %v1304 = vld [vmem:[#allocation11 + $0x78] sm:$0xff]
        %v1305 = vld [vmem:[#allocation11 + $0x80] sm:$0xff]
        %v1306 = vld [vmem:[#allocation11 + $0x88] sm:$0xff]
        %v1307 = vld [vmem:[#allocation11 + $0x90] sm:$0xff]
        %v1308 = vld [vmem:[#allocation11 + $0x98] sm:$0xff]
        %v1309 = vld [vmem:[#allocation11 + $0xa0] sm:$0xff]
        %v1310 = vld [vmem:[#allocation11 + $0xa8] sm:$0xff]
        %v1311 = vld [vmem:[#allocation11 + $0xb0] sm:$0xff]
        %v1312 = vld [vmem:[#allocation11 + $0xb8] sm:$0xff]
        %v1313 = vld [vmem:[#allocation11 + $0xc0] sm:$0xff]
        %v1314 = vld [vmem:[#allocation11 + $0xc8] sm:$0xff]
        %v1315 = vld [vmem:[#allocation11 + $0xd0] sm:$0xff]
        %v1316 = vld [vmem:[#allocation11 + $0xd8] sm:$0xff]
        %v1317 = vld [vmem:[#allocation11 + $0xe0] sm:$0xff]
        %v1318 = vld [vmem:[#allocation11 + $0xe8] sm:$0xff]
        %v1319 = vld [vmem:[#allocation11 + $0xf0] sm:$0xff]
        %v1320 = vld [vmem:[#allocation11 + $0xf8] sm:$0xff]
        %v1353 = vunpack.c.l.b16 %v1289
        %v1354 = vunpack.c.h.b16 %v1289
        %v1355 = vunpack.c.l.b16 %v1290
        %v1356 = vunpack.c.h.b16 %v1290
        %v1357 = vunpack.c.l.b16 %v1291
        %v1358 = vunpack.c.h.b16 %v1291
        %v1359 = vunpack.c.l.b16 %v1292
        %v1360 = vunpack.c.h.b16 %v1292
        %v1361 = vunpack.c.l.b16 %v1293
        %v1362 = vunpack.c.h.b16 %v1293
        %v1363 = vunpack.c.l.b16 %v1294
        %v1364 = vunpack.c.h.b16 %v1294
        %v1365 = vunpack.c.l.b16 %v1295
        %v1366 = vunpack.c.h.b16 %v1295
        %v1367 = vunpack.c.l.b16 %v1296
        %v1368 = vunpack.c.h.b16 %v1296
        %v1369 = vunpack.c.l.b16 %v1297
        %v1370 = vunpack.c.h.b16 %v1297
        %v1371 = vunpack.c.l.b16 %v1298
        %v1372 = vunpack.c.h.b16 %v1298
        %v1373 = vunpack.c.l.b16 %v1299
        %v1374 = vunpack.c.h.b16 %v1299
        %v1375 = vunpack.c.l.b16 %v1300
        %v1376 = vunpack.c.h.b16 %v1300
        %v1377 = vunpack.c.l.b16 %v1301
        %v1378 = vunpack.c.h.b16 %v1301
        %v1379 = vunpack.c.l.b16 %v1302
        %v1380 = vunpack.c.h.b16 %v1302
        %v1381 = vunpack.c.l.b16 %v1303
        %v1382 = vunpack.c.h.b16 %v1303
        %v1383 = vunpack.c.l.b16 %v1304
        %v1384 = vunpack.c.h.b16 %v1304
        %v1385 = vunpack.c.l.b16 %v1305
        %v1386 = vunpack.c.h.b16 %v1305
        %v1387 = vunpack.c.l.b16 %v1306
        %v1388 = vunpack.c.h.b16 %v1306
        %v1389 = vunpack.c.l.b16 %v1307
        %v1390 = vunpack.c.h.b16 %v1307
        %v1391 = vunpack.c.l.b16 %v1308
        %v1392 = vunpack.c.h.b16 %v1308
        %v1393 = vunpack.c.l.b16 %v1309
        %v1394 = vunpack.c.h.b16 %v1309
        %v1395 = vunpack.c.l.b16 %v1310
        %v1396 = vunpack.c.h.b16 %v1310
        %v1397 = vunpack.c.l.b16 %v1311
        %v1398 = vunpack.c.h.b16 %v1311
        %v1399 = vunpack.c.l.b16 %v1312
        %v1400 = vunpack.c.h.b16 %v1312
        %v1401 = vunpack.c.l.b16 %v1313
        %v1402 = vunpack.c.h.b16 %v1313
        %v1403 = vunpack.c.l.b16 %v1314
        %v1404 = vunpack.c.h.b16 %v1314
        %v1405 = vunpack.c.l.b16 %v1315
        %v1406 = vunpack.c.h.b16 %v1315
        %v1407 = vunpack.c.l.b16 %v1316
        %v1408 = vunpack.c.h.b16 %v1316
        %v1409 = vunpack.c.l.b16 %v1317
        %v1410 = vunpack.c.h.b16 %v1317
        %v1411 = vunpack.c.l.b16 %v1318
        %v1412 = vunpack.c.h.b16 %v1318
        %v1413 = vunpack.c.l.b16 %v1319
        %v1414 = vunpack.c.h.b16 %v1319
        %v1415 = vunpack.c.l.b16 %v1320
        %v1416 = vunpack.c.h.b16 %v1320
        %v1417 = vpack.c.b16 %v1357, %v1353
        %v1418 = vpack.c.b16 %v1358, %v1354
        %v1419 = vpack.c.b16 %v1359, %v1355
        %v1420 = vpack.c.b16 %v1360, %v1356
        %v1421 = vpack.c.b16 %v1365, %v1361
        %v1422 = vpack.c.b16 %v1366, %v1362
        %v1423 = vpack.c.b16 %v1367, %v1363
        %v1424 = vpack.c.b16 %v1368, %v1364
        %v1425 = vpack.c.b16 %v1373, %v1369
        %v1426 = vpack.c.b16 %v1374, %v1370
        %v1427 = vpack.c.b16 %v1375, %v1371
        %v1428 = vpack.c.b16 %v1376, %v1372
        %v1429 = vpack.c.b16 %v1381, %v1377
        %v1430 = vpack.c.b16 %v1382, %v1378
        %v1431 = vpack.c.b16 %v1383, %v1379
        %v1432 = vpack.c.b16 %v1384, %v1380
        %v1433 = vpack.c.b16 %v1389, %v1385
        %v1434 = vpack.c.b16 %v1390, %v1386
        %v1435 = vpack.c.b16 %v1391, %v1387
        %v1436 = vpack.c.b16 %v1392, %v1388
        %v1437 = vpack.c.b16 %v1397, %v1393
        %v1438 = vpack.c.b16 %v1398, %v1394
        %v1439 = vpack.c.b16 %v1399, %v1395
        %v1440 = vpack.c.b16 %v1400, %v1396
        %v1441 = vpack.c.b16 %v1405, %v1401
        %v1442 = vpack.c.b16 %v1406, %v1402
        %v1443 = vpack.c.b16 %v1407, %v1403
        %v1444 = vpack.c.b16 %v1408, %v1404
        %v1445 = vpack.c.b16 %v1413, %v1409
        %v1446 = vpack.c.b16 %v1414, %v1410
        %v1447 = vpack.c.b16 %v1415, %v1411
        %v1448 = vpack.c.b16 %v1416, %v1412
        %1481 = vmatprep.subr.bf16.mxu0 %v1446
        %1482 = vmatpush1.bf16.msra.mxu0 %v1445
        %1483 = vmatprep.subr.bf16.mxu0 %v1442
        %1484 = vmatpush1.bf16.msra.mxu0 %v1441
        %1485 = vmatprep.subr.bf16.mxu0 %v1438
        %1486 = vmatpush1.bf16.msra.mxu0 %v1437
        %1487 = vmatprep.subr.bf16.mxu0 %v1434
        %1488 = vmatpush1.bf16.msra.mxu0 %v1433
        %1489 = vmatprep.subr.bf16.mxu0 %v1430
        %1490 = vmatpush1.bf16.msra.mxu0 %v1429
        %1491 = vmatprep.subr.bf16.mxu0 %v1426
        %1492 = vmatpush1.bf16.msra.mxu0 %v1425
        %1493 = vmatprep.subr.bf16.mxu0 %v1422
        %1494 = vmatpush1.bf16.msra.mxu0 %v1421
        %1495 = vmatprep.subr.bf16.mxu0 %v1418
        %1496 = vmatpush1.bf16.msra.mxu0 %v1417
        %1497 = vmatprep.subr.bf16.mxu0 0
        %1498 = vmatpush2.bf16.msra.mxu0 0
        %1499 = vmatprep.subr.bf16.mxu0 0
        %1500 = vmatpush2.bf16.msra.mxu0 0
        %1501 = vmatprep.subr.bf16.mxu0 0
        %1502 = vmatpush2.bf16.msra.mxu0 0
        %1503 = vmatprep.subr.bf16.mxu0 0
        %1504 = vmatpush2.bf16.msra.mxu0 0
        %1505 = vmatprep.subr.bf16.mxu0 0
        %1506 = vmatpush2.bf16.msra.mxu0 0
        %1507 = vmatprep.subr.bf16.mxu0 0
        %1508 = vmatpush2.bf16.msra.mxu0 0
        %1509 = vmatprep.subr.bf16.mxu0 0
        %1510 = vmatpush2.bf16.msra.mxu0 0
        %1511 = vmatprep.subr.bf16.mxu0 0
        %1512 = vmatpush2.bf16.msra.mxu0 0
        %1513 = vmatprep.mubr.bf16.mxu0 0
        %1514 = vmatmul.mubr.bf16.gmra.mxu0 %v1265
        %v1515 = vpop.f32.mrf.mxu0
        %v1516 = vadd.f32 0.0, %v1515
        %v1517 = vpop.f32.mrf.mxu0
        %v1518 = vadd.f32 0.0, %v1517
        %v1519 = vpop.f32.mrf.mxu0
        %v1520 = vadd.f32 0.0, %v1519
        %v1521 = vpop.f32.mrf.mxu0
        %v1522 = vadd.f32 0.0, %v1521
        %1523 = vmatprep.mubr.bf16.mxu0 0
        %1524 = vmatmul.mubr.bf16.gmra.mxu0 %v1266
        %v1525 = vpop.f32.mrf.mxu0
        %v1526 = vadd.f32 0.0, %v1525
        %v1527 = vpop.f32.mrf.mxu0
        %v1528 = vadd.f32 0.0, %v1527
        %v1529 = vpop.f32.mrf.mxu0
        %v1530 = vadd.f32 0.0, %v1529
        %v1531 = vpop.f32.mrf.mxu0
        %v1532 = vadd.f32 0.0, %v1531
        %1533 = vmatprep.mubr.bf16.mxu0 0
        %1534 = vmatmul.mubr.bf16.gmra.mxu0 %v1267
        %v1535 = vpop.f32.mrf.mxu0
        %v1536 = vadd.f32 0.0, %v1535
        %v1537 = vpop.f32.mrf.mxu0
        %v1538 = vadd.f32 0.0, %v1537
        %v1539 = vpop.f32.mrf.mxu0
        %v1540 = vadd.f32 0.0, %v1539
        %v1541 = vpop.f32.mrf.mxu0
        %v1542 = vadd.f32 0.0, %v1541
        %1543 = vmatprep.mubr.bf16.mxu0 0
        %1544 = vmatmul.mubr.bf16.gmra.mxu0 %v1268
        %v1545 = vpop.f32.mrf.mxu0
        %v1546 = vadd.f32 0.0, %v1545
        %v1547 = vpop.f32.mrf.mxu0
        %v1548 = vadd.f32 0.0, %v1547
        %v1549 = vpop.f32.mrf.mxu0
        %v1550 = vadd.f32 0.0, %v1549
        %v1551 = vpop.f32.mrf.mxu0
        %v1552 = vadd.f32 0.0, %v1551
        %1553 = vmatprep.mubr.bf16.mxu0 0
        %1554 = vmatmul.mubr.bf16.gmra.mxu0 %v1269
        %v1555 = vpop.f32.mrf.mxu0
        %v1556 = vadd.f32 0.0, %v1555
        %v1557 = vpop.f32.mrf.mxu0
        %v1558 = vadd.f32 0.0, %v1557
        %v1559 = vpop.f32.mrf.mxu0
        %v1560 = vadd.f32 0.0, %v1559
        %v1561 = vpop.f32.mrf.mxu0
        %v1562 = vadd.f32 0.0, %v1561
        %1563 = vmatprep.mubr.bf16.mxu0 0
        %1564 = vmatmul.mubr.bf16.gmra.mxu0 %v1270
        %v1565 = vpop.f32.mrf.mxu0
        %v1566 = vadd.f32 0.0, %v1565
        %v1567 = vpop.f32.mrf.mxu0
        %v1568 = vadd.f32 0.0, %v1567
        %v1569 = vpop.f32.mrf.mxu0
        %v1570 = vadd.f32 0.0, %v1569
        %v1571 = vpop.f32.mrf.mxu0
        %v1572 = vadd.f32 0.0, %v1571
        %1573 = vmatprep.mubr.bf16.mxu0 0
        %1574 = vmatmul.mubr.bf16.gmra.mxu0 %v1271
        %v1575 = vpop.f32.mrf.mxu0
        %v1576 = vadd.f32 0.0, %v1575
        %v1577 = vpop.f32.mrf.mxu0
        %v1578 = vadd.f32 0.0, %v1577
        %v1579 = vpop.f32.mrf.mxu0
        %v1580 = vadd.f32 0.0, %v1579
        %v1581 = vpop.f32.mrf.mxu0
        %v1582 = vadd.f32 0.0, %v1581
        %1583 = vmatprep.mubr.bf16.mxu0 0
        %1584 = vmatmul.mubr.bf16.gmra.mxu0 %v1272
        %v1585 = vpop.f32.mrf.mxu0
        %v1586 = vadd.f32 0.0, %v1585
        %v1587 = vpop.f32.mrf.mxu0
        %v1588 = vadd.f32 0.0, %v1587
        %v1589 = vpop.f32.mrf.mxu0
        %v1590 = vadd.f32 0.0, %v1589
        %v1591 = vpop.f32.mrf.mxu0
        %v1592 = vadd.f32 0.0, %v1591
        %1593 = vmatprep.mubr.bf16.mxu0 0
        %1594 = vmatmul.mubr.bf16.gmra.mxu0 %v1273
        %v1595 = vpop.f32.mrf.mxu0
        %v1596 = vadd.f32 0.0, %v1595
        %v1597 = vpop.f32.mrf.mxu0
        %v1598 = vadd.f32 0.0, %v1597
        %v1599 = vpop.f32.mrf.mxu0
        %v1600 = vadd.f32 0.0, %v1599
        %v1601 = vpop.f32.mrf.mxu0
        %v1602 = vadd.f32 0.0, %v1601
        %1603 = vmatprep.mubr.bf16.mxu0 0
        %1604 = vmatmul.mubr.bf16.gmra.mxu0 %v1274
        %v1605 = vpop.f32.mrf.mxu0
        %v1606 = vadd.f32 0.0, %v1605
        %v1607 = vpop.f32.mrf.mxu0
        %v1608 = vadd.f32 0.0, %v1607
        %v1609 = vpop.f32.mrf.mxu0
        %v1610 = vadd.f32 0.0, %v1609
        %v1611 = vpop.f32.mrf.mxu0
        %v1612 = vadd.f32 0.0, %v1611
        %1613 = vmatprep.mubr.bf16.mxu0 0
        %1614 = vmatmul.mubr.bf16.gmra.mxu0 %v1275
        %v1615 = vpop.f32.mrf.mxu0
        %v1616 = vadd.f32 0.0, %v1615
        %v1617 = vpop.f32.mrf.mxu0
        %v1618 = vadd.f32 0.0, %v1617
        %v1619 = vpop.f32.mrf.mxu0
        %v1620 = vadd.f32 0.0, %v1619
        %v1621 = vpop.f32.mrf.mxu0
        %v1622 = vadd.f32 0.0, %v1621
        %1623 = vmatprep.mubr.bf16.mxu0 0
        %1624 = vmatmul.mubr.bf16.gmra.mxu0 %v1276
        %v1625 = vpop.f32.mrf.mxu0
        %v1626 = vadd.f32 0.0, %v1625
        %v1627 = vpop.f32.mrf.mxu0
        %v1628 = vadd.f32 0.0, %v1627
        %v1629 = vpop.f32.mrf.mxu0
        %v1630 = vadd.f32 0.0, %v1629
        %v1631 = vpop.f32.mrf.mxu0
        %v1632 = vadd.f32 0.0, %v1631
        %1633 = vmatprep.mubr.bf16.mxu0 0
        %1634 = vmatmul.mubr.bf16.gmra.mxu0 %v1277
        %v1635 = vpop.f32.mrf.mxu0
        %v1636 = vadd.f32 0.0, %v1635
        %v1637 = vpop.f32.mrf.mxu0
        %v1638 = vadd.f32 0.0, %v1637
        %v1639 = vpop.f32.mrf.mxu0
        %v1640 = vadd.f32 0.0, %v1639
        %v1641 = vpop.f32.mrf.mxu0
        %v1642 = vadd.f32 0.0, %v1641
        %1643 = vmatprep.mubr.bf16.mxu0 0
        %1644 = vmatmul.mubr.bf16.gmra.mxu0 %v1278
        %v1645 = vpop.f32.mrf.mxu0
        %v1646 = vadd.f32 0.0, %v1645
        %v1647 = vpop.f32.mrf.mxu0
        %v1648 = vadd.f32 0.0, %v1647
        %v1649 = vpop.f32.mrf.mxu0
        %v1650 = vadd.f32 0.0, %v1649
        %v1651 = vpop.f32.mrf.mxu0
        %v1652 = vadd.f32 0.0, %v1651
        %1653 = vmatprep.mubr.bf16.mxu0 0
        %1654 = vmatmul.mubr.bf16.gmra.mxu0 %v1279
        %v1655 = vpop.f32.mrf.mxu0
        %v1656 = vadd.f32 0.0, %v1655
        %v1657 = vpop.f32.mrf.mxu0
        %v1658 = vadd.f32 0.0, %v1657
        %v1659 = vpop.f32.mrf.mxu0
        %v1660 = vadd.f32 0.0, %v1659
        %v1661 = vpop.f32.mrf.mxu0
        %v1662 = vadd.f32 0.0, %v1661
        %1663 = vmatprep.mubr.bf16.mxu0 0
        %1664 = vmatmul.mubr.bf16.gmra.mxu0 %v1280
        %v1665 = vpop.f32.mrf.mxu0
        %v1666 = vadd.f32 0.0, %v1665
        %v1667 = vpop.f32.mrf.mxu0
        %v1668 = vadd.f32 0.0, %v1667
        %v1669 = vpop.f32.mrf.mxu0
        %v1670 = vadd.f32 0.0, %v1669
        %v1671 = vpop.f32.mrf.mxu0
        %v1672 = vadd.f32 0.0, %v1671
        %1673 = vmatprep.mubr.bf16.mxu0 0
        %1674 = vmatmul.mubr.bf16.gmra.mxu0 %v1281
        %v1675 = vpop.f32.mrf.mxu0
        %v1676 = vadd.f32 0.0, %v1675
        %v1677 = vpop.f32.mrf.mxu0
        %v1678 = vadd.f32 0.0, %v1677
        %v1679 = vpop.f32.mrf.mxu0
        %v1680 = vadd.f32 0.0, %v1679
        %v1681 = vpop.f32.mrf.mxu0
        %v1682 = vadd.f32 0.0, %v1681
        %1683 = vmatprep.mubr.bf16.mxu0 0
        %1684 = vmatmul.mubr.bf16.gmra.mxu0 %v1282
        %v1685 = vpop.f32.mrf.mxu0
        %v1686 = vadd.f32 0.0, %v1685
        %v1687 = vpop.f32.mrf.mxu0
        %v1688 = vadd.f32 0.0, %v1687
        %v1689 = vpop.f32.mrf.mxu0
        %v1690 = vadd.f32 0.0, %v1689
        %v1691 = vpop.f32.mrf.mxu0
        %v1692 = vadd.f32 0.0, %v1691
        %1693 = vmatprep.mubr.bf16.mxu0 0
        %1694 = vmatmul.mubr.bf16.gmra.mxu0 %v1283
        %v1695 = vpop.f32.mrf.mxu0
        %v1696 = vadd.f32 0.0, %v1695
        %v1697 = vpop.f32.mrf.mxu0
        %v1698 = vadd.f32 0.0, %v1697
        %v1699 = vpop.f32.mrf.mxu0
        %v1700 = vadd.f32 0.0, %v1699
        %v1701 = vpop.f32.mrf.mxu0
        %v1702 = vadd.f32 0.0, %v1701
        %1703 = vmatprep.mubr.bf16.mxu0 0
        %1704 = vmatmul.mubr.bf16.gmra.mxu0 %v1284
        %v1705 = vpop.f32.mrf.mxu0
        %v1706 = vadd.f32 0.0, %v1705
        %v1707 = vpop.f32.mrf.mxu0
        %v1708 = vadd.f32 0.0, %v1707
        %v1709 = vpop.f32.mrf.mxu0
        %v1710 = vadd.f32 0.0, %v1709
        %v1711 = vpop.f32.mrf.mxu0
        %v1712 = vadd.f32 0.0, %v1711
        %1713 = vmatprep.mubr.bf16.mxu0 0
        %1714 = vmatmul.mubr.bf16.gmra.mxu0 %v1285
        %v1715 = vpop.f32.mrf.mxu0
        %v1716 = vadd.f32 0.0, %v1715
        %v1717 = vpop.f32.mrf.mxu0
        %v1718 = vadd.f32 0.0, %v1717
        %v1719 = vpop.f32.mrf.mxu0
        %v1720 = vadd.f32 0.0, %v1719
        %v1721 = vpop.f32.mrf.mxu0
        %v1722 = vadd.f32 0.0, %v1721
        %1723 = vmatprep.mubr.bf16.mxu0 0
        %1724 = vmatmul.mubr.bf16.gmra.mxu0 %v1286
        %v1725 = vpop.f32.mrf.mxu0
        %v1726 = vadd.f32 0.0, %v1725
        %v1727 = vpop.f32.mrf.mxu0
        %v1728 = vadd.f32 0.0, %v1727
        %v1729 = vpop.f32.mrf.mxu0
        %v1730 = vadd.f32 0.0, %v1729
        %v1731 = vpop.f32.mrf.mxu0
        %v1732 = vadd.f32 0.0, %v1731
        %1733 = vmatprep.mubr.bf16.mxu0 0
        %1734 = vmatmul.mubr.bf16.gmra.mxu0 %v1287
        %v1735 = vpop.f32.mrf.mxu0
        %v1736 = vadd.f32 0.0, %v1735
        %v1737 = vpop.f32.mrf.mxu0
        %v1738 = vadd.f32 0.0, %v1737
        %v1739 = vpop.f32.mrf.mxu0
        %v1740 = vadd.f32 0.0, %v1739
        %v1741 = vpop.f32.mrf.mxu0
        %v1742 = vadd.f32 0.0, %v1741
        %1743 = vmatprep.mubr.bf16.mxu0 0
        %1744 = vmatmul.mubr.bf16.gmra.mxu0 %v1288
        %v1745 = vpop.f32.mrf.mxu0
        %v1746 = vadd.f32 0.0, %v1745
        %v1747 = vpop.f32.mrf.mxu0
        %v1748 = vadd.f32 0.0, %v1747
        %v1749 = vpop.f32.mrf.mxu0
        %v1750 = vadd.f32 0.0, %v1749
        %v1751 = vpop.f32.mrf.mxu0
        %v1752 = vadd.f32 0.0, %v1751
        %1753 = vdwg.mxu0
        %1754 = vmatprep.subr.bf16.mxu0 %v1448
        %1755 = vmatpush1.bf16.msra.mxu0 %v1447
        %1756 = vmatprep.subr.bf16.mxu0 %v1444
        %1757 = vmatpush1.bf16.msra.mxu0 %v1443
        %1758 = vmatprep.subr.bf16.mxu0 %v1440
        %1759 = vmatpush1.bf16.msra.mxu0 %v1439
        %1760 = vmatprep.subr.bf16.mxu0 %v1436
        %1761 = vmatpush1.bf16.msra.mxu0 %v1435
        %1762 = vmatprep.subr.bf16.mxu0 %v1432
        %1763 = vmatpush1.bf16.msra.mxu0 %v1431
        %1764 = vmatprep.subr.bf16.mxu0 %v1428
        %1765 = vmatpush1.bf16.msra.mxu0 %v1427
        %1766 = vmatprep.subr.bf16.mxu0 %v1424
        %1767 = vmatpush1.bf16.msra.mxu0 %v1423
        %1768 = vmatprep.subr.bf16.mxu0 %v1420
        %1769 = vmatpush1.bf16.msra.mxu0 %v1419
        %1770 = vmatprep.subr.bf16.mxu0 0
        %1771 = vmatpush2.bf16.msra.mxu0 0
        %1772 = vmatprep.subr.bf16.mxu0 0
        %1773 = vmatpush2.bf16.msra.mxu0 0
        %1774 = vmatprep.subr.bf16.mxu0 0
        %1775 = vmatpush2.bf16.msra.mxu0 0
        %1776 = vmatprep.subr.bf16.mxu0 0
        %1777 = vmatpush2.bf16.msra.mxu0 0
        %1778 = vmatprep.subr.bf16.mxu0 0
        %1779 = vmatpush2.bf16.msra.mxu0 0
        %1780 = vmatprep.subr.bf16.mxu0 0
        %1781 = vmatpush2.bf16.msra.mxu0 0
        %1782 = vmatprep.subr.bf16.mxu0 0
        %1783 = vmatpush2.bf16.msra.mxu0 0
        %1784 = vmatprep.subr.bf16.mxu0 0
        %1785 = vmatpush2.bf16.msra.mxu0 0
        %1786 = vmatprep.mubr.bf16.mxu0 0
        %1787 = vmatmul.mubr.bf16.gmra.mxu0 %v1265
        %v1788 = vpop.f32.mrf.mxu0
        %v1789 = vadd.f32 0.0, %v1788
        %v1790 = vpop.f32.mrf.mxu0
        %v1791 = vadd.f32 0.0, %v1790
        %v1792 = vpop.f32.mrf.mxu0
        %v1793 = vadd.f32 0.0, %v1792
        %v1794 = vpop.f32.mrf.mxu0
        %v1795 = vadd.f32 0.0, %v1794
        %1796 = vmatprep.mubr.bf16.mxu0 0
        %1797 = vmatmul.mubr.bf16.gmra.mxu0 %v1266
        %v1798 = vpop.f32.mrf.mxu0
        %v1799 = vadd.f32 0.0, %v1798
        %v1800 = vpop.f32.mrf.mxu0
        %v1801 = vadd.f32 0.0, %v1800
        %v1802 = vpop.f32.mrf.mxu0
        %v1803 = vadd.f32 0.0, %v1802
        %v1804 = vpop.f32.mrf.mxu0
        %v1805 = vadd.f32 0.0, %v1804
        %1806 = vmatprep.mubr.bf16.mxu0 0
        %1807 = vmatmul.mubr.bf16.gmra.mxu0 %v1267
        %v1808 = vpop.f32.mrf.mxu0
        %v1809 = vadd.f32 0.0, %v1808
        %v1810 = vpop.f32.mrf.mxu0
        %v1811 = vadd.f32 0.0, %v1810
        %v1812 = vpop.f32.mrf.mxu0
        %v1813 = vadd.f32 0.0, %v1812
        %v1814 = vpop.f32.mrf.mxu0
        %v1815 = vadd.f32 0.0, %v1814
        %1816 = vmatprep.mubr.bf16.mxu0 0
        %1817 = vmatmul.mubr.bf16.gmra.mxu0 %v1268
        %v1818 = vpop.f32.mrf.mxu0
        %v1819 = vadd.f32 0.0, %v1818
        %v1820 = vpop.f32.mrf.mxu0
        %v1821 = vadd.f32 0.0, %v1820
        %v1822 = vpop.f32.mrf.mxu0
        %v1823 = vadd.f32 0.0, %v1822
        %v1824 = vpop.f32.mrf.mxu0
        %v1825 = vadd.f32 0.0, %v1824
        %1826 = vmatprep.mubr.bf16.mxu0 0
        %1827 = vmatmul.mubr.bf16.gmra.mxu0 %v1269
        %v1828 = vpop.f32.mrf.mxu0
        %v1829 = vadd.f32 0.0, %v1828
        %v1830 = vpop.f32.mrf.mxu0
        %v1831 = vadd.f32 0.0, %v1830
        %v1832 = vpop.f32.mrf.mxu0
        %v1833 = vadd.f32 0.0, %v1832
        %v1834 = vpop.f32.mrf.mxu0
        %v1835 = vadd.f32 0.0, %v1834
        %1836 = vmatprep.mubr.bf16.mxu0 0
        %1837 = vmatmul.mubr.bf16.gmra.mxu0 %v1270
        %v1838 = vpop.f32.mrf.mxu0
        %v1839 = vadd.f32 0.0, %v1838
        %v1840 = vpop.f32.mrf.mxu0
        %v1841 = vadd.f32 0.0, %v1840
        %v1842 = vpop.f32.mrf.mxu0
        %v1843 = vadd.f32 0.0, %v1842
        %v1844 = vpop.f32.mrf.mxu0
        %v1845 = vadd.f32 0.0, %v1844
        %1846 = vmatprep.mubr.bf16.mxu0 0
        %1847 = vmatmul.mubr.bf16.gmra.mxu0 %v1271
        %v1848 = vpop.f32.mrf.mxu0
        %v1849 = vadd.f32 0.0, %v1848
        %v1850 = vpop.f32.mrf.mxu0
        %v1851 = vadd.f32 0.0, %v1850
        %v1852 = vpop.f32.mrf.mxu0
        %v1853 = vadd.f32 0.0, %v1852
        %v1854 = vpop.f32.mrf.mxu0
        %v1855 = vadd.f32 0.0, %v1854
        %1856 = vmatprep.mubr.bf16.mxu0 0
        %1857 = vmatmul.mubr.bf16.gmra.mxu0 %v1272
        %v1858 = vpop.f32.mrf.mxu0
        %v1859 = vadd.f32 0.0, %v1858
        %v1860 = vpop.f32.mrf.mxu0
        %v1861 = vadd.f32 0.0, %v1860
        %v1862 = vpop.f32.mrf.mxu0
        %v1863 = vadd.f32 0.0, %v1862
        %v1864 = vpop.f32.mrf.mxu0
        %v1865 = vadd.f32 0.0, %v1864
        %1866 = vmatprep.mubr.bf16.mxu0 0
        %1867 = vmatmul.mubr.bf16.gmra.mxu0 %v1273
        %v1868 = vpop.f32.mrf.mxu0
        %v1869 = vadd.f32 0.0, %v1868
        %v1870 = vpop.f32.mrf.mxu0
        %v1871 = vadd.f32 0.0, %v1870
        %v1872 = vpop.f32.mrf.mxu0
        %v1873 = vadd.f32 0.0, %v1872
        %v1874 = vpop.f32.mrf.mxu0
        %v1875 = vadd.f32 0.0, %v1874
        %1876 = vmatprep.mubr.bf16.mxu0 0
        %1877 = vmatmul.mubr.bf16.gmra.mxu0 %v1274
        %v1878 = vpop.f32.mrf.mxu0
        %v1879 = vadd.f32 0.0, %v1878
        %v1880 = vpop.f32.mrf.mxu0
        %v1881 = vadd.f32 0.0, %v1880
        %v1882 = vpop.f32.mrf.mxu0
        %v1883 = vadd.f32 0.0, %v1882
        %v1884 = vpop.f32.mrf.mxu0
        %v1885 = vadd.f32 0.0, %v1884
        %1886 = vmatprep.mubr.bf16.mxu0 0
        %1887 = vmatmul.mubr.bf16.gmra.mxu0 %v1275
        %v1888 = vpop.f32.mrf.mxu0
        %v1889 = vadd.f32 0.0, %v1888
        %v1890 = vpop.f32.mrf.mxu0
        %v1891 = vadd.f32 0.0, %v1890
        %v1892 = vpop.f32.mrf.mxu0
        %v1893 = vadd.f32 0.0, %v1892
        %v1894 = vpop.f32.mrf.mxu0
        %v1895 = vadd.f32 0.0, %v1894
        %1896 = vmatprep.mubr.bf16.mxu0 0
        %1897 = vmatmul.mubr.bf16.gmra.mxu0 %v1276
        %v1898 = vpop.f32.mrf.mxu0
        %v1899 = vadd.f32 0.0, %v1898
        %v1900 = vpop.f32.mrf.mxu0
        %v1901 = vadd.f32 0.0, %v1900
        %v1902 = vpop.f32.mrf.mxu0
        %v1903 = vadd.f32 0.0, %v1902
        %v1904 = vpop.f32.mrf.mxu0
        %v1905 = vadd.f32 0.0, %v1904
        %1906 = vmatprep.mubr.bf16.mxu0 0
        %1907 = vmatmul.mubr.bf16.gmra.mxu0 %v1277
        %v1908 = vpop.f32.mrf.mxu0
        %v1909 = vadd.f32 0.0, %v1908
        %v1910 = vpop.f32.mrf.mxu0
        %v1911 = vadd.f32 0.0, %v1910
        %v1912 = vpop.f32.mrf.mxu0
        %v1913 = vadd.f32 0.0, %v1912
        %v1914 = vpop.f32.mrf.mxu0
        %v1915 = vadd.f32 0.0, %v1914
        %1916 = vmatprep.mubr.bf16.mxu0 0
        %1917 = vmatmul.mubr.bf16.gmra.mxu0 %v1278
        %v1918 = vpop.f32.mrf.mxu0
        %v1919 = vadd.f32 0.0, %v1918
        %v1920 = vpop.f32.mrf.mxu0
        %v1921 = vadd.f32 0.0, %v1920
        %v1922 = vpop.f32.mrf.mxu0
        %v1923 = vadd.f32 0.0, %v1922
        %v1924 = vpop.f32.mrf.mxu0
        %v1925 = vadd.f32 0.0, %v1924
        %1926 = vmatprep.mubr.bf16.mxu0 0
        %1927 = vmatmul.mubr.bf16.gmra.mxu0 %v1279
        %v1928 = vpop.f32.mrf.mxu0
        %v1929 = vadd.f32 0.0, %v1928
        %v1930 = vpop.f32.mrf.mxu0
        %v1931 = vadd.f32 0.0, %v1930
        %v1932 = vpop.f32.mrf.mxu0
        %v1933 = vadd.f32 0.0, %v1932
        %v1934 = vpop.f32.mrf.mxu0
        %v1935 = vadd.f32 0.0, %v1934
        %1936 = vmatprep.mubr.bf16.mxu0 0
        %1937 = vmatmul.mubr.bf16.gmra.mxu0 %v1280
        %v1938 = vpop.f32.mrf.mxu0
        %v1939 = vadd.f32 0.0, %v1938
        %v1940 = vpop.f32.mrf.mxu0
        %v1941 = vadd.f32 0.0, %v1940
        %v1942 = vpop.f32.mrf.mxu0
        %v1943 = vadd.f32 0.0, %v1942
        %v1944 = vpop.f32.mrf.mxu0
        %v1945 = vadd.f32 0.0, %v1944
        %1946 = vmatprep.mubr.bf16.mxu0 0
        %1947 = vmatmul.mubr.bf16.gmra.mxu0 %v1281
        %v1948 = vpop.f32.mrf.mxu0
        %v1949 = vadd.f32 0.0, %v1948
        %v1950 = vpop.f32.mrf.mxu0
        %v1951 = vadd.f32 0.0, %v1950
        %v1952 = vpop.f32.mrf.mxu0
        %v1953 = vadd.f32 0.0, %v1952
        %v1954 = vpop.f32.mrf.mxu0
        %v1955 = vadd.f32 0.0, %v1954
        %1956 = vmatprep.mubr.bf16.mxu0 0
        %1957 = vmatmul.mubr.bf16.gmra.mxu0 %v1282
        %v1958 = vpop.f32.mrf.mxu0
        %v1959 = vadd.f32 0.0, %v1958
        %v1960 = vpop.f32.mrf.mxu0
        %v1961 = vadd.f32 0.0, %v1960
        %v1962 = vpop.f32.mrf.mxu0
        %v1963 = vadd.f32 0.0, %v1962
        %v1964 = vpop.f32.mrf.mxu0
        %v1965 = vadd.f32 0.0, %v1964
        %1966 = vmatprep.mubr.bf16.mxu0 0
        %1967 = vmatmul.mubr.bf16.gmra.mxu0 %v1283
        %v1968 = vpop.f32.mrf.mxu0
        %v1969 = vadd.f32 0.0, %v1968
        %v1970 = vpop.f32.mrf.mxu0
        %v1971 = vadd.f32 0.0, %v1970
        %v1972 = vpop.f32.mrf.mxu0
        %v1973 = vadd.f32 0.0, %v1972
        %v1974 = vpop.f32.mrf.mxu0
        %v1975 = vadd.f32 0.0, %v1974
        %1976 = vmatprep.mubr.bf16.mxu0 0
        %1977 = vmatmul.mubr.bf16.gmra.mxu0 %v1284
        %v1978 = vpop.f32.mrf.mxu0
        %v1979 = vadd.f32 0.0, %v1978
        %v1980 = vpop.f32.mrf.mxu0
        %v1981 = vadd.f32 0.0, %v1980
        %v1982 = vpop.f32.mrf.mxu0
        %v1983 = vadd.f32 0.0, %v1982
        %v1984 = vpop.f32.mrf.mxu0
        %v1985 = vadd.f32 0.0, %v1984
        %1986 = vmatprep.mubr.bf16.mxu0 0
        %1987 = vmatmul.mubr.bf16.gmra.mxu0 %v1285
        %v1988 = vpop.f32.mrf.mxu0
        %v1989 = vadd.f32 0.0, %v1988
        %v1990 = vpop.f32.mrf.mxu0
        %v1991 = vadd.f32 0.0, %v1990
        %v1992 = vpop.f32.mrf.mxu0
        %v1993 = vadd.f32 0.0, %v1992
        %v1994 = vpop.f32.mrf.mxu0
        %v1995 = vadd.f32 0.0, %v1994
        %1996 = vmatprep.mubr.bf16.mxu0 0
        %1997 = vmatmul.mubr.bf16.gmra.mxu0 %v1286
        %v1998 = vpop.f32.mrf.mxu0
        %v1999 = vadd.f32 0.0, %v1998
        %v2000 = vpop.f32.mrf.mxu0
        %v2001 = vadd.f32 0.0, %v2000
        %v2002 = vpop.f32.mrf.mxu0
        %v2003 = vadd.f32 0.0, %v2002
        %v2004 = vpop.f32.mrf.mxu0
        %v2005 = vadd.f32 0.0, %v2004
        %2006 = vmatprep.mubr.bf16.mxu0 0
        %2007 = vmatmul.mubr.bf16.gmra.mxu0 %v1287
        %v2008 = vpop.f32.mrf.mxu0
        %v2009 = vadd.f32 0.0, %v2008
        %v2010 = vpop.f32.mrf.mxu0
        %v2011 = vadd.f32 0.0, %v2010
        %v2012 = vpop.f32.mrf.mxu0
        %v2013 = vadd.f32 0.0, %v2012
        %v2014 = vpop.f32.mrf.mxu0
        %v2015 = vadd.f32 0.0, %v2014
        %2016 = vmatprep.mubr.bf16.mxu0 0
        %2017 = vmatmul.mubr.bf16.gmra.mxu0 %v1288
        %v2018 = vpop.f32.mrf.mxu0
        %v2019 = vadd.f32 0.0, %v2018
        %v2020 = vpop.f32.mrf.mxu0
        %v2021 = vadd.f32 0.0, %v2020
        %v2022 = vpop.f32.mrf.mxu0
        %v2023 = vadd.f32 0.0, %v2022
        %v2024 = vpop.f32.mrf.mxu0
        %v2025 = vadd.f32 0.0, %v2024
        %2026 = vdwg.mxu0
        %v2027 = vld [vmem:[%s492 + $0x7] sm:$0x1]
        %v2028 = vld [vmem:[%s501] sm:$0x1]
        %v2030 = vrot.slane %v2028, 7
        %vm2032 = vcmask 1040384
        %v2033 = vsel %vm2032, %v2027, %v2030
        %vm2034 = vcmask 1041408
        %v2035 = vsel %vm2034, %v2033, 0.0
        %2036 = vadd.xlane.f32.xlu0 %v2035
        %v2037 = vpop.xlane.xlu0 %2036
        %v2038 = vmul.f32 %v2037, 0.0078125
        %v2039 = vsub.f32 %v2033, %v2038
        %v2040 = vmul.f32 %v2039, %v2039
        %v2041 = vsel %vm2034, %v2040, 0.0
        %2042 = vadd.xlane.f32.xlu0 %v2041
        %v2043 = vpop.xlane.xlu0 %2042
        %v2044 = vmul.f32 %v2043, 0.0078125
        %v2045 = vadd.f32 %v2044, 1e-05
        %v2046 = vrsqrt.pop %v2045
        %v2047 = vmul.f32 %v2039, %v2046
        %v2048 = vmul.f32 %v2047, %v1161
        %v2049 = vadd.f32 %v2048, %v1215
        %v2050 = vpack.c.bf16 %v2049, %v2049
        %v2051 = vld [vmem:[#allocation11] sm:$0xff]
        %v2052 = vld [vmem:[#allocation11 + $0x10] sm:$0xff]
        %v2053 = vld [vmem:[#allocation11 + $0x20] sm:$0xff]
        %v2054 = vld [vmem:[#allocation11 + $0x30] sm:$0xff]
        %v2055 = vld [vmem:[#allocation11 + $0x40] sm:$0xff]
        %v2056 = vld [vmem:[#allocation11 + $0x50] sm:$0xff]
        %v2057 = vld [vmem:[#allocation11 + $0x60] sm:$0xff]
        %v2058 = vld [vmem:[#allocation11 + $0x70] sm:$0xff]
        %v2059 = vld [vmem:[#allocation11 + $0x80] sm:$0xff]
        %v2060 = vld [vmem:[#allocation11 + $0x90] sm:$0xff]
        %v2061 = vld [vmem:[#allocation11 + $0xa0] sm:$0xff]
        %v2062 = vld [vmem:[#allocation11 + $0xb0] sm:$0xff]
        %v2063 = vld [vmem:[#allocation11 + $0xc0] sm:$0xff]
        %v2064 = vld [vmem:[#allocation11 + $0xd0] sm:$0xff]
        %v2065 = vld [vmem:[#allocation11 + $0xe0] sm:$0xff]
        %v2066 = vld [vmem:[#allocation11 + $0xf0] sm:$0xff]
        %v2083 = vunpack.c.l.b16 %v2051
        %v2084 = vunpack.c.h.b16 %v2051
        %v2085 = vunpack.c.l.b16 %v2052
        %v2086 = vunpack.c.h.b16 %v2052
        %v2087 = vunpack.c.l.b16 %v2053
        %v2088 = vunpack.c.h.b16 %v2053
        %v2089 = vunpack.c.l.b16 %v2054
        %v2090 = vunpack.c.h.b16 %v2054
        %v2091 = vunpack.c.l.b16 %v2055
        %v2092 = vunpack.c.h.b16 %v2055
        %v2093 = vunpack.c.l.b16 %v2056
        %v2094 = vunpack.c.h.b16 %v2056
        %v2095 = vunpack.c.l.b16 %v2057
        %v2096 = vunpack.c.h.b16 %v2057
        %v2097 = vunpack.c.l.b16 %v2058
        %v2098 = vunpack.c.h.b16 %v2058
        %v2099 = vunpack.c.l.b16 %v2059
        %v2100 = vunpack.c.h.b16 %v2059
        %v2101 = vunpack.c.l.b16 %v2060
        %v2102 = vunpack.c.h.b16 %v2060
        %v2103 = vunpack.c.l.b16 %v2061
        %v2104 = vunpack.c.h.b16 %v2061
        %v2105 = vunpack.c.l.b16 %v2062
        %v2106 = vunpack.c.h.b16 %v2062
        %v2107 = vunpack.c.l.b16 %v2063
        %v2108 = vunpack.c.h.b16 %v2063
        %v2109 = vunpack.c.l.b16 %v2064
        %v2110 = vunpack.c.h.b16 %v2064
        %v2111 = vunpack.c.l.b16 %v2065
        %v2112 = vunpack.c.h.b16 %v2065
        %v2113 = vunpack.c.l.b16 %v2066
        %v2114 = vunpack.c.h.b16 %v2066
        %v2115 = vpack.c.b16 %v2085, %v2083
        %v2116 = vpack.c.b16 %v2086, %v2084
        %v2117 = vpack.c.b16 %v2089, %v2087
        %v2118 = vpack.c.b16 %v2090, %v2088
        %v2119 = vpack.c.b16 %v2093, %v2091
        %v2120 = vpack.c.b16 %v2094, %v2092
        %v2121 = vpack.c.b16 %v2097, %v2095
        %v2122 = vpack.c.b16 %v2098, %v2096
        %v2123 = vpack.c.b16 %v2101, %v2099
        %v2124 = vpack.c.b16 %v2102, %v2100
        %v2125 = vpack.c.b16 %v2105, %v2103
        %v2126 = vpack.c.b16 %v2106, %v2104
        %v2127 = vpack.c.b16 %v2109, %v2107
        %v2128 = vpack.c.b16 %v2110, %v2108
        %v2129 = vpack.c.b16 %v2113, %v2111
        %v2130 = vpack.c.b16 %v2114, %v2112
        %2147 = vmatprep.subr.bf16.mxu0 %v2130
        %2148 = vmatpush1.bf16.msra.mxu0 %v2129
        %2149 = vmatprep.subr.bf16.mxu0 %v2128
        %2150 = vmatpush1.bf16.msra.mxu0 %v2127
        %2151 = vmatprep.subr.bf16.mxu0 %v2126
        %2152 = vmatpush1.bf16.msra.mxu0 %v2125
        %2153 = vmatprep.subr.bf16.mxu0 %v2124
        %2154 = vmatpush1.bf16.msra.mxu0 %v2123
        %2155 = vmatprep.subr.bf16.mxu0 %v2122
        %2156 = vmatpush1.bf16.msra.mxu0 %v2121
        %2157 = vmatprep.subr.bf16.mxu0 %v2120
        %2158 = vmatpush1.bf16.msra.mxu0 %v2119
        %2159 = vmatprep.subr.bf16.mxu0 %v2118
        %2160 = vmatpush1.bf16.msra.mxu0 %v2117
        %2161 = vmatprep.subr.bf16.mxu0 %v2116
        %2162 = vmatpush1.bf16.msra.mxu0 %v2115
        %2163 = vmatprep.subr.bf16.mxu0 0
        %2164 = vmatpush2.bf16.msra.mxu0 0
        %2165 = vmatprep.subr.bf16.mxu0 0
        %2166 = vmatpush2.bf16.msra.mxu0 0
        %2167 = vmatprep.subr.bf16.mxu0 0
        %2168 = vmatpush2.bf16.msra.mxu0 0
        %2169 = vmatprep.subr.bf16.mxu0 0
        %2170 = vmatpush2.bf16.msra.mxu0 0
        %2171 = vmatprep.subr.bf16.mxu0 0
        %2172 = vmatpush2.bf16.msra.mxu0 0
        %2173 = vmatprep.subr.bf16.mxu0 0
        %2174 = vmatpush2.bf16.msra.mxu0 0
        %2175 = vmatprep.subr.bf16.mxu0 0
        %2176 = vmatpush2.bf16.msra.mxu0 0
        %2177 = vmatprep.subr.bf16.mxu0 0
        %2178 = vmatpush2.bf16.msra.mxu0 0
        %2179 = vmatprep.mubr.bf16.mxu0 0
        %2180 = vmatmul.mubr.bf16.gmra.mxu0 %v2050
        %v2181 = vpop.f32.mrf.mxu0
        %v2182 = vadd.f32 0.0, %v2181
        %v2183 = vpop.f32.mrf.mxu0
        %v2184 = vadd.f32 0.0, %v2183
        %v2185 = vpop.f32.mrf.mxu0
        %v2186 = vpop.f32.mrf.mxu0
        %2187 = vdwg.mxu0
        %p2188 = scmp.gt.s32.totalorder %s38, 0
        %s2189 = scalar_select %p2188, 1.0, 0.0
        %p2190 = scmp.lt.s32.totalorder %s38, 0
        %s2191 = scalar_select %p2190, 1.0, 0.0
        %v2192 = vstv %s2189
        %v2193 = vmul.f32 %v2182, %v2192
        %v2194 = vmul.f32 %v2184, %v2192
        %v2195 = vstv %s2191
        %v2196 = vmul.f32 %v2182, %v2195
        %v2197 = vmul.f32 %v2184, %v2195
        %v2198 = vlaneseq
        %v2199 = vshrl.u32 %v2198, 7
        %v2200 = vadd.s32 %v2199, 8
        %v2201 = vadd.s32 %v2199, 16
        %v2202 = vadd.s32 %v2199, 24
        %v2203 = vadd.s32 %v2199, 32
        %v2204 = vadd.s32 %v2199, 40
        %v2205 = vadd.s32 %v2199, 48
        %v2206 = vadd.s32 %v2199, 56
        %v2207 = vadd.s32 %v2199, 64
        %v2208 = vadd.s32 %v2199, 72
        %v2209 = vadd.s32 %v2199, 80
        %v2210 = vadd.s32 %v2199, 88
        %v2211 = vadd.s32 %v2199, 96
        %v2212 = vadd.s32 %v2199, 104
        %v2213 = vadd.s32 %v2199, 112
        %v2214 = vadd.s32 %v2199, 120
        %v2215 = vadd.s32 %v2199, 128
        %v2216 = vadd.s32 %v2199, 136
        %v2217 = vadd.s32 %v2199, 144
        %v2218 = vadd.s32 %v2199, 152
        %v2219 = vadd.s32 %v2199, 160
        %v2220 = vadd.s32 %v2199, 168
        %v2221 = vadd.s32 %v2199, 176
        %v2222 = vadd.s32 %v2199, 184
        %v2223 = vadd.s32 %v2199, 192
        %v2224 = vadd.s32 %v2199, 200
        %v2225 = vadd.s32 %v2199, 208
        %v2226 = vadd.s32 %v2199, 216
        %v2227 = vadd.s32 %v2199, 224
        %v2228 = vadd.s32 %v2199, 232
        %v2229 = vadd.s32 %v2199, 240
        %v2230 = vadd.s32 %v2199, 248
        %v2231 = vadd.s32 %v2199, 256
        %v2232 = vadd.s32 %v2199, 264
        %v2233 = vadd.s32 %v2199, 272
        %v2234 = vadd.s32 %v2199, 280
        %v2235 = vadd.s32 %v2199, 288
        %v2236 = vadd.s32 %v2199, 296
        %v2237 = vadd.s32 %v2199, 304
        %v2238 = vadd.s32 %v2199, 312
        %v2239 = vadd.s32 %v2199, 320
        %v2240 = vadd.s32 %v2199, 328
        %v2241 = vadd.s32 %v2199, 336
        %v2242 = vadd.s32 %v2199, 344
        %v2243 = vadd.s32 %v2199, 352
        %v2244 = vadd.s32 %v2199, 360
        %v2245 = vadd.s32 %v2199, 368
        %v2246 = vadd.s32 %v2199, 376
        %vm2247 = vcmp.eq.s32.totalorder %v2199, 0
        %vm2248 = vcmp.eq.s32.totalorder %v2200, 0
        %vm2249 = vcmp.eq.s32.totalorder %v2201, 0
        %vm2250 = vcmp.eq.s32.totalorder %v2202, 0
        %vm2251 = vcmp.eq.s32.totalorder %v2203, 0
        %vm2252 = vcmp.eq.s32.totalorder %v2204, 0
        %vm2253 = vcmp.eq.s32.totalorder %v2205, 0
        %vm2254 = vcmp.eq.s32.totalorder %v2206, 0
        %vm2255 = vcmp.eq.s32.totalorder %v2207, 0
        %vm2256 = vcmp.eq.s32.totalorder %v2208, 0
        %vm2257 = vcmp.eq.s32.totalorder %v2209, 0
        %vm2258 = vcmp.eq.s32.totalorder %v2210, 0
        %vm2259 = vcmp.eq.s32.totalorder %v2211, 0
        %vm2260 = vcmp.eq.s32.totalorder %v2212, 0
        %vm2261 = vcmp.eq.s32.totalorder %v2213, 0
        %vm2262 = vcmp.eq.s32.totalorder %v2214, 0
        %vm2263 = vcmp.eq.s32.totalorder %v2215, 0
        %vm2264 = vcmp.eq.s32.totalorder %v2216, 0
        %vm2265 = vcmp.eq.s32.totalorder %v2217, 0
        %vm2266 = vcmp.eq.s32.totalorder %v2218, 0
        %vm2267 = vcmp.eq.s32.totalorder %v2219, 0
        %vm2268 = vcmp.eq.s32.totalorder %v2220, 0
        %vm2269 = vcmp.eq.s32.totalorder %v2221, 0
        %vm2270 = vcmp.eq.s32.totalorder %v2222, 0
        %vm2271 = vcmp.eq.s32.totalorder %v2223, 0
        %vm2272 = vcmp.eq.s32.totalorder %v2224, 0
        %vm2273 = vcmp.eq.s32.totalorder %v2225, 0
        %vm2274 = vcmp.eq.s32.totalorder %v2226, 0
        %vm2275 = vcmp.eq.s32.totalorder %v2227, 0
        %vm2276 = vcmp.eq.s32.totalorder %v2228, 0
        %vm2277 = vcmp.eq.s32.totalorder %v2229, 0
        %vm2278 = vcmp.eq.s32.totalorder %v2230, 0
        %vm2279 = vcmp.eq.s32.totalorder %v2231, 0
        %vm2280 = vcmp.eq.s32.totalorder %v2232, 0
        %vm2281 = vcmp.eq.s32.totalorder %v2233, 0
        %vm2282 = vcmp.eq.s32.totalorder %v2234, 0
        %vm2283 = vcmp.eq.s32.totalorder %v2235, 0
        %vm2284 = vcmp.eq.s32.totalorder %v2236, 0
        %vm2285 = vcmp.eq.s32.totalorder %v2237, 0
        %vm2286 = vcmp.eq.s32.totalorder %v2238, 0
        %vm2287 = vcmp.eq.s32.totalorder %v2239, 0
        %vm2288 = vcmp.eq.s32.totalorder %v2240, 0
        %vm2289 = vcmp.eq.s32.totalorder %v2241, 0
        %vm2290 = vcmp.eq.s32.totalorder %v2242, 0
        %vm2291 = vcmp.eq.s32.totalorder %v2243, 0
        %vm2292 = vcmp.eq.s32.totalorder %v2244, 0
        %vm2293 = vcmp.eq.s32.totalorder %v2245, 0
        %vm2294 = vcmp.eq.s32.totalorder %v2246, 0
        %v2295 = vrot.slane %v1516, 7
        %v2296 = vrot.slane %v1518, 7
        %v2297 = vrot.slane %v1520, 7
        %v2298 = vrot.slane %v1522, 7
        %v2299 = vrot.slane %v1526, 7
        %v2300 = vrot.slane %v1528, 7
        %v2301 = vrot.slane %v1530, 7
        %v2302 = vrot.slane %v1532, 7
        %v2303 = vrot.slane %v1536, 7
        %v2304 = vrot.slane %v1538, 7
        %v2305 = vrot.slane %v1540, 7
        %v2306 = vrot.slane %v1542, 7
        %v2307 = vrot.slane %v1546, 7
        %v2308 = vrot.slane %v1548, 7
        %v2309 = vrot.slane %v1550, 7
        %v2310 = vrot.slane %v1552, 7
        %v2311 = vrot.slane %v1556, 7
        %v2312 = vrot.slane %v1558, 7
        %v2313 = vrot.slane %v1560, 7
        %v2314 = vrot.slane %v1562, 7
        %v2315 = vrot.slane %v1566, 7
        %v2316 = vrot.slane %v1568, 7
        %v2317 = vrot.slane %v1570, 7
        %v2318 = vrot.slane %v1572, 7
        %v2319 = vrot.slane %v1576, 7
        %v2320 = vrot.slane %v1578, 7
        %v2321 = vrot.slane %v1580, 7
        %v2322 = vrot.slane %v1582, 7
        %v2323 = vrot.slane %v1586, 7
        %v2324 = vrot.slane %v1588, 7
        %v2325 = vrot.slane %v1590, 7
        %v2326 = vrot.slane %v1592, 7
        %v2327 = vrot.slane %v1596, 7
        %v2328 = vrot.slane %v1598, 7
        %v2329 = vrot.slane %v1600, 7
        %v2330 = vrot.slane %v1602, 7
        %v2331 = vrot.slane %v1606, 7
        %v2332 = vrot.slane %v1608, 7
        %v2333 = vrot.slane %v1610, 7
        %v2334 = vrot.slane %v1612, 7
        %v2335 = vrot.slane %v1616, 7
        %v2336 = vrot.slane %v1618, 7
        %v2337 = vrot.slane %v1620, 7
        %v2338 = vrot.slane %v1622, 7
        %v2339 = vrot.slane %v1626, 7
        %v2340 = vrot.slane %v1628, 7
        %v2341 = vrot.slane %v1630, 7
        %v2342 = vrot.slane %v1632, 7
        %v2343 = vrot.slane %v1636, 7
        %v2344 = vrot.slane %v1638, 7
        %v2345 = vrot.slane %v1640, 7
        %v2346 = vrot.slane %v1642, 7
        %v2347 = vrot.slane %v1646, 7
        %v2348 = vrot.slane %v1648, 7
        %v2349 = vrot.slane %v1650, 7
        %v2350 = vrot.slane %v1652, 7
        %v2351 = vrot.slane %v1656, 7
        %v2352 = vrot.slane %v1658, 7
        %v2353 = vrot.slane %v1660, 7
        %v2354 = vrot.slane %v1662, 7
        %v2355 = vrot.slane %v1666, 7
        %v2356 = vrot.slane %v1668, 7
        %v2357 = vrot.slane %v1670, 7
        %v2358 = vrot.slane %v1672, 7
        %v2359 = vrot.slane %v1676, 7
        %v2360 = vrot.slane %v1678, 7
        %v2361 = vrot.slane %v1680, 7
        %v2362 = vrot.slane %v1682, 7
        %v2363 = vrot.slane %v1686, 7
        %v2364 = vrot.slane %v1688, 7
        %v2365 = vrot.slane %v1690, 7
        %v2366 = vrot.slane %v1692, 7
        %v2367 = vrot.slane %v1696, 7
        %v2368 = vrot.slane %v1698, 7
        %v2369 = vrot.slane %v1700, 7
        %v2370 = vrot.slane %v1702, 7
        %v2371 = vrot.slane %v1706, 7
        %v2372 = vrot.slane %v1708, 7
        %v2373 = vrot.slane %v1710, 7
        %v2374 = vrot.slane %v1712, 7
        %v2375 = vrot.slane %v1716, 7
        %v2376 = vrot.slane %v1718, 7
        %v2377 = vrot.slane %v1720, 7
        %v2378 = vrot.slane %v1722, 7
        %v2379 = vrot.slane %v1726, 7
        %v2380 = vrot.slane %v1728, 7
        %v2381 = vrot.slane %v1730, 7
        %v2382 = vrot.slane %v1732, 7
        %v2383 = vrot.slane %v1736, 7
        %v2384 = vrot.slane %v1738, 7
        %v2385 = vrot.slane %v1740, 7
        %v2386 = vrot.slane %v1742, 7
        %v2387 = vrot.slane %v1746, 7
        %v2388 = vrot.slane %v1748, 7
        %v2389 = vrot.slane %v1750, 7
        %v2390 = vrot.slane %v1752, 7
        %vm2391 = vcmp.lt.s32.totalorder %v2199, 1
        %v2392 = vsel %vm2391, %v2387, %v2389
        %v2393 = vsel %vm2391, %v2388, %v2390
        %v2394 = vsel %vm2391, %v2385, %v2387
        %v2395 = vsel %vm2391, %v2386, %v2388
        %v2396 = vsel %vm2391, %v2383, %v2385
        %v2397 = vsel %vm2391, %v2384, %v2386
        %v2398 = vsel %vm2391, %v2381, %v2383
        %v2399 = vsel %vm2391, %v2382, %v2384
        %v2400 = vsel %vm2391, %v2379, %v2381
        %v2401 = vsel %vm2391, %v2380, %v2382
        %v2402 = vsel %vm2391, %v2377, %v2379
        %v2403 = vsel %vm2391, %v2378, %v2380
        %v2404 = vsel %vm2391, %v2375, %v2377
        %v2405 = vsel %vm2391, %v2376, %v2378
        %v2406 = vsel %vm2391, %v2373, %v2375
        %v2407 = vsel %vm2391, %v2374, %v2376
        %v2408 = vsel %vm2391, %v2371, %v2373
        %v2409 = vsel %vm2391, %v2372, %v2374
        %v2410 = vsel %vm2391, %v2369, %v2371
        %v2411 = vsel %vm2391, %v2370, %v2372
        %v2412 = vsel %vm2391, %v2367, %v2369
        %v2413 = vsel %vm2391, %v2368, %v2370
        %v2414 = vsel %vm2391, %v2365, %v2367
        %v2415 = vsel %vm2391, %v2366, %v2368
        %v2416 = vsel %vm2391, %v2363, %v2365
        %v2417 = vsel %vm2391, %v2364, %v2366
        %v2418 = vsel %vm2391, %v2361, %v2363
        %v2419 = vsel %vm2391, %v2362, %v2364
        %v2420 = vsel %vm2391, %v2359, %v2361
        %v2421 = vsel %vm2391, %v2360, %v2362
        %v2422 = vsel %vm2391, %v2357, %v2359
        %v2423 = vsel %vm2391, %v2358, %v2360
        %v2424 = vsel %vm2391, %v2355, %v2357
        %v2425 = vsel %vm2391, %v2356, %v2358
        %v2426 = vsel %vm2391, %v2353, %v2355
        %v2427 = vsel %vm2391, %v2354, %v2356
        %v2428 = vsel %vm2391, %v2351, %v2353
        %v2429 = vsel %vm2391, %v2352, %v2354
        %v2430 = vsel %vm2391, %v2349, %v2351
        %v2431 = vsel %vm2391, %v2350, %v2352
        %v2432 = vsel %vm2391, %v2347, %v2349
        %v2433 = vsel %vm2391, %v2348, %v2350
        %v2434 = vsel %vm2391, %v2345, %v2347
        %v2435 = vsel %vm2391, %v2346, %v2348
        %v2436 = vsel %vm2391, %v2343, %v2345
        %v2437 = vsel %vm2391, %v2344, %v2346
        %v2438 = vsel %vm2391, %v2341, %v2343
        %v2439 = vsel %vm2391, %v2342, %v2344
        %v2440 = vsel %vm2391, %v2339, %v2341
        %v2441 = vsel %vm2391, %v2340, %v2342
        %v2442 = vsel %vm2391, %v2337, %v2339
        %v2443 = vsel %vm2391, %v2338, %v2340
        %v2444 = vsel %vm2391, %v2335, %v2337
        %v2445 = vsel %vm2391, %v2336, %v2338
        %v2446 = vsel %vm2391, %v2333, %v2335
        %v2447 = vsel %vm2391, %v2334, %v2336
        %v2448 = vsel %vm2391, %v2331, %v2333
        %v2449 = vsel %vm2391, %v2332, %v2334
        %v2450 = vsel %vm2391, %v2329, %v2331
        %v2451 = vsel %vm2391, %v2330, %v2332
        %v2452 = vsel %vm2391, %v2327, %v2329
        %v2453 = vsel %vm2391, %v2328, %v2330
        %v2454 = vsel %vm2391, %v2325, %v2327
        %v2455 = vsel %vm2391, %v2326, %v2328
        %v2456 = vsel %vm2391, %v2323, %v2325
        %v2457 = vsel %vm2391, %v2324, %v2326
        %v2458 = vsel %vm2391, %v2321, %v2323
        %v2459 = vsel %vm2391, %v2322, %v2324
        %v2460 = vsel %vm2391, %v2319, %v2321
        %v2461 = vsel %vm2391, %v2320, %v2322
        %v2462 = vsel %vm2391, %v2317, %v2319
        %v2463 = vsel %vm2391, %v2318, %v2320
        %v2464 = vsel %vm2391, %v2315, %v2317
        %v2465 = vsel %vm2391, %v2316, %v2318
        %v2466 = vsel %vm2391, %v2313, %v2315
        %v2467 = vsel %vm2391, %v2314, %v2316
        %v2468 = vsel %vm2391, %v2311, %v2313
        %v2469 = vsel %vm2391, %v2312, %v2314
        %v2470 = vsel %vm2391, %v2309, %v2311
        %v2471 = vsel %vm2391, %v2310, %v2312
        %v2472 = vsel %vm2391, %v2307, %v2309
        %v2473 = vsel %vm2391, %v2308, %v2310
        %v2474 = vsel %vm2391, %v2305, %v2307
        %v2475 = vsel %vm2391, %v2306, %v2308
        %v2476 = vsel %vm2391, %v2303, %v2305
        %v2477 = vsel %vm2391, %v2304, %v2306
        %v2478 = vsel %vm2391, %v2301, %v2303
        %v2479 = vsel %vm2391, %v2302, %v2304
        %v2480 = vsel %vm2391, %v2299, %v2301
        %v2481 = vsel %vm2391, %v2300, %v2302
        %v2482 = vsel %vm2391, %v2297, %v2299
        %v2483 = vsel %vm2391, %v2298, %v2300
        %v2484 = vsel %vm2391, %v2295, %v2297
        %v2485 = vsel %vm2391, %v2296, %v2298
        %v2486 = vsel %vm2391, %v2389, %v2295
        %v2487 = vsel %vm2391, %v2390, %v2296
        %v2488 = vsel %vm2247, 1, 0
        %v2489 = vsel %vm2248, 1, 0
        %v2490 = vsel %vm2249, 1, 0
        %v2491 = vsel %vm2250, 1, 0
        %v2492 = vsel %vm2251, 1, 0
        %v2493 = vsel %vm2252, 1, 0
        %v2494 = vsel %vm2253, 1, 0
        %v2495 = vsel %vm2254, 1, 0
        %v2496 = vsel %vm2255, 1, 0
        %v2497 = vsel %vm2256, 1, 0
        %v2498 = vsel %vm2257, 1, 0
        %v2499 = vsel %vm2258, 1, 0
        %v2500 = vsel %vm2259, 1, 0
        %v2501 = vsel %vm2260, 1, 0
        %v2502 = vsel %vm2261, 1, 0
        %v2503 = vsel %vm2262, 1, 0
        %v2504 = vsel %vm2263, 1, 0
        %v2505 = vsel %vm2264, 1, 0
        %v2506 = vsel %vm2265, 1, 0
        %v2507 = vsel %vm2266, 1, 0
        %v2508 = vsel %vm2267, 1, 0
        %v2509 = vsel %vm2268, 1, 0
        %v2510 = vsel %vm2269, 1, 0
        %v2511 = vsel %vm2270, 1, 0
        %v2512 = vsel %vm2271, 1, 0
        %v2513 = vsel %vm2272, 1, 0
        %v2514 = vsel %vm2273, 1, 0
        %v2515 = vsel %vm2274, 1, 0
        %v2516 = vsel %vm2275, 1, 0
        %v2517 = vsel %vm2276, 1, 0
        %v2518 = vsel %vm2277, 1, 0
        %v2519 = vsel %vm2278, 1, 0
        %v2520 = vsel %vm2279, 1, 0
        %v2521 = vsel %vm2280, 1, 0
        %v2522 = vsel %vm2281, 1, 0
        %v2523 = vsel %vm2282, 1, 0
        %v2524 = vsel %vm2283, 1, 0
        %v2525 = vsel %vm2284, 1, 0
        %v2526 = vsel %vm2285, 1, 0
        %v2527 = vsel %vm2286, 1, 0
        %v2528 = vsel %vm2287, 1, 0
        %v2529 = vsel %vm2288, 1, 0
        %v2530 = vsel %vm2289, 1, 0
        %v2531 = vsel %vm2290, 1, 0
        %v2532 = vsel %vm2291, 1, 0
        %v2533 = vsel %vm2292, 1, 0
        %v2534 = vsel %vm2293, 1, 0
        %v2535 = vsel %vm2294, 1, 0
        %vm2536 = vcmp.eq.s32.totalorder %v2488, 1
        %vm2537 = vcmp.eq.s32.totalorder %v2489, 1
        %vm2538 = vcmp.eq.s32.totalorder %v2490, 1
        %vm2539 = vcmp.eq.s32.totalorder %v2491, 1
        %vm2540 = vcmp.eq.s32.totalorder %v2492, 1
        %vm2541 = vcmp.eq.s32.totalorder %v2493, 1
        %vm2542 = vcmp.eq.s32.totalorder %v2494, 1
        %vm2543 = vcmp.eq.s32.totalorder %v2495, 1
        %vm2544 = vcmp.eq.s32.totalorder %v2496, 1
        %vm2545 = vcmp.eq.s32.totalorder %v2497, 1
        %vm2546 = vcmp.eq.s32.totalorder %v2498, 1
        %vm2547 = vcmp.eq.s32.totalorder %v2499, 1
        %vm2548 = vcmp.eq.s32.totalorder %v2500, 1
        %vm2549 = vcmp.eq.s32.totalorder %v2501, 1
        %vm2550 = vcmp.eq.s32.totalorder %v2502, 1
        %vm2551 = vcmp.eq.s32.totalorder %v2503, 1
        %vm2552 = vcmp.eq.s32.totalorder %v2504, 1
        %vm2553 = vcmp.eq.s32.totalorder %v2505, 1
        %vm2554 = vcmp.eq.s32.totalorder %v2506, 1
        %vm2555 = vcmp.eq.s32.totalorder %v2507, 1
        %vm2556 = vcmp.eq.s32.totalorder %v2508, 1
        %vm2557 = vcmp.eq.s32.totalorder %v2509, 1
        %vm2558 = vcmp.eq.s32.totalorder %v2510, 1
        %vm2559 = vcmp.eq.s32.totalorder %v2511, 1
        %vm2560 = vcmp.eq.s32.totalorder %v2512, 1
        %vm2561 = vcmp.eq.s32.totalorder %v2513, 1
        %vm2562 = vcmp.eq.s32.totalorder %v2514, 1
        %vm2563 = vcmp.eq.s32.totalorder %v2515, 1
        %vm2564 = vcmp.eq.s32.totalorder %v2516, 1
        %vm2565 = vcmp.eq.s32.totalorder %v2517, 1
        %vm2566 = vcmp.eq.s32.totalorder %v2518, 1
        %vm2567 = vcmp.eq.s32.totalorder %v2519, 1
        %vm2568 = vcmp.eq.s32.totalorder %v2520, 1
        %vm2569 = vcmp.eq.s32.totalorder %v2521, 1
        %vm2570 = vcmp.eq.s32.totalorder %v2522, 1
        %vm2571 = vcmp.eq.s32.totalorder %v2523, 1
        %vm2572 = vcmp.eq.s32.totalorder %v2524, 1
        %vm2573 = vcmp.eq.s32.totalorder %v2525, 1
        %vm2574 = vcmp.eq.s32.totalorder %v2526, 1
        %vm2575 = vcmp.eq.s32.totalorder %v2527, 1
        %vm2576 = vcmp.eq.s32.totalorder %v2528, 1
        %vm2577 = vcmp.eq.s32.totalorder %v2529, 1
        %vm2578 = vcmp.eq.s32.totalorder %v2530, 1
        %vm2579 = vcmp.eq.s32.totalorder %v2531, 1
        %vm2580 = vcmp.eq.s32.totalorder %v2532, 1
        %vm2581 = vcmp.eq.s32.totalorder %v2533, 1
        %vm2582 = vcmp.eq.s32.totalorder %v2534, 1
        %vm2583 = vcmp.eq.s32.totalorder %v2535, 1
        %v2584 = vlaneseq
        %v2585 = vshrl.u32 %v2584, 7
        %v2586 = vsub.s32 0, %v2585
        %v2587 = vrot.slane %v2193, %v2586
        %v2588 = vlaneseq
        %v2589 = vshrl.u32 %v2588, 7
        %v2590 = vsub.s32 0, %v2589
        %v2591 = vrot.slane %v2194, %v2590
        %v2592 = vsel %vm2536, %v2587, %v2486
        %v2593 = vsel %vm2536, %v2591, %v2487
        %v2594 = vsel %vm2537, %v2587, %v2484
        %v2595 = vsel %vm2537, %v2591, %v2485
        %v2596 = vsel %vm2538, %v2587, %v2482
        %v2597 = vsel %vm2538, %v2591, %v2483
        %v2598 = vsel %vm2539, %v2587, %v2480
        %v2599 = vsel %vm2539, %v2591, %v2481
        %v2600 = vsel %vm2540, %v2587, %v2478
        %v2601 = vsel %vm2540, %v2591, %v2479
        %v2602 = vsel %vm2541, %v2587, %v2476
        %v2603 = vsel %vm2541, %v2591, %v2477
        %v2604 = vsel %vm2542, %v2587, %v2474
        %v2605 = vsel %vm2542, %v2591, %v2475
        %v2606 = vsel %vm2543, %v2587, %v2472
        %v2607 = vsel %vm2543, %v2591, %v2473
        %v2608 = vsel %vm2544, %v2587, %v2470
        %v2609 = vsel %vm2544, %v2591, %v2471
        %v2610 = vsel %vm2545, %v2587, %v2468
        %v2611 = vsel %vm2545, %v2591, %v2469
        %v2612 = vsel %vm2546, %v2587, %v2466
        %v2613 = vsel %vm2546, %v2591, %v2467
        %v2614 = vsel %vm2547, %v2587, %v2464
        %v2615 = vsel %vm2547, %v2591, %v2465
        %v2616 = vsel %vm2548, %v2587, %v2462
        %v2617 = vsel %vm2548, %v2591, %v2463
        %v2618 = vsel %vm2549, %v2587, %v2460
        %v2619 = vsel %vm2549, %v2591, %v2461
        %v2620 = vsel %vm2550, %v2587, %v2458
        %v2621 = vsel %vm2550, %v2591, %v2459
        %v2622 = vsel %vm2551, %v2587, %v2456
        %v2623 = vsel %vm2551, %v2591, %v2457
        %v2624 = vsel %vm2552, %v2587, %v2454
        %v2625 = vsel %vm2552, %v2591, %v2455
        %v2626 = vsel %vm2553, %v2587, %v2452
        %v2627 = vsel %vm2553, %v2591, %v2453
        %v2628 = vsel %vm2554, %v2587, %v2450
        %v2629 = vsel %vm2554, %v2591, %v2451
        %v2630 = vsel %vm2555, %v2587, %v2448
        %v2631 = vsel %vm2555, %v2591, %v2449
        %v2632 = vsel %vm2556, %v2587, %v2446
        %v2633 = vsel %vm2556, %v2591, %v2447
        %v2634 = vsel %vm2557, %v2587, %v2444
        %v2635 = vsel %vm2557, %v2591, %v2445
        %v2636 = vsel %vm2558, %v2587, %v2442
        %v2637 = vsel %vm2558, %v2591, %v2443
        %v2638 = vsel %vm2559, %v2587, %v2440
        %v2639 = vsel %vm2559, %v2591, %v2441
        %v2640 = vsel %vm2560, %v2587, %v2438
        %v2641 = vsel %vm2560, %v2591, %v2439
        %v2642 = vsel %vm2561, %v2587, %v2436
        %v2643 = vsel %vm2561, %v2591, %v2437
        %v2644 = vsel %vm2562, %v2587, %v2434
        %v2645 = vsel %vm2562, %v2591, %v2435
        %v2646 = vsel %vm2563, %v2587, %v2432
        %v2647 = vsel %vm2563, %v2591, %v2433
        %v2648 = vsel %vm2564, %v2587, %v2430
        %v2649 = vsel %vm2564, %v2591, %v2431
        %v2650 = vsel %vm2565, %v2587, %v2428
        %v2651 = vsel %vm2565, %v2591, %v2429
        %v2652 = vsel %vm2566, %v2587, %v2426
        %v2653 = vsel %vm2566, %v2591, %v2427
        %v2654 = vsel %vm2567, %v2587, %v2424
        %v2655 = vsel %vm2567, %v2591, %v2425
        %v2656 = vsel %vm2568, %v2587, %v2422
        %v2657 = vsel %vm2568, %v2591, %v2423
        %v2658 = vsel %vm2569, %v2587, %v2420
        %v2659 = vsel %vm2569, %v2591, %v2421
        %v2660 = vsel %vm2570, %v2587, %v2418
        %v2661 = vsel %vm2570, %v2591, %v2419
        %v2662 = vsel %vm2571, %v2587, %v2416
        %v2663 = vsel %vm2571, %v2591, %v2417
        %v2664 = vsel %vm2572, %v2587, %v2414
        %v2665 = vsel %vm2572, %v2591, %v2415
        %v2666 = vsel %vm2573, %v2587, %v2412
        %v2667 = vsel %vm2573, %v2591, %v2413
        %v2668 = vsel %vm2574, %v2587, %v2410
        %v2669 = vsel %vm2574, %v2591, %v2411
        %v2670 = vsel %vm2575, %v2587, %v2408
        %v2671 = vsel %vm2575, %v2591, %v2409
        %v2672 = vsel %vm2576, %v2587, %v2406
        %v2673 = vsel %vm2576, %v2591, %v2407
        %v2674 = vsel %vm2577, %v2587, %v2404
        %v2675 = vsel %vm2577, %v2591, %v2405
        %v2676 = vsel %vm2578, %v2587, %v2402
        %v2677 = vsel %vm2578, %v2591, %v2403
        %v2678 = vsel %vm2579, %v2587, %v2400
        %v2679 = vsel %vm2579, %v2591, %v2401
        %v2680 = vsel %vm2580, %v2587, %v2398
        %v2681 = vsel %vm2580, %v2591, %v2399
        %v2682 = vsel %vm2581, %v2587, %v2396
        %v2683 = vsel %vm2581, %v2591, %v2397
        %v2684 = vsel %vm2582, %v2587, %v2394
        %v2685 = vsel %vm2582, %v2591, %v2395
        %v2686 = vsel %vm2583, %v2587, %v2392
        %v2687 = vsel %vm2583, %v2591, %v2393
        %vm2688 = vcmp.eq.s32.totalorder %v2199, 383
        %vm2689 = vcmp.eq.s32.totalorder %v2200, 383
        %vm2690 = vcmp.eq.s32.totalorder %v2201, 383
        %vm2691 = vcmp.eq.s32.totalorder %v2202, 383
        %vm2692 = vcmp.eq.s32.totalorder %v2203, 383
        %vm2693 = vcmp.eq.s32.totalorder %v2204, 383
        %vm2694 = vcmp.eq.s32.totalorder %v2205, 383
        %vm2695 = vcmp.eq.s32.totalorder %v2206, 383
        %vm2696 = vcmp.eq.s32.totalorder %v2207, 383
        %vm2697 = vcmp.eq.s32.totalorder %v2208, 383
        %vm2698 = vcmp.eq.s32.totalorder %v2209, 383
        %vm2699 = vcmp.eq.s32.totalorder %v2210, 383
        %vm2700 = vcmp.eq.s32.totalorder %v2211, 383
        %vm2701 = vcmp.eq.s32.totalorder %v2212, 383
        %vm2702 = vcmp.eq.s32.totalorder %v2213, 383
        %vm2703 = vcmp.eq.s32.totalorder %v2214, 383
        %vm2704 = vcmp.eq.s32.totalorder %v2215, 383
        %vm2705 = vcmp.eq.s32.totalorder %v2216, 383
        %vm2706 = vcmp.eq.s32.totalorder %v2217, 383
        %vm2707 = vcmp.eq.s32.totalorder %v2218, 383
        %vm2708 = vcmp.eq.s32.totalorder %v2219, 383
        %vm2709 = vcmp.eq.s32.totalorder %v2220, 383
        %vm2710 = vcmp.eq.s32.totalorder %v2221, 383
        %vm2711 = vcmp.eq.s32.totalorder %v2222, 383
        %vm2712 = vcmp.eq.s32.totalorder %v2223, 383
        %vm2713 = vcmp.eq.s32.totalorder %v2224, 383
        %vm2714 = vcmp.eq.s32.totalorder %v2225, 383
        %vm2715 = vcmp.eq.s32.totalorder %v2226, 383
        %vm2716 = vcmp.eq.s32.totalorder %v2227, 383
        %vm2717 = vcmp.eq.s32.totalorder %v2228, 383
        %vm2718 = vcmp.eq.s32.totalorder %v2229, 383
        %vm2719 = vcmp.eq.s32.totalorder %v2230, 383
        %vm2720 = vcmp.eq.s32.totalorder %v2231, 383
        %vm2721 = vcmp.eq.s32.totalorder %v2232, 383
        %vm2722 = vcmp.eq.s32.totalorder %v2233, 383
        %vm2723 = vcmp.eq.s32.totalorder %v2234, 383
        %vm2724 = vcmp.eq.s32.totalorder %v2235, 383
        %vm2725 = vcmp.eq.s32.totalorder %v2236, 383
        %vm2726 = vcmp.eq.s32.totalorder %v2237, 383
        %vm2727 = vcmp.eq.s32.totalorder %v2238, 383
        %vm2728 = vcmp.eq.s32.totalorder %v2239, 383
        %vm2729 = vcmp.eq.s32.totalorder %v2240, 383
        %vm2730 = vcmp.eq.s32.totalorder %v2241, 383
        %vm2731 = vcmp.eq.s32.totalorder %v2242, 383
        %vm2732 = vcmp.eq.s32.totalorder %v2243, 383
        %vm2733 = vcmp.eq.s32.totalorder %v2244, 383
        %vm2734 = vcmp.eq.s32.totalorder %v2245, 383
        %vm2735 = vcmp.eq.s32.totalorder %v2246, 383
        %v2736 = vrot.slane %v1516, 1
        %v2737 = vrot.slane %v1518, 1
        %v2738 = vrot.slane %v1520, 1
        %v2739 = vrot.slane %v1522, 1
        %v2740 = vrot.slane %v1526, 1
        %v2741 = vrot.slane %v1528, 1
        %v2742 = vrot.slane %v1530, 1
        %v2743 = vrot.slane %v1532, 1
        %v2744 = vrot.slane %v1536, 1
        %v2745 = vrot.slane %v1538, 1
        %v2746 = vrot.slane %v1540, 1
        %v2747 = vrot.slane %v1542, 1
        %v2748 = vrot.slane %v1546, 1
        %v2749 = vrot.slane %v1548, 1
        %v2750 = vrot.slane %v1550, 1
        %v2751 = vrot.slane %v1552, 1
        %v2752 = vrot.slane %v1556, 1
        %v2753 = vrot.slane %v1558, 1
        %v2754 = vrot.slane %v1560, 1
        %v2755 = vrot.slane %v1562, 1
        %v2756 = vrot.slane %v1566, 1
        %v2757 = vrot.slane %v1568, 1
        %v2758 = vrot.slane %v1570, 1
        %v2759 = vrot.slane %v1572, 1
        %v2760 = vrot.slane %v1576, 1
        %v2761 = vrot.slane %v1578, 1
        %v2762 = vrot.slane %v1580, 1
        %v2763 = vrot.slane %v1582, 1
        %v2764 = vrot.slane %v1586, 1
        %v2765 = vrot.slane %v1588, 1
        %v2766 = vrot.slane %v1590, 1
        %v2767 = vrot.slane %v1592, 1
        %v2768 = vrot.slane %v1596, 1
        %v2769 = vrot.slane %v1598, 1
        %v2770 = vrot.slane %v1600, 1
        %v2771 = vrot.slane %v1602, 1
        %v2772 = vrot.slane %v1606, 1
        %v2773 = vrot.slane %v1608, 1
        %v2774 = vrot.slane %v1610, 1
        %v2775 = vrot.slane %v1612, 1
        %v2776 = vrot.slane %v1616, 1
        %v2777 = vrot.slane %v1618, 1
        %v2778 = vrot.slane %v1620, 1
        %v2779 = vrot.slane %v1622, 1
        %v2780 = vrot.slane %v1626, 1
        %v2781 = vrot.slane %v1628, 1
        %v2782 = vrot.slane %v1630, 1
        %v2783 = vrot.slane %v1632, 1
        %v2784 = vrot.slane %v1636, 1
        %v2785 = vrot.slane %v1638, 1
        %v2786 = vrot.slane %v1640, 1
        %v2787 = vrot.slane %v1642, 1
        %v2788 = vrot.slane %v1646, 1
        %v2789 = vrot.slane %v1648, 1
        %v2790 = vrot.slane %v1650, 1
        %v2791 = vrot.slane %v1652, 1
        %v2792 = vrot.slane %v1656, 1
        %v2793 = vrot.slane %v1658, 1
        %v2794 = vrot.slane %v1660, 1
        %v2795 = vrot.slane %v1662, 1
        %v2796 = vrot.slane %v1666, 1
        %v2797 = vrot.slane %v1668, 1
        %v2798 = vrot.slane %v1670, 1
        %v2799 = vrot.slane %v1672, 1
        %v2800 = vrot.slane %v1676, 1
        %v2801 = vrot.slane %v1678, 1
        %v2802 = vrot.slane %v1680, 1
        %v2803 = vrot.slane %v1682, 1
        %v2804 = vrot.slane %v1686, 1
        %v2805 = vrot.slane %v1688, 1
        %v2806 = vrot.slane %v1690, 1
        %v2807 = vrot.slane %v1692, 1
        %v2808 = vrot.slane %v1696, 1
        %v2809 = vrot.slane %v1698, 1
        %v2810 = vrot.slane %v1700, 1
        %v2811 = vrot.slane %v1702, 1
        %v2812 = vrot.slane %v1706, 1
        %v2813 = vrot.slane %v1708, 1
        %v2814 = vrot.slane %v1710, 1
        %v2815 = vrot.slane %v1712, 1
        %v2816 = vrot.slane %v1716, 1
        %v2817 = vrot.slane %v1718, 1
        %v2818 = vrot.slane %v1720, 1
        %v2819 = vrot.slane %v1722, 1
        %v2820 = vrot.slane %v1726, 1
        %v2821 = vrot.slane %v1728, 1
        %v2822 = vrot.slane %v1730, 1
        %v2823 = vrot.slane %v1732, 1
        %v2824 = vrot.slane %v1736, 1
        %v2825 = vrot.slane %v1738, 1
        %v2826 = vrot.slane %v1740, 1
        %v2827 = vrot.slane %v1742, 1
        %v2828 = vrot.slane %v1746, 1
        %v2829 = vrot.slane %v1748, 1
        %v2830 = vrot.slane %v1750, 1
        %v2831 = vrot.slane %v1752, 1
        %vm2832 = vcmp.lt.s32.totalorder %v2199, 7
        %v2833 = vsel %vm2832, %v2828, %v2830
        %v2834 = vsel %vm2832, %v2829, %v2831
        %v2835 = vsel %vm2832, %v2826, %v2828
        %v2836 = vsel %vm2832, %v2827, %v2829
        %v2837 = vsel %vm2832, %v2824, %v2826
        %v2838 = vsel %vm2832, %v2825, %v2827
        %v2839 = vsel %vm2832, %v2822, %v2824
        %v2840 = vsel %vm2832, %v2823, %v2825
        %v2841 = vsel %vm2832, %v2820, %v2822
        %v2842 = vsel %vm2832, %v2821, %v2823
        %v2843 = vsel %vm2832, %v2818, %v2820
        %v2844 = vsel %vm2832, %v2819, %v2821
        %v2845 = vsel %vm2832, %v2816, %v2818
        %v2846 = vsel %vm2832, %v2817, %v2819
        %v2847 = vsel %vm2832, %v2814, %v2816
        %v2848 = vsel %vm2832, %v2815, %v2817
        %v2849 = vsel %vm2832, %v2812, %v2814
        %v2850 = vsel %vm2832, %v2813, %v2815
        %v2851 = vsel %vm2832, %v2810, %v2812
        %v2852 = vsel %vm2832, %v2811, %v2813
        %v2853 = vsel %vm2832, %v2808, %v2810
        %v2854 = vsel %vm2832, %v2809, %v2811
        %v2855 = vsel %vm2832, %v2806, %v2808
        %v2856 = vsel %vm2832, %v2807, %v2809
        %v2857 = vsel %vm2832, %v2804, %v2806
        %v2858 = vsel %vm2832, %v2805, %v2807
        %v2859 = vsel %vm2832, %v2802, %v2804
        %v2860 = vsel %vm2832, %v2803, %v2805
        %v2861 = vsel %vm2832, %v2800, %v2802
        %v2862 = vsel %vm2832, %v2801, %v2803
        %v2863 = vsel %vm2832, %v2798, %v2800
        %v2864 = vsel %vm2832, %v2799, %v2801
        %v2865 = vsel %vm2832, %v2796, %v2798
        %v2866 = vsel %vm2832, %v2797, %v2799
        %v2867 = vsel %vm2832, %v2794, %v2796
        %v2868 = vsel %vm2832, %v2795, %v2797
        %v2869 = vsel %vm2832, %v2792, %v2794
        %v2870 = vsel %vm2832, %v2793, %v2795
        %v2871 = vsel %vm2832, %v2790, %v2792
        %v2872 = vsel %vm2832, %v2791, %v2793
        %v2873 = vsel %vm2832, %v2788, %v2790
        %v2874 = vsel %vm2832, %v2789, %v2791
        %v2875 = vsel %vm2832, %v2786, %v2788
        %v2876 = vsel %vm2832, %v2787, %v2789
        %v2877 = vsel %vm2832, %v2784, %v2786
        %v2878 = vsel %vm2832, %v2785, %v2787
        %v2879 = vsel %vm2832, %v2782, %v2784
        %v2880 = vsel %vm2832, %v2783, %v2785
        %v2881 = vsel %vm2832, %v2780, %v2782
        %v2882 = vsel %vm2832, %v2781, %v2783
        %v2883 = vsel %vm2832, %v2778, %v2780
        %v2884 = vsel %vm2832, %v2779, %v2781
        %v2885 = vsel %vm2832, %v2776, %v2778
        %v2886 = vsel %vm2832, %v2777, %v2779
        %v2887 = vsel %vm2832, %v2774, %v2776
        %v2888 = vsel %vm2832, %v2775, %v2777
        %v2889 = vsel %vm2832, %v2772, %v2774
        %v2890 = vsel %vm2832, %v2773, %v2775
        %v2891 = vsel %vm2832, %v2770, %v2772
        %v2892 = vsel %vm2832, %v2771, %v2773
        %v2893 = vsel %vm2832, %v2768, %v2770
        %v2894 = vsel %vm2832, %v2769, %v2771
        %v2895 = vsel %vm2832, %v2766, %v2768
        %v2896 = vsel %vm2832, %v2767, %v2769
        %v2897 = vsel %vm2832, %v2764, %v2766
        %v2898 = vsel %vm2832, %v2765, %v2767
        %v2899 = vsel %vm2832, %v2762, %v2764
        %v2900 = vsel %vm2832, %v2763, %v2765
        %v2901 = vsel %vm2832, %v2760, %v2762
        %v2902 = vsel %vm2832, %v2761, %v2763
        %v2903 = vsel %vm2832, %v2758, %v2760
        %v2904 = vsel %vm2832, %v2759, %v2761
        %v2905 = vsel %vm2832, %v2756, %v2758
        %v2906 = vsel %vm2832, %v2757, %v2759
        %v2907 = vsel %vm2832, %v2754, %v2756
        %v2908 = vsel %vm2832, %v2755, %v2757
        %v2909 = vsel %vm2832, %v2752, %v2754
        %v2910 = vsel %vm2832, %v2753, %v2755
        %v2911 = vsel %vm2832, %v2750, %v2752
        %v2912 = vsel %vm2832, %v2751, %v2753
        %v2913 = vsel %vm2832, %v2748, %v2750
        %v2914 = vsel %vm2832, %v2749, %v2751
        %v2915 = vsel %vm2832, %v2746, %v2748
        %v2916 = vsel %vm2832, %v2747, %v2749
        %v2917 = vsel %vm2832, %v2744, %v2746
        %v2918 = vsel %vm2832, %v2745, %v2747
        %v2919 = vsel %vm2832, %v2742, %v2744
        %v2920 = vsel %vm2832, %v2743, %v2745
        %v2921 = vsel %vm2832, %v2740, %v2742
        %v2922 = vsel %vm2832, %v2741, %v2743
        %v2923 = vsel %vm2832, %v2738, %v2740
        %v2924 = vsel %vm2832, %v2739, %v2741
        %v2925 = vsel %vm2832, %v2736, %v2738
        %v2926 = vsel %vm2832, %v2737, %v2739
        %v2927 = vsel %vm2832, %v2830, %v2736
        %v2928 = vsel %vm2832, %v2831, %v2737
        %v2929 = vsel %vm2688, 1, 0
        %v2930 = vsel %vm2689, 1, 0
        %v2931 = vsel %vm2690, 1, 0
        %v2932 = vsel %vm2691, 1, 0
        %v2933 = vsel %vm2692, 1, 0
        %v2934 = vsel %vm2693, 1, 0
        %v2935 = vsel %vm2694, 1, 0
        %v2936 = vsel %vm2695, 1, 0
        %v2937 = vsel %vm2696, 1, 0
        %v2938 = vsel %vm2697, 1, 0
        %v2939 = vsel %vm2698, 1, 0
        %v2940 = vsel %vm2699, 1, 0
        %v2941 = vsel %vm2700, 1, 0
        %v2942 = vsel %vm2701, 1, 0
        %v2943 = vsel %vm2702, 1, 0
        %v2944 = vsel %vm2703, 1, 0
        %v2945 = vsel %vm2704, 1, 0
        %v2946 = vsel %vm2705, 1, 0
        %v2947 = vsel %vm2706, 1, 0
        %v2948 = vsel %vm2707, 1, 0
        %v2949 = vsel %vm2708, 1, 0
        %v2950 = vsel %vm2709, 1, 0
        %v2951 = vsel %vm2710, 1, 0
        %v2952 = vsel %vm2711, 1, 0
        %v2953 = vsel %vm2712, 1, 0
        %v2954 = vsel %vm2713, 1, 0
        %v2955 = vsel %vm2714, 1, 0
        %v2956 = vsel %vm2715, 1, 0
        %v2957 = vsel %vm2716, 1, 0
        %v2958 = vsel %vm2717, 1, 0
        %v2959 = vsel %vm2718, 1, 0
        %v2960 = vsel %vm2719, 1, 0
        %v2961 = vsel %vm2720, 1, 0
        %v2962 = vsel %vm2721, 1, 0
        %v2963 = vsel %vm2722, 1, 0
        %v2964 = vsel %vm2723, 1, 0
        %v2965 = vsel %vm2724, 1, 0
        %v2966 = vsel %vm2725, 1, 0
        %v2967 = vsel %vm2726, 1, 0
        %v2968 = vsel %vm2727, 1, 0
        %v2969 = vsel %vm2728, 1, 0
        %v2970 = vsel %vm2729, 1, 0
        %v2971 = vsel %vm2730, 1, 0
        %v2972 = vsel %vm2731, 1, 0
        %v2973 = vsel %vm2732, 1, 0
        %v2974 = vsel %vm2733, 1, 0
        %v2975 = vsel %vm2734, 1, 0
        %v2976 = vsel %vm2735, 1, 0
        %vm2977 = vcmp.eq.s32.totalorder %v2929, 1
        %vm2978 = vcmp.eq.s32.totalorder %v2930, 1
        %vm2979 = vcmp.eq.s32.totalorder %v2931, 1
        %vm2980 = vcmp.eq.s32.totalorder %v2932, 1
        %vm2981 = vcmp.eq.s32.totalorder %v2933, 1
        %vm2982 = vcmp.eq.s32.totalorder %v2934, 1
        %vm2983 = vcmp.eq.s32.totalorder %v2935, 1
        %vm2984 = vcmp.eq.s32.totalorder %v2936, 1
        %vm2985 = vcmp.eq.s32.totalorder %v2937, 1
        %vm2986 = vcmp.eq.s32.totalorder %v2938, 1
        %vm2987 = vcmp.eq.s32.totalorder %v2939, 1
        %vm2988 = vcmp.eq.s32.totalorder %v2940, 1
        %vm2989 = vcmp.eq.s32.totalorder %v2941, 1
        %vm2990 = vcmp.eq.s32.totalorder %v2942, 1
        %vm2991 = vcmp.eq.s32.totalorder %v2943, 1
        %vm2992 = vcmp.eq.s32.totalorder %v2944, 1
        %vm2993 = vcmp.eq.s32.totalorder %v2945, 1
        %vm2994 = vcmp.eq.s32.totalorder %v2946, 1
        %vm2995 = vcmp.eq.s32.totalorder %v2947, 1
        %vm2996 = vcmp.eq.s32.totalorder %v2948, 1
        %vm2997 = vcmp.eq.s32.totalorder %v2949, 1
        %vm2998 = vcmp.eq.s32.totalorder %v2950, 1
        %vm2999 = vcmp.eq.s32.totalorder %v2951, 1
        %vm3000 = vcmp.eq.s32.totalorder %v2952, 1
        %vm3001 = vcmp.eq.s32.totalorder %v2953, 1
        %vm3002 = vcmp.eq.s32.totalorder %v2954, 1
        %vm3003 = vcmp.eq.s32.totalorder %v2955, 1
        %vm3004 = vcmp.eq.s32.totalorder %v2956, 1
        %vm3005 = vcmp.eq.s32.totalorder %v2957, 1
        %vm3006 = vcmp.eq.s32.totalorder %v2958, 1
        %vm3007 = vcmp.eq.s32.totalorder %v2959, 1
        %vm3008 = vcmp.eq.s32.totalorder %v2960, 1
        %vm3009 = vcmp.eq.s32.totalorder %v2961, 1
        %vm3010 = vcmp.eq.s32.totalorder %v2962, 1
        %vm3011 = vcmp.eq.s32.totalorder %v2963, 1
        %vm3012 = vcmp.eq.s32.totalorder %v2964, 1
        %vm3013 = vcmp.eq.s32.totalorder %v2965, 1
        %vm3014 = vcmp.eq.s32.totalorder %v2966, 1
        %vm3015 = vcmp.eq.s32.totalorder %v2967, 1
        %vm3016 = vcmp.eq.s32.totalorder %v2968, 1
        %vm3017 = vcmp.eq.s32.totalorder %v2969, 1
        %vm3018 = vcmp.eq.s32.totalorder %v2970, 1
        %vm3019 = vcmp.eq.s32.totalorder %v2971, 1
        %vm3020 = vcmp.eq.s32.totalorder %v2972, 1
        %vm3021 = vcmp.eq.s32.totalorder %v2973, 1
        %vm3022 = vcmp.eq.s32.totalorder %v2974, 1
        %vm3023 = vcmp.eq.s32.totalorder %v2975, 1
        %vm3024 = vcmp.eq.s32.totalorder %v2976, 1
        %v3025 = vlaneseq
        %v3026 = vshrl.u32 %v3025, 7
        %v3027 = vsub.s32 1, %v3026
        %v3028 = vrot.slane %v2196, %v3027
        %v3029 = vlaneseq
        %v3030 = vshrl.u32 %v3029, 7
        %v3031 = vsub.s32 1, %v3030
        %v3032 = vrot.slane %v2197, %v3031
        %v3033 = vsel %vm2977, %v3028, %v2925
        %v3034 = vsel %vm2977, %v3032, %v2926
        %v3035 = vsel %vm2978, %v3028, %v2923
        %v3036 = vsel %vm2978, %v3032, %v2924
        %v3037 = vsel %vm2979, %v3028, %v2921
        %v3038 = vsel %vm2979, %v3032, %v2922
        %v3039 = vsel %vm2980, %v3028, %v2919
        %v3040 = vsel %vm2980, %v3032, %v2920
        %v3041 = vsel %vm2981, %v3028, %v2917
        %v3042 = vsel %vm2981, %v3032, %v2918
        %v3043 = vsel %vm2982, %v3028, %v2915
        %v3044 = vsel %vm2982, %v3032, %v2916
        %v3045 = vsel %vm2983, %v3028, %v2913
        %v3046 = vsel %vm2983, %v3032, %v2914
        %v3047 = vsel %vm2984, %v3028, %v2911
        %v3048 = vsel %vm2984, %v3032, %v2912
        %v3049 = vsel %vm2985, %v3028, %v2909
        %v3050 = vsel %vm2985, %v3032, %v2910
        %v3051 = vsel %vm2986, %v3028, %v2907
        %v3052 = vsel %vm2986, %v3032, %v2908
        %v3053 = vsel %vm2987, %v3028, %v2905
        %v3054 = vsel %vm2987, %v3032, %v2906
        %v3055 = vsel %vm2988, %v3028, %v2903
        %v3056 = vsel %vm2988, %v3032, %v2904
        %v3057 = vsel %vm2989, %v3028, %v2901
        %v3058 = vsel %vm2989, %v3032, %v2902
        %v3059 = vsel %vm2990, %v3028, %v2899
        %v3060 = vsel %vm2990, %v3032, %v2900
        %v3061 = vsel %vm2991, %v3028, %v2897
        %v3062 = vsel %vm2991, %v3032, %v2898
        %v3063 = vsel %vm2992, %v3028, %v2895
        %v3064 = vsel %vm2992, %v3032, %v2896
        %v3065 = vsel %vm2993, %v3028, %v2893
        %v3066 = vsel %vm2993, %v3032, %v2894
        %v3067 = vsel %vm2994, %v3028, %v2891
        %v3068 = vsel %vm2994, %v3032, %v2892
        %v3069 = vsel %vm2995, %v3028, %v2889
        %v3070 = vsel %vm2995, %v3032, %v2890
        %v3071 = vsel %vm2996, %v3028, %v2887
        %v3072 = vsel %vm2996, %v3032, %v2888
        %v3073 = vsel %vm2997, %v3028, %v2885
        %v3074 = vsel %vm2997, %v3032, %v2886
        %v3075 = vsel %vm2998, %v3028, %v2883
        %v3076 = vsel %vm2998, %v3032, %v2884
        %v3077 = vsel %vm2999, %v3028, %v2881
        %v3078 = vsel %vm2999, %v3032, %v2882
        %v3079 = vsel %vm3000, %v3028, %v2879
        %v3080 = vsel %vm3000, %v3032, %v2880
        %v3081 = vsel %vm3001, %v3028, %v2877
        %v3082 = vsel %vm3001, %v3032, %v2878
        %v3083 = vsel %vm3002, %v3028, %v2875
        %v3084 = vsel %vm3002, %v3032, %v2876
        %v3085 = vsel %vm3003, %v3028, %v2873
        %v3086 = vsel %vm3003, %v3032, %v2874
        %v3087 = vsel %vm3004, %v3028, %v2871
        %v3088 = vsel %vm3004, %v3032, %v2872
        %v3089 = vsel %vm3005, %v3028, %v2869
        %v3090 = vsel %vm3005, %v3032, %v2870
        %v3091 = vsel %vm3006, %v3028, %v2867
        %v3092 = vsel %vm3006, %v3032, %v2868
        %v3093 = vsel %vm3007, %v3028, %v2865
        %v3094 = vsel %vm3007, %v3032, %v2866
        %v3095 = vsel %vm3008, %v3028, %v2863
        %v3096 = vsel %vm3008, %v3032, %v2864
        %v3097 = vsel %vm3009, %v3028, %v2861
        %v3098 = vsel %vm3009, %v3032, %v2862
        %v3099 = vsel %vm3010, %v3028, %v2859
        %v3100 = vsel %vm3010, %v3032, %v2860
        %v3101 = vsel %vm3011, %v3028, %v2857
        %v3102 = vsel %vm3011, %v3032, %v2858
        %v3103 = vsel %vm3012, %v3028, %v2855
        %v3104 = vsel %vm3012, %v3032, %v2856
        %v3105 = vsel %vm3013, %v3028, %v2853
        %v3106 = vsel %vm3013, %v3032, %v2854
        %v3107 = vsel %vm3014, %v3028, %v2851
        %v3108 = vsel %vm3014, %v3032, %v2852
        %v3109 = vsel %vm3015, %v3028, %v2849
        %v3110 = vsel %vm3015, %v3032, %v2850
        %v3111 = vsel %vm3016, %v3028, %v2847
        %v3112 = vsel %vm3016, %v3032, %v2848
        %v3113 = vsel %vm3017, %v3028, %v2845
        %v3114 = vsel %vm3017, %v3032, %v2846
        %v3115 = vsel %vm3018, %v3028, %v2843
        %v3116 = vsel %vm3018, %v3032, %v2844
        %v3117 = vsel %vm3019, %v3028, %v2841
        %v3118 = vsel %vm3019, %v3032, %v2842
        %v3119 = vsel %vm3020, %v3028, %v2839
        %v3120 = vsel %vm3020, %v3032, %v2840
        %v3121 = vsel %vm3021, %v3028, %v2837
        %v3122 = vsel %vm3021, %v3032, %v2838
        %v3123 = vsel %vm3022, %v3028, %v2835
        %v3124 = vsel %vm3022, %v3032, %v2836
        %v3125 = vsel %vm3023, %v3028, %v2833
        %v3126 = vsel %vm3023, %v3032, %v2834
        %v3127 = vsel %vm3024, %v3028, %v2927
        %v3128 = vsel %vm3024, %v3032, %v2928
        %v3129 = vld [vmem:[%s6] ss:$4 sm:$0x3]
        %v3131 = vlaneseq
        %v3132 = vshrl.u32 %v3131, 7
        %v3133 = vsub.s32 0, %v3132
        %v3134 = vrot.slane %v3129, %v3133
        %v3135 = vlaneseq
        %v3136 = vshrl.u32 %v3135, 7
        %v3137 = vsub.s32 1, %v3136
        %v3138 = vrot.slane %v3129, %v3137
        %v3141 = vmul.f32 %v2592, %v3134
        %v3142 = vmul.f32 %v2593, %v3138
        %v3143 = vmul.f32 %v2594, %v3134
        %v3144 = vmul.f32 %v2595, %v3138
        %v3145 = vmul.f32 %v2596, %v3134
        %v3146 = vmul.f32 %v2597, %v3138
        %v3147 = vmul.f32 %v2598, %v3134
        %v3148 = vmul.f32 %v2599, %v3138
        %v3149 = vmul.f32 %v2600, %v3134
        %v3150 = vmul.f32 %v2601, %v3138
        %v3151 = vmul.f32 %v2602, %v3134
        %v3152 = vmul.f32 %v2603, %v3138
        %v3153 = vmul.f32 %v2604, %v3134
        %v3154 = vmul.f32 %v2605, %v3138
        %v3155 = vmul.f32 %v2606, %v3134
        %v3156 = vmul.f32 %v2607, %v3138
        %v3157 = vmul.f32 %v2608, %v3134
        %v3158 = vmul.f32 %v2609, %v3138
        %v3159 = vmul.f32 %v2610, %v3134
        %v3160 = vmul.f32 %v2611, %v3138
        %v3161 = vmul.f32 %v2612, %v3134
        %v3162 = vmul.f32 %v2613, %v3138
        %v3163 = vmul.f32 %v2614, %v3134
        %v3164 = vmul.f32 %v2615, %v3138
        %v3165 = vmul.f32 %v2616, %v3134
        %v3166 = vmul.f32 %v2617, %v3138
        %v3167 = vmul.f32 %v2618, %v3134
        %v3168 = vmul.f32 %v2619, %v3138
        %v3169 = vmul.f32 %v2620, %v3134
        %v3170 = vmul.f32 %v2621, %v3138
        %v3171 = vmul.f32 %v2622, %v3134
        %v3172 = vmul.f32 %v2623, %v3138
        %v3173 = vmul.f32 %v2624, %v3134
        %v3174 = vmul.f32 %v2625, %v3138
        %v3175 = vmul.f32 %v2626, %v3134
        %v3176 = vmul.f32 %v2627, %v3138
        %v3177 = vmul.f32 %v2628, %v3134
        %v3178 = vmul.f32 %v2629, %v3138
        %v3179 = vmul.f32 %v2630, %v3134
        %v3180 = vmul.f32 %v2631, %v3138
        %v3181 = vmul.f32 %v2632, %v3134
        %v3182 = vmul.f32 %v2633, %v3138
        %v3183 = vmul.f32 %v2634, %v3134
        %v3184 = vmul.f32 %v2635, %v3138
        %v3185 = vmul.f32 %v2636, %v3134
        %v3186 = vmul.f32 %v2637, %v3138
        %v3187 = vmul.f32 %v2638, %v3134
        %v3188 = vmul.f32 %v2639, %v3138
        %v3189 = vmul.f32 %v2640, %v3134
        %v3190 = vmul.f32 %v2641, %v3138
        %v3191 = vmul.f32 %v2642, %v3134
        %v3192 = vmul.f32 %v2643, %v3138
        %v3193 = vmul.f32 %v2644, %v3134
        %v3194 = vmul.f32 %v2645, %v3138
        %v3195 = vmul.f32 %v2646, %v3134
        %v3196 = vmul.f32 %v2647, %v3138
        %v3197 = vmul.f32 %v2648, %v3134
        %v3198 = vmul.f32 %v2649, %v3138
        %v3199 = vmul.f32 %v2650, %v3134
        %v3200 = vmul.f32 %v2651, %v3138
        %v3201 = vmul.f32 %v2652, %v3134
        %v3202 = vmul.f32 %v2653, %v3138
        %v3203 = vmul.f32 %v2654, %v3134
        %v3204 = vmul.f32 %v2655, %v3138
        %v3205 = vmul.f32 %v2656, %v3134
        %v3206 = vmul.f32 %v2657, %v3138
        %v3207 = vmul.f32 %v2658, %v3134
        %v3208 = vmul.f32 %v2659, %v3138
        %v3209 = vmul.f32 %v2660, %v3134
        %v3210 = vmul.f32 %v2661, %v3138
        %v3211 = vmul.f32 %v2662, %v3134
        %v3212 = vmul.f32 %v2663, %v3138
        %v3213 = vmul.f32 %v2664, %v3134
        %v3214 = vmul.f32 %v2665, %v3138
        %v3215 = vmul.f32 %v2666, %v3134
        %v3216 = vmul.f32 %v2667, %v3138
        %v3217 = vmul.f32 %v2668, %v3134
        %v3218 = vmul.f32 %v2669, %v3138
        %v3219 = vmul.f32 %v2670, %v3134
        %v3220 = vmul.f32 %v2671, %v3138
        %v3221 = vmul.f32 %v2672, %v3134
        %v3222 = vmul.f32 %v2673, %v3138
        %v3223 = vmul.f32 %v2674, %v3134
        %v3224 = vmul.f32 %v2675, %v3138
        %v3225 = vmul.f32 %v2676, %v3134
        %v3226 = vmul.f32 %v2677, %v3138
        %v3227 = vmul.f32 %v2678, %v3134
        %v3228 = vmul.f32 %v2679, %v3138
        %v3229 = vmul.f32 %v2680, %v3134
        %v3230 = vmul.f32 %v2681, %v3138
        %v3231 = vmul.f32 %v2682, %v3134
        %v3232 = vmul.f32 %v2683, %v3138
        %v3233 = vmul.f32 %v2684, %v3134
        %v3234 = vmul.f32 %v2685, %v3138
        %v3235 = vmul.f32 %v2686, %v3134
        %v3236 = vmul.f32 %v2687, %v3138
        %s3237 = scalar_lea.vmem %s6, 1
        %v3238 = vld [vmem:[%s3237] ss:$4 sm:$0x3]
        %v3240 = vlaneseq
        %v3241 = vshrl.u32 %v3240, 7
        %v3242 = vsub.s32 0, %v3241
        %v3243 = vrot.slane %v3238, %v3242
        %v3244 = vlaneseq
        %v3245 = vshrl.u32 %v3244, 7
        %v3246 = vsub.s32 1, %v3245
        %v3247 = vrot.slane %v3238, %v3246
        %v3250 = vmul.f32 %v1516, %v3243
        %v3251 = vmul.f32 %v1518, %v3247
        %v3252 = vmul.f32 %v1520, %v3243
        %v3253 = vmul.f32 %v1522, %v3247
        %v3254 = vmul.f32 %v1526, %v3243
        %v3255 = vmul.f32 %v1528, %v3247
        %v3256 = vmul.f32 %v1530, %v3243
        %v3257 = vmul.f32 %v1532, %v3247
        %v3258 = vmul.f32 %v1536, %v3243
        %v3259 = vmul.f32 %v1538, %v3247
        %v3260 = vmul.f32 %v1540, %v3243
        %v3261 = vmul.f32 %v1542, %v3247
        %v3262 = vmul.f32 %v1546, %v3243
        %v3263 = vmul.f32 %v1548, %v3247
        %v3264 = vmul.f32 %v1550, %v3243
        %v3265 = vmul.f32 %v1552, %v3247
        %v3266 = vmul.f32 %v1556, %v3243
        %v3267 = vmul.f32 %v1558, %v3247
        %v3268 = vmul.f32 %v1560, %v3243
        %v3269 = vmul.f32 %v1562, %v3247
        %v3270 = vmul.f32 %v1566, %v3243
        %v3271 = vmul.f32 %v1568, %v3247
        %v3272 = vmul.f32 %v1570, %v3243
        %v3273 = vmul.f32 %v1572, %v3247
        %v3274 = vmul.f32 %v1576, %v3243
        %v3275 = vmul.f32 %v1578, %v3247
        %v3276 = vmul.f32 %v1580, %v3243
        %v3277 = vmul.f32 %v1582, %v3247
        %v3278 = vmul.f32 %v1586, %v3243
        %v3279 = vmul.f32 %v1588, %v3247
        %v3280 = vmul.f32 %v1590, %v3243
        %v3281 = vmul.f32 %v1592, %v3247
        %v3282 = vmul.f32 %v1596, %v3243
        %v3283 = vmul.f32 %v1598, %v3247
        %v3284 = vmul.f32 %v1600, %v3243
        %v3285 = vmul.f32 %v1602, %v3247
        %v3286 = vmul.f32 %v1606, %v3243
        %v3287 = vmul.f32 %v1608, %v3247
        %v3288 = vmul.f32 %v1610, %v3243
        %v3289 = vmul.f32 %v1612, %v3247
        %v3290 = vmul.f32 %v1616, %v3243
        %v3291 = vmul.f32 %v1618, %v3247
        %v3292 = vmul.f32 %v1620, %v3243
        %v3293 = vmul.f32 %v1622, %v3247
        %v3294 = vmul.f32 %v1626, %v3243
        %v3295 = vmul.f32 %v1628, %v3247
        %v3296 = vmul.f32 %v1630, %v3243
        %v3297 = vmul.f32 %v1632, %v3247
        %v3298 = vmul.f32 %v1636, %v3243
        %v3299 = vmul.f32 %v1638, %v3247
        %v3300 = vmul.f32 %v1640, %v3243
        %v3301 = vmul.f32 %v1642, %v3247
        %v3302 = vmul.f32 %v1646, %v3243
        %v3303 = vmul.f32 %v1648, %v3247
        %v3304 = vmul.f32 %v1650, %v3243
        %v3305 = vmul.f32 %v1652, %v3247
        %v3306 = vmul.f32 %v1656, %v3243
        %v3307 = vmul.f32 %v1658, %v3247
        %v3308 = vmul.f32 %v1660, %v3243
        %v3309 = vmul.f32 %v1662, %v3247
        %v3310 = vmul.f32 %v1666, %v3243
        %v3311 = vmul.f32 %v1668, %v3247
        %v3312 = vmul.f32 %v1670, %v3243
        %v3313 = vmul.f32 %v1672, %v3247
        %v3314 = vmul.f32 %v1676, %v3243
        %v3315 = vmul.f32 %v1678, %v3247
        %v3316 = vmul.f32 %v1680, %v3243
        %v3317 = vmul.f32 %v1682, %v3247
        %v3318 = vmul.f32 %v1686, %v3243
        %v3319 = vmul.f32 %v1688, %v3247
        %v3320 = vmul.f32 %v1690, %v3243
        %v3321 = vmul.f32 %v1692, %v3247
        %v3322 = vmul.f32 %v1696, %v3243
        %v3323 = vmul.f32 %v1698, %v3247
        %v3324 = vmul.f32 %v1700, %v3243
        %v3325 = vmul.f32 %v1702, %v3247
        %v3326 = vmul.f32 %v1706, %v3243
        %v3327 = vmul.f32 %v1708, %v3247
        %v3328 = vmul.f32 %v1710, %v3243
        %v3329 = vmul.f32 %v1712, %v3247
        %v3330 = vmul.f32 %v1716, %v3243
        %v3331 = vmul.f32 %v1718, %v3247
        %v3332 = vmul.f32 %v1720, %v3243
        %v3333 = vmul.f32 %v1722, %v3247
        %v3334 = vmul.f32 %v1726, %v3243
        %v3335 = vmul.f32 %v1728, %v3247
        %v3336 = vmul.f32 %v1730, %v3243
        %v3337 = vmul.f32 %v1732, %v3247
        %v3338 = vmul.f32 %v1736, %v3243
        %v3339 = vmul.f32 %v1738, %v3247
        %v3340 = vmul.f32 %v1740, %v3243
        %v3341 = vmul.f32 %v1742, %v3247
        %v3342 = vmul.f32 %v1746, %v3243
        %v3343 = vmul.f32 %v1748, %v3247
        %v3344 = vmul.f32 %v1750, %v3243
        %v3345 = vmul.f32 %v1752, %v3247
        %v3346 = vadd.f32 %v3141, %v3250
        %v3347 = vadd.f32 %v3142, %v3251
        %v3348 = vadd.f32 %v3143, %v3252
        %v3349 = vadd.f32 %v3144, %v3253
        %v3350 = vadd.f32 %v3145, %v3254
        %v3351 = vadd.f32 %v3146, %v3255
        %v3352 = vadd.f32 %v3147, %v3256
        %v3353 = vadd.f32 %v3148, %v3257
        %v3354 = vadd.f32 %v3149, %v3258
        %v3355 = vadd.f32 %v3150, %v3259
        %v3356 = vadd.f32 %v3151, %v3260
        %v3357 = vadd.f32 %v3152, %v3261
        %v3358 = vadd.f32 %v3153, %v3262
        %v3359 = vadd.f32 %v3154, %v3263
        %v3360 = vadd.f32 %v3155, %v3264
        %v3361 = vadd.f32 %v3156, %v3265
        %v3362 = vadd.f32 %v3157, %v3266
        %v3363 = vadd.f32 %v3158, %v3267
        %v3364 = vadd.f32 %v3159, %v3268
        %v3365 = vadd.f32 %v3160, %v3269
        %v3366 = vadd.f32 %v3161, %v3270
        %v3367 = vadd.f32 %v3162, %v3271
        %v3368 = vadd.f32 %v3163, %v3272
        %v3369 = vadd.f32 %v3164, %v3273
        %v3370 = vadd.f32 %v3165, %v3274
        %v3371 = vadd.f32 %v3166, %v3275
        %v3372 = vadd.f32 %v3167, %v3276
        %v3373 = vadd.f32 %v3168, %v3277
        %v3374 = vadd.f32 %v3169, %v3278
        %v3375 = vadd.f32 %v3170, %v3279
        %v3376 = vadd.f32 %v3171, %v3280
        %v3377 = vadd.f32 %v3172, %v3281
        %v3378 = vadd.f32 %v3173, %v3282
        %v3379 = vadd.f32 %v3174, %v3283
        %v3380 = vadd.f32 %v3175, %v3284
        %v3381 = vadd.f32 %v3176, %v3285
        %v3382 = vadd.f32 %v3177, %v3286
        %v3383 = vadd.f32 %v3178, %v3287
        %v3384 = vadd.f32 %v3179, %v3288
        %v3385 = vadd.f32 %v3180, %v3289
        %v3386 = vadd.f32 %v3181, %v3290
        %v3387 = vadd.f32 %v3182, %v3291
        %v3388 = vadd.f32 %v3183, %v3292
        %v3389 = vadd.f32 %v3184, %v3293
        %v3390 = vadd.f32 %v3185, %v3294
        %v3391 = vadd.f32 %v3186, %v3295
        %v3392 = vadd.f32 %v3187, %v3296
        %v3393 = vadd.f32 %v3188, %v3297
        %v3394 = vadd.f32 %v3189, %v3298
        %v3395 = vadd.f32 %v3190, %v3299
        %v3396 = vadd.f32 %v3191, %v3300
        %v3397 = vadd.f32 %v3192, %v3301
        %v3398 = vadd.f32 %v3193, %v3302
        %v3399 = vadd.f32 %v3194, %v3303
        %v3400 = vadd.f32 %v3195, %v3304
        %v3401 = vadd.f32 %v3196, %v3305
        %v3402 = vadd.f32 %v3197, %v3306
        %v3403 = vadd.f32 %v3198, %v3307
        %v3404 = vadd.f32 %v3199, %v3308
        %v3405 = vadd.f32 %v3200, %v3309
        %v3406 = vadd.f32 %v3201, %v3310
        %v3407 = vadd.f32 %v3202, %v3311
        %v3408 = vadd.f32 %v3203, %v3312
        %v3409 = vadd.f32 %v3204, %v3313
        %v3410 = vadd.f32 %v3205, %v3314
        %v3411 = vadd.f32 %v3206, %v3315
        %v3412 = vadd.f32 %v3207, %v3316
        %v3413 = vadd.f32 %v3208, %v3317
        %v3414 = vadd.f32 %v3209, %v3318
        %v3415 = vadd.f32 %v3210, %v3319
        %v3416 = vadd.f32 %v3211, %v3320
        %v3417 = vadd.f32 %v3212, %v3321
        %v3418 = vadd.f32 %v3213, %v3322
        %v3419 = vadd.f32 %v3214, %v3323
        %v3420 = vadd.f32 %v3215, %v3324
        %v3421 = vadd.f32 %v3216, %v3325
        %v3422 = vadd.f32 %v3217, %v3326
        %v3423 = vadd.f32 %v3218, %v3327
        %v3424 = vadd.f32 %v3219, %v3328
        %v3425 = vadd.f32 %v3220, %v3329
        %v3426 = vadd.f32 %v3221, %v3330
        %v3427 = vadd.f32 %v3222, %v3331
        %v3428 = vadd.f32 %v3223, %v3332
        %v3429 = vadd.f32 %v3224, %v3333
        %v3430 = vadd.f32 %v3225, %v3334
        %v3431 = vadd.f32 %v3226, %v3335
        %v3432 = vadd.f32 %v3227, %v3336
        %v3433 = vadd.f32 %v3228, %v3337
        %v3434 = vadd.f32 %v3229, %v3338
        %v3435 = vadd.f32 %v3230, %v3339
        %v3436 = vadd.f32 %v3231, %v3340
        %v3437 = vadd.f32 %v3232, %v3341
        %v3438 = vadd.f32 %v3233, %v3342
        %v3439 = vadd.f32 %v3234, %v3343
        %v3440 = vadd.f32 %v3235, %v3344
        %v3441 = vadd.f32 %v3236, %v3345
        %s3442 = scalar_lea.vmem %s6, 2
        %v3443 = vld [vmem:[%s3442] ss:$4 sm:$0x3]
        %v3445 = vlaneseq
        %v3446 = vshrl.u32 %v3445, 7
        %v3447 = vsub.s32 0, %v3446
        %v3448 = vrot.slane %v3443, %v3447
        %v3449 = vlaneseq
        %v3450 = vshrl.u32 %v3449, 7
        %v3451 = vsub.s32 1, %v3450
        %v3452 = vrot.slane %v3443, %v3451
        %v3455 = vmul.f32 %v3033, %v3448
        %v3456 = vmul.f32 %v3034, %v3452
        %v3457 = vmul.f32 %v3035, %v3448
        %v3458 = vmul.f32 %v3036, %v3452
        %v3459 = vmul.f32 %v3037, %v3448
        %v3460 = vmul.f32 %v3038, %v3452
        %v3461 = vmul.f32 %v3039, %v3448
        %v3462 = vmul.f32 %v3040, %v3452
        %v3463 = vmul.f32 %v3041, %v3448
        %v3464 = vmul.f32 %v3042, %v3452
        %v3465 = vmul.f32 %v3043, %v3448
        %v3466 = vmul.f32 %v3044, %v3452
        %v3467 = vmul.f32 %v3045, %v3448
        %v3468 = vmul.f32 %v3046, %v3452
        %v3469 = vmul.f32 %v3047, %v3448
        %v3470 = vmul.f32 %v3048, %v3452
        %v3471 = vmul.f32 %v3049, %v3448
        %v3472 = vmul.f32 %v3050, %v3452
        %v3473 = vmul.f32 %v3051, %v3448
        %v3474 = vmul.f32 %v3052, %v3452
        %v3475 = vmul.f32 %v3053, %v3448
        %v3476 = vmul.f32 %v3054, %v3452
        %v3477 = vmul.f32 %v3055, %v3448
        %v3478 = vmul.f32 %v3056, %v3452
        %v3479 = vmul.f32 %v3057, %v3448
        %v3480 = vmul.f32 %v3058, %v3452
        %v3481 = vmul.f32 %v3059, %v3448
        %v3482 = vmul.f32 %v3060, %v3452
        %v3483 = vmul.f32 %v3061, %v3448
        %v3484 = vmul.f32 %v3062, %v3452
        %v3485 = vmul.f32 %v3063, %v3448
        %v3486 = vmul.f32 %v3064, %v3452
        %v3487 = vmul.f32 %v3065, %v3448
        %v3488 = vmul.f32 %v3066, %v3452
        %v3489 = vmul.f32 %v3067, %v3448
        %v3490 = vmul.f32 %v3068, %v3452
        %v3491 = vmul.f32 %v3069, %v3448
        %v3492 = vmul.f32 %v3070, %v3452
        %v3493 = vmul.f32 %v3071, %v3448
        %v3494 = vmul.f32 %v3072, %v3452
        %v3495 = vmul.f32 %v3073, %v3448
        %v3496 = vmul.f32 %v3074, %v3452
        %v3497 = vmul.f32 %v3075, %v3448
        %v3498 = vmul.f32 %v3076, %v3452
        %v3499 = vmul.f32 %v3077, %v3448
        %v3500 = vmul.f32 %v3078, %v3452
        %v3501 = vmul.f32 %v3079, %v3448
        %v3502 = vmul.f32 %v3080, %v3452
        %v3503 = vmul.f32 %v3081, %v3448
        %v3504 = vmul.f32 %v3082, %v3452
        %v3505 = vmul.f32 %v3083, %v3448
        %v3506 = vmul.f32 %v3084, %v3452
        %v3507 = vmul.f32 %v3085, %v3448
        %v3508 = vmul.f32 %v3086, %v3452
        %v3509 = vmul.f32 %v3087, %v3448
        %v3510 = vmul.f32 %v3088, %v3452
        %v3511 = vmul.f32 %v3089, %v3448
        %v3512 = vmul.f32 %v3090, %v3452
        %v3513 = vmul.f32 %v3091, %v3448
        %v3514 = vmul.f32 %v3092, %v3452
        %v3515 = vmul.f32 %v3093, %v3448
        %v3516 = vmul.f32 %v3094, %v3452
        %v3517 = vmul.f32 %v3095, %v3448
        %v3518 = vmul.f32 %v3096, %v3452
        %v3519 = vmul.f32 %v3097, %v3448
        %v3520 = vmul.f32 %v3098, %v3452
        %v3521 = vmul.f32 %v3099, %v3448
        %v3522 = vmul.f32 %v3100, %v3452
        %v3523 = vmul.f32 %v3101, %v3448
        %v3524 = vmul.f32 %v3102, %v3452
        %v3525 = vmul.f32 %v3103, %v3448
        %v3526 = vmul.f32 %v3104, %v3452
        %v3527 = vmul.f32 %v3105, %v3448
        %v3528 = vmul.f32 %v3106, %v3452
        %v3529 = vmul.f32 %v3107, %v3448
        %v3530 = vmul.f32 %v3108, %v3452
        %v3531 = vmul.f32 %v3109, %v3448
        %v3532 = vmul.f32 %v3110, %v3452
        %v3533 = vmul.f32 %v3111, %v3448
        %v3534 = vmul.f32 %v3112, %v3452
        %v3535 = vmul.f32 %v3113, %v3448
        %v3536 = vmul.f32 %v3114, %v3452
        %v3537 = vmul.f32 %v3115, %v3448
        %v3538 = vmul.f32 %v3116, %v3452
        %v3539 = vmul.f32 %v3117, %v3448
        %v3540 = vmul.f32 %v3118, %v3452
        %v3541 = vmul.f32 %v3119, %v3448
        %v3542 = vmul.f32 %v3120, %v3452
        %v3543 = vmul.f32 %v3121, %v3448
        %v3544 = vmul.f32 %v3122, %v3452
        %v3545 = vmul.f32 %v3123, %v3448
        %v3546 = vmul.f32 %v3124, %v3452
        %v3547 = vmul.f32 %v3125, %v3448
        %v3548 = vmul.f32 %v3126, %v3452
        %v3549 = vmul.f32 %v3127, %v3448
        %v3550 = vmul.f32 %v3128, %v3452
        %v3551 = vadd.f32 %v3346, %v3455
        %v3552 = vadd.f32 %v3347, %v3456
        %v3553 = vadd.f32 %v3348, %v3457
        %v3554 = vadd.f32 %v3349, %v3458
        %v3555 = vadd.f32 %v3350, %v3459
        %v3556 = vadd.f32 %v3351, %v3460
        %v3557 = vadd.f32 %v3352, %v3461
        %v3558 = vadd.f32 %v3353, %v3462
        %v3559 = vadd.f32 %v3354, %v3463
        %v3560 = vadd.f32 %v3355, %v3464
        %v3561 = vadd.f32 %v3356, %v3465
        %v3562 = vadd.f32 %v3357, %v3466
        %v3563 = vadd.f32 %v3358, %v3467
        %v3564 = vadd.f32 %v3359, %v3468
        %v3565 = vadd.f32 %v3360, %v3469
        %v3566 = vadd.f32 %v3361, %v3470
        %v3567 = vadd.f32 %v3362, %v3471
        %v3568 = vadd.f32 %v3363, %v3472
        %v3569 = vadd.f32 %v3364, %v3473
        %v3570 = vadd.f32 %v3365, %v3474
        %v3571 = vadd.f32 %v3366, %v3475
        %v3572 = vadd.f32 %v3367, %v3476
        %v3573 = vadd.f32 %v3368, %v3477
        %v3574 = vadd.f32 %v3369, %v3478
        %v3575 = vadd.f32 %v3370, %v3479
        %v3576 = vadd.f32 %v3371, %v3480
        %v3577 = vadd.f32 %v3372, %v3481
        %v3578 = vadd.f32 %v3373, %v3482
        %v3579 = vadd.f32 %v3374, %v3483
        %v3580 = vadd.f32 %v3375, %v3484
        %v3581 = vadd.f32 %v3376, %v3485
        %v3582 = vadd.f32 %v3377, %v3486
        %v3583 = vadd.f32 %v3378, %v3487
        %v3584 = vadd.f32 %v3379, %v3488
        %v3585 = vadd.f32 %v3380, %v3489
        %v3586 = vadd.f32 %v3381, %v3490
        %v3587 = vadd.f32 %v3382, %v3491
        %v3588 = vadd.f32 %v3383, %v3492
        %v3589 = vadd.f32 %v3384, %v3493
        %v3590 = vadd.f32 %v3385, %v3494
        %v3591 = vadd.f32 %v3386, %v3495
        %v3592 = vadd.f32 %v3387, %v3496
        %v3593 = vadd.f32 %v3388, %v3497
        %v3594 = vadd.f32 %v3389, %v3498
        %v3595 = vadd.f32 %v3390, %v3499
        %v3596 = vadd.f32 %v3391, %v3500
        %v3597 = vadd.f32 %v3392, %v3501
        %v3598 = vadd.f32 %v3393, %v3502
        %v3599 = vadd.f32 %v3394, %v3503
        %v3600 = vadd.f32 %v3395, %v3504
        %v3601 = vadd.f32 %v3396, %v3505
        %v3602 = vadd.f32 %v3397, %v3506
        %v3603 = vadd.f32 %v3398, %v3507
        %v3604 = vadd.f32 %v3399, %v3508
        %v3605 = vadd.f32 %v3400, %v3509
        %v3606 = vadd.f32 %v3401, %v3510
        %v3607 = vadd.f32 %v3402, %v3511
        %v3608 = vadd.f32 %v3403, %v3512
        %v3609 = vadd.f32 %v3404, %v3513
        %v3610 = vadd.f32 %v3405, %v3514
        %v3611 = vadd.f32 %v3406, %v3515
        %v3612 = vadd.f32 %v3407, %v3516
        %v3613 = vadd.f32 %v3408, %v3517
        %v3614 = vadd.f32 %v3409, %v3518
        %v3615 = vadd.f32 %v3410, %v3519
        %v3616 = vadd.f32 %v3411, %v3520
        %v3617 = vadd.f32 %v3412, %v3521
        %v3618 = vadd.f32 %v3413, %v3522
        %v3619 = vadd.f32 %v3414, %v3523
        %v3620 = vadd.f32 %v3415, %v3524
        %v3621 = vadd.f32 %v3416, %v3525
        %v3622 = vadd.f32 %v3417, %v3526
        %v3623 = vadd.f32 %v3418, %v3527
        %v3624 = vadd.f32 %v3419, %v3528
        %v3625 = vadd.f32 %v3420, %v3529
        %v3626 = vadd.f32 %v3421, %v3530
        %v3627 = vadd.f32 %v3422, %v3531
        %v3628 = vadd.f32 %v3423, %v3532
        %v3629 = vadd.f32 %v3424, %v3533
        %v3630 = vadd.f32 %v3425, %v3534
        %v3631 = vadd.f32 %v3426, %v3535
        %v3632 = vadd.f32 %v3427, %v3536
        %v3633 = vadd.f32 %v3428, %v3537
        %v3634 = vadd.f32 %v3429, %v3538
        %v3635 = vadd.f32 %v3430, %v3539
        %v3636 = vadd.f32 %v3431, %v3540
        %v3637 = vadd.f32 %v3432, %v3541
        %v3638 = vadd.f32 %v3433, %v3542
        %v3639 = vadd.f32 %v3434, %v3543
        %v3640 = vadd.f32 %v3435, %v3544
        %v3641 = vadd.f32 %v3436, %v3545
        %v3642 = vadd.f32 %v3437, %v3546
        %v3643 = vadd.f32 %v3438, %v3547
        %v3644 = vadd.f32 %v3439, %v3548
        %v3645 = vadd.f32 %v3440, %v3549
        %v3646 = vadd.f32 %v3441, %v3550
        %v3647 = vxor.u32 %v3551, 2147483648
        %v3648 = vxor.u32 %v3552, 2147483648
        %v3649 = vxor.u32 %v3553, 2147483648
        %v3650 = vxor.u32 %v3554, 2147483648
        %v3651 = vxor.u32 %v3555, 2147483648
        %v3652 = vxor.u32 %v3556, 2147483648
        %v3653 = vxor.u32 %v3557, 2147483648
        %v3654 = vxor.u32 %v3558, 2147483648
        %v3655 = vxor.u32 %v3559, 2147483648
        %v3656 = vxor.u32 %v3560, 2147483648
        %v3657 = vxor.u32 %v3561, 2147483648
        %v3658 = vxor.u32 %v3562, 2147483648
        %v3659 = vxor.u32 %v3563, 2147483648
        %v3660 = vxor.u32 %v3564, 2147483648
        %v3661 = vxor.u32 %v3565, 2147483648
        %v3662 = vxor.u32 %v3566, 2147483648
        %v3663 = vxor.u32 %v3567, 2147483648
        %v3664 = vxor.u32 %v3568, 2147483648
        %v3665 = vxor.u32 %v3569, 2147483648
        %v3666 = vxor.u32 %v3570, 2147483648
        %v3667 = vxor.u32 %v3571, 2147483648
        %v3668 = vxor.u32 %v3572, 2147483648
        %v3669 = vxor.u32 %v3573, 2147483648
        %v3670 = vxor.u32 %v3574, 2147483648
        %v3671 = vxor.u32 %v3575, 2147483648
        %v3672 = vxor.u32 %v3576, 2147483648
        %v3673 = vxor.u32 %v3577, 2147483648
        %v3674 = vxor.u32 %v3578, 2147483648
        %v3675 = vxor.u32 %v3579, 2147483648
        %v3676 = vxor.u32 %v3580, 2147483648
        %v3677 = vxor.u32 %v3581, 2147483648
        %v3678 = vxor.u32 %v3582, 2147483648
        %v3679 = vxor.u32 %v3583, 2147483648
        %v3680 = vxor.u32 %v3584, 2147483648
        %v3681 = vxor.u32 %v3585, 2147483648
        %v3682 = vxor.u32 %v3586, 2147483648
        %v3683 = vxor.u32 %v3587, 2147483648
        %v3684 = vxor.u32 %v3588, 2147483648
        %v3685 = vxor.u32 %v3589, 2147483648
        %v3686 = vxor.u32 %v3590, 2147483648
        %v3687 = vxor.u32 %v3591, 2147483648
        %v3688 = vxor.u32 %v3592, 2147483648
        %v3689 = vxor.u32 %v3593, 2147483648
        %v3690 = vxor.u32 %v3594, 2147483648
        %v3691 = vxor.u32 %v3595, 2147483648
        %v3692 = vxor.u32 %v3596, 2147483648
        %v3693 = vxor.u32 %v3597, 2147483648
        %v3694 = vxor.u32 %v3598, 2147483648
        %v3695 = vxor.u32 %v3599, 2147483648
        %v3696 = vxor.u32 %v3600, 2147483648
        %v3697 = vxor.u32 %v3601, 2147483648
        %v3698 = vxor.u32 %v3602, 2147483648
        %v3699 = vxor.u32 %v3603, 2147483648
        %v3700 = vxor.u32 %v3604, 2147483648
        %v3701 = vxor.u32 %v3605, 2147483648
        %v3702 = vxor.u32 %v3606, 2147483648
        %v3703 = vxor.u32 %v3607, 2147483648
        %v3704 = vxor.u32 %v3608, 2147483648
        %v3705 = vxor.u32 %v3609, 2147483648
        %v3706 = vxor.u32 %v3610, 2147483648
        %v3707 = vxor.u32 %v3611, 2147483648
        %v3708 = vxor.u32 %v3612, 2147483648
        %v3709 = vxor.u32 %v3613, 2147483648
        %v3710 = vxor.u32 %v3614, 2147483648
        %v3711 = vxor.u32 %v3615, 2147483648
        %v3712 = vxor.u32 %v3616, 2147483648
        %v3713 = vxor.u32 %v3617, 2147483648
        %v3714 = vxor.u32 %v3618, 2147483648
        %v3715 = vxor.u32 %v3619, 2147483648
        %v3716 = vxor.u32 %v3620, 2147483648
        %v3717 = vxor.u32 %v3621, 2147483648
        %v3718 = vxor.u32 %v3622, 2147483648
        %v3719 = vxor.u32 %v3623, 2147483648
        %v3720 = vxor.u32 %v3624, 2147483648
        %v3721 = vxor.u32 %v3625, 2147483648
        %v3722 = vxor.u32 %v3626, 2147483648
        %v3723 = vxor.u32 %v3627, 2147483648
        %v3724 = vxor.u32 %v3628, 2147483648
        %v3725 = vxor.u32 %v3629, 2147483648
        %v3726 = vxor.u32 %v3630, 2147483648
        %v3727 = vxor.u32 %v3631, 2147483648
        %v3728 = vxor.u32 %v3632, 2147483648
        %v3729 = vxor.u32 %v3633, 2147483648
        %v3730 = vxor.u32 %v3634, 2147483648
        %v3731 = vxor.u32 %v3635, 2147483648
        %v3732 = vxor.u32 %v3636, 2147483648
        %v3733 = vxor.u32 %v3637, 2147483648
        %v3734 = vxor.u32 %v3638, 2147483648
        %v3735 = vxor.u32 %v3639, 2147483648
        %v3736 = vxor.u32 %v3640, 2147483648
        %v3737 = vxor.u32 %v3641, 2147483648
        %v3738 = vxor.u32 %v3642, 2147483648
        %v3739 = vxor.u32 %v3643, 2147483648
        %v3740 = vxor.u32 %v3644, 2147483648
        %v3741 = vxor.u32 %v3645, 2147483648
        %v3742 = vxor.u32 %v3646, 2147483648
        %v3743 = vmul.f32 %v3647, 1.442695
        %v3744 = vpow.pop %v3743
        %v3745 = vmul.f32 %v3648, 1.442695
        %v3746 = vpow.pop %v3745
        %v3747 = vmul.f32 %v3649, 1.442695
        %v3748 = vpow.pop %v3747
        %v3749 = vmul.f32 %v3650, 1.442695
        %v3750 = vpow.pop %v3749
        %v3751 = vmul.f32 %v3651, 1.442695
        %v3752 = vpow.pop %v3751
        %v3753 = vmul.f32 %v3652, 1.442695
        %v3754 = vpow.pop %v3753
        %v3755 = vmul.f32 %v3653, 1.442695
        %v3756 = vpow.pop %v3755
        %v3757 = vmul.f32 %v3654, 1.442695
        %v3758 = vpow.pop %v3757
        %v3759 = vmul.f32 %v3655, 1.442695
        %v3760 = vpow.pop %v3759
        %v3761 = vmul.f32 %v3656, 1.442695
        %v3762 = vpow.pop %v3761
        %v3763 = vmul.f32 %v3657, 1.442695
        %v3764 = vpow.pop %v3763
        %v3765 = vmul.f32 %v3658, 1.442695
        %v3766 = vpow.pop %v3765
        %v3767 = vmul.f32 %v3659, 1.442695
        %v3768 = vpow.pop %v3767
        %v3769 = vmul.f32 %v3660, 1.442695
        %v3770 = vpow.pop %v3769
        %v3771 = vmul.f32 %v3661, 1.442695
        %v3772 = vpow.pop %v3771
        %v3773 = vmul.f32 %v3662, 1.442695
        %v3774 = vpow.pop %v3773
        %v3775 = vmul.f32 %v3663, 1.442695
        %v3776 = vpow.pop %v3775
        %v3777 = vmul.f32 %v3664, 1.442695
        %v3778 = vpow.pop %v3777
        %v3779 = vmul.f32 %v3665, 1.442695
        %v3780 = vpow.pop %v3779
        %v3781 = vmul.f32 %v3666, 1.442695
        %v3782 = vpow.pop %v3781
        %v3783 = vmul.f32 %v3667, 1.442695
        %v3784 = vpow.pop %v3783
        %v3785 = vmul.f32 %v3668, 1.442695
        %v3786 = vpow.pop %v3785
        %v3787 = vmul.f32 %v3669, 1.442695
        %v3788 = vpow.pop %v3787
        %v3789 = vmul.f32 %v3670, 1.442695
        %v3790 = vpow.pop %v3789
        %v3791 = vmul.f32 %v3671, 1.442695
        %v3792 = vpow.pop %v3791
        %v3793 = vmul.f32 %v3672, 1.442695
        %v3794 = vpow.pop %v3793
        %v3795 = vmul.f32 %v3673, 1.442695
        %v3796 = vpow.pop %v3795
        %v3797 = vmul.f32 %v3674, 1.442695
        %v3798 = vpow.pop %v3797
        %v3799 = vmul.f32 %v3675, 1.442695
        %v3800 = vpow.pop %v3799
        %v3801 = vmul.f32 %v3676, 1.442695
        %v3802 = vpow.pop %v3801
        %v3803 = vmul.f32 %v3677, 1.442695
        %v3804 = vpow.pop %v3803
        %v3805 = vmul.f32 %v3678, 1.442695
        %v3806 = vpow.pop %v3805
        %v3807 = vmul.f32 %v3679, 1.442695
        %v3808 = vpow.pop %v3807
        %v3809 = vmul.f32 %v3680, 1.442695
        %v3810 = vpow.pop %v3809
        %v3811 = vmul.f32 %v3681, 1.442695
        %v3812 = vpow.pop %v3811
        %v3813 = vmul.f32 %v3682, 1.442695
        %v3814 = vpow.pop %v3813
        %v3815 = vmul.f32 %v3683, 1.442695
        %v3816 = vpow.pop %v3815
        %v3817 = vmul.f32 %v3684, 1.442695
        %v3818 = vpow.pop %v3817
        %v3819 = vmul.f32 %v3685, 1.442695
        %v3820 = vpow.pop %v3819
        %v3821 = vmul.f32 %v3686, 1.442695
        %v3822 = vpow.pop %v3821
        %v3823 = vmul.f32 %v3687, 1.442695
        %v3824 = vpow.pop %v3823
        %v3825 = vmul.f32 %v3688, 1.442695
        %v3826 = vpow.pop %v3825
        %v3827 = vmul.f32 %v3689, 1.442695
        %v3828 = vpow.pop %v3827
        %v3829 = vmul.f32 %v3690, 1.442695
        %v3830 = vpow.pop %v3829
        %v3831 = vmul.f32 %v3691, 1.442695
        %v3832 = vpow.pop %v3831
        %v3833 = vmul.f32 %v3692, 1.442695
        %v3834 = vpow.pop %v3833
        %v3835 = vmul.f32 %v3693, 1.442695
        %v3836 = vpow.pop %v3835
        %v3837 = vmul.f32 %v3694, 1.442695
        %v3838 = vpow.pop %v3837
        %v3839 = vmul.f32 %v3695, 1.442695
        %v3840 = vpow.pop %v3839
        %v3841 = vmul.f32 %v3696, 1.442695
        %v3842 = vpow.pop %v3841
        %v3843 = vmul.f32 %v3697, 1.442695
        %v3844 = vpow.pop %v3843
        %v3845 = vmul.f32 %v3698, 1.442695
        %v3846 = vpow.pop %v3845
        %v3847 = vmul.f32 %v3699, 1.442695
        %v3848 = vpow.pop %v3847
        %v3849 = vmul.f32 %v3700, 1.442695
        %v3850 = vpow.pop %v3849
        %v3851 = vmul.f32 %v3701, 1.442695
        %v3852 = vpow.pop %v3851
        %v3853 = vmul.f32 %v3702, 1.442695
        %v3854 = vpow.pop %v3853
        %v3855 = vmul.f32 %v3703, 1.442695
        %v3856 = vpow.pop %v3855
        %v3857 = vmul.f32 %v3704, 1.442695
        %v3858 = vpow.pop %v3857
        %v3859 = vmul.f32 %v3705, 1.442695
        %v3860 = vpow.pop %v3859
        %v3861 = vmul.f32 %v3706, 1.442695
        %v3862 = vpow.pop %v3861
        %v3863 = vmul.f32 %v3707, 1.442695
        %v3864 = vpow.pop %v3863
        %v3865 = vmul.f32 %v3708, 1.442695
        %v3866 = vpow.pop %v3865
        %v3867 = vmul.f32 %v3709, 1.442695
        %v3868 = vpow.pop %v3867
        %v3869 = vmul.f32 %v3710, 1.442695
        %v3870 = vpow.pop %v3869
        %v3871 = vmul.f32 %v3711, 1.442695
        %v3872 = vpow.pop %v3871
        %v3873 = vmul.f32 %v3712, 1.442695
        %v3874 = vpow.pop %v3873
        %v3875 = vmul.f32 %v3713, 1.442695
        %v3876 = vpow.pop %v3875
        %v3877 = vmul.f32 %v3714, 1.442695
        %v3878 = vpow.pop %v3877
        %v3879 = vmul.f32 %v3715, 1.442695
        %v3880 = vpow.pop %v3879
        %v3881 = vmul.f32 %v3716, 1.442695
        %v3882 = vpow.pop %v3881
        %v3883 = vmul.f32 %v3717, 1.442695
        %v3884 = vpow.pop %v3883
        %v3885 = vmul.f32 %v3718, 1.442695
        %v3886 = vpow.pop %v3885
        %v3887 = vmul.f32 %v3719, 1.442695
        %v3888 = vpow.pop %v3887
        %v3889 = vmul.f32 %v3720, 1.442695
        %v3890 = vpow.pop %v3889
        %v3891 = vmul.f32 %v3721, 1.442695
        %v3892 = vpow.pop %v3891
        %v3893 = vmul.f32 %v3722, 1.442695
        %v3894 = vpow.pop %v3893
        %v3895 = vmul.f32 %v3723, 1.442695
        %v3896 = vpow.pop %v3895
        %v3897 = vmul.f32 %v3724, 1.442695
        %v3898 = vpow.pop %v3897
        %v3899 = vmul.f32 %v3725, 1.442695
        %v3900 = vpow.pop %v3899
        %v3901 = vmul.f32 %v3726, 1.442695
        %v3902 = vpow.pop %v3901
        %v3903 = vmul.f32 %v3727, 1.442695
        %v3904 = vpow.pop %v3903
        %v3905 = vmul.f32 %v3728, 1.442695
        %v3906 = vpow.pop %v3905
        %v3907 = vmul.f32 %v3729, 1.442695
        %v3908 = vpow.pop %v3907
        %v3909 = vmul.f32 %v3730, 1.442695
        %v3910 = vpow.pop %v3909
        %v3911 = vmul.f32 %v3731, 1.442695
        %v3912 = vpow.pop %v3911
        %v3913 = vmul.f32 %v3732, 1.442695
        %v3914 = vpow.pop %v3913
        %v3915 = vmul.f32 %v3733, 1.442695
        %v3916 = vpow.pop %v3915
        %v3917 = vmul.f32 %v3734, 1.442695
        %v3918 = vpow.pop %v3917
        %v3919 = vmul.f32 %v3735, 1.442695
        %v3920 = vpow.pop %v3919
        %v3921 = vmul.f32 %v3736, 1.442695
        %v3922 = vpow.pop %v3921
        %v3923 = vmul.f32 %v3737, 1.442695
        %v3924 = vpow.pop %v3923
        %v3925 = vmul.f32 %v3738, 1.442695
        %v3926 = vpow.pop %v3925
        %v3927 = vmul.f32 %v3739, 1.442695
        %v3928 = vpow.pop %v3927
        %v3929 = vmul.f32 %v3740, 1.442695
        %v3930 = vpow.pop %v3929
        %v3931 = vmul.f32 %v3741, 1.442695
        %v3932 = vpow.pop %v3931
        %v3933 = vmul.f32 %v3742, 1.442695
        %v3934 = vpow.pop %v3933
        %v3935 = vadd.f32 %v3744, 1.0
        %v3936 = vadd.f32 %v3746, 1.0
        %v3937 = vadd.f32 %v3748, 1.0
        %v3938 = vadd.f32 %v3750, 1.0
        %v3939 = vadd.f32 %v3752, 1.0
        %v3940 = vadd.f32 %v3754, 1.0
        %v3941 = vadd.f32 %v3756, 1.0
        %v3942 = vadd.f32 %v3758, 1.0
        %v3943 = vadd.f32 %v3760, 1.0
        %v3944 = vadd.f32 %v3762, 1.0
        %v3945 = vadd.f32 %v3764, 1.0
        %v3946 = vadd.f32 %v3766, 1.0
        %v3947 = vadd.f32 %v3768, 1.0
        %v3948 = vadd.f32 %v3770, 1.0
        %v3949 = vadd.f32 %v3772, 1.0
        %v3950 = vadd.f32 %v3774, 1.0
        %v3951 = vadd.f32 %v3776, 1.0
        %v3952 = vadd.f32 %v3778, 1.0
        %v3953 = vadd.f32 %v3780, 1.0
        %v3954 = vadd.f32 %v3782, 1.0
        %v3955 = vadd.f32 %v3784, 1.0
        %v3956 = vadd.f32 %v3786, 1.0
        %v3957 = vadd.f32 %v3788, 1.0
        %v3958 = vadd.f32 %v3790, 1.0
        %v3959 = vadd.f32 %v3792, 1.0
        %v3960 = vadd.f32 %v3794, 1.0
        %v3961 = vadd.f32 %v3796, 1.0
        %v3962 = vadd.f32 %v3798, 1.0
        %v3963 = vadd.f32 %v3800, 1.0
        %v3964 = vadd.f32 %v3802, 1.0
        %v3965 = vadd.f32 %v3804, 1.0
        %v3966 = vadd.f32 %v3806, 1.0
        %v3967 = vadd.f32 %v3808, 1.0
        %v3968 = vadd.f32 %v3810, 1.0
        %v3969 = vadd.f32 %v3812, 1.0
        %v3970 = vadd.f32 %v3814, 1.0
        %v3971 = vadd.f32 %v3816, 1.0
        %v3972 = vadd.f32 %v3818, 1.0
        %v3973 = vadd.f32 %v3820, 1.0
        %v3974 = vadd.f32 %v3822, 1.0
        %v3975 = vadd.f32 %v3824, 1.0
        %v3976 = vadd.f32 %v3826, 1.0
        %v3977 = vadd.f32 %v3828, 1.0
        %v3978 = vadd.f32 %v3830, 1.0
        %v3979 = vadd.f32 %v3832, 1.0
        %v3980 = vadd.f32 %v3834, 1.0
        %v3981 = vadd.f32 %v3836, 1.0
        %v3982 = vadd.f32 %v3838, 1.0
        %v3983 = vadd.f32 %v3840, 1.0
        %v3984 = vadd.f32 %v3842, 1.0
        %v3985 = vadd.f32 %v3844, 1.0
        %v3986 = vadd.f32 %v3846, 1.0
        %v3987 = vadd.f32 %v3848, 1.0
        %v3988 = vadd.f32 %v3850, 1.0
        %v3989 = vadd.f32 %v3852, 1.0
        %v3990 = vadd.f32 %v3854, 1.0
        %v3991 = vadd.f32 %v3856, 1.0
        %v3992 = vadd.f32 %v3858, 1.0
        %v3993 = vadd.f32 %v3860, 1.0
        %v3994 = vadd.f32 %v3862, 1.0
        %v3995 = vadd.f32 %v3864, 1.0
        %v3996 = vadd.f32 %v3866, 1.0
        %v3997 = vadd.f32 %v3868, 1.0
        %v3998 = vadd.f32 %v3870, 1.0
        %v3999 = vadd.f32 %v3872, 1.0
        %v4000 = vadd.f32 %v3874, 1.0
        %v4001 = vadd.f32 %v3876, 1.0
        %v4002 = vadd.f32 %v3878, 1.0
        %v4003 = vadd.f32 %v3880, 1.0
        %v4004 = vadd.f32 %v3882, 1.0
        %v4005 = vadd.f32 %v3884, 1.0
        %v4006 = vadd.f32 %v3886, 1.0
        %v4007 = vadd.f32 %v3888, 1.0
        %v4008 = vadd.f32 %v3890, 1.0
        %v4009 = vadd.f32 %v3892, 1.0
        %v4010 = vadd.f32 %v3894, 1.0
        %v4011 = vadd.f32 %v3896, 1.0
        %v4012 = vadd.f32 %v3898, 1.0
        %v4013 = vadd.f32 %v3900, 1.0
        %v4014 = vadd.f32 %v3902, 1.0
        %v4015 = vadd.f32 %v3904, 1.0
        %v4016 = vadd.f32 %v3906, 1.0
        %v4017 = vadd.f32 %v3908, 1.0
        %v4018 = vadd.f32 %v3910, 1.0
        %v4019 = vadd.f32 %v3912, 1.0
        %v4020 = vadd.f32 %v3914, 1.0
        %v4021 = vadd.f32 %v3916, 1.0
        %v4022 = vadd.f32 %v3918, 1.0
        %v4023 = vadd.f32 %v3920, 1.0
        %v4024 = vadd.f32 %v3922, 1.0
        %v4025 = vadd.f32 %v3924, 1.0
        %v4026 = vadd.f32 %v3926, 1.0
        %v4027 = vadd.f32 %v3928, 1.0
        %v4028 = vadd.f32 %v3930, 1.0
        %v4029 = vadd.f32 %v3932, 1.0
        %v4030 = vadd.f32 %v3934, 1.0
        %v4031 = vrcp.pop %v3935
        %v4032 = vmul.f32 1.0, %v4031
        %v4033 = vrcp.pop %v3936
        %v4034 = vmul.f32 1.0, %v4033
        %v4035 = vrcp.pop %v3937
        %v4036 = vmul.f32 1.0, %v4035
        %v4037 = vrcp.pop %v3938
        %v4038 = vmul.f32 1.0, %v4037
        %v4039 = vrcp.pop %v3939
        %v4040 = vmul.f32 1.0, %v4039
        %v4041 = vrcp.pop %v3940
        %v4042 = vmul.f32 1.0, %v4041
        %v4043 = vrcp.pop %v3941
        %v4044 = vmul.f32 1.0, %v4043
        %v4045 = vrcp.pop %v3942
        %v4046 = vmul.f32 1.0, %v4045
        %v4047 = vrcp.pop %v3943
        %v4048 = vmul.f32 1.0, %v4047
        %v4049 = vrcp.pop %v3944
        %v4050 = vmul.f32 1.0, %v4049
        %v4051 = vrcp.pop %v3945
        %v4052 = vmul.f32 1.0, %v4051
        %v4053 = vrcp.pop %v3946
        %v4054 = vmul.f32 1.0, %v4053
        %v4055 = vrcp.pop %v3947
        %v4056 = vmul.f32 1.0, %v4055
        %v4057 = vrcp.pop %v3948
        %v4058 = vmul.f32 1.0, %v4057
        %v4059 = vrcp.pop %v3949
        %v4060 = vmul.f32 1.0, %v4059
        %v4061 = vrcp.pop %v3950
        %v4062 = vmul.f32 1.0, %v4061
        %v4063 = vrcp.pop %v3951
        %v4064 = vmul.f32 1.0, %v4063
        %v4065 = vrcp.pop %v3952
        %v4066 = vmul.f32 1.0, %v4065
        %v4067 = vrcp.pop %v3953
        %v4068 = vmul.f32 1.0, %v4067
        %v4069 = vrcp.pop %v3954
        %v4070 = vmul.f32 1.0, %v4069
        %v4071 = vrcp.pop %v3955
        %v4072 = vmul.f32 1.0, %v4071
        %v4073 = vrcp.pop %v3956
        %v4074 = vmul.f32 1.0, %v4073
        %v4075 = vrcp.pop %v3957
        %v4076 = vmul.f32 1.0, %v4075
        %v4077 = vrcp.pop %v3958
        %v4078 = vmul.f32 1.0, %v4077
        %v4079 = vrcp.pop %v3959
        %v4080 = vmul.f32 1.0, %v4079
        %v4081 = vrcp.pop %v3960
        %v4082 = vmul.f32 1.0, %v4081
        %v4083 = vrcp.pop %v3961
        %v4084 = vmul.f32 1.0, %v4083
        %v4085 = vrcp.pop %v3962
        %v4086 = vmul.f32 1.0, %v4085
        %v4087 = vrcp.pop %v3963
        %v4088 = vmul.f32 1.0, %v4087
        %v4089 = vrcp.pop %v3964
        %v4090 = vmul.f32 1.0, %v4089
        %v4091 = vrcp.pop %v3965
        %v4092 = vmul.f32 1.0, %v4091
        %v4093 = vrcp.pop %v3966
        %v4094 = vmul.f32 1.0, %v4093
        %v4095 = vrcp.pop %v3967
        %v4096 = vmul.f32 1.0, %v4095
        %v4097 = vrcp.pop %v3968
        %v4098 = vmul.f32 1.0, %v4097
        %v4099 = vrcp.pop %v3969
        %v4100 = vmul.f32 1.0, %v4099
        %v4101 = vrcp.pop %v3970
        %v4102 = vmul.f32 1.0, %v4101
        %v4103 = vrcp.pop %v3971
        %v4104 = vmul.f32 1.0, %v4103
        %v4105 = vrcp.pop %v3972
        %v4106 = vmul.f32 1.0, %v4105
        %v4107 = vrcp.pop %v3973
        %v4108 = vmul.f32 1.0, %v4107
        %v4109 = vrcp.pop %v3974
        %v4110 = vmul.f32 1.0, %v4109
        %v4111 = vrcp.pop %v3975
        %v4112 = vmul.f32 1.0, %v4111
        %v4113 = vrcp.pop %v3976
        %v4114 = vmul.f32 1.0, %v4113
        %v4115 = vrcp.pop %v3977
        %v4116 = vmul.f32 1.0, %v4115
        %v4117 = vrcp.pop %v3978
        %v4118 = vmul.f32 1.0, %v4117
        %v4119 = vrcp.pop %v3979
        %v4120 = vmul.f32 1.0, %v4119
        %v4121 = vrcp.pop %v3980
        %v4122 = vmul.f32 1.0, %v4121
        %v4123 = vrcp.pop %v3981
        %v4124 = vmul.f32 1.0, %v4123
        %v4125 = vrcp.pop %v3982
        %v4126 = vmul.f32 1.0, %v4125
        %v4127 = vrcp.pop %v3983
        %v4128 = vmul.f32 1.0, %v4127
        %v4129 = vrcp.pop %v3984
        %v4130 = vmul.f32 1.0, %v4129
        %v4131 = vrcp.pop %v3985
        %v4132 = vmul.f32 1.0, %v4131
        %v4133 = vrcp.pop %v3986
        %v4134 = vmul.f32 1.0, %v4133
        %v4135 = vrcp.pop %v3987
        %v4136 = vmul.f32 1.0, %v4135
        %v4137 = vrcp.pop %v3988
        %v4138 = vmul.f32 1.0, %v4137
        %v4139 = vrcp.pop %v3989
        %v4140 = vmul.f32 1.0, %v4139
        %v4141 = vrcp.pop %v3990
        %v4142 = vmul.f32 1.0, %v4141
        %v4143 = vrcp.pop %v3991
        %v4144 = vmul.f32 1.0, %v4143
        %v4145 = vrcp.pop %v3992
        %v4146 = vmul.f32 1.0, %v4145
        %v4147 = vrcp.pop %v3993
        %v4148 = vmul.f32 1.0, %v4147
        %v4149 = vrcp.pop %v3994
        %v4150 = vmul.f32 1.0, %v4149
        %v4151 = vrcp.pop %v3995
        %v4152 = vmul.f32 1.0, %v4151
        %v4153 = vrcp.pop %v3996
        %v4154 = vmul.f32 1.0, %v4153
        %v4155 = vrcp.pop %v3997
        %v4156 = vmul.f32 1.0, %v4155
        %v4157 = vrcp.pop %v3998
        %v4158 = vmul.f32 1.0, %v4157
        %v4159 = vrcp.pop %v3999
        %v4160 = vmul.f32 1.0, %v4159
        %v4161 = vrcp.pop %v4000
        %v4162 = vmul.f32 1.0, %v4161
        %v4163 = vrcp.pop %v4001
        %v4164 = vmul.f32 1.0, %v4163
        %v4165 = vrcp.pop %v4002
        %v4166 = vmul.f32 1.0, %v4165
        %v4167 = vrcp.pop %v4003
        %v4168 = vmul.f32 1.0, %v4167
        %v4169 = vrcp.pop %v4004
        %v4170 = vmul.f32 1.0, %v4169
        %v4171 = vrcp.pop %v4005
        %v4172 = vmul.f32 1.0, %v4171
        %v4173 = vrcp.pop %v4006
        %v4174 = vmul.f32 1.0, %v4173
        %v4175 = vrcp.pop %v4007
        %v4176 = vmul.f32 1.0, %v4175
        %v4177 = vrcp.pop %v4008
        %v4178 = vmul.f32 1.0, %v4177
        %v4179 = vrcp.pop %v4009
        %v4180 = vmul.f32 1.0, %v4179
        %v4181 = vrcp.pop %v4010
        %v4182 = vmul.f32 1.0, %v4181
        %v4183 = vrcp.pop %v4011
        %v4184 = vmul.f32 1.0, %v4183
        %v4185 = vrcp.pop %v4012
        %v4186 = vmul.f32 1.0, %v4185
        %v4187 = vrcp.pop %v4013
        %v4188 = vmul.f32 1.0, %v4187
        %v4189 = vrcp.pop %v4014
        %v4190 = vmul.f32 1.0, %v4189
        %v4191 = vrcp.pop %v4015
        %v4192 = vmul.f32 1.0, %v4191
        %v4193 = vrcp.pop %v4016
        %v4194 = vmul.f32 1.0, %v4193
        %v4195 = vrcp.pop %v4017
        %v4196 = vmul.f32 1.0, %v4195
        %v4197 = vrcp.pop %v4018
        %v4198 = vmul.f32 1.0, %v4197
        %v4199 = vrcp.pop %v4019
        %v4200 = vmul.f32 1.0, %v4199
        %v4201 = vrcp.pop %v4020
        %v4202 = vmul.f32 1.0, %v4201
        %v4203 = vrcp.pop %v4021
        %v4204 = vmul.f32 1.0, %v4203
        %v4205 = vrcp.pop %v4022
        %v4206 = vmul.f32 1.0, %v4205
        %v4207 = vrcp.pop %v4023
        %v4208 = vmul.f32 1.0, %v4207
        %v4209 = vrcp.pop %v4024
        %v4210 = vmul.f32 1.0, %v4209
        %v4211 = vrcp.pop %v4025
        %v4212 = vmul.f32 1.0, %v4211
        %v4213 = vrcp.pop %v4026
        %v4214 = vmul.f32 1.0, %v4213
        %v4215 = vrcp.pop %v4027
        %v4216 = vmul.f32 1.0, %v4215
        %v4217 = vrcp.pop %v4028
        %v4218 = vmul.f32 1.0, %v4217
        %v4219 = vrcp.pop %v4029
        %v4220 = vmul.f32 1.0, %v4219
        %v4221 = vrcp.pop %v4030
        %v4222 = vmul.f32 1.0, %v4221
        %v4223 = vmul.f32 %v3551, %v4032
        %v4224 = vmul.f32 %v3552, %v4034
        %v4225 = vmul.f32 %v3553, %v4036
        %v4226 = vmul.f32 %v3554, %v4038
        %v4227 = vmul.f32 %v3555, %v4040
        %v4228 = vmul.f32 %v3556, %v4042
        %v4229 = vmul.f32 %v3557, %v4044
        %v4230 = vmul.f32 %v3558, %v4046
        %v4231 = vmul.f32 %v3559, %v4048
        %v4232 = vmul.f32 %v3560, %v4050
        %v4233 = vmul.f32 %v3561, %v4052
        %v4234 = vmul.f32 %v3562, %v4054
        %v4235 = vmul.f32 %v3563, %v4056
        %v4236 = vmul.f32 %v3564, %v4058
        %v4237 = vmul.f32 %v3565, %v4060
        %v4238 = vmul.f32 %v3566, %v4062
        %v4239 = vmul.f32 %v3567, %v4064
        %v4240 = vmul.f32 %v3568, %v4066
        %v4241 = vmul.f32 %v3569, %v4068
        %v4242 = vmul.f32 %v3570, %v4070
        %v4243 = vmul.f32 %v3571, %v4072
        %v4244 = vmul.f32 %v3572, %v4074
        %v4245 = vmul.f32 %v3573, %v4076
        %v4246 = vmul.f32 %v3574, %v4078
        %v4247 = vmul.f32 %v3575, %v4080
        %v4248 = vmul.f32 %v3576, %v4082
        %v4249 = vmul.f32 %v3577, %v4084
        %v4250 = vmul.f32 %v3578, %v4086
        %v4251 = vmul.f32 %v3579, %v4088
        %v4252 = vmul.f32 %v3580, %v4090
        %v4253 = vmul.f32 %v3581, %v4092
        %v4254 = vmul.f32 %v3582, %v4094
        %v4255 = vmul.f32 %v3583, %v4096
        %v4256 = vmul.f32 %v3584, %v4098
        %v4257 = vmul.f32 %v3585, %v4100
        %v4258 = vmul.f32 %v3586, %v4102
        %v4259 = vmul.f32 %v3587, %v4104
        %v4260 = vmul.f32 %v3588, %v4106
        %v4261 = vmul.f32 %v3589, %v4108
        %v4262 = vmul.f32 %v3590, %v4110
        %v4263 = vmul.f32 %v3591, %v4112
        %v4264 = vmul.f32 %v3592, %v4114
        %v4265 = vmul.f32 %v3593, %v4116
        %v4266 = vmul.f32 %v3594, %v4118
        %v4267 = vmul.f32 %v3595, %v4120
        %v4268 = vmul.f32 %v3596, %v4122
        %v4269 = vmul.f32 %v3597, %v4124
        %v4270 = vmul.f32 %v3598, %v4126
        %v4271 = vmul.f32 %v3599, %v4128
        %v4272 = vmul.f32 %v3600, %v4130
        %v4273 = vmul.f32 %v3601, %v4132
        %v4274 = vmul.f32 %v3602, %v4134
        %v4275 = vmul.f32 %v3603, %v4136
        %v4276 = vmul.f32 %v3604, %v4138
        %v4277 = vmul.f32 %v3605, %v4140
        %v4278 = vmul.f32 %v3606, %v4142
        %v4279 = vmul.f32 %v3607, %v4144
        %v4280 = vmul.f32 %v3608, %v4146
        %v4281 = vmul.f32 %v3609, %v4148
        %v4282 = vmul.f32 %v3610, %v4150
        %v4283 = vmul.f32 %v3611, %v4152
        %v4284 = vmul.f32 %v3612, %v4154
        %v4285 = vmul.f32 %v3613, %v4156
        %v4286 = vmul.f32 %v3614, %v4158
        %v4287 = vmul.f32 %v3615, %v4160
        %v4288 = vmul.f32 %v3616, %v4162
        %v4289 = vmul.f32 %v3617, %v4164
        %v4290 = vmul.f32 %v3618, %v4166
        %v4291 = vmul.f32 %v3619, %v4168
        %v4292 = vmul.f32 %v3620, %v4170
        %v4293 = vmul.f32 %v3621, %v4172
        %v4294 = vmul.f32 %v3622, %v4174
        %v4295 = vmul.f32 %v3623, %v4176
        %v4296 = vmul.f32 %v3624, %v4178
        %v4297 = vmul.f32 %v3625, %v4180
        %v4298 = vmul.f32 %v3626, %v4182
        %v4299 = vmul.f32 %v3627, %v4184
        %v4300 = vmul.f32 %v3628, %v4186
        %v4301 = vmul.f32 %v3629, %v4188
        %v4302 = vmul.f32 %v3630, %v4190
        %v4303 = vmul.f32 %v3631, %v4192
        %v4304 = vmul.f32 %v3632, %v4194
        %v4305 = vmul.f32 %v3633, %v4196
        %v4306 = vmul.f32 %v3634, %v4198
        %v4307 = vmul.f32 %v3635, %v4200
        %v4308 = vmul.f32 %v3636, %v4202
        %v4309 = vmul.f32 %v3637, %v4204
        %v4310 = vmul.f32 %v3638, %v4206
        %v4311 = vmul.f32 %v3639, %v4208
        %v4312 = vmul.f32 %v3640, %v4210
        %v4313 = vmul.f32 %v3641, %v4212
        %v4314 = vmul.f32 %v3642, %v4214
        %v4315 = vmul.f32 %v3643, %v4216
        %v4316 = vmul.f32 %v3644, %v4218
        %v4317 = vmul.f32 %v3645, %v4220
        %v4318 = vmul.f32 %v3646, %v4222
        %v4319 = vpack.c.bf16 %v4225, %v4223
        %v4320 = vpack.c.bf16 %v4226, %v4224
        %v4321 = vpack.c.bf16 %v4229, %v4227
        %v4322 = vpack.c.bf16 %v4230, %v4228
        %v4323 = vpack.c.bf16 %v4233, %v4231
        %v4324 = vpack.c.bf16 %v4234, %v4232
        %v4325 = vpack.c.bf16 %v4237, %v4235
        %v4326 = vpack.c.bf16 %v4238, %v4236
        %v4327 = vpack.c.bf16 %v4241, %v4239
        %v4328 = vpack.c.bf16 %v4242, %v4240
        %v4329 = vpack.c.bf16 %v4245, %v4243
        %v4330 = vpack.c.bf16 %v4246, %v4244
        %v4331 = vpack.c.bf16 %v4249, %v4247
        %v4332 = vpack.c.bf16 %v4250, %v4248
        %v4333 = vpack.c.bf16 %v4253, %v4251
        %v4334 = vpack.c.bf16 %v4254, %v4252
        %v4335 = vpack.c.bf16 %v4257, %v4255
        %v4336 = vpack.c.bf16 %v4258, %v4256
        %v4337 = vpack.c.bf16 %v4261, %v4259
        %v4338 = vpack.c.bf16 %v4262, %v4260
        %v4339 = vpack.c.bf16 %v4265, %v4263
        %v4340 = vpack.c.bf16 %v4266, %v4264
        %v4341 = vpack.c.bf16 %v4269, %v4267
        %v4342 = vpack.c.bf16 %v4270, %v4268
        %v4343 = vpack.c.bf16 %v4273, %v4271
        %v4344 = vpack.c.bf16 %v4274, %v4272
        %v4345 = vpack.c.bf16 %v4277, %v4275
        %v4346 = vpack.c.bf16 %v4278, %v4276
        %v4347 = vpack.c.bf16 %v4281, %v4279
        %v4348 = vpack.c.bf16 %v4282, %v4280
        %v4349 = vpack.c.bf16 %v4285, %v4283
        %v4350 = vpack.c.bf16 %v4286, %v4284
        %v4351 = vpack.c.bf16 %v4289, %v4287
        %v4352 = vpack.c.bf16 %v4290, %v4288
        %v4353 = vpack.c.bf16 %v4293, %v4291
        %v4354 = vpack.c.bf16 %v4294, %v4292
        %v4355 = vpack.c.bf16 %v4297, %v4295
        %v4356 = vpack.c.bf16 %v4298, %v4296
        %v4357 = vpack.c.bf16 %v4301, %v4299
        %v4358 = vpack.c.bf16 %v4302, %v4300
        %v4359 = vpack.c.bf16 %v4305, %v4303
        %v4360 = vpack.c.bf16 %v4306, %v4304
        %v4361 = vpack.c.bf16 %v4309, %v4307
        %v4362 = vpack.c.bf16 %v4310, %v4308
        %v4363 = vpack.c.bf16 %v4313, %v4311
        %v4364 = vpack.c.bf16 %v4314, %v4312
        %v4365 = vpack.c.bf16 %v4317, %v4315
        %v4366 = vpack.c.bf16 %v4318, %v4316
        %v4367 = vld [vmem:[#allocation13] sm:$0xff]
        %v4368 = vld [vmem:[#allocation13 + $0x8] sm:$0xff]
        %v4369 = vld [vmem:[#allocation13 + $0x10] sm:$0xff]
        %v4370 = vld [vmem:[#allocation13 + $0x18] sm:$0xff]
        %v4371 = vld [vmem:[#allocation13 + $0x20] sm:$0xff]
        %v4372 = vld [vmem:[#allocation13 + $0x28] sm:$0xff]
        %v4373 = vld [vmem:[#allocation13 + $0x30] sm:$0xff]
        %v4374 = vld [vmem:[#allocation13 + $0x38] sm:$0xff]
        %v4375 = vld [vmem:[#allocation13 + $0x40] sm:$0xff]
        %v4376 = vld [vmem:[#allocation13 + $0x48] sm:$0xff]
        %v4377 = vld [vmem:[#allocation13 + $0x50] sm:$0xff]
        %v4378 = vld [vmem:[#allocation13 + $0x58] sm:$0xff]
        %v4379 = vld [vmem:[#allocation13 + $0x60] sm:$0xff]
        %v4380 = vld [vmem:[#allocation13 + $0x68] sm:$0xff]
        %v4381 = vld [vmem:[#allocation13 + $0x70] sm:$0xff]
        %v4382 = vld [vmem:[#allocation13 + $0x78] sm:$0xff]
        %v4383 = vld [vmem:[#allocation13 + $0x80] sm:$0xff]
        %v4384 = vld [vmem:[#allocation13 + $0x88] sm:$0xff]
        %v4385 = vld [vmem:[#allocation13 + $0x90] sm:$0xff]
        %v4386 = vld [vmem:[#allocation13 + $0x98] sm:$0xff]
        %v4387 = vld [vmem:[#allocation13 + $0xa0] sm:$0xff]
        %v4388 = vld [vmem:[#allocation13 + $0xa8] sm:$0xff]
        %v4389 = vld [vmem:[#allocation13 + $0xb0] sm:$0xff]
        %v4390 = vld [vmem:[#allocation13 + $0xb8] sm:$0xff]
        %v4391 = vld [vmem:[#allocation13 + $0xc0] sm:$0xff]
        %v4392 = vld [vmem:[#allocation13 + $0xc8] sm:$0xff]
        %v4393 = vld [vmem:[#allocation13 + $0xd0] sm:$0xff]
        %v4394 = vld [vmem:[#allocation13 + $0xd8] sm:$0xff]
        %v4395 = vld [vmem:[#allocation13 + $0xe0] sm:$0xff]
        %v4396 = vld [vmem:[#allocation13 + $0xe8] sm:$0xff]
        %v4397 = vld [vmem:[#allocation13 + $0xf0] sm:$0xff]
        %v4398 = vld [vmem:[#allocation13 + $0xf8] sm:$0xff]
        %v4399 = vld [vmem:[%s8] sm:$0x3]
        %v4401 = vlaneseq
        %v4402 = vshrl.u32 %v4401, 7
        %v4403 = vsub.s32 0, %v4402
        %v4404 = vrot.slane %v4399, %v4403
        %v4405 = vlaneseq
        %v4406 = vshrl.u32 %v4405, 7
        %v4407 = vsub.s32 1, %v4406
        %v4408 = vrot.slane %v4399, %v4407
        %v4443 = vunpack.c.l.b16 %v4367
        %v4444 = vunpack.c.h.b16 %v4367
        %v4445 = vunpack.c.l.b16 %v4368
        %v4446 = vunpack.c.h.b16 %v4368
        %v4447 = vunpack.c.l.b16 %v4369
        %v4448 = vunpack.c.h.b16 %v4369
        %v4449 = vunpack.c.l.b16 %v4370
        %v4450 = vunpack.c.h.b16 %v4370
        %v4451 = vunpack.c.l.b16 %v4371
        %v4452 = vunpack.c.h.b16 %v4371
        %v4453 = vunpack.c.l.b16 %v4372
        %v4454 = vunpack.c.h.b16 %v4372
        %v4455 = vunpack.c.l.b16 %v4373
        %v4456 = vunpack.c.h.b16 %v4373
        %v4457 = vunpack.c.l.b16 %v4374
        %v4458 = vunpack.c.h.b16 %v4374
        %v4459 = vunpack.c.l.b16 %v4375
        %v4460 = vunpack.c.h.b16 %v4375
        %v4461 = vunpack.c.l.b16 %v4376
        %v4462 = vunpack.c.h.b16 %v4376
        %v4463 = vunpack.c.l.b16 %v4377
        %v4464 = vunpack.c.h.b16 %v4377
        %v4465 = vunpack.c.l.b16 %v4378
        %v4466 = vunpack.c.h.b16 %v4378
        %v4467 = vunpack.c.l.b16 %v4379
        %v4468 = vunpack.c.h.b16 %v4379
        %v4469 = vunpack.c.l.b16 %v4380
        %v4470 = vunpack.c.h.b16 %v4380
        %v4471 = vunpack.c.l.b16 %v4381
        %v4472 = vunpack.c.h.b16 %v4381
        %v4473 = vunpack.c.l.b16 %v4382
        %v4474 = vunpack.c.h.b16 %v4382
        %v4475 = vunpack.c.l.b16 %v4383
        %v4476 = vunpack.c.h.b16 %v4383
        %v4477 = vunpack.c.l.b16 %v4384
        %v4478 = vunpack.c.h.b16 %v4384
        %v4479 = vunpack.c.l.b16 %v4385
        %v4480 = vunpack.c.h.b16 %v4385
        %v4481 = vunpack.c.l.b16 %v4386
        %v4482 = vunpack.c.h.b16 %v4386
        %v4483 = vunpack.c.l.b16 %v4387
        %v4484 = vunpack.c.h.b16 %v4387
        %v4485 = vunpack.c.l.b16 %v4388
        %v4486 = vunpack.c.h.b16 %v4388
        %v4487 = vunpack.c.l.b16 %v4389
        %v4488 = vunpack.c.h.b16 %v4389
        %v4489 = vunpack.c.l.b16 %v4390
        %v4490 = vunpack.c.h.b16 %v4390
        %v4491 = vunpack.c.l.b16 %v4391
        %v4492 = vunpack.c.h.b16 %v4391
        %v4493 = vunpack.c.l.b16 %v4392
        %v4494 = vunpack.c.h.b16 %v4392
        %v4495 = vunpack.c.l.b16 %v4393
        %v4496 = vunpack.c.h.b16 %v4393
        %v4497 = vunpack.c.l.b16 %v4394
        %v4498 = vunpack.c.h.b16 %v4394
        %v4499 = vunpack.c.l.b16 %v4395
        %v4500 = vunpack.c.h.b16 %v4395
        %v4501 = vunpack.c.l.b16 %v4396
        %v4502 = vunpack.c.h.b16 %v4396
        %v4503 = vunpack.c.l.b16 %v4397
        %v4504 = vunpack.c.h.b16 %v4397
        %v4505 = vunpack.c.l.b16 %v4398
        %v4506 = vunpack.c.h.b16 %v4398
        %v4507 = vpack.c.b16 %v4445, %v4443
        %v4508 = vpack.c.b16 %v4446, %v4444
        %v4509 = vpack.c.b16 %v4449, %v4447
        %v4510 = vpack.c.b16 %v4450, %v4448
        %v4511 = vpack.c.b16 %v4453, %v4451
        %v4512 = vpack.c.b16 %v4454, %v4452
        %v4513 = vpack.c.b16 %v4457, %v4455
        %v4514 = vpack.c.b16 %v4458, %v4456
        %v4515 = vpack.c.b16 %v4461, %v4459
        %v4516 = vpack.c.b16 %v4462, %v4460
        %v4517 = vpack.c.b16 %v4465, %v4463
        %v4518 = vpack.c.b16 %v4466, %v4464
        %v4519 = vpack.c.b16 %v4469, %v4467
        %v4520 = vpack.c.b16 %v4470, %v4468
        %v4521 = vpack.c.b16 %v4473, %v4471
        %v4522 = vpack.c.b16 %v4474, %v4472
        %v4523 = vpack.c.b16 %v4477, %v4475
        %v4524 = vpack.c.b16 %v4478, %v4476
        %v4525 = vpack.c.b16 %v4481, %v4479
        %v4526 = vpack.c.b16 %v4482, %v4480
        %v4527 = vpack.c.b16 %v4485, %v4483
        %v4528 = vpack.c.b16 %v4486, %v4484
        %v4529 = vpack.c.b16 %v4489, %v4487
        %v4530 = vpack.c.b16 %v4490, %v4488
        %v4531 = vpack.c.b16 %v4493, %v4491
        %v4532 = vpack.c.b16 %v4494, %v4492
        %v4533 = vpack.c.b16 %v4497, %v4495
        %v4534 = vpack.c.b16 %v4498, %v4496
        %v4535 = vpack.c.b16 %v4501, %v4499
        %v4536 = vpack.c.b16 %v4502, %v4500
        %v4537 = vpack.c.b16 %v4505, %v4503
        %v4538 = vpack.c.b16 %v4506, %v4504
        %4571 = vmatprep.subr.bf16.mxu0 %v4522
        %4572 = vmatpush1.bf16.msra.mxu0 %v4521
        %4573 = vmatprep.subr.bf16.mxu0 %v4520
        %4574 = vmatpush1.bf16.msra.mxu0 %v4519
        %4575 = vmatprep.subr.bf16.mxu0 %v4518
        %4576 = vmatpush1.bf16.msra.mxu0 %v4517
        %4577 = vmatprep.subr.bf16.mxu0 %v4516
        %4578 = vmatpush1.bf16.msra.mxu0 %v4515
        %4579 = vmatprep.subr.bf16.mxu0 %v4514
        %4580 = vmatpush1.bf16.msra.mxu0 %v4513
        %4581 = vmatprep.subr.bf16.mxu0 %v4512
        %4582 = vmatpush1.bf16.msra.mxu0 %v4511
        %4583 = vmatprep.subr.bf16.mxu0 %v4510
        %4584 = vmatpush1.bf16.msra.mxu0 %v4509
        %4585 = vmatprep.subr.bf16.mxu0 %v4508
        %4586 = vmatpush1.bf16.msra.mxu0 %v4507
        %4587 = vmatprep.subr.bf16.mxu0 %v4538
        %4588 = vmatpush2.bf16.msra.mxu0 %v4537
        %4589 = vmatprep.subr.bf16.mxu0 %v4536
        %4590 = vmatpush2.bf16.msra.mxu0 %v4535
        %4591 = vmatprep.subr.bf16.mxu0 %v4534
        %4592 = vmatpush2.bf16.msra.mxu0 %v4533
        %4593 = vmatprep.subr.bf16.mxu0 %v4532
        %4594 = vmatpush2.bf16.msra.mxu0 %v4531
        %4595 = vmatprep.subr.bf16.mxu0 %v4530
        %4596 = vmatpush2.bf16.msra.mxu0 %v4529
        %4597 = vmatprep.subr.bf16.mxu0 %v4528
        %4598 = vmatpush2.bf16.msra.mxu0 %v4527
        %4599 = vmatprep.subr.bf16.mxu0 %v4526
        %4600 = vmatpush2.bf16.msra.mxu0 %v4525
        %4601 = vmatprep.subr.bf16.mxu0 %v4524
        %4602 = vmatpush2.bf16.msra.mxu0 %v4523
        %4603 = vmatprep.mubr.bf16.mxu0 %v4320
        %4604 = vmatmul.mubr.bf16.gmra.mxu0 %v4319
        %v4605 = vpop.f32.mrf.mxu0
        %v4606 = vadd.f32 %v4404, %v4605
        %v4607 = vpop.f32.mrf.mxu0
        %v4608 = vadd.f32 %v4408, %v4607
        %v4609 = vpop.f32.mrf.mxu0
        %v4610 = vadd.f32 %v4404, %v4609
        %v4611 = vpop.f32.mrf.mxu0
        %v4612 = vadd.f32 %v4408, %v4611
        %4613 = vmatprep.mubr.bf16.mxu0 %v4322
        %4614 = vmatmul.mubr.bf16.gmra.mxu0 %v4321
        %v4615 = vpop.f32.mrf.mxu0
        %v4616 = vadd.f32 %v4404, %v4615
        %v4617 = vpop.f32.mrf.mxu0
        %v4618 = vadd.f32 %v4408, %v4617
        %v4619 = vpop.f32.mrf.mxu0
        %v4620 = vadd.f32 %v4404, %v4619
        %v4621 = vpop.f32.mrf.mxu0
        %v4622 = vadd.f32 %v4408, %v4621
        %4623 = vmatprep.mubr.bf16.mxu0 %v4324
        %4624 = vmatmul.mubr.bf16.gmra.mxu0 %v4323
        %v4625 = vpop.f32.mrf.mxu0
        %v4626 = vadd.f32 %v4404, %v4625
        %v4627 = vpop.f32.mrf.mxu0
        %v4628 = vadd.f32 %v4408, %v4627
        %v4629 = vpop.f32.mrf.mxu0
        %v4630 = vadd.f32 %v4404, %v4629
        %v4631 = vpop.f32.mrf.mxu0
        %v4632 = vadd.f32 %v4408, %v4631
        %4633 = vmatprep.mubr.bf16.mxu0 %v4326
        %4634 = vmatmul.mubr.bf16.gmra.mxu0 %v4325
        %v4635 = vpop.f32.mrf.mxu0
        %v4636 = vadd.f32 %v4404, %v4635
        %v4637 = vpop.f32.mrf.mxu0
        %v4638 = vadd.f32 %v4408, %v4637
        %v4639 = vpop.f32.mrf.mxu0
        %v4640 = vadd.f32 %v4404, %v4639
        %v4641 = vpop.f32.mrf.mxu0
        %v4642 = vadd.f32 %v4408, %v4641
        %4643 = vmatprep.mubr.bf16.mxu0 %v4328
        %4644 = vmatmul.mubr.bf16.gmra.mxu0 %v4327
        %v4645 = vpop.f32.mrf.mxu0
        %v4646 = vadd.f32 %v4404, %v4645
        %v4647 = vpop.f32.mrf.mxu0
        %v4648 = vadd.f32 %v4408, %v4647
        %v4649 = vpop.f32.mrf.mxu0
        %v4650 = vadd.f32 %v4404, %v4649
        %v4651 = vpop.f32.mrf.mxu0
        %v4652 = vadd.f32 %v4408, %v4651
        %4653 = vmatprep.mubr.bf16.mxu0 %v4330
        %4654 = vmatmul.mubr.bf16.gmra.mxu0 %v4329
        %v4655 = vpop.f32.mrf.mxu0
        %v4656 = vadd.f32 %v4404, %v4655
        %v4657 = vpop.f32.mrf.mxu0
        %v4658 = vadd.f32 %v4408, %v4657
        %v4659 = vpop.f32.mrf.mxu0
        %v4660 = vadd.f32 %v4404, %v4659
        %v4661 = vpop.f32.mrf.mxu0
        %v4662 = vadd.f32 %v4408, %v4661
        %4663 = vmatprep.mubr.bf16.mxu0 %v4332
        %4664 = vmatmul.mubr.bf16.gmra.mxu0 %v4331
        %v4665 = vpop.f32.mrf.mxu0
        %v4666 = vadd.f32 %v4404, %v4665
        %v4667 = vpop.f32.mrf.mxu0
        %v4668 = vadd.f32 %v4408, %v4667
        %v4669 = vpop.f32.mrf.mxu0
        %v4670 = vadd.f32 %v4404, %v4669
        %v4671 = vpop.f32.mrf.mxu0
        %v4672 = vadd.f32 %v4408, %v4671
        %4673 = vmatprep.mubr.bf16.mxu0 %v4334
        %4674 = vmatmul.mubr.bf16.gmra.mxu0 %v4333
        %v4675 = vpop.f32.mrf.mxu0
        %v4676 = vadd.f32 %v4404, %v4675
        %v4677 = vpop.f32.mrf.mxu0
        %v4678 = vadd.f32 %v4408, %v4677
        %v4679 = vpop.f32.mrf.mxu0
        %v4680 = vadd.f32 %v4404, %v4679
        %v4681 = vpop.f32.mrf.mxu0
        %v4682 = vadd.f32 %v4408, %v4681
        %4683 = vmatprep.mubr.bf16.mxu0 %v4336
        %4684 = vmatmul.mubr.bf16.gmra.mxu0 %v4335
        %v4685 = vpop.f32.mrf.mxu0
        %v4686 = vadd.f32 %v4404, %v4685
        %v4687 = vpop.f32.mrf.mxu0
        %v4688 = vadd.f32 %v4408, %v4687
        %v4689 = vpop.f32.mrf.mxu0
        %v4690 = vadd.f32 %v4404, %v4689
        %v4691 = vpop.f32.mrf.mxu0
        %v4692 = vadd.f32 %v4408, %v4691
        %4693 = vmatprep.mubr.bf16.mxu0 %v4338
        %4694 = vmatmul.mubr.bf16.gmra.mxu0 %v4337
        %v4695 = vpop.f32.mrf.mxu0
        %v4696 = vadd.f32 %v4404, %v4695
        %v4697 = vpop.f32.mrf.mxu0
        %v4698 = vadd.f32 %v4408, %v4697
        %v4699 = vpop.f32.mrf.mxu0
        %v4700 = vadd.f32 %v4404, %v4699
        %v4701 = vpop.f32.mrf.mxu0
        %v4702 = vadd.f32 %v4408, %v4701
        %4703 = vmatprep.mubr.bf16.mxu0 %v4340
        %4704 = vmatmul.mubr.bf16.gmra.mxu0 %v4339
        %v4705 = vpop.f32.mrf.mxu0
        %v4706 = vadd.f32 %v4404, %v4705
        %v4707 = vpop.f32.mrf.mxu0
        %v4708 = vadd.f32 %v4408, %v4707
        %v4709 = vpop.f32.mrf.mxu0
        %v4710 = vadd.f32 %v4404, %v4709
        %v4711 = vpop.f32.mrf.mxu0
        %v4712 = vadd.f32 %v4408, %v4711
        %4713 = vmatprep.mubr.bf16.mxu0 %v4342
        %4714 = vmatmul.mubr.bf16.gmra.mxu0 %v4341
        %v4715 = vpop.f32.mrf.mxu0
        %v4716 = vadd.f32 %v4404, %v4715
        %v4717 = vpop.f32.mrf.mxu0
        %v4718 = vadd.f32 %v4408, %v4717
        %v4719 = vpop.f32.mrf.mxu0
        %v4720 = vadd.f32 %v4404, %v4719
        %v4721 = vpop.f32.mrf.mxu0
        %v4722 = vadd.f32 %v4408, %v4721
        %4723 = vmatprep.mubr.bf16.mxu0 %v4344
        %4724 = vmatmul.mubr.bf16.gmra.mxu0 %v4343
        %v4725 = vpop.f32.mrf.mxu0
        %v4726 = vadd.f32 %v4404, %v4725
        %v4727 = vpop.f32.mrf.mxu0
        %v4728 = vadd.f32 %v4408, %v4727
        %v4729 = vpop.f32.mrf.mxu0
        %v4730 = vadd.f32 %v4404, %v4729
        %v4731 = vpop.f32.mrf.mxu0
        %v4732 = vadd.f32 %v4408, %v4731
        %4733 = vmatprep.mubr.bf16.mxu0 %v4346
        %4734 = vmatmul.mubr.bf16.gmra.mxu0 %v4345
        %v4735 = vpop.f32.mrf.mxu0
        %v4736 = vadd.f32 %v4404, %v4735
        %v4737 = vpop.f32.mrf.mxu0
        %v4738 = vadd.f32 %v4408, %v4737
        %v4739 = vpop.f32.mrf.mxu0
        %v4740 = vadd.f32 %v4404, %v4739
        %v4741 = vpop.f32.mrf.mxu0
        %v4742 = vadd.f32 %v4408, %v4741
        %4743 = vmatprep.mubr.bf16.mxu0 %v4348
        %4744 = vmatmul.mubr.bf16.gmra.mxu0 %v4347
        %v4745 = vpop.f32.mrf.mxu0
        %v4746 = vadd.f32 %v4404, %v4745
        %v4747 = vpop.f32.mrf.mxu0
        %v4748 = vadd.f32 %v4408, %v4747
        %v4749 = vpop.f32.mrf.mxu0
        %v4750 = vadd.f32 %v4404, %v4749
        %v4751 = vpop.f32.mrf.mxu0
        %v4752 = vadd.f32 %v4408, %v4751
        %4753 = vmatprep.mubr.bf16.mxu0 %v4350
        %4754 = vmatmul.mubr.bf16.gmra.mxu0 %v4349
        %v4755 = vpop.f32.mrf.mxu0
        %v4756 = vadd.f32 %v4404, %v4755
        %v4757 = vpop.f32.mrf.mxu0
        %v4758 = vadd.f32 %v4408, %v4757
        %v4759 = vpop.f32.mrf.mxu0
        %v4760 = vadd.f32 %v4404, %v4759
        %v4761 = vpop.f32.mrf.mxu0
        %v4762 = vadd.f32 %v4408, %v4761
        %4763 = vmatprep.mubr.bf16.mxu0 %v4352
        %4764 = vmatmul.mubr.bf16.gmra.mxu0 %v4351
        %v4765 = vpop.f32.mrf.mxu0
        %v4766 = vadd.f32 %v4404, %v4765
        %v4767 = vpop.f32.mrf.mxu0
        %v4768 = vadd.f32 %v4408, %v4767
        %v4769 = vpop.f32.mrf.mxu0
        %v4770 = vadd.f32 %v4404, %v4769
        %v4771 = vpop.f32.mrf.mxu0
        %v4772 = vadd.f32 %v4408, %v4771
        %4773 = vmatprep.mubr.bf16.mxu0 %v4354
        %4774 = vmatmul.mubr.bf16.gmra.mxu0 %v4353
        %v4775 = vpop.f32.mrf.mxu0
        %v4776 = vadd.f32 %v4404, %v4775
        %v4777 = vpop.f32.mrf.mxu0
        %v4778 = vadd.f32 %v4408, %v4777
        %v4779 = vpop.f32.mrf.mxu0
        %v4780 = vadd.f32 %v4404, %v4779
        %v4781 = vpop.f32.mrf.mxu0
        %v4782 = vadd.f32 %v4408, %v4781
        %4783 = vmatprep.mubr.bf16.mxu0 %v4356
        %4784 = vmatmul.mubr.bf16.gmra.mxu0 %v4355
        %v4785 = vpop.f32.mrf.mxu0
        %v4786 = vadd.f32 %v4404, %v4785
        %v4787 = vpop.f32.mrf.mxu0
        %v4788 = vadd.f32 %v4408, %v4787
        %v4789 = vpop.f32.mrf.mxu0
        %v4790 = vadd.f32 %v4404, %v4789
        %v4791 = vpop.f32.mrf.mxu0
        %v4792 = vadd.f32 %v4408, %v4791
        %4793 = vmatprep.mubr.bf16.mxu0 %v4358
        %4794 = vmatmul.mubr.bf16.gmra.mxu0 %v4357
        %v4795 = vpop.f32.mrf.mxu0
        %v4796 = vadd.f32 %v4404, %v4795
        %v4797 = vpop.f32.mrf.mxu0
        %v4798 = vadd.f32 %v4408, %v4797
        %v4799 = vpop.f32.mrf.mxu0
        %v4800 = vadd.f32 %v4404, %v4799
        %v4801 = vpop.f32.mrf.mxu0
        %v4802 = vadd.f32 %v4408, %v4801
        %4803 = vmatprep.mubr.bf16.mxu0 %v4360
        %4804 = vmatmul.mubr.bf16.gmra.mxu0 %v4359
        %v4805 = vpop.f32.mrf.mxu0
        %v4806 = vadd.f32 %v4404, %v4805
        %v4807 = vpop.f32.mrf.mxu0
        %v4808 = vadd.f32 %v4408, %v4807
        %v4809 = vpop.f32.mrf.mxu0
        %v4810 = vadd.f32 %v4404, %v4809
        %v4811 = vpop.f32.mrf.mxu0
        %v4812 = vadd.f32 %v4408, %v4811
        %4813 = vmatprep.mubr.bf16.mxu0 %v4362
        %4814 = vmatmul.mubr.bf16.gmra.mxu0 %v4361
        %v4815 = vpop.f32.mrf.mxu0
        %v4816 = vadd.f32 %v4404, %v4815
        %v4817 = vpop.f32.mrf.mxu0
        %v4818 = vadd.f32 %v4408, %v4817
        %v4819 = vpop.f32.mrf.mxu0
        %v4820 = vadd.f32 %v4404, %v4819
        %v4821 = vpop.f32.mrf.mxu0
        %v4822 = vadd.f32 %v4408, %v4821
        %4823 = vmatprep.mubr.bf16.mxu0 %v4364
        %4824 = vmatmul.mubr.bf16.gmra.mxu0 %v4363
        %v4825 = vpop.f32.mrf.mxu0
        %v4826 = vadd.f32 %v4404, %v4825
        %v4827 = vpop.f32.mrf.mxu0
        %v4828 = vadd.f32 %v4408, %v4827
        %v4829 = vpop.f32.mrf.mxu0
        %v4830 = vadd.f32 %v4404, %v4829
        %v4831 = vpop.f32.mrf.mxu0
        %v4832 = vadd.f32 %v4408, %v4831
        %4833 = vmatprep.mubr.bf16.mxu0 %v4366
        %4834 = vmatmul.mubr.bf16.gmra.mxu0 %v4365
        %v4835 = vpop.f32.mrf.mxu0
        %v4836 = vadd.f32 %v4404, %v4835
        %v4837 = vpop.f32.mrf.mxu0
        %v4838 = vadd.f32 %v4408, %v4837
        %v4839 = vpop.f32.mrf.mxu0
        %v4840 = vadd.f32 %v4404, %v4839
        %v4841 = vpop.f32.mrf.mxu0
        %v4842 = vadd.f32 %v4408, %v4841
        %4843 = vdwg.mxu0
        %v4844 = vmin.f32 %v4606, 30.0
        %v4845 = vmin.f32 %v4608, 30.0
        %v4846 = vmin.f32 %v4610, 30.0
        %v4847 = vmin.f32 %v4612, 30.0
        %v4848 = vmin.f32 %v4616, 30.0
        %v4849 = vmin.f32 %v4618, 30.0
        %v4850 = vmin.f32 %v4620, 30.0
        %v4851 = vmin.f32 %v4622, 30.0
        %v4852 = vmin.f32 %v4626, 30.0
        %v4853 = vmin.f32 %v4628, 30.0
        %v4854 = vmin.f32 %v4630, 30.0
        %v4855 = vmin.f32 %v4632, 30.0
        %v4856 = vmin.f32 %v4636, 30.0
        %v4857 = vmin.f32 %v4638, 30.0
        %v4858 = vmin.f32 %v4640, 30.0
        %v4859 = vmin.f32 %v4642, 30.0
        %v4860 = vmin.f32 %v4646, 30.0
        %v4861 = vmin.f32 %v4648, 30.0
        %v4862 = vmin.f32 %v4650, 30.0
        %v4863 = vmin.f32 %v4652, 30.0
        %v4864 = vmin.f32 %v4656, 30.0
        %v4865 = vmin.f32 %v4658, 30.0
        %v4866 = vmin.f32 %v4660, 30.0
        %v4867 = vmin.f32 %v4662, 30.0
        %v4868 = vmin.f32 %v4666, 30.0
        %v4869 = vmin.f32 %v4668, 30.0
        %v4870 = vmin.f32 %v4670, 30.0
        %v4871 = vmin.f32 %v4672, 30.0
        %v4872 = vmin.f32 %v4676, 30.0
        %v4873 = vmin.f32 %v4678, 30.0
        %v4874 = vmin.f32 %v4680, 30.0
        %v4875 = vmin.f32 %v4682, 30.0
        %v4876 = vmin.f32 %v4686, 30.0
        %v4877 = vmin.f32 %v4688, 30.0
        %v4878 = vmin.f32 %v4690, 30.0
        %v4879 = vmin.f32 %v4692, 30.0
        %v4880 = vmin.f32 %v4696, 30.0
        %v4881 = vmin.f32 %v4698, 30.0
        %v4882 = vmin.f32 %v4700, 30.0
        %v4883 = vmin.f32 %v4702, 30.0
        %v4884 = vmin.f32 %v4706, 30.0
        %v4885 = vmin.f32 %v4708, 30.0
        %v4886 = vmin.f32 %v4710, 30.0
        %v4887 = vmin.f32 %v4712, 30.0
        %v4888 = vmin.f32 %v4716, 30.0
        %v4889 = vmin.f32 %v4718, 30.0
        %v4890 = vmin.f32 %v4720, 30.0
        %v4891 = vmin.f32 %v4722, 30.0
        %v4892 = vmin.f32 %v4726, 30.0
        %v4893 = vmin.f32 %v4728, 30.0
        %v4894 = vmin.f32 %v4730, 30.0
        %v4895 = vmin.f32 %v4732, 30.0
        %v4896 = vmin.f32 %v4736, 30.0
        %v4897 = vmin.f32 %v4738, 30.0
        %v4898 = vmin.f32 %v4740, 30.0
        %v4899 = vmin.f32 %v4742, 30.0
        %v4900 = vmin.f32 %v4746, 30.0
        %v4901 = vmin.f32 %v4748, 30.0
        %v4902 = vmin.f32 %v4750, 30.0
        %v4903 = vmin.f32 %v4752, 30.0
        %v4904 = vmin.f32 %v4756, 30.0
        %v4905 = vmin.f32 %v4758, 30.0
        %v4906 = vmin.f32 %v4760, 30.0
        %v4907 = vmin.f32 %v4762, 30.0
        %v4908 = vmin.f32 %v4766, 30.0
        %v4909 = vmin.f32 %v4768, 30.0
        %v4910 = vmin.f32 %v4770, 30.0
        %v4911 = vmin.f32 %v4772, 30.0
        %v4912 = vmin.f32 %v4776, 30.0
        %v4913 = vmin.f32 %v4778, 30.0
        %v4914 = vmin.f32 %v4780, 30.0
        %v4915 = vmin.f32 %v4782, 30.0
        %v4916 = vmin.f32 %v4786, 30.0
        %v4917 = vmin.f32 %v4788, 30.0
        %v4918 = vmin.f32 %v4790, 30.0
        %v4919 = vmin.f32 %v4792, 30.0
        %v4920 = vmin.f32 %v4796, 30.0
        %v4921 = vmin.f32 %v4798, 30.0
        %v4922 = vmin.f32 %v4800, 30.0
        %v4923 = vmin.f32 %v4802, 30.0
        %v4924 = vmin.f32 %v4806, 30.0
        %v4925 = vmin.f32 %v4808, 30.0
        %v4926 = vmin.f32 %v4810, 30.0
        %v4927 = vmin.f32 %v4812, 30.0
        %v4928 = vmin.f32 %v4816, 30.0
        %v4929 = vmin.f32 %v4818, 30.0
        %v4930 = vmin.f32 %v4820, 30.0
        %v4931 = vmin.f32 %v4822, 30.0
        %v4932 = vmin.f32 %v4826, 30.0
        %v4933 = vmin.f32 %v4828, 30.0
        %v4934 = vmin.f32 %v4830, 30.0
        %v4935 = vmin.f32 %v4832, 30.0
        %v4936 = vmin.f32 %v4836, 30.0
        %v4937 = vmin.f32 %v4838, 30.0
        %v4938 = vmin.f32 %v4840, 30.0
        %v4939 = vmin.f32 %v4842, 30.0
        %v4940 = vmul.f32 %v4844, 1.442695
        %v4941 = vpow.pop %v4940
        %v4942 = vmul.f32 %v4845, 1.442695
        %v4943 = vpow.pop %v4942
        %v4944 = vmul.f32 %v4846, 1.442695
        %v4945 = vpow.pop %v4944
        %v4946 = vmul.f32 %v4847, 1.442695
        %v4947 = vpow.pop %v4946
        %v4948 = vmul.f32 %v4848, 1.442695
        %v4949 = vpow.pop %v4948
        %v4950 = vmul.f32 %v4849, 1.442695
        %v4951 = vpow.pop %v4950
        %v4952 = vmul.f32 %v4850, 1.442695
        %v4953 = vpow.pop %v4952
        %v4954 = vmul.f32 %v4851, 1.442695
        %v4955 = vpow.pop %v4954
        %v4956 = vmul.f32 %v4852, 1.442695
        %v4957 = vpow.pop %v4956
        %v4958 = vmul.f32 %v4853, 1.442695
        %v4959 = vpow.pop %v4958
        %v4960 = vmul.f32 %v4854, 1.442695
        %v4961 = vpow.pop %v4960
        %v4962 = vmul.f32 %v4855, 1.442695
        %v4963 = vpow.pop %v4962
        %v4964 = vmul.f32 %v4856, 1.442695
        %v4965 = vpow.pop %v4964
        %v4966 = vmul.f32 %v4857, 1.442695
        %v4967 = vpow.pop %v4966
        %v4968 = vmul.f32 %v4858, 1.442695
        %v4969 = vpow.pop %v4968
        %v4970 = vmul.f32 %v4859, 1.442695
        %v4971 = vpow.pop %v4970
        %v4972 = vmul.f32 %v4860, 1.442695
        %v4973 = vpow.pop %v4972
        %v4974 = vmul.f32 %v4861, 1.442695
        %v4975 = vpow.pop %v4974
        %v4976 = vmul.f32 %v4862, 1.442695
        %v4977 = vpow.pop %v4976
        %v4978 = vmul.f32 %v4863, 1.442695
        %v4979 = vpow.pop %v4978
        %v4980 = vmul.f32 %v4864, 1.442695
        %v4981 = vpow.pop %v4980
        %v4982 = vmul.f32 %v4865, 1.442695
        %v4983 = vpow.pop %v4982
        %v4984 = vmul.f32 %v4866, 1.442695
        %v4985 = vpow.pop %v4984
        %v4986 = vmul.f32 %v4867, 1.442695
        %v4987 = vpow.pop %v4986
        %v4988 = vmul.f32 %v4868, 1.442695
        %v4989 = vpow.pop %v4988
        %v4990 = vmul.f32 %v4869, 1.442695
        %v4991 = vpow.pop %v4990
        %v4992 = vmul.f32 %v4870, 1.442695
        %v4993 = vpow.pop %v4992
        %v4994 = vmul.f32 %v4871, 1.442695
        %v4995 = vpow.pop %v4994
        %v4996 = vmul.f32 %v4872, 1.442695
        %v4997 = vpow.pop %v4996
        %v4998 = vmul.f32 %v4873, 1.442695
        %v4999 = vpow.pop %v4998
        %v5000 = vmul.f32 %v4874, 1.442695
        %v5001 = vpow.pop %v5000
        %v5002 = vmul.f32 %v4875, 1.442695
        %v5003 = vpow.pop %v5002
        %v5004 = vmul.f32 %v4876, 1.442695
        %v5005 = vpow.pop %v5004
        %v5006 = vmul.f32 %v4877, 1.442695
        %v5007 = vpow.pop %v5006
        %v5008 = vmul.f32 %v4878, 1.442695
        %v5009 = vpow.pop %v5008
        %v5010 = vmul.f32 %v4879, 1.442695
        %v5011 = vpow.pop %v5010
        %v5012 = vmul.f32 %v4880, 1.442695
        %v5013 = vpow.pop %v5012
        %v5014 = vmul.f32 %v4881, 1.442695
        %v5015 = vpow.pop %v5014
        %v5016 = vmul.f32 %v4882, 1.442695
        %v5017 = vpow.pop %v5016
        %v5018 = vmul.f32 %v4883, 1.442695
        %v5019 = vpow.pop %v5018
        %v5020 = vmul.f32 %v4884, 1.442695
        %v5021 = vpow.pop %v5020
        %v5022 = vmul.f32 %v4885, 1.442695
        %v5023 = vpow.pop %v5022
        %v5024 = vmul.f32 %v4886, 1.442695
        %v5025 = vpow.pop %v5024
        %v5026 = vmul.f32 %v4887, 1.442695
        %v5027 = vpow.pop %v5026
        %v5028 = vmul.f32 %v4888, 1.442695
        %v5029 = vpow.pop %v5028
        %v5030 = vmul.f32 %v4889, 1.442695
        %v5031 = vpow.pop %v5030
        %v5032 = vmul.f32 %v4890, 1.442695
        %v5033 = vpow.pop %v5032
        %v5034 = vmul.f32 %v4891, 1.442695
        %v5035 = vpow.pop %v5034
        %v5036 = vmul.f32 %v4892, 1.442695
        %v5037 = vpow.pop %v5036
        %v5038 = vmul.f32 %v4893, 1.442695
        %v5039 = vpow.pop %v5038
        %v5040 = vmul.f32 %v4894, 1.442695
        %v5041 = vpow.pop %v5040
        %v5042 = vmul.f32 %v4895, 1.442695
        %v5043 = vpow.pop %v5042
        %v5044 = vmul.f32 %v4896, 1.442695
        %v5045 = vpow.pop %v5044
        %v5046 = vmul.f32 %v4897, 1.442695
        %v5047 = vpow.pop %v5046
        %v5048 = vmul.f32 %v4898, 1.442695
        %v5049 = vpow.pop %v5048
        %v5050 = vmul.f32 %v4899, 1.442695
        %v5051 = vpow.pop %v5050
        %v5052 = vmul.f32 %v4900, 1.442695
        %v5053 = vpow.pop %v5052
        %v5054 = vmul.f32 %v4901, 1.442695
        %v5055 = vpow.pop %v5054
        %v5056 = vmul.f32 %v4902, 1.442695
        %v5057 = vpow.pop %v5056
        %v5058 = vmul.f32 %v4903, 1.442695
        %v5059 = vpow.pop %v5058
        %v5060 = vmul.f32 %v4904, 1.442695
        %v5061 = vpow.pop %v5060
        %v5062 = vmul.f32 %v4905, 1.442695
        %v5063 = vpow.pop %v5062
        %v5064 = vmul.f32 %v4906, 1.442695
        %v5065 = vpow.pop %v5064
        %v5066 = vmul.f32 %v4907, 1.442695
        %v5067 = vpow.pop %v5066
        %v5068 = vmul.f32 %v4908, 1.442695
        %v5069 = vpow.pop %v5068
        %v5070 = vmul.f32 %v4909, 1.442695
        %v5071 = vpow.pop %v5070
        %v5072 = vmul.f32 %v4910, 1.442695
        %v5073 = vpow.pop %v5072
        %v5074 = vmul.f32 %v4911, 1.442695
        %v5075 = vpow.pop %v5074
        %v5076 = vmul.f32 %v4912, 1.442695
        %v5077 = vpow.pop %v5076
        %v5078 = vmul.f32 %v4913, 1.442695
        %v5079 = vpow.pop %v5078
        %v5080 = vmul.f32 %v4914, 1.442695
        %v5081 = vpow.pop %v5080
        %v5082 = vmul.f32 %v4915, 1.442695
        %v5083 = vpow.pop %v5082
        %v5084 = vmul.f32 %v4916, 1.442695
        %v5085 = vpow.pop %v5084
        %v5086 = vmul.f32 %v4917, 1.442695
        %v5087 = vpow.pop %v5086
        %v5088 = vmul.f32 %v4918, 1.442695
        %v5089 = vpow.pop %v5088
        %v5090 = vmul.f32 %v4919, 1.442695
        %v5091 = vpow.pop %v5090
        %v5092 = vmul.f32 %v4920, 1.442695
        %v5093 = vpow.pop %v5092
        %v5094 = vmul.f32 %v4921, 1.442695
        %v5095 = vpow.pop %v5094
        %v5096 = vmul.f32 %v4922, 1.442695
        %v5097 = vpow.pop %v5096
        %v5098 = vmul.f32 %v4923, 1.442695
        %v5099 = vpow.pop %v5098
        %v5100 = vmul.f32 %v4924, 1.442695
        %v5101 = vpow.pop %v5100
        %v5102 = vmul.f32 %v4925, 1.442695
        %v5103 = vpow.pop %v5102
        %v5104 = vmul.f32 %v4926, 1.442695
        %v5105 = vpow.pop %v5104
        %v5106 = vmul.f32 %v4927, 1.442695
        %v5107 = vpow.pop %v5106
        %v5108 = vmul.f32 %v4928, 1.442695
        %v5109 = vpow.pop %v5108
        %v5110 = vmul.f32 %v4929, 1.442695
        %v5111 = vpow.pop %v5110
        %v5112 = vmul.f32 %v4930, 1.442695
        %v5113 = vpow.pop %v5112
        %v5114 = vmul.f32 %v4931, 1.442695
        %v5115 = vpow.pop %v5114
        %v5116 = vmul.f32 %v4932, 1.442695
        %v5117 = vpow.pop %v5116
        %v5118 = vmul.f32 %v4933, 1.442695
        %v5119 = vpow.pop %v5118
        %v5120 = vmul.f32 %v4934, 1.442695
        %v5121 = vpow.pop %v5120
        %v5122 = vmul.f32 %v4935, 1.442695
        %v5123 = vpow.pop %v5122
        %v5124 = vmul.f32 %v4936, 1.442695
        %v5125 = vpow.pop %v5124
        %v5126 = vmul.f32 %v4937, 1.442695
        %v5127 = vpow.pop %v5126
        %v5128 = vmul.f32 %v4938, 1.442695
        %v5129 = vpow.pop %v5128
        %v5130 = vmul.f32 %v4939, 1.442695
        %v5131 = vpow.pop %v5130
        %v5132 = vadd.f32 %v4941, 2.0
        %v5133 = vadd.f32 %v4943, 2.0
        %v5134 = vadd.f32 %v4945, 2.0
        %v5135 = vadd.f32 %v4947, 2.0
        %v5136 = vadd.f32 %v4949, 2.0
        %v5137 = vadd.f32 %v4951, 2.0
        %v5138 = vadd.f32 %v4953, 2.0
        %v5139 = vadd.f32 %v4955, 2.0
        %v5140 = vadd.f32 %v4957, 2.0
        %v5141 = vadd.f32 %v4959, 2.0
        %v5142 = vadd.f32 %v4961, 2.0
        %v5143 = vadd.f32 %v4963, 2.0
        %v5144 = vadd.f32 %v4965, 2.0
        %v5145 = vadd.f32 %v4967, 2.0
        %v5146 = vadd.f32 %v4969, 2.0
        %v5147 = vadd.f32 %v4971, 2.0
        %v5148 = vadd.f32 %v4973, 2.0
        %v5149 = vadd.f32 %v4975, 2.0
        %v5150 = vadd.f32 %v4977, 2.0
        %v5151 = vadd.f32 %v4979, 2.0
        %v5152 = vadd.f32 %v4981, 2.0
        %v5153 = vadd.f32 %v4983, 2.0
        %v5154 = vadd.f32 %v4985, 2.0
        %v5155 = vadd.f32 %v4987, 2.0
        %v5156 = vadd.f32 %v4989, 2.0
        %v5157 = vadd.f32 %v4991, 2.0
        %v5158 = vadd.f32 %v4993, 2.0
        %v5159 = vadd.f32 %v4995, 2.0
        %v5160 = vadd.f32 %v4997, 2.0
        %v5161 = vadd.f32 %v4999, 2.0
        %v5162 = vadd.f32 %v5001, 2.0
        %v5163 = vadd.f32 %v5003, 2.0
        %v5164 = vadd.f32 %v5005, 2.0
        %v5165 = vadd.f32 %v5007, 2.0
        %v5166 = vadd.f32 %v5009, 2.0
        %v5167 = vadd.f32 %v5011, 2.0
        %v5168 = vadd.f32 %v5013, 2.0
        %v5169 = vadd.f32 %v5015, 2.0
        %v5170 = vadd.f32 %v5017, 2.0
        %v5171 = vadd.f32 %v5019, 2.0
        %v5172 = vadd.f32 %v5021, 2.0
        %v5173 = vadd.f32 %v5023, 2.0
        %v5174 = vadd.f32 %v5025, 2.0
        %v5175 = vadd.f32 %v5027, 2.0
        %v5176 = vadd.f32 %v5029, 2.0
        %v5177 = vadd.f32 %v5031, 2.0
        %v5178 = vadd.f32 %v5033, 2.0
        %v5179 = vadd.f32 %v5035, 2.0
        %v5180 = vadd.f32 %v5037, 2.0
        %v5181 = vadd.f32 %v5039, 2.0
        %v5182 = vadd.f32 %v5041, 2.0
        %v5183 = vadd.f32 %v5043, 2.0
        %v5184 = vadd.f32 %v5045, 2.0
        %v5185 = vadd.f32 %v5047, 2.0
        %v5186 = vadd.f32 %v5049, 2.0
        %v5187 = vadd.f32 %v5051, 2.0
        %v5188 = vadd.f32 %v5053, 2.0
        %v5189 = vadd.f32 %v5055, 2.0
        %v5190 = vadd.f32 %v5057, 2.0
        %v5191 = vadd.f32 %v5059, 2.0
        %v5192 = vadd.f32 %v5061, 2.0
        %v5193 = vadd.f32 %v5063, 2.0
        %v5194 = vadd.f32 %v5065, 2.0
        %v5195 = vadd.f32 %v5067, 2.0
        %v5196 = vadd.f32 %v5069, 2.0
        %v5197 = vadd.f32 %v5071, 2.0
        %v5198 = vadd.f32 %v5073, 2.0
        %v5199 = vadd.f32 %v5075, 2.0
        %v5200 = vadd.f32 %v5077, 2.0
        %v5201 = vadd.f32 %v5079, 2.0
        %v5202 = vadd.f32 %v5081, 2.0
        %v5203 = vadd.f32 %v5083, 2.0
        %v5204 = vadd.f32 %v5085, 2.0
        %v5205 = vadd.f32 %v5087, 2.0
        %v5206 = vadd.f32 %v5089, 2.0
        %v5207 = vadd.f32 %v5091, 2.0
        %v5208 = vadd.f32 %v5093, 2.0
        %v5209 = vadd.f32 %v5095, 2.0
        %v5210 = vadd.f32 %v5097, 2.0
        %v5211 = vadd.f32 %v5099, 2.0
        %v5212 = vadd.f32 %v5101, 2.0
        %v5213 = vadd.f32 %v5103, 2.0
        %v5214 = vadd.f32 %v5105, 2.0
        %v5215 = vadd.f32 %v5107, 2.0
        %v5216 = vadd.f32 %v5109, 2.0
        %v5217 = vadd.f32 %v5111, 2.0
        %v5218 = vadd.f32 %v5113, 2.0
        %v5219 = vadd.f32 %v5115, 2.0
        %v5220 = vadd.f32 %v5117, 2.0
        %v5221 = vadd.f32 %v5119, 2.0
        %v5222 = vadd.f32 %v5121, 2.0
        %v5223 = vadd.f32 %v5123, 2.0
        %v5224 = vadd.f32 %v5125, 2.0
        %v5225 = vadd.f32 %v5127, 2.0
        %v5226 = vadd.f32 %v5129, 2.0
        %v5227 = vadd.f32 %v5131, 2.0
        %v5228 = vrcp.pop %v5132
        %v5229 = vrcp.pop %v5133
        %v5230 = vrcp.pop %v5134
        %v5231 = vrcp.pop %v5135
        %v5232 = vrcp.pop %v5136
        %v5233 = vrcp.pop %v5137
        %v5234 = vrcp.pop %v5138
        %v5235 = vrcp.pop %v5139
        %v5236 = vrcp.pop %v5140
        %v5237 = vrcp.pop %v5141
        %v5238 = vrcp.pop %v5142
        %v5239 = vrcp.pop %v5143
        %v5240 = vrcp.pop %v5144
        %v5241 = vrcp.pop %v5145
        %v5242 = vrcp.pop %v5146
        %v5243 = vrcp.pop %v5147
        %v5244 = vrcp.pop %v5148
        %v5245 = vrcp.pop %v5149
        %v5246 = vrcp.pop %v5150
        %v5247 = vrcp.pop %v5151
        %v5248 = vrcp.pop %v5152
        %v5249 = vrcp.pop %v5153
        %v5250 = vrcp.pop %v5154
        %v5251 = vrcp.pop %v5155
        %v5252 = vrcp.pop %v5156
        %v5253 = vrcp.pop %v5157
        %v5254 = vrcp.pop %v5158
        %v5255 = vrcp.pop %v5159
        %v5256 = vrcp.pop %v5160
        %v5257 = vrcp.pop %v5161
        %v5258 = vrcp.pop %v5162
        %v5259 = vrcp.pop %v5163
        %v5260 = vrcp.pop %v5164
        %v5261 = vrcp.pop %v5165
        %v5262 = vrcp.pop %v5166
        %v5263 = vrcp.pop %v5167
        %v5264 = vrcp.pop %v5168
        %v5265 = vrcp.pop %v5169
        %v5266 = vrcp.pop %v5170
        %v5267 = vrcp.pop %v5171
        %v5268 = vrcp.pop %v5172
        %v5269 = vrcp.pop %v5173
        %v5270 = vrcp.pop %v5174
        %v5271 = vrcp.pop %v5175
        %v5272 = vrcp.pop %v5176
        %v5273 = vrcp.pop %v5177
        %v5274 = vrcp.pop %v5178
        %v5275 = vrcp.pop %v5179
        %v5276 = vrcp.pop %v5180
        %v5277 = vrcp.pop %v5181
        %v5278 = vrcp.pop %v5182
        %v5279 = vrcp.pop %v5183
        %v5280 = vrcp.pop %v5184
        %v5281 = vrcp.pop %v5185
        %v5282 = vrcp.pop %v5186
        %v5283 = vrcp.pop %v5187
        %v5284 = vrcp.pop %v5188
        %v5285 = vrcp.pop %v5189
        %v5286 = vrcp.pop %v5190
        %v5287 = vrcp.pop %v5191
        %v5288 = vrcp.pop %v5192
        %v5289 = vrcp.pop %v5193
        %v5290 = vrcp.pop %v5194
        %v5291 = vrcp.pop %v5195
        %v5292 = vrcp.pop %v5196
        %v5293 = vrcp.pop %v5197
        %v5294 = vrcp.pop %v5198
        %v5295 = vrcp.pop %v5199
        %v5296 = vrcp.pop %v5200
        %v5297 = vrcp.pop %v5201
        %v5298 = vrcp.pop %v5202
        %v5299 = vrcp.pop %v5203
        %v5300 = vrcp.pop %v5204
        %v5301 = vrcp.pop %v5205
        %v5302 = vrcp.pop %v5206
        %v5303 = vrcp.pop %v5207
        %v5304 = vrcp.pop %v5208
        %v5305 = vrcp.pop %v5209
        %v5306 = vrcp.pop %v5210
        %v5307 = vrcp.pop %v5211
        %v5308 = vrcp.pop %v5212
        %v5309 = vrcp.pop %v5213
        %v5310 = vrcp.pop %v5214
        %v5311 = vrcp.pop %v5215
        %v5312 = vrcp.pop %v5216
        %v5313 = vrcp.pop %v5217
        %v5314 = vrcp.pop %v5218
        %v5315 = vrcp.pop %v5219
        %v5316 = vrcp.pop %v5220
        %v5317 = vrcp.pop %v5221
        %v5318 = vrcp.pop %v5222
        %v5319 = vrcp.pop %v5223
        %v5320 = vrcp.pop %v5224
        %v5321 = vrcp.pop %v5225
        %v5322 = vrcp.pop %v5226
        %v5323 = vrcp.pop %v5227
        %v5324 = vsub.f32 1.0, %v5228
        %v5325 = vsub.f32 1.0, %v5229
        %v5326 = vsub.f32 1.0, %v5230
        %v5327 = vsub.f32 1.0, %v5231
        %v5328 = vsub.f32 1.0, %v5232
        %v5329 = vsub.f32 1.0, %v5233
        %v5330 = vsub.f32 1.0, %v5234
        %v5331 = vsub.f32 1.0, %v5235
        %v5332 = vsub.f32 1.0, %v5236
        %v5333 = vsub.f32 1.0, %v5237
        %v5334 = vsub.f32 1.0, %v5238
        %v5335 = vsub.f32 1.0, %v5239
        %v5336 = vsub.f32 1.0, %v5240
        %v5337 = vsub.f32 1.0, %v5241
        %v5338 = vsub.f32 1.0, %v5242
        %v5339 = vsub.f32 1.0, %v5243
        %v5340 = vsub.f32 1.0, %v5244
        %v5341 = vsub.f32 1.0, %v5245
        %v5342 = vsub.f32 1.0, %v5246
        %v5343 = vsub.f32 1.0, %v5247
        %v5344 = vsub.f32 1.0, %v5248
        %v5345 = vsub.f32 1.0, %v5249
        %v5346 = vsub.f32 1.0, %v5250
        %v5347 = vsub.f32 1.0, %v5251
        %v5348 = vsub.f32 1.0, %v5252
        %v5349 = vsub.f32 1.0, %v5253
        %v5350 = vsub.f32 1.0, %v5254
        %v5351 = vsub.f32 1.0, %v5255
        %v5352 = vsub.f32 1.0, %v5256
        %v5353 = vsub.f32 1.0, %v5257
        %v5354 = vsub.f32 1.0, %v5258
        %v5355 = vsub.f32 1.0, %v5259
        %v5356 = vsub.f32 1.0, %v5260
        %v5357 = vsub.f32 1.0, %v5261
        %v5358 = vsub.f32 1.0, %v5262
        %v5359 = vsub.f32 1.0, %v5263
        %v5360 = vsub.f32 1.0, %v5264
        %v5361 = vsub.f32 1.0, %v5265
        %v5362 = vsub.f32 1.0, %v5266
        %v5363 = vsub.f32 1.0, %v5267
        %v5364 = vsub.f32 1.0, %v5268
        %v5365 = vsub.f32 1.0, %v5269
        %v5366 = vsub.f32 1.0, %v5270
        %v5367 = vsub.f32 1.0, %v5271
        %v5368 = vsub.f32 1.0, %v5272
        %v5369 = vsub.f32 1.0, %v5273
        %v5370 = vsub.f32 1.0, %v5274
        %v5371 = vsub.f32 1.0, %v5275
        %v5372 = vsub.f32 1.0, %v5276
        %v5373 = vsub.f32 1.0, %v5277
        %v5374 = vsub.f32 1.0, %v5278
        %v5375 = vsub.f32 1.0, %v5279
        %v5376 = vsub.f32 1.0, %v5280
        %v5377 = vsub.f32 1.0, %v5281
        %v5378 = vsub.f32 1.0, %v5282
        %v5379 = vsub.f32 1.0, %v5283
        %v5380 = vsub.f32 1.0, %v5284
        %v5381 = vsub.f32 1.0, %v5285
        %v5382 = vsub.f32 1.0, %v5286
        %v5383 = vsub.f32 1.0, %v5287
        %v5384 = vsub.f32 1.0, %v5288
        %v5385 = vsub.f32 1.0, %v5289
        %v5386 = vsub.f32 1.0, %v5290
        %v5387 = vsub.f32 1.0, %v5291
        %v5388 = vsub.f32 1.0, %v5292
        %v5389 = vsub.f32 1.0, %v5293
        %v5390 = vsub.f32 1.0, %v5294
        %v5391 = vsub.f32 1.0, %v5295
        %v5392 = vsub.f32 1.0, %v5296
        %v5393 = vsub.f32 1.0, %v5297
        %v5394 = vsub.f32 1.0, %v5298
        %v5395 = vsub.f32 1.0, %v5299
        %v5396 = vsub.f32 1.0, %v5300
        %v5397 = vsub.f32 1.0, %v5301
        %v5398 = vsub.f32 1.0, %v5302
        %v5399 = vsub.f32 1.0, %v5303
        %v5400 = vsub.f32 1.0, %v5304
        %v5401 = vsub.f32 1.0, %v5305
        %v5402 = vsub.f32 1.0, %v5306
        %v5403 = vsub.f32 1.0, %v5307
        %v5404 = vsub.f32 1.0, %v5308
        %v5405 = vsub.f32 1.0, %v5309
        %v5406 = vsub.f32 1.0, %v5310
        %v5407 = vsub.f32 1.0, %v5311
        %v5408 = vsub.f32 1.0, %v5312
        %v5409 = vsub.f32 1.0, %v5313
        %v5410 = vsub.f32 1.0, %v5314
        %v5411 = vsub.f32 1.0, %v5315
        %v5412 = vsub.f32 1.0, %v5316
        %v5413 = vsub.f32 1.0, %v5317
        %v5414 = vsub.f32 1.0, %v5318
        %v5415 = vsub.f32 1.0, %v5319
        %v5416 = vsub.f32 1.0, %v5320
        %v5417 = vsub.f32 1.0, %v5321
        %v5418 = vsub.f32 1.0, %v5322
        %v5419 = vsub.f32 1.0, %v5323
        %v5420 = vmul.f32 %v4223, %v5324
        %v5421 = vmul.f32 %v4224, %v5325
        %v5422 = vmul.f32 %v4225, %v5326
        %v5423 = vmul.f32 %v4226, %v5327
        %v5424 = vmul.f32 %v4227, %v5328
        %v5425 = vmul.f32 %v4228, %v5329
        %v5426 = vmul.f32 %v4229, %v5330
        %v5427 = vmul.f32 %v4230, %v5331
        %v5428 = vmul.f32 %v4231, %v5332
        %v5429 = vmul.f32 %v4232, %v5333
        %v5430 = vmul.f32 %v4233, %v5334
        %v5431 = vmul.f32 %v4234, %v5335
        %v5432 = vmul.f32 %v4235, %v5336
        %v5433 = vmul.f32 %v4236, %v5337
        %v5434 = vmul.f32 %v4237, %v5338
        %v5435 = vmul.f32 %v4238, %v5339
        %v5436 = vmul.f32 %v4239, %v5340
        %v5437 = vmul.f32 %v4240, %v5341
        %v5438 = vmul.f32 %v4241, %v5342
        %v5439 = vmul.f32 %v4242, %v5343
        %v5440 = vmul.f32 %v4243, %v5344
        %v5441 = vmul.f32 %v4244, %v5345
        %v5442 = vmul.f32 %v4245, %v5346
        %v5443 = vmul.f32 %v4246, %v5347
        %v5444 = vmul.f32 %v4247, %v5348
        %v5445 = vmul.f32 %v4248, %v5349
        %v5446 = vmul.f32 %v4249, %v5350
        %v5447 = vmul.f32 %v4250, %v5351
        %v5448 = vmul.f32 %v4251, %v5352
        %v5449 = vmul.f32 %v4252, %v5353
        %v5450 = vmul.f32 %v4253, %v5354
        %v5451 = vmul.f32 %v4254, %v5355
        %v5452 = vmul.f32 %v4255, %v5356
        %v5453 = vmul.f32 %v4256, %v5357
        %v5454 = vmul.f32 %v4257, %v5358
        %v5455 = vmul.f32 %v4258, %v5359
        %v5456 = vmul.f32 %v4259, %v5360
        %v5457 = vmul.f32 %v4260, %v5361
        %v5458 = vmul.f32 %v4261, %v5362
        %v5459 = vmul.f32 %v4262, %v5363
        %v5460 = vmul.f32 %v4263, %v5364
        %v5461 = vmul.f32 %v4264, %v5365
        %v5462 = vmul.f32 %v4265, %v5366
        %v5463 = vmul.f32 %v4266, %v5367
        %v5464 = vmul.f32 %v4267, %v5368
        %v5465 = vmul.f32 %v4268, %v5369
        %v5466 = vmul.f32 %v4269, %v5370
        %v5467 = vmul.f32 %v4270, %v5371
        %v5468 = vmul.f32 %v4271, %v5372
        %v5469 = vmul.f32 %v4272, %v5373
        %v5470 = vmul.f32 %v4273, %v5374
        %v5471 = vmul.f32 %v4274, %v5375
        %v5472 = vmul.f32 %v4275, %v5376
        %v5473 = vmul.f32 %v4276, %v5377
        %v5474 = vmul.f32 %v4277, %v5378
        %v5475 = vmul.f32 %v4278, %v5379
        %v5476 = vmul.f32 %v4279, %v5380
        %v5477 = vmul.f32 %v4280, %v5381
        %v5478 = vmul.f32 %v4281, %v5382
        %v5479 = vmul.f32 %v4282, %v5383
        %v5480 = vmul.f32 %v4283, %v5384
        %v5481 = vmul.f32 %v4284, %v5385
        %v5482 = vmul.f32 %v4285, %v5386
        %v5483 = vmul.f32 %v4286, %v5387
        %v5484 = vmul.f32 %v4287, %v5388
        %v5485 = vmul.f32 %v4288, %v5389
        %v5486 = vmul.f32 %v4289, %v5390
        %v5487 = vmul.f32 %v4290, %v5391
        %v5488 = vmul.f32 %v4291, %v5392
        %v5489 = vmul.f32 %v4292, %v5393
        %v5490 = vmul.f32 %v4293, %v5394
        %v5491 = vmul.f32 %v4294, %v5395
        %v5492 = vmul.f32 %v4295, %v5396
        %v5493 = vmul.f32 %v4296, %v5397
        %v5494 = vmul.f32 %v4297, %v5398
        %v5495 = vmul.f32 %v4298, %v5399
        %v5496 = vmul.f32 %v4299, %v5400
        %v5497 = vmul.f32 %v4300, %v5401
        %v5498 = vmul.f32 %v4301, %v5402
        %v5499 = vmul.f32 %v4302, %v5403
        %v5500 = vmul.f32 %v4303, %v5404
        %v5501 = vmul.f32 %v4304, %v5405
        %v5502 = vmul.f32 %v4305, %v5406
        %v5503 = vmul.f32 %v4306, %v5407
        %v5504 = vmul.f32 %v4307, %v5408
        %v5505 = vmul.f32 %v4308, %v5409
        %v5506 = vmul.f32 %v4309, %v5410
        %v5507 = vmul.f32 %v4310, %v5411
        %v5508 = vmul.f32 %v4311, %v5412
        %v5509 = vmul.f32 %v4312, %v5413
        %v5510 = vmul.f32 %v4313, %v5414
        %v5511 = vmul.f32 %v4314, %v5415
        %v5512 = vmul.f32 %v4315, %v5416
        %v5513 = vmul.f32 %v4316, %v5417
        %v5514 = vmul.f32 %v4317, %v5418
        %v5515 = vmul.f32 %v4318, %v5419
        %v5516 = vxor.u32 %v1789, 2147483648
        %v5517 = vxor.u32 %v1791, 2147483648
        %v5518 = vxor.u32 %v1793, 2147483648
        %v5519 = vxor.u32 %v1795, 2147483648
        %v5520 = vxor.u32 %v1799, 2147483648
        %v5521 = vxor.u32 %v1801, 2147483648
        %v5522 = vxor.u32 %v1803, 2147483648
        %v5523 = vxor.u32 %v1805, 2147483648
        %v5524 = vxor.u32 %v1809, 2147483648
        %v5525 = vxor.u32 %v1811, 2147483648
        %v5526 = vxor.u32 %v1813, 2147483648
        %v5527 = vxor.u32 %v1815, 2147483648
        %v5528 = vxor.u32 %v1819, 2147483648
        %v5529 = vxor.u32 %v1821, 2147483648
        %v5530 = vxor.u32 %v1823, 2147483648
        %v5531 = vxor.u32 %v1825, 2147483648
        %v5532 = vxor.u32 %v1829, 2147483648
        %v5533 = vxor.u32 %v1831, 2147483648
        %v5534 = vxor.u32 %v1833, 2147483648
        %v5535 = vxor.u32 %v1835, 2147483648
        %v5536 = vxor.u32 %v1839, 2147483648
        %v5537 = vxor.u32 %v1841, 2147483648
        %v5538 = vxor.u32 %v1843, 2147483648
        %v5539 = vxor.u32 %v1845, 2147483648
        %v5540 = vxor.u32 %v1849, 2147483648
        %v5541 = vxor.u32 %v1851, 2147483648
        %v5542 = vxor.u32 %v1853, 2147483648
        %v5543 = vxor.u32 %v1855, 2147483648
        %v5544 = vxor.u32 %v1859, 2147483648
        %v5545 = vxor.u32 %v1861, 2147483648
        %v5546 = vxor.u32 %v1863, 2147483648
        %v5547 = vxor.u32 %v1865, 2147483648
        %v5548 = vxor.u32 %v1869, 2147483648
        %v5549 = vxor.u32 %v1871, 2147483648
        %v5550 = vxor.u32 %v1873, 2147483648
        %v5551 = vxor.u32 %v1875, 2147483648
        %v5552 = vxor.u32 %v1879, 2147483648
        %v5553 = vxor.u32 %v1881, 2147483648
        %v5554 = vxor.u32 %v1883, 2147483648
        %v5555 = vxor.u32 %v1885, 2147483648
        %v5556 = vxor.u32 %v1889, 2147483648
        %v5557 = vxor.u32 %v1891, 2147483648
        %v5558 = vxor.u32 %v1893, 2147483648
        %v5559 = vxor.u32 %v1895, 2147483648
        %v5560 = vxor.u32 %v1899, 2147483648
        %v5561 = vxor.u32 %v1901, 2147483648
        %v5562 = vxor.u32 %v1903, 2147483648
        %v5563 = vxor.u32 %v1905, 2147483648
        %v5564 = vxor.u32 %v1909, 2147483648
        %v5565 = vxor.u32 %v1911, 2147483648
        %v5566 = vxor.u32 %v1913, 2147483648
        %v5567 = vxor.u32 %v1915, 2147483648
        %v5568 = vxor.u32 %v1919, 2147483648
        %v5569 = vxor.u32 %v1921, 2147483648
        %v5570 = vxor.u32 %v1923, 2147483648
        %v5571 = vxor.u32 %v1925, 2147483648
        %v5572 = vxor.u32 %v1929, 2147483648
        %v5573 = vxor.u32 %v1931, 2147483648
        %v5574 = vxor.u32 %v1933, 2147483648
        %v5575 = vxor.u32 %v1935, 2147483648
        %v5576 = vxor.u32 %v1939, 2147483648
        %v5577 = vxor.u32 %v1941, 2147483648
        %v5578 = vxor.u32 %v1943, 2147483648
        %v5579 = vxor.u32 %v1945, 2147483648
        %v5580 = vxor.u32 %v1949, 2147483648
        %v5581 = vxor.u32 %v1951, 2147483648
        %v5582 = vxor.u32 %v1953, 2147483648
        %v5583 = vxor.u32 %v1955, 2147483648
        %v5584 = vxor.u32 %v1959, 2147483648
        %v5585 = vxor.u32 %v1961, 2147483648
        %v5586 = vxor.u32 %v1963, 2147483648
        %v5587 = vxor.u32 %v1965, 2147483648
        %v5588 = vxor.u32 %v1969, 2147483648
        %v5589 = vxor.u32 %v1971, 2147483648
        %v5590 = vxor.u32 %v1973, 2147483648
        %v5591 = vxor.u32 %v1975, 2147483648
        %v5592 = vxor.u32 %v1979, 2147483648
        %v5593 = vxor.u32 %v1981, 2147483648
        %v5594 = vxor.u32 %v1983, 2147483648
        %v5595 = vxor.u32 %v1985, 2147483648
        %v5596 = vxor.u32 %v1989, 2147483648
        %v5597 = vxor.u32 %v1991, 2147483648
        %v5598 = vxor.u32 %v1993, 2147483648
        %v5599 = vxor.u32 %v1995, 2147483648
        %v5600 = vxor.u32 %v1999, 2147483648
        %v5601 = vxor.u32 %v2001, 2147483648
        %v5602 = vxor.u32 %v2003, 2147483648
        %v5603 = vxor.u32 %v2005, 2147483648
        %v5604 = vxor.u32 %v2009, 2147483648
        %v5605 = vxor.u32 %v2011, 2147483648
        %v5606 = vxor.u32 %v2013, 2147483648
        %v5607 = vxor.u32 %v2015, 2147483648
        %v5608 = vxor.u32 %v2019, 2147483648
        %v5609 = vxor.u32 %v2021, 2147483648
        %v5610 = vxor.u32 %v2023, 2147483648
        %v5611 = vxor.u32 %v2025, 2147483648
        %v5612 = vmul.f32 %v5516, 1.442695
        %v5613 = vpow.pop %v5612
        %v5614 = vmul.f32 %v5517, 1.442695
        %v5615 = vpow.pop %v5614
        %v5616 = vmul.f32 %v5518, 1.442695
        %v5617 = vpow.pop %v5616
        %v5618 = vmul.f32 %v5519, 1.442695
        %v5619 = vpow.pop %v5618
        %v5620 = vmul.f32 %v5520, 1.442695
        %v5621 = vpow.pop %v5620
        %v5622 = vmul.f32 %v5521, 1.442695
        %v5623 = vpow.pop %v5622
        %v5624 = vmul.f32 %v5522, 1.442695
        %v5625 = vpow.pop %v5624
        %v5626 = vmul.f32 %v5523, 1.442695
        %v5627 = vpow.pop %v5626
        %v5628 = vmul.f32 %v5524, 1.442695
        %v5629 = vpow.pop %v5628
        %v5630 = vmul.f32 %v5525, 1.442695
        %v5631 = vpow.pop %v5630
        %v5632 = vmul.f32 %v5526, 1.442695
        %v5633 = vpow.pop %v5632
        %v5634 = vmul.f32 %v5527, 1.442695
        %v5635 = vpow.pop %v5634
        %v5636 = vmul.f32 %v5528, 1.442695
        %v5637 = vpow.pop %v5636
        %v5638 = vmul.f32 %v5529, 1.442695
        %v5639 = vpow.pop %v5638
        %v5640 = vmul.f32 %v5530, 1.442695
        %v5641 = vpow.pop %v5640
        %v5642 = vmul.f32 %v5531, 1.442695
        %v5643 = vpow.pop %v5642
        %v5644 = vmul.f32 %v5532, 1.442695
        %v5645 = vpow.pop %v5644
        %v5646 = vmul.f32 %v5533, 1.442695
        %v5647 = vpow.pop %v5646
        %v5648 = vmul.f32 %v5534, 1.442695
        %v5649 = vpow.pop %v5648
        %v5650 = vmul.f32 %v5535, 1.442695
        %v5651 = vpow.pop %v5650
        %v5652 = vmul.f32 %v5536, 1.442695
        %v5653 = vpow.pop %v5652
        %v5654 = vmul.f32 %v5537, 1.442695
        %v5655 = vpow.pop %v5654
        %v5656 = vmul.f32 %v5538, 1.442695
        %v5657 = vpow.pop %v5656
        %v5658 = vmul.f32 %v5539, 1.442695
        %v5659 = vpow.pop %v5658
        %v5660 = vmul.f32 %v5540, 1.442695
        %v5661 = vpow.pop %v5660
        %v5662 = vmul.f32 %v5541, 1.442695
        %v5663 = vpow.pop %v5662
        %v5664 = vmul.f32 %v5542, 1.442695
        %v5665 = vpow.pop %v5664
        %v5666 = vmul.f32 %v5543, 1.442695
        %v5667 = vpow.pop %v5666
        %v5668 = vmul.f32 %v5544, 1.442695
        %v5669 = vpow.pop %v5668
        %v5670 = vmul.f32 %v5545, 1.442695
        %v5671 = vpow.pop %v5670
        %v5672 = vmul.f32 %v5546, 1.442695
        %v5673 = vpow.pop %v5672
        %v5674 = vmul.f32 %v5547, 1.442695
        %v5675 = vpow.pop %v5674
        %v5676 = vmul.f32 %v5548, 1.442695
        %v5677 = vpow.pop %v5676
        %v5678 = vmul.f32 %v5549, 1.442695
        %v5679 = vpow.pop %v5678
        %v5680 = vmul.f32 %v5550, 1.442695
        %v5681 = vpow.pop %v5680
        %v5682 = vmul.f32 %v5551, 1.442695
        %v5683 = vpow.pop %v5682
        %v5684 = vmul.f32 %v5552, 1.442695
        %v5685 = vpow.pop %v5684
        %v5686 = vmul.f32 %v5553, 1.442695
        %v5687 = vpow.pop %v5686
        %v5688 = vmul.f32 %v5554, 1.442695
        %v5689 = vpow.pop %v5688
        %v5690 = vmul.f32 %v5555, 1.442695
        %v5691 = vpow.pop %v5690
        %v5692 = vmul.f32 %v5556, 1.442695
        %v5693 = vpow.pop %v5692
        %v5694 = vmul.f32 %v5557, 1.442695
        %v5695 = vpow.pop %v5694
        %v5696 = vmul.f32 %v5558, 1.442695
        %v5697 = vpow.pop %v5696
        %v5698 = vmul.f32 %v5559, 1.442695
        %v5699 = vpow.pop %v5698
        %v5700 = vmul.f32 %v5560, 1.442695
        %v5701 = vpow.pop %v5700
        %v5702 = vmul.f32 %v5561, 1.442695
        %v5703 = vpow.pop %v5702
        %v5704 = vmul.f32 %v5562, 1.442695
        %v5705 = vpow.pop %v5704
        %v5706 = vmul.f32 %v5563, 1.442695
        %v5707 = vpow.pop %v5706
        %v5708 = vmul.f32 %v5564, 1.442695
        %v5709 = vpow.pop %v5708
        %v5710 = vmul.f32 %v5565, 1.442695
        %v5711 = vpow.pop %v5710
        %v5712 = vmul.f32 %v5566, 1.442695
        %v5713 = vpow.pop %v5712
        %v5714 = vmul.f32 %v5567, 1.442695
        %v5715 = vpow.pop %v5714
        %v5716 = vmul.f32 %v5568, 1.442695
        %v5717 = vpow.pop %v5716
        %v5718 = vmul.f32 %v5569, 1.442695
        %v5719 = vpow.pop %v5718
        %v5720 = vmul.f32 %v5570, 1.442695
        %v5721 = vpow.pop %v5720
        %v5722 = vmul.f32 %v5571, 1.442695
        %v5723 = vpow.pop %v5722
        %v5724 = vmul.f32 %v5572, 1.442695
        %v5725 = vpow.pop %v5724
        %v5726 = vmul.f32 %v5573, 1.442695
        %v5727 = vpow.pop %v5726
        %v5728 = vmul.f32 %v5574, 1.442695
        %v5729 = vpow.pop %v5728
        %v5730 = vmul.f32 %v5575, 1.442695
        %v5731 = vpow.pop %v5730
        %v5732 = vmul.f32 %v5576, 1.442695
        %v5733 = vpow.pop %v5732
        %v5734 = vmul.f32 %v5577, 1.442695
        %v5735 = vpow.pop %v5734
        %v5736 = vmul.f32 %v5578, 1.442695
        %v5737 = vpow.pop %v5736
        %v5738 = vmul.f32 %v5579, 1.442695
        %v5739 = vpow.pop %v5738
        %v5740 = vmul.f32 %v5580, 1.442695
        %v5741 = vpow.pop %v5740
        %v5742 = vmul.f32 %v5581, 1.442695
        %v5743 = vpow.pop %v5742
        %v5744 = vmul.f32 %v5582, 1.442695
        %v5745 = vpow.pop %v5744
        %v5746 = vmul.f32 %v5583, 1.442695
        %v5747 = vpow.pop %v5746
        %v5748 = vmul.f32 %v5584, 1.442695
        %v5749 = vpow.pop %v5748
        %v5750 = vmul.f32 %v5585, 1.442695
        %v5751 = vpow.pop %v5750
        %v5752 = vmul.f32 %v5586, 1.442695
        %v5753 = vpow.pop %v5752
        %v5754 = vmul.f32 %v5587, 1.442695
        %v5755 = vpow.pop %v5754
        %v5756 = vmul.f32 %v5588, 1.442695
        %v5757 = vpow.pop %v5756
        %v5758 = vmul.f32 %v5589, 1.442695
        %v5759 = vpow.pop %v5758
        %v5760 = vmul.f32 %v5590, 1.442695
        %v5761 = vpow.pop %v5760
        %v5762 = vmul.f32 %v5591, 1.442695
        %v5763 = vpow.pop %v5762
        %v5764 = vmul.f32 %v5592, 1.442695
        %v5765 = vpow.pop %v5764
        %v5766 = vmul.f32 %v5593, 1.442695
        %v5767 = vpow.pop %v5766
        %v5768 = vmul.f32 %v5594, 1.442695
        %v5769 = vpow.pop %v5768
        %v5770 = vmul.f32 %v5595, 1.442695
        %v5771 = vpow.pop %v5770
        %v5772 = vmul.f32 %v5596, 1.442695
        %v5773 = vpow.pop %v5772
        %v5774 = vmul.f32 %v5597, 1.442695
        %v5775 = vpow.pop %v5774
        %v5776 = vmul.f32 %v5598, 1.442695
        %v5777 = vpow.pop %v5776
        %v5778 = vmul.f32 %v5599, 1.442695
        %v5779 = vpow.pop %v5778
        %v5780 = vmul.f32 %v5600, 1.442695
        %v5781 = vpow.pop %v5780
        %v5782 = vmul.f32 %v5601, 1.442695
        %v5783 = vpow.pop %v5782
        %v5784 = vmul.f32 %v5602, 1.442695
        %v5785 = vpow.pop %v5784
        %v5786 = vmul.f32 %v5603, 1.442695
        %v5787 = vpow.pop %v5786
        %v5788 = vmul.f32 %v5604, 1.442695
        %v5789 = vpow.pop %v5788
        %v5790 = vmul.f32 %v5605, 1.442695
        %v5791 = vpow.pop %v5790
        %v5792 = vmul.f32 %v5606, 1.442695
        %v5793 = vpow.pop %v5792
        %v5794 = vmul.f32 %v5607, 1.442695
        %v5795 = vpow.pop %v5794
        %v5796 = vmul.f32 %v5608, 1.442695
        %v5797 = vpow.pop %v5796
        %v5798 = vmul.f32 %v5609, 1.442695
        %v5799 = vpow.pop %v5798
        %v5800 = vmul.f32 %v5610, 1.442695
        %v5801 = vpow.pop %v5800
        %v5802 = vmul.f32 %v5611, 1.442695
        %v5803 = vpow.pop %v5802
        %v5804 = vadd.f32 %v5613, 1.0
        %v5805 = vadd.f32 %v5615, 1.0
        %v5806 = vadd.f32 %v5617, 1.0
        %v5807 = vadd.f32 %v5619, 1.0
        %v5808 = vadd.f32 %v5621, 1.0
        %v5809 = vadd.f32 %v5623, 1.0
        %v5810 = vadd.f32 %v5625, 1.0
        %v5811 = vadd.f32 %v5627, 1.0
        %v5812 = vadd.f32 %v5629, 1.0
        %v5813 = vadd.f32 %v5631, 1.0
        %v5814 = vadd.f32 %v5633, 1.0
        %v5815 = vadd.f32 %v5635, 1.0
        %v5816 = vadd.f32 %v5637, 1.0
        %v5817 = vadd.f32 %v5639, 1.0
        %v5818 = vadd.f32 %v5641, 1.0
        %v5819 = vadd.f32 %v5643, 1.0
        %v5820 = vadd.f32 %v5645, 1.0
        %v5821 = vadd.f32 %v5647, 1.0
        %v5822 = vadd.f32 %v5649, 1.0
        %v5823 = vadd.f32 %v5651, 1.0
        %v5824 = vadd.f32 %v5653, 1.0
        %v5825 = vadd.f32 %v5655, 1.0
        %v5826 = vadd.f32 %v5657, 1.0
        %v5827 = vadd.f32 %v5659, 1.0
        %v5828 = vadd.f32 %v5661, 1.0
        %v5829 = vadd.f32 %v5663, 1.0
        %v5830 = vadd.f32 %v5665, 1.0
        %v5831 = vadd.f32 %v5667, 1.0
        %v5832 = vadd.f32 %v5669, 1.0
        %v5833 = vadd.f32 %v5671, 1.0
        %v5834 = vadd.f32 %v5673, 1.0
        %v5835 = vadd.f32 %v5675, 1.0
        %v5836 = vadd.f32 %v5677, 1.0
        %v5837 = vadd.f32 %v5679, 1.0
        %v5838 = vadd.f32 %v5681, 1.0
        %v5839 = vadd.f32 %v5683, 1.0
        %v5840 = vadd.f32 %v5685, 1.0
        %v5841 = vadd.f32 %v5687, 1.0
        %v5842 = vadd.f32 %v5689, 1.0
        %v5843 = vadd.f32 %v5691, 1.0
        %v5844 = vadd.f32 %v5693, 1.0
        %v5845 = vadd.f32 %v5695, 1.0
        %v5846 = vadd.f32 %v5697, 1.0
        %v5847 = vadd.f32 %v5699, 1.0
        %v5848 = vadd.f32 %v5701, 1.0
        %v5849 = vadd.f32 %v5703, 1.0
        %v5850 = vadd.f32 %v5705, 1.0
        %v5851 = vadd.f32 %v5707, 1.0
        %v5852 = vadd.f32 %v5709, 1.0
        %v5853 = vadd.f32 %v5711, 1.0
        %v5854 = vadd.f32 %v5713, 1.0
        %v5855 = vadd.f32 %v5715, 1.0
        %v5856 = vadd.f32 %v5717, 1.0
        %v5857 = vadd.f32 %v5719, 1.0
        %v5858 = vadd.f32 %v5721, 1.0
        %v5859 = vadd.f32 %v5723, 1.0
        %v5860 = vadd.f32 %v5725, 1.0
        %v5861 = vadd.f32 %v5727, 1.0
        %v5862 = vadd.f32 %v5729, 1.0
        %v5863 = vadd.f32 %v5731, 1.0
        %v5864 = vadd.f32 %v5733, 1.0
        %v5865 = vadd.f32 %v5735, 1.0
        %v5866 = vadd.f32 %v5737, 1.0
        %v5867 = vadd.f32 %v5739, 1.0
        %v5868 = vadd.f32 %v5741, 1.0
        %v5869 = vadd.f32 %v5743, 1.0
        %v5870 = vadd.f32 %v5745, 1.0
        %v5871 = vadd.f32 %v5747, 1.0
        %v5872 = vadd.f32 %v5749, 1.0
        %v5873 = vadd.f32 %v5751, 1.0
        %v5874 = vadd.f32 %v5753, 1.0
        %v5875 = vadd.f32 %v5755, 1.0
        %v5876 = vadd.f32 %v5757, 1.0
        %v5877 = vadd.f32 %v5759, 1.0
        %v5878 = vadd.f32 %v5761, 1.0
        %v5879 = vadd.f32 %v5763, 1.0
        %v5880 = vadd.f32 %v5765, 1.0
        %v5881 = vadd.f32 %v5767, 1.0
        %v5882 = vadd.f32 %v5769, 1.0
        %v5883 = vadd.f32 %v5771, 1.0
        %v5884 = vadd.f32 %v5773, 1.0
        %v5885 = vadd.f32 %v5775, 1.0
        %v5886 = vadd.f32 %v5777, 1.0
        %v5887 = vadd.f32 %v5779, 1.0
        %v5888 = vadd.f32 %v5781, 1.0
        %v5889 = vadd.f32 %v5783, 1.0
        %v5890 = vadd.f32 %v5785, 1.0
        %v5891 = vadd.f32 %v5787, 1.0
        %v5892 = vadd.f32 %v5789, 1.0
        %v5893 = vadd.f32 %v5791, 1.0
        %v5894 = vadd.f32 %v5793, 1.0
        %v5895 = vadd.f32 %v5795, 1.0
        %v5896 = vadd.f32 %v5797, 1.0
        %v5897 = vadd.f32 %v5799, 1.0
        %v5898 = vadd.f32 %v5801, 1.0
        %v5899 = vadd.f32 %v5803, 1.0
        %v5900 = vrcp.pop %v5804
        %v5901 = vmul.f32 1.0, %v5900
        %v5902 = vrcp.pop %v5805
        %v5903 = vmul.f32 1.0, %v5902
        %v5904 = vrcp.pop %v5806
        %v5905 = vmul.f32 1.0, %v5904
        %v5906 = vrcp.pop %v5807
        %v5907 = vmul.f32 1.0, %v5906
        %v5908 = vrcp.pop %v5808
        %v5909 = vmul.f32 1.0, %v5908
        %v5910 = vrcp.pop %v5809
        %v5911 = vmul.f32 1.0, %v5910
        %v5912 = vrcp.pop %v5810
        %v5913 = vmul.f32 1.0, %v5912
        %v5914 = vrcp.pop %v5811
        %v5915 = vmul.f32 1.0, %v5914
        %v5916 = vrcp.pop %v5812
        %v5917 = vmul.f32 1.0, %v5916
        %v5918 = vrcp.pop %v5813
        %v5919 = vmul.f32 1.0, %v5918
        %v5920 = vrcp.pop %v5814
        %v5921 = vmul.f32 1.0, %v5920
        %v5922 = vrcp.pop %v5815
        %v5923 = vmul.f32 1.0, %v5922
        %v5924 = vrcp.pop %v5816
        %v5925 = vmul.f32 1.0, %v5924
        %v5926 = vrcp.pop %v5817
        %v5927 = vmul.f32 1.0, %v5926
        %v5928 = vrcp.pop %v5818
        %v5929 = vmul.f32 1.0, %v5928
        %v5930 = vrcp.pop %v5819
        %v5931 = vmul.f32 1.0, %v5930
        %v5932 = vrcp.pop %v5820
        %v5933 = vmul.f32 1.0, %v5932
        %v5934 = vrcp.pop %v5821
        %v5935 = vmul.f32 1.0, %v5934
        %v5936 = vrcp.pop %v5822
        %v5937 = vmul.f32 1.0, %v5936
        %v5938 = vrcp.pop %v5823
        %v5939 = vmul.f32 1.0, %v5938
        %v5940 = vrcp.pop %v5824
        %v5941 = vmul.f32 1.0, %v5940
        %v5942 = vrcp.pop %v5825
        %v5943 = vmul.f32 1.0, %v5942
        %v5944 = vrcp.pop %v5826
        %v5945 = vmul.f32 1.0, %v5944
        %v5946 = vrcp.pop %v5827
        %v5947 = vmul.f32 1.0, %v5946
        %v5948 = vrcp.pop %v5828
        %v5949 = vmul.f32 1.0, %v5948
        %v5950 = vrcp.pop %v5829
        %v5951 = vmul.f32 1.0, %v5950
        %v5952 = vrcp.pop %v5830
        %v5953 = vmul.f32 1.0, %v5952
        %v5954 = vrcp.pop %v5831
        %v5955 = vmul.f32 1.0, %v5954
        %v5956 = vrcp.pop %v5832
        %v5957 = vmul.f32 1.0, %v5956
        %v5958 = vrcp.pop %v5833
        %v5959 = vmul.f32 1.0, %v5958
        %v5960 = vrcp.pop %v5834
        %v5961 = vmul.f32 1.0, %v5960
        %v5962 = vrcp.pop %v5835
        %v5963 = vmul.f32 1.0, %v5962
        %v5964 = vrcp.pop %v5836
        %v5965 = vmul.f32 1.0, %v5964
        %v5966 = vrcp.pop %v5837
        %v5967 = vmul.f32 1.0, %v5966
        %v5968 = vrcp.pop %v5838
        %v5969 = vmul.f32 1.0, %v5968
        %v5970 = vrcp.pop %v5839
        %v5971 = vmul.f32 1.0, %v5970
        %v5972 = vrcp.pop %v5840
        %v5973 = vmul.f32 1.0, %v5972
        %v5974 = vrcp.pop %v5841
        %v5975 = vmul.f32 1.0, %v5974
        %v5976 = vrcp.pop %v5842
        %v5977 = vmul.f32 1.0, %v5976
        %v5978 = vrcp.pop %v5843
        %v5979 = vmul.f32 1.0, %v5978
        %v5980 = vrcp.pop %v5844
        %v5981 = vmul.f32 1.0, %v5980
        %v5982 = vrcp.pop %v5845
        %v5983 = vmul.f32 1.0, %v5982
        %v5984 = vrcp.pop %v5846
        %v5985 = vmul.f32 1.0, %v5984
        %v5986 = vrcp.pop %v5847
        %v5987 = vmul.f32 1.0, %v5986
        %v5988 = vrcp.pop %v5848
        %v5989 = vmul.f32 1.0, %v5988
        %v5990 = vrcp.pop %v5849
        %v5991 = vmul.f32 1.0, %v5990
        %v5992 = vrcp.pop %v5850
        %v5993 = vmul.f32 1.0, %v5992
        %v5994 = vrcp.pop %v5851
        %v5995 = vmul.f32 1.0, %v5994
        %v5996 = vrcp.pop %v5852
        %v5997 = vmul.f32 1.0, %v5996
        %v5998 = vrcp.pop %v5853
        %v5999 = vmul.f32 1.0, %v5998
        %v6000 = vrcp.pop %v5854
        %v6001 = vmul.f32 1.0, %v6000
        %v6002 = vrcp.pop %v5855
        %v6003 = vmul.f32 1.0, %v6002
        %v6004 = vrcp.pop %v5856
        %v6005 = vmul.f32 1.0, %v6004
        %v6006 = vrcp.pop %v5857
        %v6007 = vmul.f32 1.0, %v6006
        %v6008 = vrcp.pop %v5858
        %v6009 = vmul.f32 1.0, %v6008
        %v6010 = vrcp.pop %v5859
        %v6011 = vmul.f32 1.0, %v6010
        %v6012 = vrcp.pop %v5860
        %v6013 = vmul.f32 1.0, %v6012
        %v6014 = vrcp.pop %v5861
        %v6015 = vmul.f32 1.0, %v6014
        %v6016 = vrcp.pop %v5862
        %v6017 = vmul.f32 1.0, %v6016
        %v6018 = vrcp.pop %v5863
        %v6019 = vmul.f32 1.0, %v6018
        %v6020 = vrcp.pop %v5864
        %v6021 = vmul.f32 1.0, %v6020
        %v6022 = vrcp.pop %v5865
        %v6023 = vmul.f32 1.0, %v6022
        %v6024 = vrcp.pop %v5866
        %v6025 = vmul.f32 1.0, %v6024
        %v6026 = vrcp.pop %v5867
        %v6027 = vmul.f32 1.0, %v6026
        %v6028 = vrcp.pop %v5868
        %v6029 = vmul.f32 1.0, %v6028
        %v6030 = vrcp.pop %v5869
        %v6031 = vmul.f32 1.0, %v6030
        %v6032 = vrcp.pop %v5870
        %v6033 = vmul.f32 1.0, %v6032
        %v6034 = vrcp.pop %v5871
        %v6035 = vmul.f32 1.0, %v6034
        %v6036 = vrcp.pop %v5872
        %v6037 = vmul.f32 1.0, %v6036
        %v6038 = vrcp.pop %v5873
        %v6039 = vmul.f32 1.0, %v6038
        %v6040 = vrcp.pop %v5874
        %v6041 = vmul.f32 1.0, %v6040
        %v6042 = vrcp.pop %v5875
        %v6043 = vmul.f32 1.0, %v6042
        %v6044 = vrcp.pop %v5876
        %v6045 = vmul.f32 1.0, %v6044
        %v6046 = vrcp.pop %v5877
        %v6047 = vmul.f32 1.0, %v6046
        %v6048 = vrcp.pop %v5878
        %v6049 = vmul.f32 1.0, %v6048
        %v6050 = vrcp.pop %v5879
        %v6051 = vmul.f32 1.0, %v6050
        %v6052 = vrcp.pop %v5880
        %v6053 = vmul.f32 1.0, %v6052
        %v6054 = vrcp.pop %v5881
        %v6055 = vmul.f32 1.0, %v6054
        %v6056 = vrcp.pop %v5882
        %v6057 = vmul.f32 1.0, %v6056
        %v6058 = vrcp.pop %v5883
        %v6059 = vmul.f32 1.0, %v6058
        %v6060 = vrcp.pop %v5884
        %v6061 = vmul.f32 1.0, %v6060
        %v6062 = vrcp.pop %v5885
        %v6063 = vmul.f32 1.0, %v6062
        %v6064 = vrcp.pop %v5886
        %v6065 = vmul.f32 1.0, %v6064
        %v6066 = vrcp.pop %v5887
        %v6067 = vmul.f32 1.0, %v6066
        %v6068 = vrcp.pop %v5888
        %v6069 = vmul.f32 1.0, %v6068
        %v6070 = vrcp.pop %v5889
        %v6071 = vmul.f32 1.0, %v6070
        %v6072 = vrcp.pop %v5890
        %v6073 = vmul.f32 1.0, %v6072
        %v6074 = vrcp.pop %v5891
        %v6075 = vmul.f32 1.0, %v6074
        %v6076 = vrcp.pop %v5892
        %v6077 = vmul.f32 1.0, %v6076
        %v6078 = vrcp.pop %v5893
        %v6079 = vmul.f32 1.0, %v6078
        %v6080 = vrcp.pop %v5894
        %v6081 = vmul.f32 1.0, %v6080
        %v6082 = vrcp.pop %v5895
        %v6083 = vmul.f32 1.0, %v6082
        %v6084 = vrcp.pop %v5896
        %v6085 = vmul.f32 1.0, %v6084
        %v6086 = vrcp.pop %v5897
        %v6087 = vmul.f32 1.0, %v6086
        %v6088 = vrcp.pop %v5898
        %v6089 = vmul.f32 1.0, %v6088
        %v6090 = vrcp.pop %v5899
        %v6091 = vmul.f32 1.0, %v6090
        %v6092 = vmul.f32 %v5420, %v5901
        %v6093 = vmul.f32 %v5421, %v5903
        %v6094 = vmul.f32 %v5422, %v5905
        %v6095 = vmul.f32 %v5423, %v5907
        %v6096 = vmul.f32 %v5424, %v5909
        %v6097 = vmul.f32 %v5425, %v5911
        %v6098 = vmul.f32 %v5426, %v5913
        %v6099 = vmul.f32 %v5427, %v5915
        %v6100 = vmul.f32 %v5428, %v5917
        %v6101 = vmul.f32 %v5429, %v5919
        %v6102 = vmul.f32 %v5430, %v5921
        %v6103 = vmul.f32 %v5431, %v5923
        %v6104 = vmul.f32 %v5432, %v5925
        %v6105 = vmul.f32 %v5433, %v5927
        %v6106 = vmul.f32 %v5434, %v5929
        %v6107 = vmul.f32 %v5435, %v5931
        %v6108 = vmul.f32 %v5436, %v5933
        %v6109 = vmul.f32 %v5437, %v5935
        %v6110 = vmul.f32 %v5438, %v5937
        %v6111 = vmul.f32 %v5439, %v5939
        %v6112 = vmul.f32 %v5440, %v5941
        %v6113 = vmul.f32 %v5441, %v5943
        %v6114 = vmul.f32 %v5442, %v5945
        %v6115 = vmul.f32 %v5443, %v5947
        %v6116 = vmul.f32 %v5444, %v5949
        %v6117 = vmul.f32 %v5445, %v5951
        %v6118 = vmul.f32 %v5446, %v5953
        %v6119 = vmul.f32 %v5447, %v5955
        %v6120 = vmul.f32 %v5448, %v5957
        %v6121 = vmul.f32 %v5449, %v5959
        %v6122 = vmul.f32 %v5450, %v5961
        %v6123 = vmul.f32 %v5451, %v5963
        %v6124 = vmul.f32 %v5452, %v5965
        %v6125 = vmul.f32 %v5453, %v5967
        %v6126 = vmul.f32 %v5454, %v5969
        %v6127 = vmul.f32 %v5455, %v5971
        %v6128 = vmul.f32 %v5456, %v5973
        %v6129 = vmul.f32 %v5457, %v5975
        %v6130 = vmul.f32 %v5458, %v5977
        %v6131 = vmul.f32 %v5459, %v5979
        %v6132 = vmul.f32 %v5460, %v5981
        %v6133 = vmul.f32 %v5461, %v5983
        %v6134 = vmul.f32 %v5462, %v5985
        %v6135 = vmul.f32 %v5463, %v5987
        %v6136 = vmul.f32 %v5464, %v5989
        %v6137 = vmul.f32 %v5465, %v5991
        %v6138 = vmul.f32 %v5466, %v5993
        %v6139 = vmul.f32 %v5467, %v5995
        %v6140 = vmul.f32 %v5468, %v5997
        %v6141 = vmul.f32 %v5469, %v5999
        %v6142 = vmul.f32 %v5470, %v6001
        %v6143 = vmul.f32 %v5471, %v6003
        %v6144 = vmul.f32 %v5472, %v6005
        %v6145 = vmul.f32 %v5473, %v6007
        %v6146 = vmul.f32 %v5474, %v6009
        %v6147 = vmul.f32 %v5475, %v6011
        %v6148 = vmul.f32 %v5476, %v6013
        %v6149 = vmul.f32 %v5477, %v6015
        %v6150 = vmul.f32 %v5478, %v6017
        %v6151 = vmul.f32 %v5479, %v6019
        %v6152 = vmul.f32 %v5480, %v6021
        %v6153 = vmul.f32 %v5481, %v6023
        %v6154 = vmul.f32 %v5482, %v6025
        %v6155 = vmul.f32 %v5483, %v6027
        %v6156 = vmul.f32 %v5484, %v6029
        %v6157 = vmul.f32 %v5485, %v6031
        %v6158 = vmul.f32 %v5486, %v6033
        %v6159 = vmul.f32 %v5487, %v6035
        %v6160 = vmul.f32 %v5488, %v6037
        %v6161 = vmul.f32 %v5489, %v6039
        %v6162 = vmul.f32 %v5490, %v6041
        %v6163 = vmul.f32 %v5491, %v6043
        %v6164 = vmul.f32 %v5492, %v6045
        %v6165 = vmul.f32 %v5493, %v6047
        %v6166 = vmul.f32 %v5494, %v6049
        %v6167 = vmul.f32 %v5495, %v6051
        %v6168 = vmul.f32 %v5496, %v6053
        %v6169 = vmul.f32 %v5497, %v6055
        %v6170 = vmul.f32 %v5498, %v6057
        %v6171 = vmul.f32 %v5499, %v6059
        %v6172 = vmul.f32 %v5500, %v6061
        %v6173 = vmul.f32 %v5501, %v6063
        %v6174 = vmul.f32 %v5502, %v6065
        %v6175 = vmul.f32 %v5503, %v6067
        %v6176 = vmul.f32 %v5504, %v6069
        %v6177 = vmul.f32 %v5505, %v6071
        %v6178 = vmul.f32 %v5506, %v6073
        %v6179 = vmul.f32 %v5507, %v6075
        %v6180 = vmul.f32 %v5508, %v6077
        %v6181 = vmul.f32 %v5509, %v6079
        %v6182 = vmul.f32 %v5510, %v6081
        %v6183 = vmul.f32 %v5511, %v6083
        %v6184 = vmul.f32 %v5512, %v6085
        %v6185 = vmul.f32 %v5513, %v6087
        %v6186 = vmul.f32 %v5514, %v6089
        %v6187 = vmul.f32 %v5515, %v6091
        %v6188 = vpack.c.bf16 %v6094, %v6092
        %v6189 = vpack.c.bf16 %v6095, %v6093
        %v6190 = vpack.c.bf16 %v6098, %v6096
        %v6191 = vpack.c.bf16 %v6099, %v6097
        %v6192 = vpack.c.bf16 %v6102, %v6100
        %v6193 = vpack.c.bf16 %v6103, %v6101
        %v6194 = vpack.c.bf16 %v6106, %v6104
        %v6195 = vpack.c.bf16 %v6107, %v6105
        %v6196 = vpack.c.bf16 %v6110, %v6108
        %v6197 = vpack.c.bf16 %v6111, %v6109
        %v6198 = vpack.c.bf16 %v6114, %v6112
        %v6199 = vpack.c.bf16 %v6115, %v6113
        %v6200 = vpack.c.bf16 %v6118, %v6116
        %v6201 = vpack.c.bf16 %v6119, %v6117
        %v6202 = vpack.c.bf16 %v6122, %v6120
        %v6203 = vpack.c.bf16 %v6123, %v6121
        %v6204 = vpack.c.bf16 %v6126, %v6124
        %v6205 = vpack.c.bf16 %v6127, %v6125
        %v6206 = vpack.c.bf16 %v6130, %v6128
        %v6207 = vpack.c.bf16 %v6131, %v6129
        %v6208 = vpack.c.bf16 %v6134, %v6132
        %v6209 = vpack.c.bf16 %v6135, %v6133
        %v6210 = vpack.c.bf16 %v6138, %v6136
        %v6211 = vpack.c.bf16 %v6139, %v6137
        %v6212 = vpack.c.bf16 %v6142, %v6140
        %v6213 = vpack.c.bf16 %v6143, %v6141
        %v6214 = vpack.c.bf16 %v6146, %v6144
        %v6215 = vpack.c.bf16 %v6147, %v6145
        %v6216 = vpack.c.bf16 %v6150, %v6148
        %v6217 = vpack.c.bf16 %v6151, %v6149
        %v6218 = vpack.c.bf16 %v6154, %v6152
        %v6219 = vpack.c.bf16 %v6155, %v6153
        %v6220 = vpack.c.bf16 %v6158, %v6156
        %v6221 = vpack.c.bf16 %v6159, %v6157
        %v6222 = vpack.c.bf16 %v6162, %v6160
        %v6223 = vpack.c.bf16 %v6163, %v6161
        %v6224 = vpack.c.bf16 %v6166, %v6164
        %v6225 = vpack.c.bf16 %v6167, %v6165
        %v6226 = vpack.c.bf16 %v6170, %v6168
        %v6227 = vpack.c.bf16 %v6171, %v6169
        %v6228 = vpack.c.bf16 %v6174, %v6172
        %v6229 = vpack.c.bf16 %v6175, %v6173
        %v6230 = vpack.c.bf16 %v6178, %v6176
        %v6231 = vpack.c.bf16 %v6179, %v6177
        %v6232 = vpack.c.bf16 %v6182, %v6180
        %v6233 = vpack.c.bf16 %v6183, %v6181
        %v6234 = vpack.c.bf16 %v6186, %v6184
        %v6235 = vpack.c.bf16 %v6187, %v6185
        %v6236 = vld [vmem:[#allocation14] sm:$0xf]
        %v6237 = vld [vmem:[#allocation14 + $0x4] sm:$0xf]
        %v6238 = vld [vmem:[#allocation14 + $0x8] sm:$0xf]
        %v6239 = vld [vmem:[#allocation14 + $0xc] sm:$0xf]
        %v6240 = vld [vmem:[#allocation14 + $0x10] sm:$0xf]
        %v6241 = vld [vmem:[#allocation14 + $0x14] sm:$0xf]
        %v6242 = vld [vmem:[#allocation14 + $0x18] sm:$0xf]
        %v6243 = vld [vmem:[#allocation14 + $0x1c] sm:$0xf]
        %v6244 = vld [vmem:[#allocation14 + $0x20] sm:$0xf]
        %v6245 = vld [vmem:[#allocation14 + $0x24] sm:$0xf]
        %v6246 = vld [vmem:[#allocation14 + $0x28] sm:$0xf]
        %v6247 = vld [vmem:[#allocation14 + $0x2c] sm:$0xf]
        %v6248 = vld [vmem:[#allocation14 + $0x30] sm:$0xf]
        %v6249 = vld [vmem:[#allocation14 + $0x34] sm:$0xf]
        %v6250 = vld [vmem:[#allocation14 + $0x38] sm:$0xf]
        %v6251 = vld [vmem:[#allocation14 + $0x3c] sm:$0xf]
        %v6252 = vld [vmem:[#allocation14 + $0x40] sm:$0xf]
        %v6253 = vld [vmem:[#allocation14 + $0x44] sm:$0xf]
        %v6254 = vld [vmem:[#allocation14 + $0x48] sm:$0xf]
        %v6255 = vld [vmem:[#allocation14 + $0x4c] sm:$0xf]
        %v6256 = vld [vmem:[#allocation14 + $0x50] sm:$0xf]
        %v6257 = vld [vmem:[#allocation14 + $0x54] sm:$0xf]
        %v6258 = vld [vmem:[#allocation14 + $0x58] sm:$0xf]
        %v6259 = vld [vmem:[#allocation14 + $0x5c] sm:$0xf]
        %v6260 = vld [vmem:[#allocation14 + $0x60] sm:$0xf]
        %v6261 = vld [vmem:[#allocation14 + $0x64] sm:$0xf]
        %v6262 = vld [vmem:[#allocation14 + $0x68] sm:$0xf]
        %v6263 = vld [vmem:[#allocation14 + $0x6c] sm:$0xf]
        %v6264 = vld [vmem:[#allocation14 + $0x70] sm:$0xf]
        %v6265 = vld [vmem:[#allocation14 + $0x74] sm:$0xf]
        %v6266 = vld [vmem:[#allocation14 + $0x78] sm:$0xf]
        %v6267 = vld [vmem:[#allocation14 + $0x7c] sm:$0xf]
        %v6300 = vunpack.c.l.b16 %v6236
        %v6301 = vunpack.c.l.b16 %v6237
        %v6302 = vunpack.c.l.b16 %v6238
        %v6303 = vunpack.c.l.b16 %v6239
        %v6304 = vunpack.c.l.b16 %v6240
        %v6305 = vunpack.c.l.b16 %v6241
        %v6306 = vunpack.c.l.b16 %v6242
        %v6307 = vunpack.c.l.b16 %v6243
        %v6308 = vunpack.c.l.b16 %v6244
        %v6309 = vunpack.c.l.b16 %v6245
        %v6310 = vunpack.c.l.b16 %v6246
        %v6311 = vunpack.c.l.b16 %v6247
        %v6312 = vunpack.c.l.b16 %v6248
        %v6313 = vunpack.c.l.b16 %v6249
        %v6314 = vunpack.c.l.b16 %v6250
        %v6315 = vunpack.c.l.b16 %v6251
        %v6316 = vunpack.c.l.b16 %v6252
        %v6317 = vunpack.c.l.b16 %v6253
        %v6318 = vunpack.c.l.b16 %v6254
        %v6319 = vunpack.c.l.b16 %v6255
        %v6320 = vunpack.c.l.b16 %v6256
        %v6321 = vunpack.c.l.b16 %v6257
        %v6322 = vunpack.c.l.b16 %v6258
        %v6323 = vunpack.c.l.b16 %v6259
        %v6324 = vunpack.c.l.b16 %v6260
        %v6325 = vunpack.c.l.b16 %v6261
        %v6326 = vunpack.c.l.b16 %v6262
        %v6327 = vunpack.c.l.b16 %v6263
        %v6328 = vunpack.c.l.b16 %v6264
        %v6329 = vunpack.c.l.b16 %v6265
        %v6330 = vunpack.c.l.b16 %v6266
        %v6331 = vunpack.c.l.b16 %v6267
        %v6332 = vpack.c.b16 %v6301, %v6300
        %v6333 = vpack.c.b16 %v6303, %v6302
        %v6334 = vpack.c.b16 %v6305, %v6304
        %v6335 = vpack.c.b16 %v6307, %v6306
        %v6336 = vpack.c.b16 %v6309, %v6308
        %v6337 = vpack.c.b16 %v6311, %v6310
        %v6338 = vpack.c.b16 %v6313, %v6312
        %v6339 = vpack.c.b16 %v6315, %v6314
        %v6340 = vpack.c.b16 %v6317, %v6316
        %v6341 = vpack.c.b16 %v6319, %v6318
        %v6342 = vpack.c.b16 %v6321, %v6320
        %v6343 = vpack.c.b16 %v6323, %v6322
        %v6344 = vpack.c.b16 %v6325, %v6324
        %v6345 = vpack.c.b16 %v6327, %v6326
        %v6346 = vpack.c.b16 %v6329, %v6328
        %v6347 = vpack.c.b16 %v6331, %v6330
        %6364 = vmatprep.subr.bf16.mxu0 0
        %6365 = vmatpush1.bf16.msra.mxu0 %v6339
        %6366 = vmatprep.subr.bf16.mxu0 0
        %6367 = vmatpush1.bf16.msra.mxu0 %v6338
        %6368 = vmatprep.subr.bf16.mxu0 0
        %6369 = vmatpush1.bf16.msra.mxu0 %v6337
        %6370 = vmatprep.subr.bf16.mxu0 0
        %6371 = vmatpush1.bf16.msra.mxu0 %v6336
        %6372 = vmatprep.subr.bf16.mxu0 0
        %6373 = vmatpush1.bf16.msra.mxu0 %v6335
        %6374 = vmatprep.subr.bf16.mxu0 0
        %6375 = vmatpush1.bf16.msra.mxu0 %v6334
        %6376 = vmatprep.subr.bf16.mxu0 0
        %6377 = vmatpush1.bf16.msra.mxu0 %v6333
        %6378 = vmatprep.subr.bf16.mxu0 0
        %6379 = vmatpush1.bf16.msra.mxu0 %v6332
        %6380 = vmatprep.subr.bf16.mxu0 0
        %6381 = vmatpush2.bf16.msra.mxu0 %v6347
        %6382 = vmatprep.subr.bf16.mxu0 0
        %6383 = vmatpush2.bf16.msra.mxu0 %v6346
        %6384 = vmatprep.subr.bf16.mxu0 0
        %6385 = vmatpush2.bf16.msra.mxu0 %v6345
        %6386 = vmatprep.subr.bf16.mxu0 0
        %6387 = vmatpush2.bf16.msra.mxu0 %v6344
        %6388 = vmatprep.subr.bf16.mxu0 0
        %6389 = vmatpush2.bf16.msra.mxu0 %v6343
        %6390 = vmatprep.subr.bf16.mxu0 0
        %6391 = vmatpush2.bf16.msra.mxu0 %v6342
        %6392 = vmatprep.subr.bf16.mxu0 0
        %6393 = vmatpush2.bf16.msra.mxu0 %v6341
        %6394 = vmatprep.subr.bf16.mxu0 0
        %6395 = vmatpush2.bf16.msra.mxu0 %v6340
        %6396 = vmatprep.mubr.bf16.mxu0 %v6189
        %6397 = vmatmul.mubr.bf16.gmra.mxu0 %v6188
        %v6398 = vpop.f32.mrf.mxu0
        %v6399 = vadd.f32 %v579, %v6398
        %v6400 = vpop.f32.mrf.mxu0
        %v6401 = vpop.f32.mrf.mxu0
        %v6402 = vadd.f32 %v580, %v6401
        %v6403 = vpop.f32.mrf.mxu0
        %6404 = vmatprep.mubr.bf16.mxu0 %v6191
        %6405 = vmatmul.mubr.bf16.gmra.mxu0 %v6190
        %v6406 = vpop.f32.mrf.mxu0
        %v6407 = vadd.f32 %v581, %v6406
        %v6408 = vpop.f32.mrf.mxu0
        %v6409 = vpop.f32.mrf.mxu0
        %v6410 = vadd.f32 %v582, %v6409
        %v6411 = vpop.f32.mrf.mxu0
        %6412 = vmatprep.mubr.bf16.mxu0 %v6193
        %6413 = vmatmul.mubr.bf16.gmra.mxu0 %v6192
        %v6414 = vpop.f32.mrf.mxu0
        %v6415 = vadd.f32 %v583, %v6414
        %v6416 = vpop.f32.mrf.mxu0
        %v6417 = vpop.f32.mrf.mxu0
        %v6418 = vadd.f32 %v584, %v6417
        %v6419 = vpop.f32.mrf.mxu0
        %6420 = vmatprep.mubr.bf16.mxu0 %v6195
        %6421 = vmatmul.mubr.bf16.gmra.mxu0 %v6194
        %v6422 = vpop.f32.mrf.mxu0
        %v6423 = vadd.f32 %v585, %v6422
        %v6424 = vpop.f32.mrf.mxu0
        %v6425 = vpop.f32.mrf.mxu0
        %v6426 = vadd.f32 %v586, %v6425
        %v6427 = vpop.f32.mrf.mxu0
        %6428 = vmatprep.mubr.bf16.mxu0 %v6197
        %6429 = vmatmul.mubr.bf16.gmra.mxu0 %v6196
        %v6430 = vpop.f32.mrf.mxu0
        %v6431 = vadd.f32 %v587, %v6430
        %v6432 = vpop.f32.mrf.mxu0
        %v6433 = vpop.f32.mrf.mxu0
        %v6434 = vadd.f32 %v588, %v6433
        %v6435 = vpop.f32.mrf.mxu0
        %6436 = vmatprep.mubr.bf16.mxu0 %v6199
        %6437 = vmatmul.mubr.bf16.gmra.mxu0 %v6198
        %v6438 = vpop.f32.mrf.mxu0
        %v6439 = vadd.f32 %v589, %v6438
        %v6440 = vpop.f32.mrf.mxu0
        %v6441 = vpop.f32.mrf.mxu0
        %v6442 = vadd.f32 %v590, %v6441
        %v6443 = vpop.f32.mrf.mxu0
        %6444 = vmatprep.mubr.bf16.mxu0 %v6201
        %6445 = vmatmul.mubr.bf16.gmra.mxu0 %v6200
        %v6446 = vpop.f32.mrf.mxu0
        %v6447 = vadd.f32 %v591, %v6446
        %v6448 = vpop.f32.mrf.mxu0
        %v6449 = vpop.f32.mrf.mxu0
        %v6450 = vadd.f32 %v592, %v6449
        %v6451 = vpop.f32.mrf.mxu0
        %6452 = vmatprep.mubr.bf16.mxu0 %v6203
        %6453 = vmatmul.mubr.bf16.gmra.mxu0 %v6202
        %v6454 = vpop.f32.mrf.mxu0
        %v6455 = vadd.f32 %v593, %v6454
        %v6456 = vpop.f32.mrf.mxu0
        %v6457 = vpop.f32.mrf.mxu0
        %v6458 = vadd.f32 %v594, %v6457
        %v6459 = vpop.f32.mrf.mxu0
        %6460 = vmatprep.mubr.bf16.mxu0 %v6205
        %6461 = vmatmul.mubr.bf16.gmra.mxu0 %v6204
        %v6462 = vpop.f32.mrf.mxu0
        %v6463 = vadd.f32 %v595, %v6462
        %v6464 = vpop.f32.mrf.mxu0
        %v6465 = vpop.f32.mrf.mxu0
        %v6466 = vadd.f32 %v596, %v6465
        %v6467 = vpop.f32.mrf.mxu0
        %6468 = vmatprep.mubr.bf16.mxu0 %v6207
        %6469 = vmatmul.mubr.bf16.gmra.mxu0 %v6206
        %v6470 = vpop.f32.mrf.mxu0
        %v6471 = vadd.f32 %v597, %v6470
        %v6472 = vpop.f32.mrf.mxu0
        %v6473 = vpop.f32.mrf.mxu0
        %v6474 = vadd.f32 %v598, %v6473
        %v6475 = vpop.f32.mrf.mxu0
        %6476 = vmatprep.mubr.bf16.mxu0 %v6209
        %6477 = vmatmul.mubr.bf16.gmra.mxu0 %v6208
        %v6478 = vpop.f32.mrf.mxu0
        %v6479 = vadd.f32 %v599, %v6478
        %v6480 = vpop.f32.mrf.mxu0
        %v6481 = vpop.f32.mrf.mxu0
        %v6482 = vadd.f32 %v600, %v6481
        %v6483 = vpop.f32.mrf.mxu0
        %6484 = vmatprep.mubr.bf16.mxu0 %v6211
        %6485 = vmatmul.mubr.bf16.gmra.mxu0 %v6210
        %v6486 = vpop.f32.mrf.mxu0
        %v6487 = vadd.f32 %v601, %v6486
        %v6488 = vpop.f32.mrf.mxu0
        %v6489 = vpop.f32.mrf.mxu0
        %v6490 = vadd.f32 %v602, %v6489
        %v6491 = vpop.f32.mrf.mxu0
        %6492 = vmatprep.mubr.bf16.mxu0 %v6213
        %6493 = vmatmul.mubr.bf16.gmra.mxu0 %v6212
        %v6494 = vpop.f32.mrf.mxu0
        %v6495 = vadd.f32 %v603, %v6494
        %v6496 = vpop.f32.mrf.mxu0
        %v6497 = vpop.f32.mrf.mxu0
        %v6498 = vadd.f32 %v604, %v6497
        %v6499 = vpop.f32.mrf.mxu0
        %6500 = vmatprep.mubr.bf16.mxu0 %v6215
        %6501 = vmatmul.mubr.bf16.gmra.mxu0 %v6214
        %v6502 = vpop.f32.mrf.mxu0
        %v6503 = vadd.f32 %v605, %v6502
        %v6504 = vpop.f32.mrf.mxu0
        %v6505 = vpop.f32.mrf.mxu0
        %v6506 = vadd.f32 %v606, %v6505
        %v6507 = vpop.f32.mrf.mxu0
        %6508 = vmatprep.mubr.bf16.mxu0 %v6217
        %6509 = vmatmul.mubr.bf16.gmra.mxu0 %v6216
        %v6510 = vpop.f32.mrf.mxu0
        %v6511 = vadd.f32 %v607, %v6510
        %v6512 = vpop.f32.mrf.mxu0
        %v6513 = vpop.f32.mrf.mxu0
        %v6514 = vadd.f32 %v608, %v6513
        %v6515 = vpop.f32.mrf.mxu0
        %6516 = vmatprep.mubr.bf16.mxu0 %v6219
        %6517 = vmatmul.mubr.bf16.gmra.mxu0 %v6218
        %v6518 = vpop.f32.mrf.mxu0
        %v6519 = vadd.f32 %v609, %v6518
        %v6520 = vpop.f32.mrf.mxu0
        %v6521 = vpop.f32.mrf.mxu0
        %v6522 = vadd.f32 %v610, %v6521
        %v6523 = vpop.f32.mrf.mxu0
        %6524 = vmatprep.mubr.bf16.mxu0 %v6221
        %6525 = vmatmul.mubr.bf16.gmra.mxu0 %v6220
        %v6526 = vpop.f32.mrf.mxu0
        %v6527 = vadd.f32 %v611, %v6526
        %v6528 = vpop.f32.mrf.mxu0
        %v6529 = vpop.f32.mrf.mxu0
        %v6530 = vadd.f32 %v612, %v6529
        %v6531 = vpop.f32.mrf.mxu0
        %6532 = vmatprep.mubr.bf16.mxu0 %v6223
        %6533 = vmatmul.mubr.bf16.gmra.mxu0 %v6222
        %v6534 = vpop.f32.mrf.mxu0
        %v6535 = vadd.f32 %v613, %v6534
        %v6536 = vpop.f32.mrf.mxu0
        %v6537 = vpop.f32.mrf.mxu0
        %v6538 = vadd.f32 %v614, %v6537
        %v6539 = vpop.f32.mrf.mxu0
        %6540 = vmatprep.mubr.bf16.mxu0 %v6225
        %6541 = vmatmul.mubr.bf16.gmra.mxu0 %v6224
        %v6542 = vpop.f32.mrf.mxu0
        %v6543 = vadd.f32 %v615, %v6542
        %v6544 = vpop.f32.mrf.mxu0
        %v6545 = vpop.f32.mrf.mxu0
        %v6546 = vadd.f32 %v616, %v6545
        %v6547 = vpop.f32.mrf.mxu0
        %6548 = vmatprep.mubr.bf16.mxu0 %v6227
        %6549 = vmatmul.mubr.bf16.gmra.mxu0 %v6226
        %v6550 = vpop.f32.mrf.mxu0
        %v6551 = vadd.f32 %v617, %v6550
        %v6552 = vpop.f32.mrf.mxu0
        %v6553 = vpop.f32.mrf.mxu0
        %v6554 = vadd.f32 %v618, %v6553
        %v6555 = vpop.f32.mrf.mxu0
        %6556 = vmatprep.mubr.bf16.mxu0 %v6229
        %6557 = vmatmul.mubr.bf16.gmra.mxu0 %v6228
        %v6558 = vpop.f32.mrf.mxu0
        %v6559 = vadd.f32 %v619, %v6558
        %v6560 = vpop.f32.mrf.mxu0
        %v6561 = vpop.f32.mrf.mxu0
        %v6562 = vadd.f32 %v620, %v6561
        %v6563 = vpop.f32.mrf.mxu0
        %6564 = vmatprep.mubr.bf16.mxu0 %v6231
        %6565 = vmatmul.mubr.bf16.gmra.mxu0 %v6230
        %v6566 = vpop.f32.mrf.mxu0
        %v6567 = vadd.f32 %v621, %v6566
        %v6568 = vpop.f32.mrf.mxu0
        %v6569 = vpop.f32.mrf.mxu0
        %v6570 = vadd.f32 %v622, %v6569
        %v6571 = vpop.f32.mrf.mxu0
        %6572 = vmatprep.mubr.bf16.mxu0 %v6233
        %6573 = vmatmul.mubr.bf16.gmra.mxu0 %v6232
        %v6574 = vpop.f32.mrf.mxu0
        %v6575 = vadd.f32 %v623, %v6574
        %v6576 = vpop.f32.mrf.mxu0
        %v6577 = vpop.f32.mrf.mxu0
        %v6578 = vadd.f32 %v624, %v6577
        %v6579 = vpop.f32.mrf.mxu0
        %6580 = vmatprep.mubr.bf16.mxu0 %v6235
        %6581 = vmatmul.mubr.bf16.gmra.mxu0 %v6234
        %v6582 = vpop.f32.mrf.mxu0
        %v6583 = vadd.f32 %v625, %v6582
        %v6584 = vpop.f32.mrf.mxu0
        %v6585 = vpop.f32.mrf.mxu0
        %v6586 = vadd.f32 %v626, %v6585
        %v6587 = vpop.f32.mrf.mxu0
        %6588 = vdwg.mxu0
        %6589 = vst [vmem:[%s567] sm:$0xff] %v6399
        %6590 = vst [vmem:[%s567 + $0x8] sm:$0xff] %v6402
        %6591 = vst [vmem:[%s567 + $0x10] sm:$0xff] %v6407
        %6592 = vst [vmem:[%s567 + $0x18] sm:$0xff] %v6410
        %6593 = vst [vmem:[%s567 + $0x20] sm:$0xff] %v6415
        %6594 = vst [vmem:[%s567 + $0x28] sm:$0xff] %v6418
        %6595 = vst [vmem:[%s567 + $0x30] sm:$0xff] %v6423
        %6596 = vst [vmem:[%s567 + $0x38] sm:$0xff] %v6426
        %6597 = vst [vmem:[%s567 + $0x40] sm:$0xff] %v6431
        %6598 = vst [vmem:[%s567 + $0x48] sm:$0xff] %v6434
        %6599 = vst [vmem:[%s567 + $0x50] sm:$0xff] %v6439
        %6600 = vst [vmem:[%s567 + $0x58] sm:$0xff] %v6442
        %6601 = vst [vmem:[%s567 + $0x60] sm:$0xff] %v6447
        %6602 = vst [vmem:[%s567 + $0x68] sm:$0xff] %v6450
        %6603 = vst [vmem:[%s567 + $0x70] sm:$0xff] %v6455
        %6604 = vst [vmem:[%s567 + $0x78] sm:$0xff] %v6458
        %6605 = vst [vmem:[%s567 + $0x80] sm:$0xff] %v6463
        %6606 = vst [vmem:[%s567 + $0x88] sm:$0xff] %v6466
        %6607 = vst [vmem:[%s567 + $0x90] sm:$0xff] %v6471
        %6608 = vst [vmem:[%s567 + $0x98] sm:$0xff] %v6474
        %6609 = vst [vmem:[%s567 + $0xa0] sm:$0xff] %v6479
        %6610 = vst [vmem:[%s567 + $0xa8] sm:$0xff] %v6482
        %6611 = vst [vmem:[%s567 + $0xb0] sm:$0xff] %v6487
        %6612 = vst [vmem:[%s567 + $0xb8] sm:$0xff] %v6490
        %6613 = vst [vmem:[%s567 + $0xc0] sm:$0xff] %v6495
        %6614 = vst [vmem:[%s567 + $0xc8] sm:$0xff] %v6498
        %6615 = vst [vmem:[%s567 + $0xd0] sm:$0xff] %v6503
        %6616 = vst [vmem:[%s567 + $0xd8] sm:$0xff] %v6506
        %6617 = vst [vmem:[%s567 + $0xe0] sm:$0xff] %v6511
        %6618 = vst [vmem:[%s567 + $0xe8] sm:$0xff] %v6514
        %6619 = vst [vmem:[%s567 + $0xf0] sm:$0xff] %v6519
        %6620 = vst [vmem:[%s567 + $0xf8] sm:$0xff] %v6522
        %6621 = vst [vmem:[%s567 + $0x100] sm:$0xff] %v6527
        %6622 = vst [vmem:[%s567 + $0x108] sm:$0xff] %v6530
        %6623 = vst [vmem:[%s567 + $0x110] sm:$0xff] %v6535
        %6624 = vst [vmem:[%s567 + $0x118] sm:$0xff] %v6538
        %6625 = vst [vmem:[%s567 + $0x120] sm:$0xff] %v6543
        %6626 = vst [vmem:[%s567 + $0x128] sm:$0xff] %v6546
        %6627 = vst [vmem:[%s567 + $0x130] sm:$0xff] %v6551
        %6628 = vst [vmem:[%s567 + $0x138] sm:$0xff] %v6554
        %6629 = vst [vmem:[%s567 + $0x140] sm:$0xff] %v6559
        %6630 = vst [vmem:[%s567 + $0x148] sm:$0xff] %v6562
        %6631 = vst [vmem:[%s567 + $0x150] sm:$0xff] %v6567
        %6632 = vst [vmem:[%s567 + $0x158] sm:$0xff] %v6570
        %6633 = vst [vmem:[%s567 + $0x160] sm:$0xff] %v6575
        %6634 = vst [vmem:[%s567 + $0x168] sm:$0xff] %v6578
        %6635 = vst [vmem:[%s567 + $0x170] sm:$0xff] %v6583
        %6636 = vst [vmem:[%s567 + $0x178] sm:$0xff] %v6586
        %s6637 = sand.u32 %s302, 1
        %s6638 = scalar_lea.sflag [#allocation4], %s6637
        %s6639 = sand.u32 %s302, 1
        %s6640 = smul.addr %s6639, 384
        %s6641 = scalar_lea.vmem [#allocation16], %s6640
        // Predicated region
        $region93: #{tpu_custom_call.1} parent=59 // pred_check
          %p6642 = pneg %p312
        $region94: #{tpu_custom_call.1} parent=59 // pred_check_branch
          %6644 = sbr.rel (%p6642) target = $region96
        $region95: #{tpu_custom_call.1} parent=59 // pred_region
          %s6645 = smul.u32 48, %s38
          %s6647 = ssub.s32 6144, 6144
          %6648 = vsyncadd %s6638, %s6647
          %s6649 = smul.addr %s37, 48
          %s6650 = sadd.s32 %s6645, %s6649
          %s6651 = smul.addr %s6650, 128
          %s6652 = scalar_lea.hbm %s10, %s6651
          %s6653 = sshll.u32 %s6641, 4
          %s6654 = int_to_ptr.vmem [resolvable:$true] %s6653
          %6659 = dma.vmem_to_hbm [thread:$0]  %s6654, 6144, %s6652, %s6638, 128, 128, 8
        $region96: #{tpu_custom_call.1} parent=59 // pred_fallthru
          _
      $region60: #{tpu_custom_call.1} parent=5 // pred_fallthru
        _
      %p6660 = scmp.le.s32.totalorder 2, %s28
      // Predicated region
      $region97: #{tpu_custom_call.1} parent=5 // pred_check
        %p6661 = pneg %p6660
      $region98: #{tpu_custom_call.1} parent=5 // pred_check_branch
        %6663 = sbr.rel (%p6661) target = $region100
      $region99: #{tpu_custom_call.1} parent=5 // pred_region
        %s6664 = ssub.s32 %s28, 2
        // Predicated region
        $region101: #{tpu_custom_call.1} parent=99 // pred_check
          %p6665 = pneg %p318
        $region102: #{tpu_custom_call.1} parent=99 // pred_check_branch
          %6667 = sbr.rel (%p6665) target = $region104
        $region103: #{tpu_custom_call.1} parent=99 // pred_region
          %s6668 = sand.u32 %s303, 1
          %s6669 = scalar_lea.sflag [#allocation4], %s6668
          %s6670 = sand.u32 %s303, 1
          %s6671 = smul.addr %s6670, 384
          %s6672 = scalar_lea.vmem [#allocation16], %s6671
          %6673 = dma.done %s6669, 6144
        $region104: #{tpu_custom_call.1} parent=99 // pred_fallthru
          _
      $region100: #{tpu_custom_call.1} parent=5 // pred_fallthru
        _
    $region6: #{tpu_custom_call.1} parent=1 // loop_footer
      %s32 = sadd.s32 1, %s28
    $region7: #{tpu_custom_call.1} parent=1 // loop_footer_branch
      %27 = sbr.rel target = $region3
    $region8: #{tpu_custom_call.1} parent=1 // loop_exit
      _
    %6674 = vsyncpa [#allocation3], 1
    %s6675 = scalar_lea.sflag [#allocation3], 1
    %6676 = vsyncpa %s6675, 1
    %6677 = vsyncpa [#allocation6], 1
    %s6678 = scalar_lea.sflag [#allocation6], 1
    %6679 = vsyncpa %s6678, 1
    %6680 = vsyncpa [#allocation9], 1
    %6681 = vsyncpa [#allocation12], 1
    %6682 = vsyncpa [#allocation15], 1
    %6683 = vsyncpa [#allocation4], 1
    %s6684 = scalar_lea.sflag [#allocation4], 1
    %6685 = vsyncpa %s6684, 1

</llo_original>
